<compile_context>
chip_gen: v7x
topology: tpu7x:2x2x1
jax: 0.10.0
libtpu: 0.0.40
codegen_flags: <defaults>
</compile_context>

<pallas_src>
import jax
import jax.numpy as jnp
from jax.experimental import pallas as pl
from jax.experimental.pallas import tpu as pltpu

LANE = 128


def _round_up(x, m):
    return (x + m - 1) // m * m


def _prep_weight(w_oihw, cin_p, cout_p, dtype):
    """PyTorch OIHW (Cout,Cin,3,3) -> (3, 3*cin_p, cout_p), channel-padded.

    Channel order of the flattened K axis is (kw, cin), matching the in-kernel
    concatenation of the three kw-shifted slices.
    """
    cout, cin = w_oihw.shape[0], w_oihw.shape[1]
    w = jnp.transpose(w_oihw, (2, 3, 1, 0))                    # HWIO (3,3,Cin,Cout)
    w = jnp.pad(w, ((0, 0), (0, 0), (0, cin_p - cin), (0, cout_p - cout)))
    return w.reshape(3, 3 * cin_p, cout_p).astype(dtype)


def _pick_tile_rows(H, W, cin_p, cmid_p, cout_p, elt_bytes,
                    budget_bytes=24 * 1024 * 1024):
    """Largest divisor of H whose per-grid-step VMEM footprint fits the budget."""
    def footprint(th):
        xwin = (th + 4) * (W + 4) * cin_p * elt_bytes          # haloed input window
        hbuf = (th + 2) * (W + 2) * cmid_p * elt_bytes         # intermediate
        acc1 = (th + 2) * (W + 2) * cmid_p * 4                 # f32 accumulators
        acc2 = th * W * cout_p * 4
        outb = 2 * th * W * cout_p * 4                         # double-buffered out
        wgts = 2 * 9 * (cin_p * cmid_p + cmid_p * cout_p) * elt_bytes
        return xwin + hbuf + acc1 + acc2 + outb + wgts

    cap = H if H <= 8 else max(8, H // 2)      # >=2 row tiles when H allows (pipelining)
    divisors = [d for d in range(min(H, cap), 0, -1) if H % d == 0]
    for d in divisors:
        if footprint(d) <= budget_bytes:
            return d
    return divisors[-1]                         # correctness over perf (TH=1)


def double_conv(x_nchw, w1, b1, w2, b2, *, compute_dtype=jnp.bfloat16):
    """DoubleConv.forward: conv3x3(pad=1) -> ReLU -> conv3x3(pad=1) -> ReLU (NCHW)."""
    N, Cin, H, W = x_nchw.shape
    Cout = w1.shape[0]
    assert w1.shape == (Cout, Cin, 3, 3) and b1.shape == (Cout,)
    assert w2.shape == (Cout, Cout, 3, 3) and b2.shape == (Cout,)

    cin_p = _round_up(Cin, LANE)
    cmid_p = _round_up(Cout, LANE)
    cout_p = _round_up(Cout, LANE)
    elt_bytes = jnp.dtype(compute_dtype).itemsize

    # NCHW -> NHWC; a SINGLE pad covering both convs (2-px spatial halo) plus the
    # lane padding of the channel axis. conv2's own zero padding is reproduced
    # in-kernel by masking the out-of-image border of the intermediate.
    x = jnp.transpose(x_nchw, (0, 2, 3, 1))
    x = jnp.pad(x, ((0, 0), (2, 2), (2, 2), (0, cin_p - Cin))).astype(compute_dtype)

    w1p = _prep_weight(w1, cin_p, cmid_p, compute_dtype)
    w2p = _prep_weight(w2, cmid_p, cout_p, compute_dtype)
    b1p = jnp.pad(b1, (0, cmid_p - Cout)).reshape(1, cmid_p).astype(jnp.float32)
    b2p = jnp.pad(b2, (0, cout_p - Cout)).reshape(1, cout_p).astype(jnp.float32)

    TH = _pick_tile_rows(H, W, cin_p, cmid_p, cout_p, elt_bytes)
    n_row_tiles = H // TH
    HH, WH = TH + 2, W + 2          # intermediate tile incl. conv2's 1-px halo

    def kernel(x_hbm, w1_ref, b1_ref, w2_ref, b2_ref, o_ref,
               xwin, hbuf, acc1, acc2, sem):
        n = pl.program_id(0)
        r = pl.program_id(1)
        row0 = r * TH                # first output row of this tile

        # Fetch the overlapping (TH+4)-row haloed input window for this tile.
        cp = pltpu.make_async_copy(x_hbm.at[n, pl.ds(row0, TH + 4)], xwin, sem)
        cp.start()
        cp.wait()
        xv = xwin[...]                                         # (TH+4, W+4, cin_p)

        # ---- conv1 + bias + ReLU over the haloed (TH+2, W+2) region ----
        acc1[...] = jnp.zeros_like(acc1)
        for kh in range(3):
            rows = xv[kh:kh + HH]                              # (HH, W+4, cin_p)
            patch = jnp.concatenate(
                [rows[:, kw:kw + WH, :] for kw in range(3)], axis=-1)
            acc1[...] += jnp.dot(patch.reshape(HH * WH, 3 * cin_p),
                                 w1_ref[kh],
                                 preferred_element_type=jnp.float32)
        h = jnp.maximum(acc1[...] + b1_ref[0], 0.0).reshape(HH, WH, cmid_p)

        # conv2's zero padding: intermediate rows/cols outside the image are 0.
        row_ids = jax.lax.broadcasted_iota(jnp.int32, (HH, WH, cmid_p), 0)
        col_ids = jax.lax.broadcasted_iota(jnp.int32, (HH, WH, cmid_p), 1)
        valid = ((row_ids >= 1 - row0) & (row_ids < H + 1 - row0) &
                 (col_ids >= 1) & (col_ids <= W))
        hbuf[...] = jnp.where(valid, h, 0.0).astype(hbuf.dtype)

        # ---- conv2 + bias + ReLU over the (TH, W) output tile ----
        hv = hbuf[...]                                         # (HH, WH, cmid_p)
        acc2[...] = jnp.zeros_like(acc2)
        for kh in range(3):
            rows = hv[kh:kh + TH]                              # (TH, WH, cmid_p)
            patch = jnp.concatenate(
                [rows[:, kw:kw + W, :] for kw in range(3)], axis=-1)
            acc2[...] += jnp.dot(patch.reshape(TH * W, 3 * cmid_p),
                                 w2_ref[kh],
                                 preferred_element_type=jnp.float32)
        y = jnp.maximum(acc2[...] + b2_ref[0], 0.0)
        o_ref[0] = y.reshape(TH, W, cout_p).astype(o_ref.dtype)

    out = pl.pallas_call(
        kernel,
        out_shape=jax.ShapeDtypeStruct((N, H, W, cout_p), jnp.float32),
        grid_spec=pltpu.PrefetchScalarGridSpec(
            num_scalar_prefetch=0,
            grid=(N, n_row_tiles),
            in_specs=[
                pl.BlockSpec(memory_space=pl.ANY),             # padded input (HBM)
                pl.BlockSpec((3, 3 * cin_p, cmid_p), lambda n, r: (0, 0, 0)),
                pl.BlockSpec((1, cmid_p), lambda n, r: (0, 0)),
                pl.BlockSpec((3, 3 * cmid_p, cout_p), lambda n, r: (0, 0, 0)),
                pl.BlockSpec((1, cout_p), lambda n, r: (0, 0)),
            ],
            out_specs=pl.BlockSpec((1, TH, W, cout_p), lambda n, r: (n, r, 0, 0)),
            scratch_shapes=[
                pltpu.VMEM((TH + 4, W + 4, cin_p), compute_dtype),   # input window
                pltpu.VMEM((HH, WH, cmid_p), compute_dtype),         # intermediate
                pltpu.VMEM((HH * WH, cmid_p), jnp.float32),          # conv1 f32 acc
                pltpu.VMEM((TH * W, cout_p), jnp.float32),           # conv2 f32 acc
                pltpu.SemaphoreType.DMA,
            ]),
        compiler_params=pltpu.CompilerParams(
            dimension_semantics=("parallel", "parallel"),
            vmem_limit_bytes=48 * 1024 * 1024),
    )(x, w1p, b1p, w2p, b2p)

    # Drop lane padding, back to NCHW.
    return jnp.transpose(out[..., :Cout], (0, 3, 1, 2))


def _reference_double_conv(x_nchw, w1, b1, w2, b2):
    """Pure-JAX reference (lax conv) for correctness checking."""
    dn = jax.lax.conv_dimension_numbers(x_nchw.shape, w1.shape,
                                        ("NCHW", "OIHW", "NCHW"))
    h = jax.lax.conv_general_dilated(x_nchw, w1, (1, 1), ((1, 1), (1, 1)),
                                     dimension_numbers=dn)
    h = jnp.maximum(h + b1.reshape(1, -1, 1, 1), 0.0)
    y = jax.lax.conv_general_dilated(h, w2, (1, 1), ((1, 1), (1, 1)),
                                     dimension_numbers=dn)
    return jnp.maximum(y + b2.reshape(1, -1, 1, 1), 0.0)


if __name__ == "__main__":
    key = jax.random.PRNGKey(0)
    N, Cin, Cout, H, W = 2, 4, 8, 16, 16

    k_x, k_w1, k_b1, k_w2, k_b2 = jax.random.split(key, 5)
    x = jax.random.normal(k_x, (N, Cin, H, W), dtype=jnp.float32)
    # Deterministic synthetic params (PyTorch Conv2d shapes: OIHW / (O,)).
    w1 = 0.1 * jax.random.normal(k_w1, (Cout, Cin, 3, 3), dtype=jnp.float32)
    b1 = 0.1 * jax.random.normal(k_b1, (Cout,), dtype=jnp.float32)
    w2 = 0.1 * jax.random.normal(k_w2, (Cout, Cout, 3, 3), dtype=jnp.float32)
    b2 = 0.1 * jax.random.normal(k_b2, (Cout,), dtype=jnp.float32)

    ref = jax.block_until_ready(_reference_double_conv(x, w1, b1, w2, b2))

    # Full-precision path: must match the lax reference tightly.
    out_f32 = jax.block_until_ready(
        double_conv(x, w1, b1, w2, b2, compute_dtype=jnp.float32))
    assert out_f32.shape == (N, Cout, H, W), out_f32.shape
    assert jnp.allclose(out_f32, ref, atol=1e-4, rtol=1e-4), \
        float(jnp.max(jnp.abs(out_f32 - ref)))

    # Default bf16-matmul / f32-accumulate path (the fast one on v6e/v7x).
    out_bf16 = jax.block_until_ready(double_conv(x, w1, b1, w2, b2))
    assert out_bf16.shape == (N, Cout, H, W), out_bf16.shape
    assert jnp.allclose(out_bf16, ref, atol=2e-2, rtol=2e-2), \
        float(jnp.max(jnp.abs(out_bf16 - ref)))

    print("KERNEL_OK")
</pallas_src>

<mosaic_0001>
module attributes {stable_mosaic.version = 11 : i64} {
  func.func @kernel(%arg0: i32, %arg1: i32, %arg2: memref<2x20x20x128xf32, #tpu.memory_space<any>>, %arg3: memref<3x384x128xf32, #tpu.memory_space<vmem>>, %arg4: memref<1x128xf32, #tpu.memory_space<vmem>>, %arg5: memref<3x384x128xf32, #tpu.memory_space<vmem>>, %arg6: memref<1x128xf32, #tpu.memory_space<vmem>>, %arg7: memref<1x8x16x128xf32, #tpu.memory_space<vmem>>, %arg8: memref<12x20x128xf32, #tpu.memory_space<vmem>>, %arg9: memref<10x18x128xf32, #tpu.memory_space<vmem>>, %arg10: memref<180x128xf32, #tpu.memory_space<vmem>>, %arg11: memref<128x128xf32, #tpu.memory_space<vmem>>, %arg12: memref<!tpu.dma_semaphore, #tpu.memory_space<semaphore_mem>>) attributes {dimension_semantics = [#tpu.dimension_semantics<parallel>, #tpu.dimension_semantics<parallel>], iteration_bounds = array<i64: 2, 2>, scalar_prefetch = 0 : i64, scratch_operands = 5 : i64, tpu.core_type = #tpu.core_type<tc>, window_params = [{}, {pipeline_mode = #tpu.pipeline_mode<synchronous>, transform_indices = @transform_1, window_bounds = array<i64: 3, 384, 128>}, {pipeline_mode = #tpu.pipeline_mode<synchronous>, transform_indices = @transform_2, window_bounds = array<i64: 1, 128>}, {pipeline_mode = #tpu.pipeline_mode<synchronous>, transform_indices = @transform_3, window_bounds = array<i64: 3, 384, 128>}, {pipeline_mode = #tpu.pipeline_mode<synchronous>, transform_indices = @transform_4, window_bounds = array<i64: 1, 128>}, {transform_indices = @transform_5, window_bounds = array<i64: 1, 8, 16, 128>}]} {
    %c8_i32 = arith.constant 8 : i32
    %0 = arith.muli %arg1, %c8_i32 : i32
    %c0_i32 = arith.constant 0 : i32
    %c0_i32_0 = arith.constant 0 : i32
    %1 = tpu.memref_slice %arg2[%arg0, %0, %c0_i32, %c0_i32_0] : memref<2x20x20x128xf32, #tpu.memory_space<any>> -> memref<1x12x20x128xf32, #tpu.memory_space<any>>
    %2 = tpu.memref_squeeze %1 : memref<1x12x20x128xf32, #tpu.memory_space<any>> -> memref<12x20x128xf32, #tpu.memory_space<any>>
    tpu.enqueue_dma source(%2 : memref<12x20x128xf32, #tpu.memory_space<any>>) target(%arg8 : memref<12x20x128xf32, #tpu.memory_space<vmem>>) target_semaphore(%arg12 : memref<!tpu.dma_semaphore, #tpu.memory_space<semaphore_mem>>)
    %c0_i32_1 = arith.constant 0 : i32
    %c0_i32_2 = arith.constant 0 : i32
    %3 = tpu.memref_slice %arg2[%arg0, %0, %c0_i32_1, %c0_i32_2] : memref<2x20x20x128xf32, #tpu.memory_space<any>> -> memref<1x12x20x128xf32, #tpu.memory_space<any>>
    %4 = tpu.memref_squeeze %3 : memref<1x12x20x128xf32, #tpu.memory_space<any>> -> memref<12x20x128xf32, #tpu.memory_space<any>>
    tpu.wait_dma2 semaphore(%arg12 : memref<!tpu.dma_semaphore, #tpu.memory_space<semaphore_mem>>) src(%4 : memref<12x20x128xf32, #tpu.memory_space<any>>) dst(%arg8 : memref<12x20x128xf32, #tpu.memory_space<vmem>>)
    %c0 = arith.constant 0 : index
    %c0_3 = arith.constant 0 : index
    %c0_4 = arith.constant 0 : index
    %5 = vector.load %arg8[%c0, %c0_3, %c0_4] : memref<12x20x128xf32, #tpu.memory_space<vmem>>, vector<12x20x128xf32>
    %cst = arith.constant 0.000000e+00 : f32
    %6 = vector.broadcast %cst : f32 to vector<180x128xf32>
    %c0_5 = arith.constant 0 : index
    %c0_6 = arith.constant 0 : index
    %7 = vector.load %arg10[%c0_5, %c0_6] : memref<180x128xf32, #tpu.memory_space<vmem>>, vector<180x128xf32>
    tpu.vector_store %arg10[%c0_5, %c0_6], %6 {strides = array<i32>} : memref<180x128xf32, #tpu.memory_space<vmem>>, vector<180x128xf32>,
    %8 = vector.extract_strided_slice %5 {offsets = [0, 0, 0], sizes = [10, 20, 128], strides = [1, 1, 1]} : vector<12x20x128xf32> to vector<10x20x128xf32>
    %9 = vector.extract_strided_slice %8 {offsets = [0, 0, 0], sizes = [10, 18, 128], strides = [1, 1, 1]} : vector<10x20x128xf32> to vector<10x18x128xf32>
    %10 = vector.extract_strided_slice %8 {offsets = [0, 1, 0], sizes = [10, 18, 128], strides = [1, 1, 1]} : vector<10x20x128xf32> to vector<10x18x128xf32>
    %11 = vector.extract_strided_slice %8 {offsets = [0, 2, 0], sizes = [10, 18, 128], strides = [1, 1, 1]} : vector<10x20x128xf32> to vector<10x18x128xf32>
    %12 = tpu.concatenate %9, %10, %11 in 2 : vector<10x18x128xf32>, vector<10x18x128xf32>, vector<10x18x128xf32> -> vector<10x18x384xf32>
    %c0_7 = arith.constant 0 : index
    %c0_8 = arith.constant 0 : index
    %13 = vector.load %arg10[%c0_7, %c0_8] : memref<180x128xf32, #tpu.memory_space<vmem>>, vector<180x128xf32>
    %14 = vector.shape_cast %12 : vector<10x18x384xf32> to vector<180x384xf32>
    %c0_9 = arith.constant 0 : index
    %c0_10 = arith.constant 0 : index
    %c0_11 = arith.constant 0 : index
    %15 = vector.load %arg3[%c0_9, %c0_10, %c0_11] : memref<3x384x128xf32, #tpu.memory_space<vmem>>, vector<1x384x128xf32>
    %16 = vector.shape_cast %15 : vector<1x384x128xf32> to vector<384x128xf32>
    %cst_12 = arith.constant dense<0.000000e+00> : vector<180x128xf32>
    %17 = tpu.matmul %14, %16, %cst_12 {dimension_numbers = #tpu.dot_dimension_numbers<[1], [0], [0], [1], [0, 0, 1, 1], [], []>} : vector<180x384xf32>, vector<384x128xf32>, vector<180x128xf32> -> vector<180x128xf32>
    %18 = arith.addf %13, %17 : vector<180x128xf32>
    %c0_13 = arith.constant 0 : index
    %c0_14 = arith.constant 0 : index
    %19 = vector.load %arg10[%c0_13, %c0_14] : memref<180x128xf32, #tpu.memory_space<vmem>>, vector<180x128xf32>
    tpu.vector_store %arg10[%c0_13, %c0_14], %18 {strides = array<i32>} : memref<180x128xf32, #tpu.memory_space<vmem>>, vector<180x128xf32>,
    %20 = vector.extract_strided_slice %5 {offsets = [1, 0, 0], sizes = [10, 20, 128], strides = [1, 1, 1]} : vector<12x20x128xf32> to vector<10x20x128xf32>
    %21 = vector.extract_strided_slice %20 {offsets = [0, 0, 0], sizes = [10, 18, 128], strides = [1, 1, 1]} : vector<10x20x128xf32> to vector<10x18x128xf32>
    %22 = vector.extract_strided_slice %20 {offsets = [0, 1, 0], sizes = [10, 18, 128], strides = [1, 1, 1]} : vector<10x20x128xf32> to vector<10x18x128xf32>
    %23 = vector.extract_strided_slice %20 {offsets = [0, 2, 0], sizes = [10, 18, 128], strides = [1, 1, 1]} : vector<10x20x128xf32> to vector<10x18x128xf32>
    %24 = tpu.concatenate %21, %22, %23 in 2 : vector<10x18x128xf32>, vector<10x18x128xf32>, vector<10x18x128xf32> -> vector<10x18x384xf32>
    %c0_15 = arith.constant 0 : index
    %c0_16 = arith.constant 0 : index
    %25 = vector.load %arg10[%c0_15, %c0_16] : memref<180x128xf32, #tpu.memory_space<vmem>>, vector<180x128xf32>
    %26 = vector.shape_cast %24 : vector<10x18x384xf32> to vector<180x384xf32>
    %c1 = arith.constant 1 : index
    %c0_17 = arith.constant 0 : index
    %c0_18 = arith.constant 0 : index
    %27 = vector.load %arg3[%c1, %c0_17, %c0_18] : memref<3x384x128xf32, #tpu.memory_space<vmem>>, vector<1x384x128xf32>
    %28 = vector.shape_cast %27 : vector<1x384x128xf32> to vector<384x128xf32>
    %cst_19 = arith.constant dense<0.000000e+00> : vector<180x128xf32>
    %29 = tpu.matmul %26, %28, %cst_19 {dimension_numbers = #tpu.dot_dimension_numbers<[1], [0], [0], [1], [0, 0, 1, 1], [], []>} : vector<180x384xf32>, vector<384x128xf32>, vector<180x128xf32> -> vector<180x128xf32>
    %30 = arith.addf %25, %29 : vector<180x128xf32>
    %c0_20 = arith.constant 0 : index
    %c0_21 = arith.constant 0 : index
    %31 = vector.load %arg10[%c0_20, %c0_21] : memref<180x128xf32, #tpu.memory_space<vmem>>, vector<180x128xf32>
    tpu.vector_store %arg10[%c0_20, %c0_21], %30 {strides = array<i32>} : memref<180x128xf32, #tpu.memory_space<vmem>>, vector<180x128xf32>,
    %32 = vector.extract_strided_slice %5 {offsets = [2, 0, 0], sizes = [10, 20, 128], strides = [1, 1, 1]} : vector<12x20x128xf32> to vector<10x20x128xf32>
    %33 = vector.extract_strided_slice %32 {offsets = [0, 0, 0], sizes = [10, 18, 128], strides = [1, 1, 1]} : vector<10x20x128xf32> to vector<10x18x128xf32>
    %34 = vector.extract_strided_slice %32 {offsets = [0, 1, 0], sizes = [10, 18, 128], strides = [1, 1, 1]} : vector<10x20x128xf32> to vector<10x18x128xf32>
    %35 = vector.extract_strided_slice %32 {offsets = [0, 2, 0], sizes = [10, 18, 128], strides = [1, 1, 1]} : vector<10x20x128xf32> to vector<10x18x128xf32>
    %36 = tpu.concatenate %33, %34, %35 in 2 : vector<10x18x128xf32>, vector<10x18x128xf32>, vector<10x18x128xf32> -> vector<10x18x384xf32>
    %c0_22 = arith.constant 0 : index
    %c0_23 = arith.constant 0 : index
    %37 = vector.load %arg10[%c0_22, %c0_23] : memref<180x128xf32, #tpu.memory_space<vmem>>, vector<180x128xf32>
    %38 = vector.shape_cast %36 : vector<10x18x384xf32> to vector<180x384xf32>
    %c2 = arith.constant 2 : index
    %c0_24 = arith.constant 0 : index
    %c0_25 = arith.constant 0 : index
    %39 = vector.load %arg3[%c2, %c0_24, %c0_25] : memref<3x384x128xf32, #tpu.memory_space<vmem>>, vector<1x384x128xf32>
    %40 = vector.shape_cast %39 : vector<1x384x128xf32> to vector<384x128xf32>
    %cst_26 = arith.constant dense<0.000000e+00> : vector<180x128xf32>
    %41 = tpu.matmul %38, %40, %cst_26 {dimension_numbers = #tpu.dot_dimension_numbers<[1], [0], [0], [1], [0, 0, 1, 1], [], []>} : vector<180x384xf32>, vector<384x128xf32>, vector<180x128xf32> -> vector<180x128xf32>
    %42 = arith.addf %37, %41 : vector<180x128xf32>
    %c0_27 = arith.constant 0 : index
    %c0_28 = arith.constant 0 : index
    %43 = vector.load %arg10[%c0_27, %c0_28] : memref<180x128xf32, #tpu.memory_space<vmem>>, vector<180x128xf32>
    tpu.vector_store %arg10[%c0_27, %c0_28], %42 {strides = array<i32>} : memref<180x128xf32, #tpu.memory_space<vmem>>, vector<180x128xf32>,
    %c0_29 = arith.constant 0 : index
    %c0_30 = arith.constant 0 : index
    %44 = vector.load %arg10[%c0_29, %c0_30] : memref<180x128xf32, #tpu.memory_space<vmem>>, vector<180x128xf32>
    %c0_31 = arith.constant 0 : index
    %c0_32 = arith.constant 0 : index
    %45 = vector.load %arg4[%c0_31, %c0_32] : memref<1x128xf32, #tpu.memory_space<vmem>>, vector<1x128xf32>
    %46 = vector.shape_cast %45 : vector<1x128xf32> to vector<128xf32>
    %47 = vector.shape_cast %46 : vector<128xf32> to vector<1x128xf32>
    %48 = vector.broadcast %47 : vector<1x128xf32> to vector<180x128xf32>
    %49 = arith.addf %44, %48 : vector<180x128xf32>
    %cst_33 = arith.constant 0.000000e+00 : f32
    %50 = vector.broadcast %cst_33 : f32 to vector<180x128xf32>
    %51 = arith.maximumf %49, %50 : vector<180x128xf32>
    %52 = vector.shape_cast %51 : vector<180x128xf32> to vector<10x18x128xf32>
    %53 = tpu.iota {dimensions = array<i32: 0>} : vector<10x18x128xi32>
    %54 = tpu.iota {dimensions = array<i32: 1>} : vector<10x18x128xi32>
    %c1_i32 = arith.constant 1 : i32
    %55 = arith.subi %c1_i32, %0 : i32
    %56 = vector.broadcast %55 : i32 to vector<10x18x128xi32>
    %57 = arith.cmpi sge, %53, %56 : vector<10x18x128xi32>
    %c17_i32 = arith.constant 17 : i32
    %58 = arith.subi %c17_i32, %0 : i32
    %59 = vector.broadcast %58 : i32 to vector<10x18x128xi32>
    %60 = arith.cmpi slt, %53, %59 : vector<10x18x128xi32>
    %61 = arith.andi %57, %60 : vector<10x18x128xi1>
    %c1_i32_34 = arith.constant 1 : i32
    %62 = vector.broadcast %c1_i32_34 : i32 to vector<10x18x128xi32>
    %63 = arith.cmpi sge, %54, %62 : vector<10x18x128xi32>
    %64 = arith.andi %61, %63 : vector<10x18x128xi1>
    %c16_i32 = arith.constant 16 : i32
    %65 = vector.broadcast %c16_i32 : i32 to vector<10x18x128xi32>
    %66 = arith.cmpi sle, %54, %65 : vector<10x18x128xi32>
    %67 = arith.andi %64, %66 : vector<10x18x128xi1>
    %cst_35 = arith.constant 0.000000e+00 : f32
    %68 = vector.broadcast %cst_35 : f32 to vector<10x18x128xf32>
    %69 = arith.select %67, %52, %68 : vector<10x18x128xi1>, vector<10x18x128xf32>
    %c0_36 = arith.constant 0 : index
    %c0_37 = arith.constant 0 : index
    %c0_38 = arith.constant 0 : index
    %70 = vector.load %arg9[%c0_36, %c0_37, %c0_38] : memref<10x18x128xf32, #tpu.memory_space<vmem>>, vector<10x18x128xf32>
    tpu.vector_store %arg9[%c0_36, %c0_37, %c0_38], %69 {strides = array<i32>} : memref<10x18x128xf32, #tpu.memory_space<vmem>>, vector<10x18x128xf32>,
    %c0_39 = arith.constant 0 : index
    %c0_40 = arith.constant 0 : index
    %c0_41 = arith.constant 0 : index
    %71 = vector.load %arg9[%c0_39, %c0_40, %c0_41] : memref<10x18x128xf32, #tpu.memory_space<vmem>>, vector<10x18x128xf32>
    %cst_42 = arith.constant 0.000000e+00 : f32
    %72 = vector.broadcast %cst_42 : f32 to vector<128x128xf32>
    %c0_43 = arith.constant 0 : index
    %c0_44 = arith.constant 0 : index
    %73 = vector.load %arg11[%c0_43, %c0_44] : memref<128x128xf32, #tpu.memory_space<vmem>>, vector<128x128xf32>
    tpu.vector_store %arg11[%c0_43, %c0_44], %72 {strides = array<i32>} : memref<128x128xf32, #tpu.memory_space<vmem>>, vector<128x128xf32>,
    %74 = vector.extract_strided_slice %71 {offsets = [0, 0, 0], sizes = [8, 18, 128], strides = [1, 1, 1]} : vector<10x18x128xf32> to vector<8x18x128xf32>
    %75 = vector.extract_strided_slice %74 {offsets = [0, 0, 0], sizes = [8, 16, 128], strides = [1, 1, 1]} : vector<8x18x128xf32> to vector<8x16x128xf32>
    %76 = vector.extract_strided_slice %74 {offsets = [0, 1, 0], sizes = [8, 16, 128], strides = [1, 1, 1]} : vector<8x18x128xf32> to vector<8x16x128xf32>
    %77 = vector.extract_strided_slice %74 {offsets = [0, 2, 0], sizes = [8, 16, 128], strides = [1, 1, 1]} : vector<8x18x128xf32> to vector<8x16x128xf32>
    %78 = tpu.concatenate %75, %76, %77 in 2 : vector<8x16x128xf32>, vector<8x16x128xf32>, vector<8x16x128xf32> -> vector<8x16x384xf32>
    %c0_45 = arith.constant 0 : index
    %c0_46 = arith.constant 0 : index
    %79 = vector.load %arg11[%c0_45, %c0_46] : memref<128x128xf32, #tpu.memory_space<vmem>>, vector<128x128xf32>
    %80 = vector.shape_cast %78 : vector<8x16x384xf32> to vector<128x384xf32>
    %c0_47 = arith.constant 0 : index
    %c0_48 = arith.constant 0 : index
    %c0_49 = arith.constant 0 : index
    %81 = vector.load %arg5[%c0_47, %c0_48, %c0_49] : memref<3x384x128xf32, #tpu.memory_space<vmem>>, vector<1x384x128xf32>
    %82 = vector.shape_cast %81 : vector<1x384x128xf32> to vector<384x128xf32>
    %cst_50 = arith.constant dense<0.000000e+00> : vector<128x128xf32>
    %83 = tpu.matmul %80, %82, %cst_50 {dimension_numbers = #tpu.dot_dimension_numbers<[1], [0], [0], [1], [0, 0, 1, 1], [], []>} : vector<128x384xf32>, vector<384x128xf32>, vector<128x128xf32> -> vector<128x128xf32>
    %84 = arith.addf %79, %83 : vector<128x128xf32>
    %c0_51 = arith.constant 0 : index
    %c0_52 = arith.constant 0 : index
    %85 = vector.load %arg11[%c0_51, %c0_52] : memref<128x128xf32, #tpu.memory_space<vmem>>, vector<128x128xf32>
    tpu.vector_store %arg11[%c0_51, %c0_52], %84 {strides = array<i32>} : memref<128x128xf32, #tpu.memory_space<vmem>>, vector<128x128xf32>,
    %86 = vector.extract_strided_slice %71 {offsets = [1, 0, 0], sizes = [8, 18, 128], strides = [1, 1, 1]} : vector<10x18x128xf32> to vector<8x18x128xf32>
    %87 = vector.extract_strided_slice %86 {offsets = [0, 0, 0], sizes = [8, 16, 128], strides = [1, 1, 1]} : vector<8x18x128xf32> to vector<8x16x128xf32>
    %88 = vector.extract_strided_slice %86 {offsets = [0, 1, 0], sizes = [8, 16, 128], strides = [1, 1, 1]} : vector<8x18x128xf32> to vector<8x16x128xf32>
    %89 = vector.extract_strided_slice %86 {offsets = [0, 2, 0], sizes = [8, 16, 128], strides = [1, 1, 1]} : vector<8x18x128xf32> to vector<8x16x128xf32>
    %90 = tpu.concatenate %87, %88, %89 in 2 : vector<8x16x128xf32>, vector<8x16x128xf32>, vector<8x16x128xf32> -> vector<8x16x384xf32>
    %c0_53 = arith.constant 0 : index
    %c0_54 = arith.constant 0 : index
    %91 = vector.load %arg11[%c0_53, %c0_54] : memref<128x128xf32, #tpu.memory_space<vmem>>, vector<128x128xf32>
    %92 = vector.shape_cast %90 : vector<8x16x384xf32> to vector<128x384xf32>
    %c1_55 = arith.constant 1 : index
    %c0_56 = arith.constant 0 : index
    %c0_57 = arith.constant 0 : index
    %93 = vector.load %arg5[%c1_55, %c0_56, %c0_57] : memref<3x384x128xf32, #tpu.memory_space<vmem>>, vector<1x384x128xf32>
    %94 = vector.shape_cast %93 : vector<1x384x128xf32> to vector<384x128xf32>
    %cst_58 = arith.constant dense<0.000000e+00> : vector<128x128xf32>
    %95 = tpu.matmul %92, %94, %cst_58 {dimension_numbers = #tpu.dot_dimension_numbers<[1], [0], [0], [1], [0, 0, 1, 1], [], []>} : vector<128x384xf32>, vector<384x128xf32>, vector<128x128xf32> -> vector<128x128xf32>
    %96 = arith.addf %91, %95 : vector<128x128xf32>
    %c0_59 = arith.constant 0 : index
    %c0_60 = arith.constant 0 : index
    %97 = vector.load %arg11[%c0_59, %c0_60] : memref<128x128xf32, #tpu.memory_space<vmem>>, vector<128x128xf32>
    tpu.vector_store %arg11[%c0_59, %c0_60], %96 {strides = array<i32>} : memref<128x128xf32, #tpu.memory_space<vmem>>, vector<128x128xf32>,
    %98 = vector.extract_strided_slice %71 {offsets = [2, 0, 0], sizes = [8, 18, 128], strides = [1, 1, 1]} : vector<10x18x128xf32> to vector<8x18x128xf32>
    %99 = vector.extract_strided_slice %98 {offsets = [0, 0, 0], sizes = [8, 16, 128], strides = [1, 1, 1]} : vector<8x18x128xf32> to vector<8x16x128xf32>
    %100 = vector.extract_strided_slice %98 {offsets = [0, 1, 0], sizes = [8, 16, 128], strides = [1, 1, 1]} : vector<8x18x128xf32> to vector<8x16x128xf32>
    %101 = vector.extract_strided_slice %98 {offsets = [0, 2, 0], sizes = [8, 16, 128], strides = [1, 1, 1]} : vector<8x18x128xf32> to vector<8x16x128xf32>
    %102 = tpu.concatenate %99, %100, %101 in 2 : vector<8x16x128xf32>, vector<8x16x128xf32>, vector<8x16x128xf32> -> vector<8x16x384xf32>
    %c0_61 = arith.constant 0 : index
    %c0_62 = arith.constant 0 : index
    %103 = vector.load %arg11[%c0_61, %c0_62] : memref<128x128xf32, #tpu.memory_space<vmem>>, vector<128x128xf32>
    %104 = vector.shape_cast %102 : vector<8x16x384xf32> to vector<128x384xf32>
    %c2_63 = arith.constant 2 : index
    %c0_64 = arith.constant 0 : index
    %c0_65 = arith.constant 0 : index
    %105 = vector.load %arg5[%c2_63, %c0_64, %c0_65] : memref<3x384x128xf32, #tpu.memory_space<vmem>>, vector<1x384x128xf32>
    %106 = vector.shape_cast %105 : vector<1x384x128xf32> to vector<384x128xf32>
    %cst_66 = arith.constant dense<0.000000e+00> : vector<128x128xf32>
    %107 = tpu.matmul %104, %106, %cst_66 {dimension_numbers = #tpu.dot_dimension_numbers<[1], [0], [0], [1], [0, 0, 1, 1], [], []>} : vector<128x384xf32>, vector<384x128xf32>, vector<128x128xf32> -> vector<128x128xf32>
    %108 = arith.addf %103, %107 : vector<128x128xf32>
    %c0_67 = arith.constant 0 : index
    %c0_68 = arith.constant 0 : index
    %109 = vector.load %arg11[%c0_67, %c0_68] : memref<128x128xf32, #tpu.memory_space<vmem>>, vector<128x128xf32>
    tpu.vector_store %arg11[%c0_67, %c0_68], %108 {strides = array<i32>} : memref<128x128xf32, #tpu.memory_space<vmem>>, vector<128x128xf32>,
    %c0_69 = arith.constant 0 : index
    %c0_70 = arith.constant 0 : index
    %110 = vector.load %arg11[%c0_69, %c0_70] : memref<128x128xf32, #tpu.memory_space<vmem>>, vector<128x128xf32>
    %c0_71 = arith.constant 0 : index
    %c0_72 = arith.constant 0 : index
    %111 = vector.load %arg6[%c0_71, %c0_72] : memref<1x128xf32, #tpu.memory_space<vmem>>, vector<1x128xf32>
    %112 = vector.shape_cast %111 : vector<1x128xf32> to vector<128xf32>
    %113 = vector.shape_cast %112 : vector<128xf32> to vector<1x128xf32>
    %114 = vector.broadcast %113 : vector<1x128xf32> to vector<128x128xf32>
    %115 = arith.addf %110, %114 : vector<128x128xf32>
    %cst_73 = arith.constant 0.000000e+00 : f32
    %116 = vector.broadcast %cst_73 : f32 to vector<128x128xf32>
    %117 = arith.maximumf %115, %116 : vector<128x128xf32>
    %118 = vector.shape_cast %117 : vector<128x128xf32> to vector<8x16x128xf32>
    %c0_74 = arith.constant 0 : index
    %c0_75 = arith.constant 0 : index
    %c0_76 = arith.constant 0 : index
    %c0_77 = arith.constant 0 : index
    %119 = vector.load %arg7[%c0_74, %c0_75, %c0_76, %c0_77] : memref<1x8x16x128xf32, #tpu.memory_space<vmem>>, vector<1x8x16x128xf32>
    %120 = vector.shape_cast %119 : vector<1x8x16x128xf32> to vector<8x16x128xf32>
    %121 = vector.shape_cast %118 : vector<8x16x128xf32> to vector<1x8x16x128xf32>
    tpu.vector_store %arg7[%c0_74, %c0_75, %c0_76, %c0_77], %121 {strides = array<i32>} : memref<1x8x16x128xf32, #tpu.memory_space<vmem>>, vector<1x8x16x128xf32>,
    return
  }
  func.func @transform_1(%arg0: i32, %arg1: i32) -> (i32, i32, i32) {
    %c0_i32 = arith.constant 0 : i32
    %c0_i32_0 = arith.constant 0 : i32
    %c0_i32_1 = arith.constant 0 : i32
    %c0_i32_2 = arith.constant 0 : i32
    return %c0_i32, %c0_i32_0, %c0_i32_1 : i32, i32, i32
  }
  func.func @transform_2(%arg0: i32, %arg1: i32) -> (i32, i32) {
    %c0_i32 = arith.constant 0 : i32
    %c0_i32_0 = arith.constant 0 : i32
    %c0_i32_1 = arith.constant 0 : i32
    return %c0_i32, %c0_i32_0 : i32, i32
  }
  func.func @transform_3(%arg0: i32, %arg1: i32) -> (i32, i32, i32) {
    %c0_i32 = arith.constant 0 : i32
    %c0_i32_0 = arith.constant 0 : i32
    %c0_i32_1 = arith.constant 0 : i32
    %c0_i32_2 = arith.constant 0 : i32
    return %c0_i32, %c0_i32_0, %c0_i32_1 : i32, i32, i32
  }
  func.func @transform_4(%arg0: i32, %arg1: i32) -> (i32, i32) {
    %c0_i32 = arith.constant 0 : i32
    %c0_i32_0 = arith.constant 0 : i32
    %c0_i32_1 = arith.constant 0 : i32
    return %c0_i32, %c0_i32_0 : i32, i32
  }
  func.func @transform_5(%arg0: i32, %arg1: i32) -> (i32, i32, i32, i32) {
    %c0_i32 = arith.constant 0 : i32
    %c0_i32_0 = arith.constant 0 : i32
    %c0_i32_1 = arith.constant 0 : i32
    return %arg0, %arg1, %c0_i32, %c0_i32_0 : i32, i32, i32, i32
  }
}

</mosaic_0001>

<llo_original>
// kernel: tpu_custom_call.1
$region0: #{tpu_custom_call.1}
  #allocation0 [shape = 'u32[]', space=smem, size = 0x4, offset = 0x4, fixed_abs, tag = 'smem constant byte address 0x4 - core index']
  #allocation1 [shape = 'u32[144,128]{1,0:T(1,128)}', space=vmem, size = 0x12000, scoped, tag = 'internal scratch']
  #allocation2 [shape = 'f32[12,20,128]{2,1,0:T(8,128)}', space=vmem, size = 0x24000, scoped, tag = 'scratch operand']
  #allocation3 [shape = 'f32[10,18,128]{2,1,0:T(8,128)}', space=vmem, size = 0x1e000, scoped, tag = 'scratch operand']
  #allocation4 [shape = 'f32[180,128]{1,0:T(8,128)}', space=vmem, size = 0x17000, scoped, tag = 'scratch operand']
  #allocation5 [shape = 'f32[128,128]{1,0:T(8,128)}', space=vmem, size = 0x10000, scoped, tag = 'scratch operand']
  #allocation6 [shape = 's32[1]{0}', space=sflag, size = 0x4, scoped, tag = 'scratch operand']
  #allocation11 [shape = 's32[]', space=sflag, size = 0x4, offset = 0, fixed_abs, tag = 'sflag constant byte address 0x0 - dummy sync flag']
  %s0 = inlined_call_operand.vmem [shape: f32[2,20,20,128], index: 0, kind: input, shape index: {}]
  %s1 = inlined_call_operand.vmem [shape: f32[3,384,128], index: 1, kind: input, shape index: {}]
  %s2 = inlined_call_operand.vmem [shape: f32[1,128], index: 2, kind: input, shape index: {}]
  %s3 = inlined_call_operand.hbm [shape: f32[3,384,128], index: 3, kind: input, shape index: {}]
  %s4 = inlined_call_operand.vmem [shape: f32[1,128], index: 4, kind: input, shape index: {}]
  %s5 = inlined_call_operand.hbm [shape: f32[2,16,16,128], index: 5, kind: output, shape index: {}]
  %s6 = sld [smem:[#allocation0]]
  $region90: #{tpu_custom_call.1} parent=0
    _
  %s8 = ssub.s32 1, %s6
  %s9 = scalar_select 0, %s8, %s6
  $region1: #{tpu_custom_call.1} parent=0
    #allocation7 [shape = 'u8[589824]{0}', space=vmem, size = 0x90000, scoped, tag = 'input window, operand 3, single buffered']
    #allocation8 [shape = 's32[2]{0}', space=sflag, size = 0x8, scoped, tag = 'scoped memory for tpu_custom_call.1']
    #allocation9 [shape = 's32[2]{0}', space=sflag, size = 0x8, scoped, tag = 'scoped memory for tpu_custom_call.1']
    #allocation10 [shape = 'u8[131072]{0}', space=vmem, size = 0x20000, scoped, tag = 'output window, operand 0']
    %10 = vsyncpa [#allocation8], 0
    %11 = vsyncpa [#allocation9], 0
    %s12 = scalar_lea.sflag [#allocation9], 1
    %13 = vsyncpa %s12, 0
    loop: start=0, step=1, limit=6
    $region2: #{tpu_custom_call.1} parent=1 // loop_pre_header
      _
    $region3: #{tpu_custom_call.1} parent=1 // loop_header
      %s15 = sphi 0, %s19
      %p16 = scmp.ge.s32.totalorder %s15, 6
      %s22 = sphi 0, %s34
      %s23 = sphi 0, %s30
      %s24 = sphi 0, %s22
      %s25 = sphi 0, %s23
      %s26 = sphi 0, %s24
      %s27 = sphi 0, %s25
      %s35 = sphi 0, %s35
      %s37 = sphi 0, %s35
      %s38 = sphi 0, %s37
      %s52 = sphi 0, %s38
      %s56 = sphi 0, %s56
      %s58 = sphi 0, %s56
      %s59 = sphi 0, %s58
      %s73 = sphi 0, %s59
      %s77 = sphi 0, %s77
      %s79 = sphi 0, %s77
      %s80 = sphi 0, %s79
      %s94 = sphi 0, %s80
      %s98 = sphi 0, %s98
      %s100 = sphi 0, %s98
      %s101 = sphi 0, %s100
      %s115 = sphi 0, %s101
      %s123 = sphi 0, %s125
      %s126 = sphi 0, %s123
      %s127 = sphi 0, %s126
      %s143 = sphi 0, %s127
    $region4: #{tpu_custom_call.1} parent=1 // loop_header_branch
      %18 = sbr.rel (%p16) target = $region8
    $region5: #{tpu_custom_call.1} parent=1 // loop_body
      %s20 = ssub.s32 %s15, 1
      %s21 = ssub.s32 %s15, 2
      %s28 = sadd.s32 1, %s23
      %p29 = scmp.ge.s32.totalorder %s28, 2
      %s30 = scalar_select %p29, 0, %s28
      %s31 = sadd.s32 1, %s22
      %s32 = scalar_select %p29, %s31, %s22
      %p33 = scmp.ge.s32.totalorder %s32, 2
      %s34 = scalar_select %p33, 0, %s32
      %s36 = sadd.s32 %s35, 1
      %p39 = scmp.eq.s32.totalorder %s15, 3
      %p40 = scmp.ne.s32.totalorder %s35, %s37
      %p41 = scmp.eq.s32.totalorder %s15, 0
      %p42 = por %p40, %p41
      %p43 = scmp.ne.s32.totalorder %s35, %s37
      %p44 = scmp.eq.s32.totalorder %s20, 3
      %p45 = por %p43, %p44
      %p46 = scmp.ne.s32.totalorder %s37, %s38
      %p47 = scmp.eq.s32.totalorder %s20, 0
      %p48 = por %p46, %p47
      %p49 = scmp.ne.s32.totalorder %s37, %s38
      %p50 = scmp.eq.s32.totalorder %s21, 3
      %p51 = por %p49, %p50
      %p53 = scmp.ne.s32.totalorder %s38, %s52
      %p54 = scmp.eq.s32.totalorder %s21, 0
      %p55 = por %p53, %p54
      %s57 = sadd.s32 %s56, 1
      %p60 = scmp.eq.s32.totalorder %s15, 3
      %p61 = scmp.ne.s32.totalorder %s56, %s58
      %p62 = scmp.eq.s32.totalorder %s15, 0
      %p63 = por %p61, %p62
      %p64 = scmp.ne.s32.totalorder %s56, %s58
      %p65 = scmp.eq.s32.totalorder %s20, 3
      %p66 = por %p64, %p65
      %p67 = scmp.ne.s32.totalorder %s58, %s59
      %p68 = scmp.eq.s32.totalorder %s20, 0
      %p69 = por %p67, %p68
      %p70 = scmp.ne.s32.totalorder %s58, %s59
      %p71 = scmp.eq.s32.totalorder %s21, 3
      %p72 = por %p70, %p71
      %p74 = scmp.ne.s32.totalorder %s59, %s73
      %p75 = scmp.eq.s32.totalorder %s21, 0
      %p76 = por %p74, %p75
      %s78 = sadd.s32 %s77, 1
      %p81 = scmp.eq.s32.totalorder %s15, 3
      %p82 = scmp.ne.s32.totalorder %s77, %s79
      %p83 = scmp.eq.s32.totalorder %s15, 0
      %p84 = por %p82, %p83
      %p85 = scmp.ne.s32.totalorder %s77, %s79
      %p86 = scmp.eq.s32.totalorder %s20, 3
      %p87 = por %p85, %p86
      %p88 = scmp.ne.s32.totalorder %s79, %s80
      %p89 = scmp.eq.s32.totalorder %s20, 0
      %p90 = por %p88, %p89
      %p91 = scmp.ne.s32.totalorder %s79, %s80
      %p92 = scmp.eq.s32.totalorder %s21, 3
      %p93 = por %p91, %p92
      %p95 = scmp.ne.s32.totalorder %s80, %s94
      %p96 = scmp.eq.s32.totalorder %s21, 0
      %p97 = por %p95, %p96
      %s99 = sadd.s32 %s98, 1
      %p102 = scmp.eq.s32.totalorder %s15, 3
      %p103 = scmp.ne.s32.totalorder %s98, %s100
      %p104 = scmp.eq.s32.totalorder %s15, 0
      %p105 = por %p103, %p104
      %p106 = scmp.ne.s32.totalorder %s98, %s100
      %p107 = scmp.eq.s32.totalorder %s20, 3
      %p108 = por %p106, %p107
      %p109 = scmp.ne.s32.totalorder %s100, %s101
      %p110 = scmp.eq.s32.totalorder %s20, 0
      %p111 = por %p109, %p110
      %p112 = scmp.ne.s32.totalorder %s100, %s101
      %p113 = scmp.eq.s32.totalorder %s21, 3
      %p114 = por %p112, %p113
      %p116 = scmp.ne.s32.totalorder %s101, %s115
      %p117 = scmp.eq.s32.totalorder %s21, 0
      %p118 = por %p116, %p117
      %s119 = ssub.s32 %s22, %s34
      %s120 = ssub.s32 %s23, %s30
      %s121 = sor.u32 %s119, %s120
      %p122 = scmp.eq.s32.totalorder %s121, 0
      %s124 = sadd.s32 %s123, 1
      %s125 = scalar_select %p122, %s123, %s124
      %p128 = pneg %p122
      %p129 = scmp.eq.s32.totalorder %s15, 3
      %p130 = por %p128, %p129
      %p131 = scmp.ne.s32.totalorder %s123, %s126
      %p132 = scmp.eq.s32.totalorder %s15, 0
      %p133 = por %p131, %p132
      %p134 = scmp.ne.s32.totalorder %s123, %s126
      %p135 = scmp.eq.s32.totalorder %s20, 3
      %p136 = por %p134, %p135
      %p137 = scmp.ne.s32.totalorder %s126, %s127
      %p138 = scmp.eq.s32.totalorder %s20, 0
      %p139 = por %p137, %p138
      %p140 = scmp.ne.s32.totalorder %s126, %s127
      %p141 = scmp.eq.s32.totalorder %s21, 3
      %p142 = por %p140, %p141
      %p144 = scmp.ne.s32.totalorder %s127, %s143
      %p145 = scmp.eq.s32.totalorder %s21, 0
      %p146 = por %p144, %p145
      %p147 = scmp.le.s32.totalorder 1, %s15
      %p148 = scmp.lt.s32.totalorder %s15, 5
      %p149 = pnand %p147, %p148
      %p150 = pneg %p149
      // Predicated region
      $region9: #{tpu_custom_call.1} parent=5 // pred_check
        _
      $region10: #{tpu_custom_call.1} parent=5 // pred_check_branch
        %152 = sbr.rel (%p149) target = $region12
      $region11: #{tpu_custom_call.1} parent=5 // pred_region
        %s153 = ssub.s32 %s15, 1
        // Predicated region
        $region13: #{tpu_custom_call.1} parent=11 // pred_check
          %p154 = pneg %p48
        $region14: #{tpu_custom_call.1} parent=11 // pred_check_branch
          %156 = sbr.rel (%p154) target = $region16
        $region15: #{tpu_custom_call.1} parent=11 // pred_region
          _
        $region16: #{tpu_custom_call.1} parent=11 // pred_fallthru
          _
        // Predicated region
        $region17: #{tpu_custom_call.1} parent=11 // pred_check
          %p157 = pneg %p69
        $region18: #{tpu_custom_call.1} parent=11 // pred_check_branch
          %159 = sbr.rel (%p157) target = $region20
        $region19: #{tpu_custom_call.1} parent=11 // pred_region
          _
        $region20: #{tpu_custom_call.1} parent=11 // pred_fallthru
          _
        // Predicated region
        $region21: #{tpu_custom_call.1} parent=11 // pred_check
          %p160 = pneg %p90
        $region22: #{tpu_custom_call.1} parent=11 // pred_check_branch
          %162 = sbr.rel (%p160) target = $region24
        $region23: #{tpu_custom_call.1} parent=11 // pred_region
          %s164 = ssub.s32 18432, 18432
          %165 = vsyncadd [#allocation8], %s164
          %s166 = sshll.u32 [#allocation7], 4
          %s167 = int_to_ptr.vmem [resolvable:$true] %s166
          %172 = dma.hbm_to_vmem [thread:$0]  %s3, 18432, %s167, [#allocation8], 128, 128, 8
        $region24: #{tpu_custom_call.1} parent=11 // pred_fallthru
          _
        // Predicated region
        $region25: #{tpu_custom_call.1} parent=11 // pred_check
          %p173 = pneg %p111
        $region26: #{tpu_custom_call.1} parent=11 // pred_check_branch
          %175 = sbr.rel (%p173) target = $region28
        $region27: #{tpu_custom_call.1} parent=11 // pred_region
          _
        $region28: #{tpu_custom_call.1} parent=11 // pred_fallthru
          _
      $region12: #{tpu_custom_call.1} parent=5 // pred_fallthru
        _
      %p176 = scmp.lt.s32.totalorder %s15, 4
      // Predicated region
      $region29: #{tpu_custom_call.1} parent=5 // pred_check
        %p177 = pneg %p176
      $region30: #{tpu_custom_call.1} parent=5 // pred_check_branch
        %179 = sbr.rel (%p177) target = $region32
      $region31: #{tpu_custom_call.1} parent=5 // pred_region
        _
      $region32: #{tpu_custom_call.1} parent=5 // pred_fallthru
        _
      %p180 = scmp.le.s32.totalorder 1, %s15
      %p181 = scmp.lt.s32.totalorder %s15, 5
      %p182 = pnand %p180, %p181
      %p183 = pneg %p182
      // Predicated region
      $region33: #{tpu_custom_call.1} parent=5 // pred_check
        _
      $region34: #{tpu_custom_call.1} parent=5 // pred_check_branch
        %185 = sbr.rel (%p182) target = $region36
      $region35: #{tpu_custom_call.1} parent=5 // pred_region
        %s186 = ssub.s32 %s15, 1
        // Predicated region
        $region37: #{tpu_custom_call.1} parent=35 // pred_check
          %p187 = pneg %p90
        $region38: #{tpu_custom_call.1} parent=35 // pred_check_branch
          %189 = sbr.rel (%p187) target = $region40
        $region39: #{tpu_custom_call.1} parent=35 // pred_region
          %190 = dma.done [#allocation8], 18432
        $region40: #{tpu_custom_call.1} parent=35 // pred_fallthru
          _
        %p191 = pneg %p48
        %p192 = pneg %p45
        %p193 = pneg %p69
        %p194 = pneg %p66
        %p195 = pneg %p90
        %p196 = pneg %p87
        %p197 = pneg %p111
        %p198 = pneg %p108
        %p199 = pneg %p139
        %p200 = pneg %p136
        %s201 = sand.u32 %s126, 1
        %s202 = scalar_lea.sflag [#allocation9], %s201
        %s203 = sand.u32 %s126, 1
        %s204 = smul.addr %s203, 128
        %s205 = scalar_lea.vmem [#allocation10], %s204
        %s206 = smul.u32 8, %s25
        %s207 = smul.u32 %s25, 8
        %s208 = smul.u32 %s207, 24
        %s209 = smul.u32 %s24, 480
        %s210 = sadd.s32 %s208, %s209
        %s211 = scalar_lea.vmem %s0, %s210
        %p213 = scmp.lt.u32.totalorder 20, 8
        %p214 = pneg %p213
        // Predicated region
        $region41: #{tpu_custom_call.1} parent=35 // pred_check
          _
        $region42: #{tpu_custom_call.1} parent=35 // pred_check_branch
          %216 = sbr.rel (%p213) target = $region44
        $region43: #{tpu_custom_call.1} parent=35 // pred_region
          %s253 = sand.u32 20, 7
          %p254 = scmp.eq.s32.totalorder %s253, 0
          %p255 = pneg %p254
          // Predicated region
          $region56: #{tpu_custom_call.1} parent=43 // pred_check
            _
          $region57: #{tpu_custom_call.1} parent=43 // pred_check_branch
            %257 = sbr.rel (%p254) target = $region59
          $region58: #{tpu_custom_call.1} parent=43 // pred_region
            %s258 = sand.u32 20, 7
            %s259 = ssub.s32 20, %s258
            %s260 = scalar_lea.vmem %s211, %s259
            %s261 = ssub.s32 20, %s258
            %s262 = scalar_lea.vmem [#allocation2], %s261
            loop: start=0, step=1, limit=1
            $region60: #{tpu_custom_call.1} parent=58 // loop_pre_header
              _
            $region61: #{tpu_custom_call.1} parent=58 // loop_header
              %s264 = sphi 0, %s268
              %p265 = scmp.ge.s32.totalorder %s264, 1
              %s269 = sphi %s211, %s211
              %s270 = sphi [#allocation2], [#allocation2]
            $region62: #{tpu_custom_call.1} parent=58 // loop_header_branch
              %267 = sbr.rel (%p265) target = $region66
            $region63: #{tpu_custom_call.1} parent=58 // loop_body
              %v271 = vld [vmem:[%s269] sm:$0xff]
              %272 = vst [vmem:[%s270] sm:$0xff] %v271
              %v273 = vld [vmem:[%s269 + $0x8] sm:$0xff]
              %274 = vst [vmem:[%s270 + $0x8] sm:$0xff] %v273
              %v275 = vld [vmem:[%s269 + $0x18] sm:$0xff]
              %276 = vst [vmem:[%s270 + $0x18] sm:$0xff] %v275
              %v277 = vld [vmem:[%s269 + $0x20] sm:$0xff]
              %278 = vst [vmem:[%s270 + $0x20] sm:$0xff] %v277
              %v279 = vld [vmem:[%s269 + $0x30] sm:$0xff]
              %280 = vst [vmem:[%s270 + $0x30] sm:$0xff] %v279
              %v281 = vld [vmem:[%s269 + $0x38] sm:$0xff]
              %282 = vst [vmem:[%s270 + $0x38] sm:$0xff] %v281
              %v283 = vld [vmem:[%s269 + $0x48] sm:$0xff]
              %284 = vst [vmem:[%s270 + $0x48] sm:$0xff] %v283
              %v285 = vld [vmem:[%s269 + $0x50] sm:$0xff]
              %286 = vst [vmem:[%s270 + $0x50] sm:$0xff] %v285
              %v287 = vld [vmem:[%s269 + $0x60] sm:$0xff]
              %288 = vst [vmem:[%s270 + $0x60] sm:$0xff] %v287
              %v289 = vld [vmem:[%s269 + $0x68] sm:$0xff]
              %290 = vst [vmem:[%s270 + $0x68] sm:$0xff] %v289
              %v291 = vld [vmem:[%s269 + $0x78] sm:$0xff]
              %292 = vst [vmem:[%s270 + $0x78] sm:$0xff] %v291
              %v293 = vld [vmem:[%s269 + $0x80] sm:$0xff]
              %294 = vst [vmem:[%s270 + $0x80] sm:$0xff] %v293
              %v295 = vld [vmem:[%s269 + $0x90] sm:$0xff]
              %296 = vst [vmem:[%s270 + $0x90] sm:$0xff] %v295
              %v297 = vld [vmem:[%s269 + $0x98] sm:$0xff]
              %298 = vst [vmem:[%s270 + $0x98] sm:$0xff] %v297
              %v299 = vld [vmem:[%s269 + $0xa8] sm:$0xff]
              %300 = vst [vmem:[%s270 + $0xa8] sm:$0xff] %v299
              %v301 = vld [vmem:[%s269 + $0xb0] sm:$0xff]
              %302 = vst [vmem:[%s270 + $0xb0] sm:$0xff] %v301
              %v303 = vld [vmem:[%s269 + $0xc0] sm:$0xff]
              %304 = vst [vmem:[%s270 + $0xc0] sm:$0xff] %v303
              %v305 = vld [vmem:[%s269 + $0xc8] sm:$0xff]
              %306 = vst [vmem:[%s270 + $0xc8] sm:$0xff] %v305
              %v307 = vld [vmem:[%s269 + $0xd8] sm:$0xff]
              %308 = vst [vmem:[%s270 + $0xd8] sm:$0xff] %v307
              %v309 = vld [vmem:[%s269 + $0xe0] sm:$0xff]
              %310 = vst [vmem:[%s270 + $0xe0] sm:$0xff] %v309
              %v311 = vld [vmem:[%s269 + $0xf0] sm:$0xff]
              %312 = vst [vmem:[%s270 + $0xf0] sm:$0xff] %v311
              %v313 = vld [vmem:[%s269 + $0xf8] sm:$0xff]
              %314 = vst [vmem:[%s270 + $0xf8] sm:$0xff] %v313
              %v315 = vld [vmem:[%s269 + $0x108] sm:$0xff]
              %316 = vst [vmem:[%s270 + $0x108] sm:$0xff] %v315
              %v317 = vld [vmem:[%s269 + $0x110] sm:$0xff]
              %318 = vst [vmem:[%s270 + $0x110] sm:$0xff] %v317
            $region64: #{tpu_custom_call.1} parent=58 // loop_footer
              %s268 = sadd.s32 1, %s264
            $region65: #{tpu_custom_call.1} parent=58 // loop_footer_branch
              %263 = sbr.rel target = $region61
            $region66: #{tpu_custom_call.1} parent=58 // loop_exit
              _
            %s319 = sshllo.u32 0, %s258
            loop: start=0, step=1, limit=1
            $region67: #{tpu_custom_call.1} parent=58 // loop_pre_header
              _
            $region68: #{tpu_custom_call.1} parent=58 // loop_header
              %s321 = sphi 0, %s325
              %p322 = scmp.ge.s32.totalorder %s321, 1
              %s326 = sphi %s260, %s260
              %s327 = sphi %s262, %s262
            $region69: #{tpu_custom_call.1} parent=58 // loop_header_branch
              %324 = sbr.rel (%p322) target = $region73
            $region70: #{tpu_custom_call.1} parent=58 // loop_body
              %v328 = vld [vmem:[%s326] sm:%s319]
              %329 = vst [vmem:[%s327] sm:%s319] %v328
              %v330 = vld [vmem:[%s326 + $0x18] sm:%s319]
              %331 = vst [vmem:[%s327 + $0x18] sm:%s319] %v330
              %v332 = vld [vmem:[%s326 + $0x30] sm:%s319]
              %333 = vst [vmem:[%s327 + $0x30] sm:%s319] %v332
              %v334 = vld [vmem:[%s326 + $0x48] sm:%s319]
              %335 = vst [vmem:[%s327 + $0x48] sm:%s319] %v334
              %v336 = vld [vmem:[%s326 + $0x60] sm:%s319]
              %337 = vst [vmem:[%s327 + $0x60] sm:%s319] %v336
              %v338 = vld [vmem:[%s326 + $0x78] sm:%s319]
              %339 = vst [vmem:[%s327 + $0x78] sm:%s319] %v338
              %v340 = vld [vmem:[%s326 + $0x90] sm:%s319]
              %341 = vst [vmem:[%s327 + $0x90] sm:%s319] %v340
              %v342 = vld [vmem:[%s326 + $0xa8] sm:%s319]
              %343 = vst [vmem:[%s327 + $0xa8] sm:%s319] %v342
              %v344 = vld [vmem:[%s326 + $0xc0] sm:%s319]
              %345 = vst [vmem:[%s327 + $0xc0] sm:%s319] %v344
              %v346 = vld [vmem:[%s326 + $0xd8] sm:%s319]
              %347 = vst [vmem:[%s327 + $0xd8] sm:%s319] %v346
              %v348 = vld [vmem:[%s326 + $0xf0] sm:%s319]
              %349 = vst [vmem:[%s327 + $0xf0] sm:%s319] %v348
              %v350 = vld [vmem:[%s326 + $0x108] sm:%s319]
              %351 = vst [vmem:[%s327 + $0x108] sm:%s319] %v350
            $region71: #{tpu_custom_call.1} parent=58 // loop_footer
              %s325 = sadd.s32 1, %s321
            $region72: #{tpu_custom_call.1} parent=58 // loop_footer_branch
              %320 = sbr.rel target = $region68
            $region73: #{tpu_custom_call.1} parent=58 // loop_exit
              _
          $region59: #{tpu_custom_call.1} parent=43 // pred_fallthru
            _
        $region44: #{tpu_custom_call.1} parent=35 // pred_fallthru
          _
        // Predicated region
        $region45: #{tpu_custom_call.1} parent=35 // pred_check
          %p217 = pneg %p213
        $region46: #{tpu_custom_call.1} parent=35 // pred_check_branch
          %219 = sbr.rel (%p217) target = $region48
        $region47: #{tpu_custom_call.1} parent=35 // pred_region
          %s220 = sshllo.u32 0, 20
          loop: start=0, step=1, limit=1
          $region49: #{tpu_custom_call.1} parent=47 // loop_pre_header
            _
          $region50: #{tpu_custom_call.1} parent=47 // loop_header
            %s222 = sphi 0, %s226
            %p223 = scmp.ge.s32.totalorder %s222, 1
            %s227 = sphi %s211, %s211
            %s228 = sphi [#allocation2], [#allocation2]
          $region51: #{tpu_custom_call.1} parent=47 // loop_header_branch
            %225 = sbr.rel (%p223) target = $region55
          $region52: #{tpu_custom_call.1} parent=47 // loop_body
            %v229 = vld [vmem:[%s227] sm:%s220]
            %230 = vst [vmem:[%s228] sm:%s220] %v229
            %v231 = vld [vmem:[%s227 + $0x18] sm:%s220]
            %232 = vst [vmem:[%s228 + $0x18] sm:%s220] %v231
            %v233 = vld [vmem:[%s227 + $0x30] sm:%s220]
            %234 = vst [vmem:[%s228 + $0x30] sm:%s220] %v233
            %v235 = vld [vmem:[%s227 + $0x48] sm:%s220]
            %236 = vst [vmem:[%s228 + $0x48] sm:%s220] %v235
            %v237 = vld [vmem:[%s227 + $0x60] sm:%s220]
            %238 = vst [vmem:[%s228 + $0x60] sm:%s220] %v237
            %v239 = vld [vmem:[%s227 + $0x78] sm:%s220]
            %240 = vst [vmem:[%s228 + $0x78] sm:%s220] %v239
            %v241 = vld [vmem:[%s227 + $0x90] sm:%s220]
            %242 = vst [vmem:[%s228 + $0x90] sm:%s220] %v241
            %v243 = vld [vmem:[%s227 + $0xa8] sm:%s220]
            %244 = vst [vmem:[%s228 + $0xa8] sm:%s220] %v243
            %v245 = vld [vmem:[%s227 + $0xc0] sm:%s220]
            %246 = vst [vmem:[%s228 + $0xc0] sm:%s220] %v245
            %v247 = vld [vmem:[%s227 + $0xd8] sm:%s220]
            %248 = vst [vmem:[%s228 + $0xd8] sm:%s220] %v247
            %v249 = vld [vmem:[%s227 + $0xf0] sm:%s220]
            %250 = vst [vmem:[%s228 + $0xf0] sm:%s220] %v249
            %v251 = vld [vmem:[%s227 + $0x108] sm:%s220]
            %252 = vst [vmem:[%s228 + $0x108] sm:%s220] %v251
          $region53: #{tpu_custom_call.1} parent=47 // loop_footer
            %s226 = sadd.s32 1, %s222
          $region54: #{tpu_custom_call.1} parent=47 // loop_footer_branch
            %221 = sbr.rel target = $region50
          $region55: #{tpu_custom_call.1} parent=47 // loop_exit
            _
        $region48: #{tpu_custom_call.1} parent=35 // pred_fallthru
          _
        // Predicated region
        $region74: #{tpu_custom_call.1} parent=35 // pred_check
          _
        $region75: #{tpu_custom_call.1} parent=35 // pred_check_branch
          %354 = sbr.rel (0) target = $region77
        $region76: #{tpu_custom_call.1} parent=35 // pred_region
          %355 = vsyncadd [#allocation6], 3840
        $region77: #{tpu_custom_call.1} parent=35 // pred_fallthru
          _
        %s356 = smul.u32 12, 20
        %s357 = smul.u32 %s356, 1
        %s358 = sshll.u32 %s357, 4
        %359 = dma.done [#allocation6], %s358
        %v360 = vld [vmem:[#allocation2] sm:$0xff]
        %v361 = vld [vmem:[#allocation2 + $0x8] sm:$0xff]
        %v362 = vld [vmem:[#allocation2 + $0x10] sm:$0xf]
        %v363 = vld [vmem:[#allocation2 + $0x18] sm:$0xff]
        %v364 = vld [vmem:[#allocation2 + $0x20] sm:$0xff]
        %v365 = vld [vmem:[#allocation2 + $0x28] sm:$0xf]
        %v366 = vld [vmem:[#allocation2 + $0x30] sm:$0xff]
        %v367 = vld [vmem:[#allocation2 + $0x38] sm:$0xff]
        %v368 = vld [vmem:[#allocation2 + $0x40] sm:$0xf]
        %v369 = vld [vmem:[#allocation2 + $0x48] sm:$0xff]
        %v370 = vld [vmem:[#allocation2 + $0x50] sm:$0xff]
        %v371 = vld [vmem:[#allocation2 + $0x58] sm:$0xf]
        %v372 = vld [vmem:[#allocation2 + $0x60] sm:$0xff]
        %v373 = vld [vmem:[#allocation2 + $0x68] sm:$0xff]
        %v374 = vld [vmem:[#allocation2 + $0x70] sm:$0xf]
        %v375 = vld [vmem:[#allocation2 + $0x78] sm:$0xff]
        %v376 = vld [vmem:[#allocation2 + $0x80] sm:$0xff]
        %v377 = vld [vmem:[#allocation2 + $0x88] sm:$0xf]
        %v378 = vld [vmem:[#allocation2 + $0x90] sm:$0xff]
        %v379 = vld [vmem:[#allocation2 + $0x98] sm:$0xff]
        %v380 = vld [vmem:[#allocation2 + $0xa0] sm:$0xf]
        %v381 = vld [vmem:[#allocation2 + $0xa8] sm:$0xff]
        %v382 = vld [vmem:[#allocation2 + $0xb0] sm:$0xff]
        %v383 = vld [vmem:[#allocation2 + $0xb8] sm:$0xf]
        %v384 = vld [vmem:[#allocation2 + $0xc0] sm:$0xff]
        %v385 = vld [vmem:[#allocation2 + $0xc8] sm:$0xff]
        %v386 = vld [vmem:[#allocation2 + $0xd0] sm:$0xf]
        %v387 = vld [vmem:[#allocation2 + $0xd8] sm:$0xff]
        %v388 = vld [vmem:[#allocation2 + $0xe0] sm:$0xff]
        %v389 = vld [vmem:[#allocation2 + $0xe8] sm:$0xf]
        %v390 = vld [vmem:[#allocation2 + $0xf0] sm:$0xff]
        %v391 = vld [vmem:[#allocation2 + $0xf8] sm:$0xff]
        %v392 = vld [vmem:[#allocation2 + $0x100] sm:$0xf]
        %v393 = vld [vmem:[#allocation2 + $0x108] sm:$0xff]
        %v394 = vld [vmem:[#allocation2 + $0x110] sm:$0xff]
        %v395 = vld [vmem:[#allocation2 + $0x118] sm:$0xf]
        %396 = vst [vmem:[#allocation4] sm:$0xff] 0.0
        %397 = vst [vmem:[#allocation4 + $0x8] sm:$0xff] 0.0
        %398 = vst [vmem:[#allocation4 + $0x10] sm:$0xff] 0.0
        %399 = vst [vmem:[#allocation4 + $0x18] sm:$0xff] 0.0
        %400 = vst [vmem:[#allocation4 + $0x20] sm:$0xff] 0.0
        %401 = vst [vmem:[#allocation4 + $0x28] sm:$0xff] 0.0
        %402 = vst [vmem:[#allocation4 + $0x30] sm:$0xff] 0.0
        %403 = vst [vmem:[#allocation4 + $0x38] sm:$0xff] 0.0
        %404 = vst [vmem:[#allocation4 + $0x40] sm:$0xff] 0.0
        %405 = vst [vmem:[#allocation4 + $0x48] sm:$0xff] 0.0
        %406 = vst [vmem:[#allocation4 + $0x50] sm:$0xff] 0.0
        %407 = vst [vmem:[#allocation4 + $0x58] sm:$0xff] 0.0
        %408 = vst [vmem:[#allocation4 + $0x60] sm:$0xff] 0.0
        %409 = vst [vmem:[#allocation4 + $0x68] sm:$0xff] 0.0
        %410 = vst [vmem:[#allocation4 + $0x70] sm:$0xff] 0.0
        %411 = vst [vmem:[#allocation4 + $0x78] sm:$0xff] 0.0
        %412 = vst [vmem:[#allocation4 + $0x80] sm:$0xff] 0.0
        %413 = vst [vmem:[#allocation4 + $0x88] sm:$0xff] 0.0
        %414 = vst [vmem:[#allocation4 + $0x90] sm:$0xff] 0.0
        %415 = vst [vmem:[#allocation4 + $0x98] sm:$0xff] 0.0
        %416 = vst [vmem:[#allocation4 + $0xa0] sm:$0xff] 0.0
        %417 = vst [vmem:[#allocation4 + $0xa8] sm:$0xff] 0.0
        %418 = vst [vmem:[#allocation4 + $0xb0] sm:$0xf] 0.0
        %vm449 = vcmask 1046528
        %v450 = vrot.slane %v360, 1
        %v451 = vrot.slane %v361, 1
        %v452 = vsel %vm449, %v450, %v451
        %v453 = vrot.slane %v362, 1
        %v454 = vsel %vm449, %v451, %v453
        %v455 = vrot.slane %v363, 1
        %v456 = vrot.slane %v364, 1
        %v457 = vsel %vm449, %v455, %v456
        %v458 = vrot.slane %v365, 1
        %v459 = vsel %vm449, %v456, %v458
        %v460 = vrot.slane %v366, 1
        %v461 = vrot.slane %v367, 1
        %v462 = vsel %vm449, %v460, %v461
        %v463 = vrot.slane %v368, 1
        %v464 = vsel %vm449, %v461, %v463
        %v465 = vrot.slane %v369, 1
        %v466 = vrot.slane %v370, 1
        %v467 = vsel %vm449, %v465, %v466
        %v468 = vrot.slane %v371, 1
        %v469 = vsel %vm449, %v466, %v468
        %v470 = vrot.slane %v372, 1
        %v471 = vrot.slane %v373, 1
        %v472 = vsel %vm449, %v470, %v471
        %v473 = vrot.slane %v374, 1
        %v474 = vsel %vm449, %v471, %v473
        %v475 = vrot.slane %v375, 1
        %v476 = vrot.slane %v376, 1
        %v477 = vsel %vm449, %v475, %v476
        %v478 = vrot.slane %v377, 1
        %v479 = vsel %vm449, %v476, %v478
        %v480 = vrot.slane %v378, 1
        %v481 = vrot.slane %v379, 1
        %v482 = vsel %vm449, %v480, %v481
        %v483 = vrot.slane %v380, 1
        %v484 = vsel %vm449, %v481, %v483
        %v485 = vrot.slane %v381, 1
        %v486 = vrot.slane %v382, 1
        %v487 = vsel %vm449, %v485, %v486
        %v488 = vrot.slane %v383, 1
        %v489 = vsel %vm449, %v486, %v488
        %v490 = vrot.slane %v384, 1
        %v491 = vrot.slane %v385, 1
        %v492 = vsel %vm449, %v490, %v491
        %v493 = vrot.slane %v386, 1
        %v494 = vsel %vm449, %v491, %v493
        %v495 = vrot.slane %v387, 1
        %v496 = vrot.slane %v388, 1
        %v497 = vsel %vm449, %v495, %v496
        %v498 = vrot.slane %v389, 1
        %v499 = vsel %vm449, %v496, %v498
        %vm500 = vcmask 1045504
        %v501 = vrot.slane %v360, 2
        %v502 = vrot.slane %v361, 2
        %v503 = vsel %vm500, %v501, %v502
        %v504 = vrot.slane %v362, 2
        %v505 = vsel %vm500, %v502, %v504
        %v506 = vrot.slane %v363, 2
        %v507 = vrot.slane %v364, 2
        %v508 = vsel %vm500, %v506, %v507
        %v509 = vrot.slane %v365, 2
        %v510 = vsel %vm500, %v507, %v509
        %v511 = vrot.slane %v366, 2
        %v512 = vrot.slane %v367, 2
        %v513 = vsel %vm500, %v511, %v512
        %v514 = vrot.slane %v368, 2
        %v515 = vsel %vm500, %v512, %v514
        %v516 = vrot.slane %v369, 2
        %v517 = vrot.slane %v370, 2
        %v518 = vsel %vm500, %v516, %v517
        %v519 = vrot.slane %v371, 2
        %v520 = vsel %vm500, %v517, %v519
        %v521 = vrot.slane %v372, 2
        %v522 = vrot.slane %v373, 2
        %v523 = vsel %vm500, %v521, %v522
        %v524 = vrot.slane %v374, 2
        %v525 = vsel %vm500, %v522, %v524
        %v526 = vrot.slane %v375, 2
        %v527 = vrot.slane %v376, 2
        %v528 = vsel %vm500, %v526, %v527
        %v529 = vrot.slane %v377, 2
        %v530 = vsel %vm500, %v527, %v529
        %v531 = vrot.slane %v378, 2
        %v532 = vrot.slane %v379, 2
        %v533 = vsel %vm500, %v531, %v532
        %v534 = vrot.slane %v380, 2
        %v535 = vsel %vm500, %v532, %v534
        %v536 = vrot.slane %v381, 2
        %v537 = vrot.slane %v382, 2
        %v538 = vsel %vm500, %v536, %v537
        %v539 = vrot.slane %v383, 2
        %v540 = vsel %vm500, %v537, %v539
        %v541 = vrot.slane %v384, 2
        %v542 = vrot.slane %v385, 2
        %v543 = vsel %vm500, %v541, %v542
        %v544 = vrot.slane %v386, 2
        %v545 = vsel %vm500, %v542, %v544
        %v546 = vrot.slane %v387, 2
        %v547 = vrot.slane %v388, 2
        %v548 = vsel %vm500, %v546, %v547
        %v549 = vrot.slane %v389, 2
        %v550 = vsel %vm500, %v547, %v549
        %v551 = vld [vmem:[#allocation4] sm:$0xff]
        %v552 = vld [vmem:[#allocation4 + $0x8] sm:$0xff]
        %v553 = vld [vmem:[#allocation4 + $0x10] sm:$0xff]
        %v554 = vld [vmem:[#allocation4 + $0x18] sm:$0xff]
        %v555 = vld [vmem:[#allocation4 + $0x20] sm:$0xff]
        %v556 = vld [vmem:[#allocation4 + $0x28] sm:$0xff]
        %v557 = vld [vmem:[#allocation4 + $0x30] sm:$0xff]
        %v558 = vld [vmem:[#allocation4 + $0x38] sm:$0xff]
        %v559 = vld [vmem:[#allocation4 + $0x40] sm:$0xff]
        %v560 = vld [vmem:[#allocation4 + $0x48] sm:$0xff]
        %v561 = vld [vmem:[#allocation4 + $0x50] sm:$0xff]
        %v562 = vld [vmem:[#allocation4 + $0x58] sm:$0xff]
        %v563 = vld [vmem:[#allocation4 + $0x60] sm:$0xff]
        %v564 = vld [vmem:[#allocation4 + $0x68] sm:$0xff]
        %v565 = vld [vmem:[#allocation4 + $0x70] sm:$0xff]
        %v566 = vld [vmem:[#allocation4 + $0x78] sm:$0xff]
        %v567 = vld [vmem:[#allocation4 + $0x80] sm:$0xff]
        %v568 = vld [vmem:[#allocation4 + $0x88] sm:$0xff]
        %v569 = vld [vmem:[#allocation4 + $0x90] sm:$0xff]
        %v570 = vld [vmem:[#allocation4 + $0x98] sm:$0xff]
        %v571 = vld [vmem:[#allocation4 + $0xa0] sm:$0xff]
        %v572 = vld [vmem:[#allocation4 + $0xa8] sm:$0xff]
        %v573 = vld [vmem:[#allocation4 + $0xb0] sm:$0xf]
        %v574 = vcombine.low %v360, %v452
        %v575 = vcombine.high %v360, %v452
        %v576 = vcombine.high %v503, %v503
        %v578 = vunpack.c.l.s4 1983009808
        %v579 = vunpack.c.0.s8 %v578
        %v580 = vlaneseq
        %v581 = vshrl.u32 %v580, 7
        %v582 = vsub.s32 %v579, %v581
        %v583 = vrot.slane %v574, %v582
        %v585 = vunpack.c.l.s4 1983009808
        %v586 = vunpack.c.0.s8 %v585
        %v587 = vlaneseq
        %v588 = vshrl.u32 %v587, 7
        %v589 = vsub.s32 %v586, %v588
        %v590 = vrot.slane %v575, %v589
        %v592 = vunpack.c.l.s4 1983009808
        %v593 = vunpack.c.0.s8 %v592
        %v594 = vlaneseq
        %v595 = vshrl.u32 %v594, 7
        %v596 = vsub.s32 %v593, %v595
        %v597 = vrot.slane %v503, %v596
        %v599 = vunpack.c.l.s4 1983009808
        %v600 = vunpack.c.0.s8 %v599
        %v601 = vlaneseq
        %v602 = vshrl.u32 %v601, 7
        %v603 = vsub.s32 %v600, %v602
        %v604 = vrot.slane %v576, %v603
        %v605 = vcombine.low %v583, %v597
        %v606 = vcombine.high %v583, %v597
        %v607 = vcombine.low %v590, %v604
        %v608 = vcombine.high %v590, %v604
        %v609 = vcombine.low %v361, %v454
        %v610 = vcombine.high %v361, %v454
        %v611 = vcombine.high %v505, %v505
        %v613 = vunpack.c.l.s4 1983009808
        %v614 = vunpack.c.0.s8 %v613
        %v615 = vlaneseq
        %v616 = vshrl.u32 %v615, 7
        %v617 = vsub.s32 %v614, %v616
        %v618 = vrot.slane %v609, %v617
        %v620 = vunpack.c.l.s4 1983009808
        %v621 = vunpack.c.0.s8 %v620
        %v622 = vlaneseq
        %v623 = vshrl.u32 %v622, 7
        %v624 = vsub.s32 %v621, %v623
        %v625 = vrot.slane %v610, %v624
        %v627 = vunpack.c.l.s4 1983009808
        %v628 = vunpack.c.0.s8 %v627
        %v629 = vlaneseq
        %v630 = vshrl.u32 %v629, 7
        %v631 = vsub.s32 %v628, %v630
        %v632 = vrot.slane %v505, %v631
        %v634 = vunpack.c.l.s4 1983009808
        %v635 = vunpack.c.0.s8 %v634
        %v636 = vlaneseq
        %v637 = vshrl.u32 %v636, 7
        %v638 = vsub.s32 %v635, %v637
        %v639 = vrot.slane %v611, %v638
        %v640 = vcombine.low %v618, %v632
        %v641 = vcombine.high %v618, %v632
        %v642 = vcombine.low %v625, %v639
        %v643 = vcombine.high %v625, %v639
        %v644 = vcombine.low %v362, %v453
        %v646 = vunpack.c.l.s4 1983009808
        %v647 = vunpack.c.0.s8 %v646
        %v648 = vlaneseq
        %v649 = vshrl.u32 %v648, 7
        %v650 = vsub.s32 %v647, %v649
        %v651 = vrot.slane %v644, %v650
        %v653 = vunpack.c.l.s4 1983009808
        %v654 = vunpack.c.0.s8 %v653
        %v655 = vlaneseq
        %v656 = vshrl.u32 %v655, 7
        %v657 = vsub.s32 %v654, %v656
        %v658 = vrot.slane %v504, %v657
        %v659 = vcombine.low %v651, %v658
        %v660 = vcombine.low %v363, %v457
        %v661 = vcombine.high %v363, %v457
        %v662 = vcombine.high %v508, %v508
        %v664 = vunpack.c.l.s4 1983009808
        %v665 = vunpack.c.0.s8 %v664
        %v666 = vlaneseq
        %v667 = vshrl.u32 %v666, 7
        %v668 = vsub.s32 %v665, %v667
        %v669 = vrot.slane %v660, %v668
        %v671 = vunpack.c.l.s4 1983009808
        %v672 = vunpack.c.0.s8 %v671
        %v673 = vlaneseq
        %v674 = vshrl.u32 %v673, 7
        %v675 = vsub.s32 %v672, %v674
        %v676 = vrot.slane %v661, %v675
        %v678 = vunpack.c.l.s4 1983009808
        %v679 = vunpack.c.0.s8 %v678
        %v680 = vlaneseq
        %v681 = vshrl.u32 %v680, 7
        %v682 = vsub.s32 %v679, %v681
        %v683 = vrot.slane %v508, %v682
        %v685 = vunpack.c.l.s4 1983009808
        %v686 = vunpack.c.0.s8 %v685
        %v687 = vlaneseq
        %v688 = vshrl.u32 %v687, 7
        %v689 = vsub.s32 %v686, %v688
        %v690 = vrot.slane %v662, %v689
        %v691 = vcombine.low %v669, %v683
        %v692 = vcombine.high %v669, %v683
        %v693 = vcombine.low %v676, %v690
        %v694 = vcombine.high %v676, %v690
        %v695 = vcombine.low %v364, %v459
        %v696 = vcombine.high %v364, %v459
        %v697 = vcombine.high %v510, %v510
        %v699 = vunpack.c.l.s4 1983009808
        %v700 = vunpack.c.0.s8 %v699
        %v701 = vlaneseq
        %v702 = vshrl.u32 %v701, 7
        %v703 = vsub.s32 %v700, %v702
        %v704 = vrot.slane %v695, %v703
        %v706 = vunpack.c.l.s4 1983009808
        %v707 = vunpack.c.0.s8 %v706
        %v708 = vlaneseq
        %v709 = vshrl.u32 %v708, 7
        %v710 = vsub.s32 %v707, %v709
        %v711 = vrot.slane %v696, %v710
        %v713 = vunpack.c.l.s4 1983009808
        %v714 = vunpack.c.0.s8 %v713
        %v715 = vlaneseq
        %v716 = vshrl.u32 %v715, 7
        %v717 = vsub.s32 %v714, %v716
        %v718 = vrot.slane %v510, %v717
        %v720 = vunpack.c.l.s4 1983009808
        %v721 = vunpack.c.0.s8 %v720
        %v722 = vlaneseq
        %v723 = vshrl.u32 %v722, 7
        %v724 = vsub.s32 %v721, %v723
        %v725 = vrot.slane %v697, %v724
        %v726 = vcombine.low %v704, %v718
        %v727 = vcombine.high %v704, %v718
        %v728 = vcombine.low %v711, %v725
        %v729 = vcombine.high %v711, %v725
        %v730 = vcombine.low %v365, %v458
        %v732 = vunpack.c.l.s4 1983009808
        %v733 = vunpack.c.0.s8 %v732
        %v734 = vlaneseq
        %v735 = vshrl.u32 %v734, 7
        %v736 = vsub.s32 %v733, %v735
        %v737 = vrot.slane %v730, %v736
        %v739 = vunpack.c.l.s4 1983009808
        %v740 = vunpack.c.0.s8 %v739
        %v741 = vlaneseq
        %v742 = vshrl.u32 %v741, 7
        %v743 = vsub.s32 %v740, %v742
        %v744 = vrot.slane %v509, %v743
        %v745 = vcombine.low %v737, %v744
        %v746 = vcombine.low %v366, %v462
        %v747 = vcombine.high %v366, %v462
        %v748 = vcombine.high %v513, %v513
        %v750 = vunpack.c.l.s4 1983009808
        %v751 = vunpack.c.0.s8 %v750
        %v752 = vlaneseq
        %v753 = vshrl.u32 %v752, 7
        %v754 = vsub.s32 %v751, %v753
        %v755 = vrot.slane %v746, %v754
        %v757 = vunpack.c.l.s4 1983009808
        %v758 = vunpack.c.0.s8 %v757
        %v759 = vlaneseq
        %v760 = vshrl.u32 %v759, 7
        %v761 = vsub.s32 %v758, %v760
        %v762 = vrot.slane %v747, %v761
        %v764 = vunpack.c.l.s4 1983009808
        %v765 = vunpack.c.0.s8 %v764
        %v766 = vlaneseq
        %v767 = vshrl.u32 %v766, 7
        %v768 = vsub.s32 %v765, %v767
        %v769 = vrot.slane %v513, %v768
        %v771 = vunpack.c.l.s4 1983009808
        %v772 = vunpack.c.0.s8 %v771
        %v773 = vlaneseq
        %v774 = vshrl.u32 %v773, 7
        %v775 = vsub.s32 %v772, %v774
        %v776 = vrot.slane %v748, %v775
        %v777 = vcombine.low %v755, %v769
        %v778 = vcombine.high %v755, %v769
        %v779 = vcombine.low %v762, %v776
        %v780 = vcombine.high %v762, %v776
        %v781 = vcombine.low %v367, %v464
        %v782 = vcombine.high %v367, %v464
        %v783 = vcombine.high %v515, %v515
        %v785 = vunpack.c.l.s4 1983009808
        %v786 = vunpack.c.0.s8 %v785
        %v787 = vlaneseq
        %v788 = vshrl.u32 %v787, 7
        %v789 = vsub.s32 %v786, %v788
        %v790 = vrot.slane %v781, %v789
        %v792 = vunpack.c.l.s4 1983009808
        %v793 = vunpack.c.0.s8 %v792
        %v794 = vlaneseq
        %v795 = vshrl.u32 %v794, 7
        %v796 = vsub.s32 %v793, %v795
        %v797 = vrot.slane %v782, %v796
        %v799 = vunpack.c.l.s4 1983009808
        %v800 = vunpack.c.0.s8 %v799
        %v801 = vlaneseq
        %v802 = vshrl.u32 %v801, 7
        %v803 = vsub.s32 %v800, %v802
        %v804 = vrot.slane %v515, %v803
        %v806 = vunpack.c.l.s4 1983009808
        %v807 = vunpack.c.0.s8 %v806
        %v808 = vlaneseq
        %v809 = vshrl.u32 %v808, 7
        %v810 = vsub.s32 %v807, %v809
        %v811 = vrot.slane %v783, %v810
        %v812 = vcombine.low %v790, %v804
        %v813 = vcombine.high %v790, %v804
        %v814 = vcombine.low %v797, %v811
        %v815 = vcombine.high %v797, %v811
        %v816 = vcombine.low %v368, %v463
        %v818 = vunpack.c.l.s4 1983009808
        %v819 = vunpack.c.0.s8 %v818
        %v820 = vlaneseq
        %v821 = vshrl.u32 %v820, 7
        %v822 = vsub.s32 %v819, %v821
        %v823 = vrot.slane %v816, %v822
        %v825 = vunpack.c.l.s4 1983009808
        %v826 = vunpack.c.0.s8 %v825
        %v827 = vlaneseq
        %v828 = vshrl.u32 %v827, 7
        %v829 = vsub.s32 %v826, %v828
        %v830 = vrot.slane %v514, %v829
        %v831 = vcombine.low %v823, %v830
        %v832 = vcombine.low %v369, %v467
        %v833 = vcombine.high %v369, %v467
        %v834 = vcombine.high %v518, %v518
        %v836 = vunpack.c.l.s4 1983009808
        %v837 = vunpack.c.0.s8 %v836
        %v838 = vlaneseq
        %v839 = vshrl.u32 %v838, 7
        %v840 = vsub.s32 %v837, %v839
        %v841 = vrot.slane %v832, %v840
        %v843 = vunpack.c.l.s4 1983009808
        %v844 = vunpack.c.0.s8 %v843
        %v845 = vlaneseq
        %v846 = vshrl.u32 %v845, 7
        %v847 = vsub.s32 %v844, %v846
        %v848 = vrot.slane %v833, %v847
        %v850 = vunpack.c.l.s4 1983009808
        %v851 = vunpack.c.0.s8 %v850
        %v852 = vlaneseq
        %v853 = vshrl.u32 %v852, 7
        %v854 = vsub.s32 %v851, %v853
        %v855 = vrot.slane %v518, %v854
        %v857 = vunpack.c.l.s4 1983009808
        %v858 = vunpack.c.0.s8 %v857
        %v859 = vlaneseq
        %v860 = vshrl.u32 %v859, 7
        %v861 = vsub.s32 %v858, %v860
        %v862 = vrot.slane %v834, %v861
        %v863 = vcombine.low %v841, %v855
        %v864 = vcombine.high %v841, %v855
        %v865 = vcombine.low %v848, %v862
        %v866 = vcombine.high %v848, %v862
        %v867 = vcombine.low %v370, %v469
        %v868 = vcombine.high %v370, %v469
        %v869 = vcombine.high %v520, %v520
        %v871 = vunpack.c.l.s4 1983009808
        %v872 = vunpack.c.0.s8 %v871
        %v873 = vlaneseq
        %v874 = vshrl.u32 %v873, 7
        %v875 = vsub.s32 %v872, %v874
        %v876 = vrot.slane %v867, %v875
        %v878 = vunpack.c.l.s4 1983009808
        %v879 = vunpack.c.0.s8 %v878
        %v880 = vlaneseq
        %v881 = vshrl.u32 %v880, 7
        %v882 = vsub.s32 %v879, %v881
        %v883 = vrot.slane %v868, %v882
        %v885 = vunpack.c.l.s4 1983009808
        %v886 = vunpack.c.0.s8 %v885
        %v887 = vlaneseq
        %v888 = vshrl.u32 %v887, 7
        %v889 = vsub.s32 %v886, %v888
        %v890 = vrot.slane %v520, %v889
        %v892 = vunpack.c.l.s4 1983009808
        %v893 = vunpack.c.0.s8 %v892
        %v894 = vlaneseq
        %v895 = vshrl.u32 %v894, 7
        %v896 = vsub.s32 %v893, %v895
        %v897 = vrot.slane %v869, %v896
        %v898 = vcombine.low %v876, %v890
        %v899 = vcombine.high %v876, %v890
        %v900 = vcombine.low %v883, %v897
        %v901 = vcombine.high %v883, %v897
        %v902 = vcombine.low %v371, %v468
        %v904 = vunpack.c.l.s4 1983009808
        %v905 = vunpack.c.0.s8 %v904
        %v906 = vlaneseq
        %v907 = vshrl.u32 %v906, 7
        %v908 = vsub.s32 %v905, %v907
        %v909 = vrot.slane %v902, %v908
        %v911 = vunpack.c.l.s4 1983009808
        %v912 = vunpack.c.0.s8 %v911
        %v913 = vlaneseq
        %v914 = vshrl.u32 %v913, 7
        %v915 = vsub.s32 %v912, %v914
        %v916 = vrot.slane %v519, %v915
        %v917 = vcombine.low %v909, %v916
        %v918 = vcombine.low %v372, %v472
        %v919 = vcombine.high %v372, %v472
        %v920 = vcombine.high %v523, %v523
        %v922 = vunpack.c.l.s4 1983009808
        %v923 = vunpack.c.0.s8 %v922
        %v924 = vlaneseq
        %v925 = vshrl.u32 %v924, 7
        %v926 = vsub.s32 %v923, %v925
        %v927 = vrot.slane %v918, %v926
        %v929 = vunpack.c.l.s4 1983009808
        %v930 = vunpack.c.0.s8 %v929
        %v931 = vlaneseq
        %v932 = vshrl.u32 %v931, 7
        %v933 = vsub.s32 %v930, %v932
        %v934 = vrot.slane %v919, %v933
        %v936 = vunpack.c.l.s4 1983009808
        %v937 = vunpack.c.0.s8 %v936
        %v938 = vlaneseq
        %v939 = vshrl.u32 %v938, 7
        %v940 = vsub.s32 %v937, %v939
        %v941 = vrot.slane %v523, %v940
        %v943 = vunpack.c.l.s4 1983009808
        %v944 = vunpack.c.0.s8 %v943
        %v945 = vlaneseq
        %v946 = vshrl.u32 %v945, 7
        %v947 = vsub.s32 %v944, %v946
        %v948 = vrot.slane %v920, %v947
        %v949 = vcombine.low %v927, %v941
        %v950 = vcombine.high %v927, %v941
        %v951 = vcombine.low %v934, %v948
        %v952 = vcombine.high %v934, %v948
        %v953 = vcombine.low %v373, %v474
        %v954 = vcombine.high %v373, %v474
        %v955 = vcombine.high %v525, %v525
        %v957 = vunpack.c.l.s4 1983009808
        %v958 = vunpack.c.0.s8 %v957
        %v959 = vlaneseq
        %v960 = vshrl.u32 %v959, 7
        %v961 = vsub.s32 %v958, %v960
        %v962 = vrot.slane %v953, %v961
        %v964 = vunpack.c.l.s4 1983009808
        %v965 = vunpack.c.0.s8 %v964
        %v966 = vlaneseq
        %v967 = vshrl.u32 %v966, 7
        %v968 = vsub.s32 %v965, %v967
        %v969 = vrot.slane %v954, %v968
        %v971 = vunpack.c.l.s4 1983009808
        %v972 = vunpack.c.0.s8 %v971
        %v973 = vlaneseq
        %v974 = vshrl.u32 %v973, 7
        %v975 = vsub.s32 %v972, %v974
        %v976 = vrot.slane %v525, %v975
        %v978 = vunpack.c.l.s4 1983009808
        %v979 = vunpack.c.0.s8 %v978
        %v980 = vlaneseq
        %v981 = vshrl.u32 %v980, 7
        %v982 = vsub.s32 %v979, %v981
        %v983 = vrot.slane %v955, %v982
        %v984 = vcombine.low %v962, %v976
        %v985 = vcombine.high %v962, %v976
        %v986 = vcombine.low %v969, %v983
        %v987 = vcombine.high %v969, %v983
        %v988 = vcombine.low %v374, %v473
        %v990 = vunpack.c.l.s4 1983009808
        %v991 = vunpack.c.0.s8 %v990
        %v992 = vlaneseq
        %v993 = vshrl.u32 %v992, 7
        %v994 = vsub.s32 %v991, %v993
        %v995 = vrot.slane %v988, %v994
        %v997 = vunpack.c.l.s4 1983009808
        %v998 = vunpack.c.0.s8 %v997
        %v999 = vlaneseq
        %v1000 = vshrl.u32 %v999, 7
        %v1001 = vsub.s32 %v998, %v1000
        %v1002 = vrot.slane %v524, %v1001
        %v1003 = vcombine.low %v995, %v1002
        %v1004 = vcombine.low %v375, %v477
        %v1005 = vcombine.high %v375, %v477
        %v1006 = vcombine.high %v528, %v528
        %v1008 = vunpack.c.l.s4 1983009808
        %v1009 = vunpack.c.0.s8 %v1008
        %v1010 = vlaneseq
        %v1011 = vshrl.u32 %v1010, 7
        %v1012 = vsub.s32 %v1009, %v1011
        %v1013 = vrot.slane %v1004, %v1012
        %v1015 = vunpack.c.l.s4 1983009808
        %v1016 = vunpack.c.0.s8 %v1015
        %v1017 = vlaneseq
        %v1018 = vshrl.u32 %v1017, 7
        %v1019 = vsub.s32 %v1016, %v1018
        %v1020 = vrot.slane %v1005, %v1019
        %v1022 = vunpack.c.l.s4 1983009808
        %v1023 = vunpack.c.0.s8 %v1022
        %v1024 = vlaneseq
        %v1025 = vshrl.u32 %v1024, 7
        %v1026 = vsub.s32 %v1023, %v1025
        %v1027 = vrot.slane %v528, %v1026
        %v1029 = vunpack.c.l.s4 1983009808
        %v1030 = vunpack.c.0.s8 %v1029
        %v1031 = vlaneseq
        %v1032 = vshrl.u32 %v1031, 7
        %v1033 = vsub.s32 %v1030, %v1032
        %v1034 = vrot.slane %v1006, %v1033
        %v1035 = vcombine.low %v1013, %v1027
        %v1036 = vcombine.high %v1013, %v1027
        %v1037 = vcombine.low %v1020, %v1034
        %v1038 = vcombine.high %v1020, %v1034
        %v1039 = vcombine.low %v376, %v479
        %v1040 = vcombine.high %v376, %v479
        %v1041 = vcombine.high %v530, %v530
        %v1043 = vunpack.c.l.s4 1983009808
        %v1044 = vunpack.c.0.s8 %v1043
        %v1045 = vlaneseq
        %v1046 = vshrl.u32 %v1045, 7
        %v1047 = vsub.s32 %v1044, %v1046
        %v1048 = vrot.slane %v1039, %v1047
        %v1050 = vunpack.c.l.s4 1983009808
        %v1051 = vunpack.c.0.s8 %v1050
        %v1052 = vlaneseq
        %v1053 = vshrl.u32 %v1052, 7
        %v1054 = vsub.s32 %v1051, %v1053
        %v1055 = vrot.slane %v1040, %v1054
        %v1057 = vunpack.c.l.s4 1983009808
        %v1058 = vunpack.c.0.s8 %v1057
        %v1059 = vlaneseq
        %v1060 = vshrl.u32 %v1059, 7
        %v1061 = vsub.s32 %v1058, %v1060
        %v1062 = vrot.slane %v530, %v1061
        %v1064 = vunpack.c.l.s4 1983009808
        %v1065 = vunpack.c.0.s8 %v1064
        %v1066 = vlaneseq
        %v1067 = vshrl.u32 %v1066, 7
        %v1068 = vsub.s32 %v1065, %v1067
        %v1069 = vrot.slane %v1041, %v1068
        %v1070 = vcombine.low %v1048, %v1062
        %v1071 = vcombine.high %v1048, %v1062
        %v1072 = vcombine.low %v1055, %v1069
        %v1073 = vcombine.high %v1055, %v1069
        %v1074 = vcombine.low %v377, %v478
        %v1076 = vunpack.c.l.s4 1983009808
        %v1077 = vunpack.c.0.s8 %v1076
        %v1078 = vlaneseq
        %v1079 = vshrl.u32 %v1078, 7
        %v1080 = vsub.s32 %v1077, %v1079
        %v1081 = vrot.slane %v1074, %v1080
        %v1083 = vunpack.c.l.s4 1983009808
        %v1084 = vunpack.c.0.s8 %v1083
        %v1085 = vlaneseq
        %v1086 = vshrl.u32 %v1085, 7
        %v1087 = vsub.s32 %v1084, %v1086
        %v1088 = vrot.slane %v529, %v1087
        %v1089 = vcombine.low %v1081, %v1088
        %v1090 = vcombine.low %v378, %v482
        %v1091 = vcombine.high %v378, %v482
        %v1092 = vcombine.high %v533, %v533
        %v1094 = vunpack.c.l.s4 1983009808
        %v1095 = vunpack.c.0.s8 %v1094
        %v1096 = vlaneseq
        %v1097 = vshrl.u32 %v1096, 7
        %v1098 = vsub.s32 %v1095, %v1097
        %v1099 = vrot.slane %v1090, %v1098
        %v1101 = vunpack.c.l.s4 1983009808
        %v1102 = vunpack.c.0.s8 %v1101
        %v1103 = vlaneseq
        %v1104 = vshrl.u32 %v1103, 7
        %v1105 = vsub.s32 %v1102, %v1104
        %v1106 = vrot.slane %v1091, %v1105
        %v1108 = vunpack.c.l.s4 1983009808
        %v1109 = vunpack.c.0.s8 %v1108
        %v1110 = vlaneseq
        %v1111 = vshrl.u32 %v1110, 7
        %v1112 = vsub.s32 %v1109, %v1111
        %v1113 = vrot.slane %v533, %v1112
        %v1115 = vunpack.c.l.s4 1983009808
        %v1116 = vunpack.c.0.s8 %v1115
        %v1117 = vlaneseq
        %v1118 = vshrl.u32 %v1117, 7
        %v1119 = vsub.s32 %v1116, %v1118
        %v1120 = vrot.slane %v1092, %v1119
        %v1121 = vcombine.low %v1099, %v1113
        %v1122 = vcombine.high %v1099, %v1113
        %v1123 = vcombine.low %v1106, %v1120
        %v1124 = vcombine.high %v1106, %v1120
        %v1125 = vcombine.low %v379, %v484
        %v1126 = vcombine.high %v379, %v484
        %v1127 = vcombine.high %v535, %v535
        %v1129 = vunpack.c.l.s4 1983009808
        %v1130 = vunpack.c.0.s8 %v1129
        %v1131 = vlaneseq
        %v1132 = vshrl.u32 %v1131, 7
        %v1133 = vsub.s32 %v1130, %v1132
        %v1134 = vrot.slane %v1125, %v1133
        %v1136 = vunpack.c.l.s4 1983009808
        %v1137 = vunpack.c.0.s8 %v1136
        %v1138 = vlaneseq
        %v1139 = vshrl.u32 %v1138, 7
        %v1140 = vsub.s32 %v1137, %v1139
        %v1141 = vrot.slane %v1126, %v1140
        %v1143 = vunpack.c.l.s4 1983009808
        %v1144 = vunpack.c.0.s8 %v1143
        %v1145 = vlaneseq
        %v1146 = vshrl.u32 %v1145, 7
        %v1147 = vsub.s32 %v1144, %v1146
        %v1148 = vrot.slane %v535, %v1147
        %v1150 = vunpack.c.l.s4 1983009808
        %v1151 = vunpack.c.0.s8 %v1150
        %v1152 = vlaneseq
        %v1153 = vshrl.u32 %v1152, 7
        %v1154 = vsub.s32 %v1151, %v1153
        %v1155 = vrot.slane %v1127, %v1154
        %v1156 = vcombine.low %v1134, %v1148
        %v1157 = vcombine.high %v1134, %v1148
        %v1158 = vcombine.low %v1141, %v1155
        %v1159 = vcombine.high %v1141, %v1155
        %v1160 = vcombine.low %v380, %v483
        %v1162 = vunpack.c.l.s4 1983009808
        %v1163 = vunpack.c.0.s8 %v1162
        %v1164 = vlaneseq
        %v1165 = vshrl.u32 %v1164, 7
        %v1166 = vsub.s32 %v1163, %v1165
        %v1167 = vrot.slane %v1160, %v1166
        %v1169 = vunpack.c.l.s4 1983009808
        %v1170 = vunpack.c.0.s8 %v1169
        %v1171 = vlaneseq
        %v1172 = vshrl.u32 %v1171, 7
        %v1173 = vsub.s32 %v1170, %v1172
        %v1174 = vrot.slane %v534, %v1173
        %v1175 = vcombine.low %v1167, %v1174
        %v1176 = vcombine.low %v381, %v487
        %v1177 = vcombine.high %v381, %v487
        %v1178 = vcombine.high %v538, %v538
        %v1180 = vunpack.c.l.s4 1983009808
        %v1181 = vunpack.c.0.s8 %v1180
        %v1182 = vlaneseq
        %v1183 = vshrl.u32 %v1182, 7
        %v1184 = vsub.s32 %v1181, %v1183
        %v1185 = vrot.slane %v1176, %v1184
        %v1187 = vunpack.c.l.s4 1983009808
        %v1188 = vunpack.c.0.s8 %v1187
        %v1189 = vlaneseq
        %v1190 = vshrl.u32 %v1189, 7
        %v1191 = vsub.s32 %v1188, %v1190
        %v1192 = vrot.slane %v1177, %v1191
        %v1194 = vunpack.c.l.s4 1983009808
        %v1195 = vunpack.c.0.s8 %v1194
        %v1196 = vlaneseq
        %v1197 = vshrl.u32 %v1196, 7
        %v1198 = vsub.s32 %v1195, %v1197
        %v1199 = vrot.slane %v538, %v1198
        %v1201 = vunpack.c.l.s4 1983009808
        %v1202 = vunpack.c.0.s8 %v1201
        %v1203 = vlaneseq
        %v1204 = vshrl.u32 %v1203, 7
        %v1205 = vsub.s32 %v1202, %v1204
        %v1206 = vrot.slane %v1178, %v1205
        %v1207 = vcombine.low %v1185, %v1199
        %v1208 = vcombine.high %v1185, %v1199
        %v1209 = vcombine.low %v1192, %v1206
        %v1210 = vcombine.high %v1192, %v1206
        %v1211 = vcombine.low %v382, %v489
        %v1212 = vcombine.high %v382, %v489
        %v1213 = vcombine.high %v540, %v540
        %v1215 = vunpack.c.l.s4 1983009808
        %v1216 = vunpack.c.0.s8 %v1215
        %v1217 = vlaneseq
        %v1218 = vshrl.u32 %v1217, 7
        %v1219 = vsub.s32 %v1216, %v1218
        %v1220 = vrot.slane %v1211, %v1219
        %v1222 = vunpack.c.l.s4 1983009808
        %v1223 = vunpack.c.0.s8 %v1222
        %v1224 = vlaneseq
        %v1225 = vshrl.u32 %v1224, 7
        %v1226 = vsub.s32 %v1223, %v1225
        %v1227 = vrot.slane %v1212, %v1226
        %v1229 = vunpack.c.l.s4 1983009808
        %v1230 = vunpack.c.0.s8 %v1229
        %v1231 = vlaneseq
        %v1232 = vshrl.u32 %v1231, 7
        %v1233 = vsub.s32 %v1230, %v1232
        %v1234 = vrot.slane %v540, %v1233
        %v1236 = vunpack.c.l.s4 1983009808
        %v1237 = vunpack.c.0.s8 %v1236
        %v1238 = vlaneseq
        %v1239 = vshrl.u32 %v1238, 7
        %v1240 = vsub.s32 %v1237, %v1239
        %v1241 = vrot.slane %v1213, %v1240
        %v1242 = vcombine.low %v1220, %v1234
        %v1243 = vcombine.high %v1220, %v1234
        %v1244 = vcombine.low %v1227, %v1241
        %v1245 = vcombine.high %v1227, %v1241
        %v1246 = vcombine.low %v383, %v488
        %v1248 = vunpack.c.l.s4 1983009808
        %v1249 = vunpack.c.0.s8 %v1248
        %v1250 = vlaneseq
        %v1251 = vshrl.u32 %v1250, 7
        %v1252 = vsub.s32 %v1249, %v1251
        %v1253 = vrot.slane %v1246, %v1252
        %v1255 = vunpack.c.l.s4 1983009808
        %v1256 = vunpack.c.0.s8 %v1255
        %v1257 = vlaneseq
        %v1258 = vshrl.u32 %v1257, 7
        %v1259 = vsub.s32 %v1256, %v1258
        %v1260 = vrot.slane %v539, %v1259
        %v1261 = vcombine.low %v1253, %v1260
        %v1262 = vcombine.low %v384, %v492
        %v1263 = vcombine.high %v384, %v492
        %v1264 = vcombine.high %v543, %v543
        %v1266 = vunpack.c.l.s4 1983009808
        %v1267 = vunpack.c.0.s8 %v1266
        %v1268 = vlaneseq
        %v1269 = vshrl.u32 %v1268, 7
        %v1270 = vsub.s32 %v1267, %v1269
        %v1271 = vrot.slane %v1262, %v1270
        %v1273 = vunpack.c.l.s4 1983009808
        %v1274 = vunpack.c.0.s8 %v1273
        %v1275 = vlaneseq
        %v1276 = vshrl.u32 %v1275, 7
        %v1277 = vsub.s32 %v1274, %v1276
        %v1278 = vrot.slane %v1263, %v1277
        %v1280 = vunpack.c.l.s4 1983009808
        %v1281 = vunpack.c.0.s8 %v1280
        %v1282 = vlaneseq
        %v1283 = vshrl.u32 %v1282, 7
        %v1284 = vsub.s32 %v1281, %v1283
        %v1285 = vrot.slane %v543, %v1284
        %v1287 = vunpack.c.l.s4 1983009808
        %v1288 = vunpack.c.0.s8 %v1287
        %v1289 = vlaneseq
        %v1290 = vshrl.u32 %v1289, 7
        %v1291 = vsub.s32 %v1288, %v1290
        %v1292 = vrot.slane %v1264, %v1291
        %v1293 = vcombine.low %v1271, %v1285
        %v1294 = vcombine.high %v1271, %v1285
        %v1295 = vcombine.low %v1278, %v1292
        %v1296 = vcombine.high %v1278, %v1292
        %v1297 = vcombine.low %v385, %v494
        %v1298 = vcombine.high %v385, %v494
        %v1299 = vcombine.high %v545, %v545
        %v1301 = vunpack.c.l.s4 1983009808
        %v1302 = vunpack.c.0.s8 %v1301
        %v1303 = vlaneseq
        %v1304 = vshrl.u32 %v1303, 7
        %v1305 = vsub.s32 %v1302, %v1304
        %v1306 = vrot.slane %v1297, %v1305
        %v1308 = vunpack.c.l.s4 1983009808
        %v1309 = vunpack.c.0.s8 %v1308
        %v1310 = vlaneseq
        %v1311 = vshrl.u32 %v1310, 7
        %v1312 = vsub.s32 %v1309, %v1311
        %v1313 = vrot.slane %v1298, %v1312
        %v1315 = vunpack.c.l.s4 1983009808
        %v1316 = vunpack.c.0.s8 %v1315
        %v1317 = vlaneseq
        %v1318 = vshrl.u32 %v1317, 7
        %v1319 = vsub.s32 %v1316, %v1318
        %v1320 = vrot.slane %v545, %v1319
        %v1322 = vunpack.c.l.s4 1983009808
        %v1323 = vunpack.c.0.s8 %v1322
        %v1324 = vlaneseq
        %v1325 = vshrl.u32 %v1324, 7
        %v1326 = vsub.s32 %v1323, %v1325
        %v1327 = vrot.slane %v1299, %v1326
        %v1328 = vcombine.low %v1306, %v1320
        %v1329 = vcombine.high %v1306, %v1320
        %v1330 = vcombine.low %v1313, %v1327
        %v1331 = vcombine.high %v1313, %v1327
        %v1332 = vcombine.low %v386, %v493
        %v1334 = vunpack.c.l.s4 1983009808
        %v1335 = vunpack.c.0.s8 %v1334
        %v1336 = vlaneseq
        %v1337 = vshrl.u32 %v1336, 7
        %v1338 = vsub.s32 %v1335, %v1337
        %v1339 = vrot.slane %v1332, %v1338
        %v1341 = vunpack.c.l.s4 1983009808
        %v1342 = vunpack.c.0.s8 %v1341
        %v1343 = vlaneseq
        %v1344 = vshrl.u32 %v1343, 7
        %v1345 = vsub.s32 %v1342, %v1344
        %v1346 = vrot.slane %v544, %v1345
        %v1347 = vcombine.low %v1339, %v1346
        %v1348 = vcombine.low %v387, %v497
        %v1349 = vcombine.high %v387, %v497
        %v1350 = vcombine.high %v548, %v548
        %v1352 = vunpack.c.l.s4 1983009808
        %v1353 = vunpack.c.0.s8 %v1352
        %v1354 = vlaneseq
        %v1355 = vshrl.u32 %v1354, 7
        %v1356 = vsub.s32 %v1353, %v1355
        %v1357 = vrot.slane %v1348, %v1356
        %v1359 = vunpack.c.l.s4 1983009808
        %v1360 = vunpack.c.0.s8 %v1359
        %v1361 = vlaneseq
        %v1362 = vshrl.u32 %v1361, 7
        %v1363 = vsub.s32 %v1360, %v1362
        %v1364 = vrot.slane %v1349, %v1363
        %v1366 = vunpack.c.l.s4 1983009808
        %v1367 = vunpack.c.0.s8 %v1366
        %v1368 = vlaneseq
        %v1369 = vshrl.u32 %v1368, 7
        %v1370 = vsub.s32 %v1367, %v1369
        %v1371 = vrot.slane %v548, %v1370
        %v1373 = vunpack.c.l.s4 1983009808
        %v1374 = vunpack.c.0.s8 %v1373
        %v1375 = vlaneseq
        %v1376 = vshrl.u32 %v1375, 7
        %v1377 = vsub.s32 %v1374, %v1376
        %v1378 = vrot.slane %v1350, %v1377
        %v1379 = vcombine.low %v1357, %v1371
        %v1380 = vcombine.high %v1357, %v1371
        %v1381 = vcombine.low %v1364, %v1378
        %v1382 = vcombine.high %v1364, %v1378
        %v1383 = vcombine.low %v388, %v499
        %v1384 = vcombine.high %v388, %v499
        %v1385 = vcombine.high %v550, %v550
        %v1387 = vunpack.c.l.s4 1983009808
        %v1388 = vunpack.c.0.s8 %v1387
        %v1389 = vlaneseq
        %v1390 = vshrl.u32 %v1389, 7
        %v1391 = vsub.s32 %v1388, %v1390
        %v1392 = vrot.slane %v1383, %v1391
        %v1394 = vunpack.c.l.s4 1983009808
        %v1395 = vunpack.c.0.s8 %v1394
        %v1396 = vlaneseq
        %v1397 = vshrl.u32 %v1396, 7
        %v1398 = vsub.s32 %v1395, %v1397
        %v1399 = vrot.slane %v1384, %v1398
        %v1401 = vunpack.c.l.s4 1983009808
        %v1402 = vunpack.c.0.s8 %v1401
        %v1403 = vlaneseq
        %v1404 = vshrl.u32 %v1403, 7
        %v1405 = vsub.s32 %v1402, %v1404
        %v1406 = vrot.slane %v550, %v1405
        %v1408 = vunpack.c.l.s4 1983009808
        %v1409 = vunpack.c.0.s8 %v1408
        %v1410 = vlaneseq
        %v1411 = vshrl.u32 %v1410, 7
        %v1412 = vsub.s32 %v1409, %v1411
        %v1413 = vrot.slane %v1385, %v1412
        %v1414 = vcombine.low %v1392, %v1406
        %v1415 = vcombine.high %v1392, %v1406
        %v1416 = vcombine.low %v1399, %v1413
        %v1417 = vcombine.high %v1399, %v1413
        %v1418 = vcombine.low %v389, %v498
        %v1420 = vunpack.c.l.s4 1983009808
        %v1421 = vunpack.c.0.s8 %v1420
        %v1422 = vlaneseq
        %v1423 = vshrl.u32 %v1422, 7
        %v1424 = vsub.s32 %v1421, %v1423
        %v1425 = vrot.slane %v1418, %v1424
        %v1427 = vunpack.c.l.s4 1983009808
        %v1428 = vunpack.c.0.s8 %v1427
        %v1429 = vlaneseq
        %v1430 = vshrl.u32 %v1429, 7
        %v1431 = vsub.s32 %v1428, %v1430
        %v1432 = vrot.slane %v549, %v1431
        %v1433 = vcombine.low %v1425, %v1432
        %v1434 = vld [vmem:[%s1] sm:$0xff]
        %v1435 = vld [vmem:[%s1 + $0x8] sm:$0xff]
        %v1436 = vld [vmem:[%s1 + $0x10] sm:$0xff]
        %v1437 = vld [vmem:[%s1 + $0x18] sm:$0xff]
        %v1438 = vld [vmem:[%s1 + $0x20] sm:$0xff]
        %v1439 = vld [vmem:[%s1 + $0x28] sm:$0xff]
        %v1440 = vld [vmem:[%s1 + $0x30] sm:$0xff]
        %v1441 = vld [vmem:[%s1 + $0x38] sm:$0xff]
        %v1442 = vld [vmem:[%s1 + $0x40] sm:$0xff]
        %v1443 = vld [vmem:[%s1 + $0x48] sm:$0xff]
        %v1444 = vld [vmem:[%s1 + $0x50] sm:$0xff]
        %v1445 = vld [vmem:[%s1 + $0x58] sm:$0xff]
        %v1446 = vld [vmem:[%s1 + $0x60] sm:$0xff]
        %v1447 = vld [vmem:[%s1 + $0x68] sm:$0xff]
        %v1448 = vld [vmem:[%s1 + $0x70] sm:$0xff]
        %v1449 = vld [vmem:[%s1 + $0x78] sm:$0xff]
        %v1450 = vld [vmem:[%s1 + $0x80] sm:$0xff]
        %v1451 = vld [vmem:[%s1 + $0x88] sm:$0xff]
        %v1452 = vld [vmem:[%s1 + $0x90] sm:$0xff]
        %v1453 = vld [vmem:[%s1 + $0x98] sm:$0xff]
        %v1454 = vld [vmem:[%s1 + $0xa0] sm:$0xff]
        %v1455 = vld [vmem:[%s1 + $0xa8] sm:$0xff]
        %v1456 = vld [vmem:[%s1 + $0xb0] sm:$0xff]
        %v1457 = vld [vmem:[%s1 + $0xb8] sm:$0xff]
        %v1458 = vld [vmem:[%s1 + $0xc0] sm:$0xff]
        %v1459 = vld [vmem:[%s1 + $0xc8] sm:$0xff]
        %v1460 = vld [vmem:[%s1 + $0xd0] sm:$0xff]
        %v1461 = vld [vmem:[%s1 + $0xd8] sm:$0xff]
        %v1462 = vld [vmem:[%s1 + $0xe0] sm:$0xff]
        %v1463 = vld [vmem:[%s1 + $0xe8] sm:$0xff]
        %v1464 = vld [vmem:[%s1 + $0xf0] sm:$0xff]
        %v1465 = vld [vmem:[%s1 + $0xf8] sm:$0xff]
        %v1466 = vld [vmem:[%s1 + $0x100] sm:$0xff]
        %v1467 = vld [vmem:[%s1 + $0x108] sm:$0xff]
        %v1468 = vld [vmem:[%s1 + $0x110] sm:$0xff]
        %v1469 = vld [vmem:[%s1 + $0x118] sm:$0xff]
        %v1470 = vld [vmem:[%s1 + $0x120] sm:$0xff]
        %v1471 = vld [vmem:[%s1 + $0x128] sm:$0xff]
        %v1472 = vld [vmem:[%s1 + $0x130] sm:$0xff]
        %v1473 = vld [vmem:[%s1 + $0x138] sm:$0xff]
        %v1474 = vld [vmem:[%s1 + $0x140] sm:$0xff]
        %v1475 = vld [vmem:[%s1 + $0x148] sm:$0xff]
        %v1476 = vld [vmem:[%s1 + $0x150] sm:$0xff]
        %v1477 = vld [vmem:[%s1 + $0x158] sm:$0xff]
        %v1478 = vld [vmem:[%s1 + $0x160] sm:$0xff]
        %v1479 = vld [vmem:[%s1 + $0x168] sm:$0xff]
        %v1480 = vld [vmem:[%s1 + $0x170] sm:$0xff]
        %v1481 = vld [vmem:[%s1 + $0x178] sm:$0xff]
        %v1482 = vcombine.low %v605, %v606
        %v1483 = vcombine.high %v605, %v606
        %v1484 = vcombine.low %v607, %v608
        %v1485 = vcombine.high %v607, %v608
        %v1487 = vunpack.c.l.s4 1983009808
        %v1488 = vunpack.c.0.s8 %v1487
        %v1489 = vlaneseq
        %v1490 = vshrl.u32 %v1489, 7
        %v1491 = vsub.s32 %v1488, %v1490
        %v1492 = vrot.slane %v1482, %v1491
        %v1494 = vunpack.c.l.s4 1983009808
        %v1495 = vunpack.c.0.s8 %v1494
        %v1496 = vlaneseq
        %v1497 = vshrl.u32 %v1496, 7
        %v1498 = vsub.s32 %v1495, %v1497
        %v1499 = vrot.slane %v1483, %v1498
        %v1501 = vunpack.c.l.s4 1983009808
        %v1502 = vunpack.c.0.s8 %v1501
        %v1503 = vlaneseq
        %v1504 = vshrl.u32 %v1503, 7
        %v1505 = vsub.s32 %v1502, %v1504
        %v1506 = vrot.slane %v1484, %v1505
        %v1508 = vunpack.c.l.s4 1983009808
        %v1509 = vunpack.c.0.s8 %v1508
        %v1510 = vlaneseq
        %v1511 = vshrl.u32 %v1510, 7
        %v1512 = vsub.s32 %v1509, %v1511
        %v1513 = vrot.slane %v1485, %v1512
        %v1514 = vcombine.low %v1492, %v1506
        %v1515 = vcombine.high %v1492, %v1506
        %v1516 = vcombine.low %v1499, %v1513
        %v1517 = vcombine.low %v640, %v641
        %v1518 = vcombine.high %v640, %v641
        %v1519 = vcombine.low %v642, %v643
        %v1520 = vcombine.high %v642, %v643
        %v1522 = vunpack.c.l.s4 1983009808
        %v1523 = vunpack.c.0.s8 %v1522
        %v1524 = vlaneseq
        %v1525 = vshrl.u32 %v1524, 7
        %v1526 = vsub.s32 %v1523, %v1525
        %v1527 = vrot.slane %v1517, %v1526
        %v1529 = vunpack.c.l.s4 1983009808
        %v1530 = vunpack.c.0.s8 %v1529
        %v1531 = vlaneseq
        %v1532 = vshrl.u32 %v1531, 7
        %v1533 = vsub.s32 %v1530, %v1532
        %v1534 = vrot.slane %v1518, %v1533
        %v1536 = vunpack.c.l.s4 1983009808
        %v1537 = vunpack.c.0.s8 %v1536
        %v1538 = vlaneseq
        %v1539 = vshrl.u32 %v1538, 7
        %v1540 = vsub.s32 %v1537, %v1539
        %v1541 = vrot.slane %v1519, %v1540
        %v1543 = vunpack.c.l.s4 1983009808
        %v1544 = vunpack.c.0.s8 %v1543
        %v1545 = vlaneseq
        %v1546 = vshrl.u32 %v1545, 7
        %v1547 = vsub.s32 %v1544, %v1546
        %v1548 = vrot.slane %v1520, %v1547
        %v1549 = vcombine.low %v1527, %v1541
        %v1550 = vcombine.high %v1527, %v1541
        %v1551 = vcombine.low %v1534, %v1548
        %v1552 = vcombine.low %v659, %v691
        %v1553 = vcombine.high %v659, %v691
        %v1554 = vcombine.low %v692, %v693
        %v1555 = vcombine.high %v692, %v693
        %v1557 = vunpack.c.l.s4 1983009808
        %v1558 = vunpack.c.0.s8 %v1557
        %v1559 = vlaneseq
        %v1560 = vshrl.u32 %v1559, 7
        %v1561 = vsub.s32 %v1558, %v1560
        %v1562 = vrot.slane %v1552, %v1561
        %v1564 = vunpack.c.l.s4 1983009808
        %v1565 = vunpack.c.0.s8 %v1564
        %v1566 = vlaneseq
        %v1567 = vshrl.u32 %v1566, 7
        %v1568 = vsub.s32 %v1565, %v1567
        %v1569 = vrot.slane %v1553, %v1568
        %v1571 = vunpack.c.l.s4 1983009808
        %v1572 = vunpack.c.0.s8 %v1571
        %v1573 = vlaneseq
        %v1574 = vshrl.u32 %v1573, 7
        %v1575 = vsub.s32 %v1572, %v1574
        %v1576 = vrot.slane %v1554, %v1575
        %v1578 = vunpack.c.l.s4 1983009808
        %v1579 = vunpack.c.0.s8 %v1578
        %v1580 = vlaneseq
        %v1581 = vshrl.u32 %v1580, 7
        %v1582 = vsub.s32 %v1579, %v1581
        %v1583 = vrot.slane %v1555, %v1582
        %v1584 = vcombine.low %v1562, %v1576
        %v1585 = vcombine.high %v1562, %v1576
        %v1586 = vcombine.low %v1569, %v1583
        %v1587 = vcombine.low %v694, %v726
        %v1588 = vcombine.high %v694, %v726
        %v1589 = vcombine.low %v727, %v728
        %v1590 = vcombine.high %v727, %v728
        %v1592 = vunpack.c.l.s4 1983009808
        %v1593 = vunpack.c.0.s8 %v1592
        %v1594 = vlaneseq
        %v1595 = vshrl.u32 %v1594, 7
        %v1596 = vsub.s32 %v1593, %v1595
        %v1597 = vrot.slane %v1587, %v1596
        %v1599 = vunpack.c.l.s4 1983009808
        %v1600 = vunpack.c.0.s8 %v1599
        %v1601 = vlaneseq
        %v1602 = vshrl.u32 %v1601, 7
        %v1603 = vsub.s32 %v1600, %v1602
        %v1604 = vrot.slane %v1588, %v1603
        %v1606 = vunpack.c.l.s4 1983009808
        %v1607 = vunpack.c.0.s8 %v1606
        %v1608 = vlaneseq
        %v1609 = vshrl.u32 %v1608, 7
        %v1610 = vsub.s32 %v1607, %v1609
        %v1611 = vrot.slane %v1589, %v1610
        %v1613 = vunpack.c.l.s4 1983009808
        %v1614 = vunpack.c.0.s8 %v1613
        %v1615 = vlaneseq
        %v1616 = vshrl.u32 %v1615, 7
        %v1617 = vsub.s32 %v1614, %v1616
        %v1618 = vrot.slane %v1590, %v1617
        %v1619 = vcombine.low %v1597, %v1611
        %v1620 = vcombine.high %v1597, %v1611
        %v1621 = vcombine.low %v1604, %v1618
        %v1622 = vcombine.low %v729, %v745
        %v1623 = vcombine.high %v729, %v745
        %v1624 = vcombine.low %v777, %v778
        %v1625 = vcombine.high %v777, %v778
        %v1627 = vunpack.c.l.s4 1983009808
        %v1628 = vunpack.c.0.s8 %v1627
        %v1629 = vlaneseq
        %v1630 = vshrl.u32 %v1629, 7
        %v1631 = vsub.s32 %v1628, %v1630
        %v1632 = vrot.slane %v1622, %v1631
        %v1634 = vunpack.c.l.s4 1983009808
        %v1635 = vunpack.c.0.s8 %v1634
        %v1636 = vlaneseq
        %v1637 = vshrl.u32 %v1636, 7
        %v1638 = vsub.s32 %v1635, %v1637
        %v1639 = vrot.slane %v1623, %v1638
        %v1641 = vunpack.c.l.s4 1983009808
        %v1642 = vunpack.c.0.s8 %v1641
        %v1643 = vlaneseq
        %v1644 = vshrl.u32 %v1643, 7
        %v1645 = vsub.s32 %v1642, %v1644
        %v1646 = vrot.slane %v1624, %v1645
        %v1648 = vunpack.c.l.s4 1983009808
        %v1649 = vunpack.c.0.s8 %v1648
        %v1650 = vlaneseq
        %v1651 = vshrl.u32 %v1650, 7
        %v1652 = vsub.s32 %v1649, %v1651
        %v1653 = vrot.slane %v1625, %v1652
        %v1654 = vcombine.low %v1632, %v1646
        %v1655 = vcombine.high %v1632, %v1646
        %v1656 = vcombine.low %v1639, %v1653
        %v1657 = vcombine.low %v779, %v780
        %v1658 = vcombine.high %v779, %v780
        %v1659 = vcombine.low %v812, %v813
        %v1660 = vcombine.high %v812, %v813
        %v1662 = vunpack.c.l.s4 1983009808
        %v1663 = vunpack.c.0.s8 %v1662
        %v1664 = vlaneseq
        %v1665 = vshrl.u32 %v1664, 7
        %v1666 = vsub.s32 %v1663, %v1665
        %v1667 = vrot.slane %v1657, %v1666
        %v1669 = vunpack.c.l.s4 1983009808
        %v1670 = vunpack.c.0.s8 %v1669
        %v1671 = vlaneseq
        %v1672 = vshrl.u32 %v1671, 7
        %v1673 = vsub.s32 %v1670, %v1672
        %v1674 = vrot.slane %v1658, %v1673
        %v1676 = vunpack.c.l.s4 1983009808
        %v1677 = vunpack.c.0.s8 %v1676
        %v1678 = vlaneseq
        %v1679 = vshrl.u32 %v1678, 7
        %v1680 = vsub.s32 %v1677, %v1679
        %v1681 = vrot.slane %v1659, %v1680
        %v1683 = vunpack.c.l.s4 1983009808
        %v1684 = vunpack.c.0.s8 %v1683
        %v1685 = vlaneseq
        %v1686 = vshrl.u32 %v1685, 7
        %v1687 = vsub.s32 %v1684, %v1686
        %v1688 = vrot.slane %v1660, %v1687
        %v1689 = vcombine.low %v1667, %v1681
        %v1690 = vcombine.high %v1667, %v1681
        %v1691 = vcombine.low %v1674, %v1688
        %v1692 = vcombine.low %v814, %v815
        %v1693 = vcombine.high %v814, %v815
        %v1694 = vcombine.low %v831, %v863
        %v1695 = vcombine.high %v831, %v863
        %v1697 = vunpack.c.l.s4 1983009808
        %v1698 = vunpack.c.0.s8 %v1697
        %v1699 = vlaneseq
        %v1700 = vshrl.u32 %v1699, 7
        %v1701 = vsub.s32 %v1698, %v1700
        %v1702 = vrot.slane %v1692, %v1701
        %v1704 = vunpack.c.l.s4 1983009808
        %v1705 = vunpack.c.0.s8 %v1704
        %v1706 = vlaneseq
        %v1707 = vshrl.u32 %v1706, 7
        %v1708 = vsub.s32 %v1705, %v1707
        %v1709 = vrot.slane %v1693, %v1708
        %v1711 = vunpack.c.l.s4 1983009808
        %v1712 = vunpack.c.0.s8 %v1711
        %v1713 = vlaneseq
        %v1714 = vshrl.u32 %v1713, 7
        %v1715 = vsub.s32 %v1712, %v1714
        %v1716 = vrot.slane %v1694, %v1715
        %v1718 = vunpack.c.l.s4 1983009808
        %v1719 = vunpack.c.0.s8 %v1718
        %v1720 = vlaneseq
        %v1721 = vshrl.u32 %v1720, 7
        %v1722 = vsub.s32 %v1719, %v1721
        %v1723 = vrot.slane %v1695, %v1722
        %v1724 = vcombine.low %v1702, %v1716
        %v1725 = vcombine.high %v1702, %v1716
        %v1726 = vcombine.low %v1709, %v1723
        %v1727 = vcombine.low %v864, %v865
        %v1728 = vcombine.high %v864, %v865
        %v1729 = vcombine.low %v866, %v898
        %v1730 = vcombine.high %v866, %v898
        %v1732 = vunpack.c.l.s4 1983009808
        %v1733 = vunpack.c.0.s8 %v1732
        %v1734 = vlaneseq
        %v1735 = vshrl.u32 %v1734, 7
        %v1736 = vsub.s32 %v1733, %v1735
        %v1737 = vrot.slane %v1727, %v1736
        %v1739 = vunpack.c.l.s4 1983009808
        %v1740 = vunpack.c.0.s8 %v1739
        %v1741 = vlaneseq
        %v1742 = vshrl.u32 %v1741, 7
        %v1743 = vsub.s32 %v1740, %v1742
        %v1744 = vrot.slane %v1728, %v1743
        %v1746 = vunpack.c.l.s4 1983009808
        %v1747 = vunpack.c.0.s8 %v1746
        %v1748 = vlaneseq
        %v1749 = vshrl.u32 %v1748, 7
        %v1750 = vsub.s32 %v1747, %v1749
        %v1751 = vrot.slane %v1729, %v1750
        %v1753 = vunpack.c.l.s4 1983009808
        %v1754 = vunpack.c.0.s8 %v1753
        %v1755 = vlaneseq
        %v1756 = vshrl.u32 %v1755, 7
        %v1757 = vsub.s32 %v1754, %v1756
        %v1758 = vrot.slane %v1730, %v1757
        %v1759 = vcombine.low %v1737, %v1751
        %v1760 = vcombine.high %v1737, %v1751
        %v1761 = vcombine.low %v1744, %v1758
        %v1762 = vcombine.low %v899, %v900
        %v1763 = vcombine.high %v899, %v900
        %v1764 = vcombine.low %v901, %v917
        %v1765 = vcombine.high %v901, %v917
        %v1767 = vunpack.c.l.s4 1983009808
        %v1768 = vunpack.c.0.s8 %v1767
        %v1769 = vlaneseq
        %v1770 = vshrl.u32 %v1769, 7
        %v1771 = vsub.s32 %v1768, %v1770
        %v1772 = vrot.slane %v1762, %v1771
        %v1774 = vunpack.c.l.s4 1983009808
        %v1775 = vunpack.c.0.s8 %v1774
        %v1776 = vlaneseq
        %v1777 = vshrl.u32 %v1776, 7
        %v1778 = vsub.s32 %v1775, %v1777
        %v1779 = vrot.slane %v1763, %v1778
        %v1781 = vunpack.c.l.s4 1983009808
        %v1782 = vunpack.c.0.s8 %v1781
        %v1783 = vlaneseq
        %v1784 = vshrl.u32 %v1783, 7
        %v1785 = vsub.s32 %v1782, %v1784
        %v1786 = vrot.slane %v1764, %v1785
        %v1788 = vunpack.c.l.s4 1983009808
        %v1789 = vunpack.c.0.s8 %v1788
        %v1790 = vlaneseq
        %v1791 = vshrl.u32 %v1790, 7
        %v1792 = vsub.s32 %v1789, %v1791
        %v1793 = vrot.slane %v1765, %v1792
        %v1794 = vcombine.low %v1772, %v1786
        %v1795 = vcombine.high %v1772, %v1786
        %v1796 = vcombine.low %v1779, %v1793
        %v1797 = vcombine.low %v949, %v950
        %v1798 = vcombine.high %v949, %v950
        %v1799 = vcombine.low %v951, %v952
        %v1800 = vcombine.high %v951, %v952
        %v1802 = vunpack.c.l.s4 1983009808
        %v1803 = vunpack.c.0.s8 %v1802
        %v1804 = vlaneseq
        %v1805 = vshrl.u32 %v1804, 7
        %v1806 = vsub.s32 %v1803, %v1805
        %v1807 = vrot.slane %v1797, %v1806
        %v1809 = vunpack.c.l.s4 1983009808
        %v1810 = vunpack.c.0.s8 %v1809
        %v1811 = vlaneseq
        %v1812 = vshrl.u32 %v1811, 7
        %v1813 = vsub.s32 %v1810, %v1812
        %v1814 = vrot.slane %v1798, %v1813
        %v1816 = vunpack.c.l.s4 1983009808
        %v1817 = vunpack.c.0.s8 %v1816
        %v1818 = vlaneseq
        %v1819 = vshrl.u32 %v1818, 7
        %v1820 = vsub.s32 %v1817, %v1819
        %v1821 = vrot.slane %v1799, %v1820
        %v1823 = vunpack.c.l.s4 1983009808
        %v1824 = vunpack.c.0.s8 %v1823
        %v1825 = vlaneseq
        %v1826 = vshrl.u32 %v1825, 7
        %v1827 = vsub.s32 %v1824, %v1826
        %v1828 = vrot.slane %v1800, %v1827
        %v1829 = vcombine.low %v1807, %v1821
        %v1830 = vcombine.high %v1807, %v1821
        %v1831 = vcombine.low %v1814, %v1828
        %v1832 = vcombine.low %v984, %v985
        %v1833 = vcombine.high %v984, %v985
        %v1834 = vcombine.low %v986, %v987
        %v1835 = vcombine.high %v986, %v987
        %v1837 = vunpack.c.l.s4 1983009808
        %v1838 = vunpack.c.0.s8 %v1837
        %v1839 = vlaneseq
        %v1840 = vshrl.u32 %v1839, 7
        %v1841 = vsub.s32 %v1838, %v1840
        %v1842 = vrot.slane %v1832, %v1841
        %v1844 = vunpack.c.l.s4 1983009808
        %v1845 = vunpack.c.0.s8 %v1844
        %v1846 = vlaneseq
        %v1847 = vshrl.u32 %v1846, 7
        %v1848 = vsub.s32 %v1845, %v1847
        %v1849 = vrot.slane %v1833, %v1848
        %v1851 = vunpack.c.l.s4 1983009808
        %v1852 = vunpack.c.0.s8 %v1851
        %v1853 = vlaneseq
        %v1854 = vshrl.u32 %v1853, 7
        %v1855 = vsub.s32 %v1852, %v1854
        %v1856 = vrot.slane %v1834, %v1855
        %v1858 = vunpack.c.l.s4 1983009808
        %v1859 = vunpack.c.0.s8 %v1858
        %v1860 = vlaneseq
        %v1861 = vshrl.u32 %v1860, 7
        %v1862 = vsub.s32 %v1859, %v1861
        %v1863 = vrot.slane %v1835, %v1862
        %v1864 = vcombine.low %v1842, %v1856
        %v1865 = vcombine.high %v1842, %v1856
        %v1866 = vcombine.low %v1849, %v1863
        %v1867 = vcombine.low %v1003, %v1035
        %v1868 = vcombine.high %v1003, %v1035
        %v1869 = vcombine.low %v1036, %v1037
        %v1870 = vcombine.high %v1036, %v1037
        %v1872 = vunpack.c.l.s4 1983009808
        %v1873 = vunpack.c.0.s8 %v1872
        %v1874 = vlaneseq
        %v1875 = vshrl.u32 %v1874, 7
        %v1876 = vsub.s32 %v1873, %v1875
        %v1877 = vrot.slane %v1867, %v1876
        %v1879 = vunpack.c.l.s4 1983009808
        %v1880 = vunpack.c.0.s8 %v1879
        %v1881 = vlaneseq
        %v1882 = vshrl.u32 %v1881, 7
        %v1883 = vsub.s32 %v1880, %v1882
        %v1884 = vrot.slane %v1868, %v1883
        %v1886 = vunpack.c.l.s4 1983009808
        %v1887 = vunpack.c.0.s8 %v1886
        %v1888 = vlaneseq
        %v1889 = vshrl.u32 %v1888, 7
        %v1890 = vsub.s32 %v1887, %v1889
        %v1891 = vrot.slane %v1869, %v1890
        %v1893 = vunpack.c.l.s4 1983009808
        %v1894 = vunpack.c.0.s8 %v1893
        %v1895 = vlaneseq
        %v1896 = vshrl.u32 %v1895, 7
        %v1897 = vsub.s32 %v1894, %v1896
        %v1898 = vrot.slane %v1870, %v1897
        %v1899 = vcombine.low %v1877, %v1891
        %v1900 = vcombine.high %v1877, %v1891
        %v1901 = vcombine.low %v1884, %v1898
        %v1902 = vcombine.low %v1038, %v1070
        %v1903 = vcombine.high %v1038, %v1070
        %v1904 = vcombine.low %v1071, %v1072
        %v1905 = vcombine.high %v1071, %v1072
        %v1907 = vunpack.c.l.s4 1983009808
        %v1908 = vunpack.c.0.s8 %v1907
        %v1909 = vlaneseq
        %v1910 = vshrl.u32 %v1909, 7
        %v1911 = vsub.s32 %v1908, %v1910
        %v1912 = vrot.slane %v1902, %v1911
        %v1914 = vunpack.c.l.s4 1983009808
        %v1915 = vunpack.c.0.s8 %v1914
        %v1916 = vlaneseq
        %v1917 = vshrl.u32 %v1916, 7
        %v1918 = vsub.s32 %v1915, %v1917
        %v1919 = vrot.slane %v1903, %v1918
        %v1921 = vunpack.c.l.s4 1983009808
        %v1922 = vunpack.c.0.s8 %v1921
        %v1923 = vlaneseq
        %v1924 = vshrl.u32 %v1923, 7
        %v1925 = vsub.s32 %v1922, %v1924
        %v1926 = vrot.slane %v1904, %v1925
        %v1928 = vunpack.c.l.s4 1983009808
        %v1929 = vunpack.c.0.s8 %v1928
        %v1930 = vlaneseq
        %v1931 = vshrl.u32 %v1930, 7
        %v1932 = vsub.s32 %v1929, %v1931
        %v1933 = vrot.slane %v1905, %v1932
        %v1934 = vcombine.low %v1912, %v1926
        %v1935 = vcombine.high %v1912, %v1926
        %v1936 = vcombine.low %v1919, %v1933
        %v1937 = vcombine.low %v1073, %v1089
        %v1938 = vcombine.high %v1073, %v1089
        %v1939 = vcombine.low %v1121, %v1122
        %v1940 = vcombine.high %v1121, %v1122
        %v1942 = vunpack.c.l.s4 1983009808
        %v1943 = vunpack.c.0.s8 %v1942
        %v1944 = vlaneseq
        %v1945 = vshrl.u32 %v1944, 7
        %v1946 = vsub.s32 %v1943, %v1945
        %v1947 = vrot.slane %v1937, %v1946
        %v1949 = vunpack.c.l.s4 1983009808
        %v1950 = vunpack.c.0.s8 %v1949
        %v1951 = vlaneseq
        %v1952 = vshrl.u32 %v1951, 7
        %v1953 = vsub.s32 %v1950, %v1952
        %v1954 = vrot.slane %v1938, %v1953
        %v1956 = vunpack.c.l.s4 1983009808
        %v1957 = vunpack.c.0.s8 %v1956
        %v1958 = vlaneseq
        %v1959 = vshrl.u32 %v1958, 7
        %v1960 = vsub.s32 %v1957, %v1959
        %v1961 = vrot.slane %v1939, %v1960
        %v1963 = vunpack.c.l.s4 1983009808
        %v1964 = vunpack.c.0.s8 %v1963
        %v1965 = vlaneseq
        %v1966 = vshrl.u32 %v1965, 7
        %v1967 = vsub.s32 %v1964, %v1966
        %v1968 = vrot.slane %v1940, %v1967
        %v1969 = vcombine.low %v1947, %v1961
        %v1970 = vcombine.high %v1947, %v1961
        %v1971 = vcombine.low %v1954, %v1968
        %v1972 = vcombine.low %v1123, %v1124
        %v1973 = vcombine.high %v1123, %v1124
        %v1974 = vcombine.low %v1156, %v1157
        %v1975 = vcombine.high %v1156, %v1157
        %v1977 = vunpack.c.l.s4 1983009808
        %v1978 = vunpack.c.0.s8 %v1977
        %v1979 = vlaneseq
        %v1980 = vshrl.u32 %v1979, 7
        %v1981 = vsub.s32 %v1978, %v1980
        %v1982 = vrot.slane %v1972, %v1981
        %v1984 = vunpack.c.l.s4 1983009808
        %v1985 = vunpack.c.0.s8 %v1984
        %v1986 = vlaneseq
        %v1987 = vshrl.u32 %v1986, 7
        %v1988 = vsub.s32 %v1985, %v1987
        %v1989 = vrot.slane %v1973, %v1988
        %v1991 = vunpack.c.l.s4 1983009808
        %v1992 = vunpack.c.0.s8 %v1991
        %v1993 = vlaneseq
        %v1994 = vshrl.u32 %v1993, 7
        %v1995 = vsub.s32 %v1992, %v1994
        %v1996 = vrot.slane %v1974, %v1995
        %v1998 = vunpack.c.l.s4 1983009808
        %v1999 = vunpack.c.0.s8 %v1998
        %v2000 = vlaneseq
        %v2001 = vshrl.u32 %v2000, 7
        %v2002 = vsub.s32 %v1999, %v2001
        %v2003 = vrot.slane %v1975, %v2002
        %v2004 = vcombine.low %v1982, %v1996
        %v2005 = vcombine.high %v1982, %v1996
        %v2006 = vcombine.low %v1989, %v2003
        %v2007 = vcombine.low %v1158, %v1159
        %v2008 = vcombine.high %v1158, %v1159
        %v2009 = vcombine.low %v1175, %v1207
        %v2010 = vcombine.high %v1175, %v1207
        %v2012 = vunpack.c.l.s4 1983009808
        %v2013 = vunpack.c.0.s8 %v2012
        %v2014 = vlaneseq
        %v2015 = vshrl.u32 %v2014, 7
        %v2016 = vsub.s32 %v2013, %v2015
        %v2017 = vrot.slane %v2007, %v2016
        %v2019 = vunpack.c.l.s4 1983009808
        %v2020 = vunpack.c.0.s8 %v2019
        %v2021 = vlaneseq
        %v2022 = vshrl.u32 %v2021, 7
        %v2023 = vsub.s32 %v2020, %v2022
        %v2024 = vrot.slane %v2008, %v2023
        %v2026 = vunpack.c.l.s4 1983009808
        %v2027 = vunpack.c.0.s8 %v2026
        %v2028 = vlaneseq
        %v2029 = vshrl.u32 %v2028, 7
        %v2030 = vsub.s32 %v2027, %v2029
        %v2031 = vrot.slane %v2009, %v2030
        %v2033 = vunpack.c.l.s4 1983009808
        %v2034 = vunpack.c.0.s8 %v2033
        %v2035 = vlaneseq
        %v2036 = vshrl.u32 %v2035, 7
        %v2037 = vsub.s32 %v2034, %v2036
        %v2038 = vrot.slane %v2010, %v2037
        %v2039 = vcombine.low %v2017, %v2031
        %v2040 = vcombine.high %v2017, %v2031
        %v2041 = vcombine.low %v2024, %v2038
        %v2042 = vcombine.low %v1208, %v1209
        %v2043 = vcombine.high %v1208, %v1209
        %v2044 = vcombine.low %v1210, %v1242
        %v2045 = vcombine.high %v1210, %v1242
        %v2047 = vunpack.c.l.s4 1983009808
        %v2048 = vunpack.c.0.s8 %v2047
        %v2049 = vlaneseq
        %v2050 = vshrl.u32 %v2049, 7
        %v2051 = vsub.s32 %v2048, %v2050
        %v2052 = vrot.slane %v2042, %v2051
        %v2054 = vunpack.c.l.s4 1983009808
        %v2055 = vunpack.c.0.s8 %v2054
        %v2056 = vlaneseq
        %v2057 = vshrl.u32 %v2056, 7
        %v2058 = vsub.s32 %v2055, %v2057
        %v2059 = vrot.slane %v2043, %v2058
        %v2061 = vunpack.c.l.s4 1983009808
        %v2062 = vunpack.c.0.s8 %v2061
        %v2063 = vlaneseq
        %v2064 = vshrl.u32 %v2063, 7
        %v2065 = vsub.s32 %v2062, %v2064
        %v2066 = vrot.slane %v2044, %v2065
        %v2068 = vunpack.c.l.s4 1983009808
        %v2069 = vunpack.c.0.s8 %v2068
        %v2070 = vlaneseq
        %v2071 = vshrl.u32 %v2070, 7
        %v2072 = vsub.s32 %v2069, %v2071
        %v2073 = vrot.slane %v2045, %v2072
        %v2074 = vcombine.low %v2052, %v2066
        %v2075 = vcombine.high %v2052, %v2066
        %v2076 = vcombine.low %v2059, %v2073
        %v2077 = vcombine.low %v1243, %v1244
        %v2078 = vcombine.high %v1243, %v1244
        %v2079 = vcombine.low %v1245, %v1261
        %v2080 = vcombine.high %v1245, %v1261
        %v2082 = vunpack.c.l.s4 1983009808
        %v2083 = vunpack.c.0.s8 %v2082
        %v2084 = vlaneseq
        %v2085 = vshrl.u32 %v2084, 7
        %v2086 = vsub.s32 %v2083, %v2085
        %v2087 = vrot.slane %v2077, %v2086
        %v2089 = vunpack.c.l.s4 1983009808
        %v2090 = vunpack.c.0.s8 %v2089
        %v2091 = vlaneseq
        %v2092 = vshrl.u32 %v2091, 7
        %v2093 = vsub.s32 %v2090, %v2092
        %v2094 = vrot.slane %v2078, %v2093
        %v2096 = vunpack.c.l.s4 1983009808
        %v2097 = vunpack.c.0.s8 %v2096
        %v2098 = vlaneseq
        %v2099 = vshrl.u32 %v2098, 7
        %v2100 = vsub.s32 %v2097, %v2099
        %v2101 = vrot.slane %v2079, %v2100
        %v2103 = vunpack.c.l.s4 1983009808
        %v2104 = vunpack.c.0.s8 %v2103
        %v2105 = vlaneseq
        %v2106 = vshrl.u32 %v2105, 7
        %v2107 = vsub.s32 %v2104, %v2106
        %v2108 = vrot.slane %v2080, %v2107
        %v2109 = vcombine.low %v2087, %v2101
        %v2110 = vcombine.high %v2087, %v2101
        %v2111 = vcombine.low %v2094, %v2108
        %v2112 = vcombine.low %v1293, %v1294
        %v2113 = vcombine.high %v1293, %v1294
        %v2114 = vcombine.low %v1295, %v1296
        %v2115 = vcombine.high %v1295, %v1296
        %v2117 = vunpack.c.l.s4 1983009808
        %v2118 = vunpack.c.0.s8 %v2117
        %v2119 = vlaneseq
        %v2120 = vshrl.u32 %v2119, 7
        %v2121 = vsub.s32 %v2118, %v2120
        %v2122 = vrot.slane %v2112, %v2121
        %v2124 = vunpack.c.l.s4 1983009808
        %v2125 = vunpack.c.0.s8 %v2124
        %v2126 = vlaneseq
        %v2127 = vshrl.u32 %v2126, 7
        %v2128 = vsub.s32 %v2125, %v2127
        %v2129 = vrot.slane %v2113, %v2128
        %v2131 = vunpack.c.l.s4 1983009808
        %v2132 = vunpack.c.0.s8 %v2131
        %v2133 = vlaneseq
        %v2134 = vshrl.u32 %v2133, 7
        %v2135 = vsub.s32 %v2132, %v2134
        %v2136 = vrot.slane %v2114, %v2135
        %v2138 = vunpack.c.l.s4 1983009808
        %v2139 = vunpack.c.0.s8 %v2138
        %v2140 = vlaneseq
        %v2141 = vshrl.u32 %v2140, 7
        %v2142 = vsub.s32 %v2139, %v2141
        %v2143 = vrot.slane %v2115, %v2142
        %v2144 = vcombine.low %v2122, %v2136
        %v2145 = vcombine.high %v2122, %v2136
        %v2146 = vcombine.low %v2129, %v2143
        %v2147 = vcombine.low %v1328, %v1329
        %v2148 = vcombine.high %v1328, %v1329
        %v2149 = vcombine.low %v1330, %v1331
        %v2150 = vcombine.high %v1330, %v1331
        %v2152 = vunpack.c.l.s4 1983009808
        %v2153 = vunpack.c.0.s8 %v2152
        %v2154 = vlaneseq
        %v2155 = vshrl.u32 %v2154, 7
        %v2156 = vsub.s32 %v2153, %v2155
        %v2157 = vrot.slane %v2147, %v2156
        %v2159 = vunpack.c.l.s4 1983009808
        %v2160 = vunpack.c.0.s8 %v2159
        %v2161 = vlaneseq
        %v2162 = vshrl.u32 %v2161, 7
        %v2163 = vsub.s32 %v2160, %v2162
        %v2164 = vrot.slane %v2148, %v2163
        %v2166 = vunpack.c.l.s4 1983009808
        %v2167 = vunpack.c.0.s8 %v2166
        %v2168 = vlaneseq
        %v2169 = vshrl.u32 %v2168, 7
        %v2170 = vsub.s32 %v2167, %v2169
        %v2171 = vrot.slane %v2149, %v2170
        %v2173 = vunpack.c.l.s4 1983009808
        %v2174 = vunpack.c.0.s8 %v2173
        %v2175 = vlaneseq
        %v2176 = vshrl.u32 %v2175, 7
        %v2177 = vsub.s32 %v2174, %v2176
        %v2178 = vrot.slane %v2150, %v2177
        %v2179 = vcombine.low %v2157, %v2171
        %v2180 = vcombine.high %v2157, %v2171
        %v2181 = vcombine.low %v2164, %v2178
        %v2182 = vcombine.low %v1347, %v1379
        %v2183 = vcombine.high %v1347, %v1379
        %v2184 = vcombine.low %v1380, %v1381
        %v2185 = vcombine.high %v1380, %v1381
        %v2187 = vunpack.c.l.s4 1983009808
        %v2188 = vunpack.c.0.s8 %v2187
        %v2189 = vlaneseq
        %v2190 = vshrl.u32 %v2189, 7
        %v2191 = vsub.s32 %v2188, %v2190
        %v2192 = vrot.slane %v2182, %v2191
        %v2194 = vunpack.c.l.s4 1983009808
        %v2195 = vunpack.c.0.s8 %v2194
        %v2196 = vlaneseq
        %v2197 = vshrl.u32 %v2196, 7
        %v2198 = vsub.s32 %v2195, %v2197
        %v2199 = vrot.slane %v2183, %v2198
        %v2201 = vunpack.c.l.s4 1983009808
        %v2202 = vunpack.c.0.s8 %v2201
        %v2203 = vlaneseq
        %v2204 = vshrl.u32 %v2203, 7
        %v2205 = vsub.s32 %v2202, %v2204
        %v2206 = vrot.slane %v2184, %v2205
        %v2208 = vunpack.c.l.s4 1983009808
        %v2209 = vunpack.c.0.s8 %v2208
        %v2210 = vlaneseq
        %v2211 = vshrl.u32 %v2210, 7
        %v2212 = vsub.s32 %v2209, %v2211
        %v2213 = vrot.slane %v2185, %v2212
        %v2214 = vcombine.low %v2192, %v2206
        %v2215 = vcombine.high %v2192, %v2206
        %v2216 = vcombine.low %v2199, %v2213
        %v2217 = vcombine.low %v1382, %v1414
        %v2218 = vcombine.high %v1382, %v1414
        %v2219 = vcombine.low %v1415, %v1416
        %v2220 = vcombine.high %v1415, %v1416
        %v2222 = vunpack.c.l.s4 1983009808
        %v2223 = vunpack.c.0.s8 %v2222
        %v2224 = vlaneseq
        %v2225 = vshrl.u32 %v2224, 7
        %v2226 = vsub.s32 %v2223, %v2225
        %v2227 = vrot.slane %v2217, %v2226
        %v2229 = vunpack.c.l.s4 1983009808
        %v2230 = vunpack.c.0.s8 %v2229
        %v2231 = vlaneseq
        %v2232 = vshrl.u32 %v2231, 7
        %v2233 = vsub.s32 %v2230, %v2232
        %v2234 = vrot.slane %v2218, %v2233
        %v2236 = vunpack.c.l.s4 1983009808
        %v2237 = vunpack.c.0.s8 %v2236
        %v2238 = vlaneseq
        %v2239 = vshrl.u32 %v2238, 7
        %v2240 = vsub.s32 %v2237, %v2239
        %v2241 = vrot.slane %v2219, %v2240
        %v2243 = vunpack.c.l.s4 1983009808
        %v2244 = vunpack.c.0.s8 %v2243
        %v2245 = vlaneseq
        %v2246 = vshrl.u32 %v2245, 7
        %v2247 = vsub.s32 %v2244, %v2246
        %v2248 = vrot.slane %v2220, %v2247
        %v2249 = vcombine.low %v2227, %v2241
        %v2250 = vcombine.high %v2227, %v2241
        %v2251 = vcombine.low %v2234, %v2248
        %v2252 = vcombine.low %v1417, %v1433
        %v2253 = vcombine.high %v1417, %v1433
        %v2255 = vunpack.c.l.s4 1983009808
        %v2256 = vunpack.c.0.s8 %v2255
        %v2257 = vlaneseq
        %v2258 = vshrl.u32 %v2257, 7
        %v2259 = vsub.s32 %v2256, %v2258
        %v2260 = vrot.slane %v2252, %v2259
        %v2262 = vunpack.c.l.s4 1983009808
        %v2263 = vunpack.c.0.s8 %v2262
        %v2264 = vlaneseq
        %v2265 = vshrl.u32 %v2264, 7
        %v2266 = vsub.s32 %v2263, %v2265
        %v2267 = vrot.slane %v2253, %v2266
        %v2268 = vcombine.high %v2260, %v2260
        %2338 = vmatprep.subr.mxu0 0.0
        %2339 = vmatpush1.msra.mxu0 %v1434
        %2340 = vmatprep.subr.mxu0 0.0
        %2341 = vmatpush1.msra.mxu0 %v1435
        %2342 = vmatprep.subr.mxu0 0.0
        %2343 = vmatpush1.msra.mxu0 %v1436
        %2344 = vmatprep.subr.mxu0 0.0
        %2345 = vmatpush1.msra.mxu0 %v1437
        %2346 = vmatprep.subr.mxu0 0.0
        %2347 = vmatpush1.msra.mxu0 %v1438
        %2348 = vmatprep.subr.mxu0 0.0
        %2349 = vmatpush1.msra.mxu0 %v1439
        %2350 = vmatprep.subr.mxu0 0.0
        %2351 = vmatpush1.msra.mxu0 %v1440
        %2352 = vmatprep.subr.mxu0 0.0
        %2353 = vmatpush1.msra.mxu0 %v1441
        %2354 = vmatprep.subr.mxu0 0.0
        %2355 = vmatpush1.msra.mxu0 %v1442
        %2356 = vmatprep.subr.mxu0 0.0
        %2357 = vmatpush1.msra.mxu0 %v1443
        %2358 = vmatprep.subr.mxu0 0.0
        %2359 = vmatpush1.msra.mxu0 %v1444
        %2360 = vmatprep.subr.mxu0 0.0
        %2361 = vmatpush1.msra.mxu0 %v1445
        %2362 = vmatprep.subr.mxu0 0.0
        %2363 = vmatpush1.msra.mxu0 %v1446
        %2364 = vmatprep.subr.mxu0 0.0
        %2365 = vmatpush1.msra.mxu0 %v1447
        %2366 = vmatprep.subr.mxu0 0.0
        %2367 = vmatpush1.msra.mxu0 %v1448
        %2368 = vmatprep.subr.mxu0 0.0
        %2369 = vmatpush1.msra.mxu0 %v1449
        %2370 = vmatprep.subr.mxu0 0.0
        %2371 = vmatpush1.msra.mxu0 %v1450
        %2372 = vmatprep.subr.mxu0 0.0
        %2373 = vmatpush1.msra.mxu0 %v1451
        %2374 = vmatprep.subr.mxu0 0.0
        %2375 = vmatpush1.msra.mxu0 %v1452
        %2376 = vmatprep.subr.mxu0 0.0
        %2377 = vmatpush1.msra.mxu0 %v1453
        %2378 = vmatprep.subr.mxu0 0.0
        %2379 = vmatpush1.msra.mxu0 %v1454
        %2380 = vmatprep.subr.mxu0 0.0
        %2381 = vmatpush1.msra.mxu0 %v1455
        %2382 = vmatprep.subr.mxu0 0.0
        %2383 = vmatpush1.msra.mxu0 %v1456
        %2384 = vmatprep.subr.mxu0 0.0
        %2385 = vmatpush1.msra.mxu0 %v1457
        %2386 = vmatprep.subr.mxu0 0.0
        %2387 = vmatpush1.msra.mxu0 %v1458
        %2388 = vmatprep.subr.mxu0 0.0
        %2389 = vmatpush1.msra.mxu0 %v1459
        %2390 = vmatprep.subr.mxu0 0.0
        %2391 = vmatpush1.msra.mxu0 %v1460
        %2392 = vmatprep.subr.mxu0 0.0
        %2393 = vmatpush1.msra.mxu0 %v1461
        %2394 = vmatprep.subr.mxu0 0.0
        %2395 = vmatpush1.msra.mxu0 %v1462
        %2396 = vmatprep.subr.mxu0 0.0
        %2397 = vmatpush1.msra.mxu0 %v1463
        %2398 = vmatprep.subr.mxu0 0.0
        %2399 = vmatpush1.msra.mxu0 %v1464
        %2400 = vmatprep.subr.mxu0 0.0
        %2401 = vmatpush1.msra.mxu0 %v1465
        %2402 = vmatprep.mubr.f32.mxu0 %v1515
        %2403 = vmatmul.mubr.f32.gmra.mrb[0].mxu0 %v1514
        %v2404 = vpop.f32.mrb[0].mxu0
        %v2405 = vadd.f32 0.0, %v2404
        %v2406 = vpop.f32.mrb[0].mxu0
        %2407 = vmatprep.mubr.f32.mxu0 %v1550
        %2408 = vmatmul.mubr.f32.gmra.mrb[0].mxu0 %v1549
        %v2409 = vpop.f32.mrb[0].mxu0
        %v2410 = vadd.f32 0.0, %v2409
        %v2411 = vpop.f32.mrb[0].mxu0
        %2412 = vmatprep.mubr.f32.mxu0 %v1585
        %2413 = vmatmul.mubr.f32.gmra.mrb[0].mxu0 %v1584
        %v2414 = vpop.f32.mrb[0].mxu0
        %v2415 = vadd.f32 0.0, %v2414
        %v2416 = vpop.f32.mrb[0].mxu0
        %2417 = vmatprep.mubr.f32.mxu0 %v1620
        %2418 = vmatmul.mubr.f32.gmra.mrb[0].mxu0 %v1619
        %v2419 = vpop.f32.mrb[0].mxu0
        %v2420 = vadd.f32 0.0, %v2419
        %v2421 = vpop.f32.mrb[0].mxu0
        %2422 = vmatprep.mubr.f32.mxu0 %v1655
        %2423 = vmatmul.mubr.f32.gmra.mrb[0].mxu0 %v1654
        %v2424 = vpop.f32.mrb[0].mxu0
        %v2425 = vadd.f32 0.0, %v2424
        %v2426 = vpop.f32.mrb[0].mxu0
        %2427 = vmatprep.mubr.f32.mxu0 %v1690
        %2428 = vmatmul.mubr.f32.gmra.mrb[0].mxu0 %v1689
        %v2429 = vpop.f32.mrb[0].mxu0
        %v2430 = vadd.f32 0.0, %v2429
        %v2431 = vpop.f32.mrb[0].mxu0
        %2432 = vmatprep.mubr.f32.mxu0 %v1725
        %2433 = vmatmul.mubr.f32.gmra.mrb[0].mxu0 %v1724
        %v2434 = vpop.f32.mrb[0].mxu0
        %v2435 = vadd.f32 0.0, %v2434
        %v2436 = vpop.f32.mrb[0].mxu0
        %2437 = vmatprep.mubr.f32.mxu0 %v1760
        %2438 = vmatmul.mubr.f32.gmra.mrb[0].mxu0 %v1759
        %v2439 = vpop.f32.mrb[0].mxu0
        %v2440 = vadd.f32 0.0, %v2439
        %v2441 = vpop.f32.mrb[0].mxu0
        %2442 = vmatprep.mubr.f32.mxu0 %v1795
        %2443 = vmatmul.mubr.f32.gmra.mrb[0].mxu0 %v1794
        %v2444 = vpop.f32.mrb[0].mxu0
        %v2445 = vadd.f32 0.0, %v2444
        %v2446 = vpop.f32.mrb[0].mxu0
        %2447 = vmatprep.mubr.f32.mxu0 %v1830
        %2448 = vmatmul.mubr.f32.gmra.mrb[0].mxu0 %v1829
        %v2449 = vpop.f32.mrb[0].mxu0
        %v2450 = vadd.f32 0.0, %v2449
        %v2451 = vpop.f32.mrb[0].mxu0
        %2452 = vmatprep.mubr.f32.mxu0 %v1865
        %2453 = vmatmul.mubr.f32.gmra.mrb[0].mxu0 %v1864
        %v2454 = vpop.f32.mrb[0].mxu0
        %v2455 = vadd.f32 0.0, %v2454
        %v2456 = vpop.f32.mrb[0].mxu0
        %2457 = vmatprep.mubr.f32.mxu0 %v1900
        %2458 = vmatmul.mubr.f32.gmra.mrb[0].mxu0 %v1899
        %v2459 = vpop.f32.mrb[0].mxu0
        %v2460 = vadd.f32 0.0, %v2459
        %v2461 = vpop.f32.mrb[0].mxu0
        %2462 = vmatprep.mubr.f32.mxu0 %v1935
        %2463 = vmatmul.mubr.f32.gmra.mrb[0].mxu0 %v1934
        %v2464 = vpop.f32.mrb[0].mxu0
        %v2465 = vadd.f32 0.0, %v2464
        %v2466 = vpop.f32.mrb[0].mxu0
        %2467 = vmatprep.mubr.f32.mxu0 %v1970
        %2468 = vmatmul.mubr.f32.gmra.mrb[0].mxu0 %v1969
        %v2469 = vpop.f32.mrb[0].mxu0
        %v2470 = vadd.f32 0.0, %v2469
        %v2471 = vpop.f32.mrb[0].mxu0
        %2472 = vmatprep.mubr.f32.mxu0 %v2005
        %2473 = vmatmul.mubr.f32.gmra.mrb[0].mxu0 %v2004
        %v2474 = vpop.f32.mrb[0].mxu0
        %v2475 = vadd.f32 0.0, %v2474
        %v2476 = vpop.f32.mrb[0].mxu0
        %2477 = vmatprep.mubr.f32.mxu0 %v2040
        %2478 = vmatmul.mubr.f32.gmra.mrb[0].mxu0 %v2039
        %v2479 = vpop.f32.mrb[0].mxu0
        %v2480 = vadd.f32 0.0, %v2479
        %v2481 = vpop.f32.mrb[0].mxu0
        %2482 = vmatprep.mubr.f32.mxu0 %v2075
        %2483 = vmatmul.mubr.f32.gmra.mrb[0].mxu0 %v2074
        %v2484 = vpop.f32.mrb[0].mxu0
        %v2485 = vadd.f32 0.0, %v2484
        %v2486 = vpop.f32.mrb[0].mxu0
        %2487 = vmatprep.mubr.f32.mxu0 %v2110
        %2488 = vmatmul.mubr.f32.gmra.mrb[0].mxu0 %v2109
        %v2489 = vpop.f32.mrb[0].mxu0
        %v2490 = vadd.f32 0.0, %v2489
        %v2491 = vpop.f32.mrb[0].mxu0
        %2492 = vmatprep.mubr.f32.mxu0 %v2145
        %2493 = vmatmul.mubr.f32.gmra.mrb[0].mxu0 %v2144
        %v2494 = vpop.f32.mrb[0].mxu0
        %v2495 = vadd.f32 0.0, %v2494
        %v2496 = vpop.f32.mrb[0].mxu0
        %2497 = vmatprep.mubr.f32.mxu0 %v2180
        %2498 = vmatmul.mubr.f32.gmra.mrb[0].mxu0 %v2179
        %v2499 = vpop.f32.mrb[0].mxu0
        %v2500 = vadd.f32 0.0, %v2499
        %v2501 = vpop.f32.mrb[0].mxu0
        %2502 = vmatprep.mubr.f32.mxu0 %v2215
        %2503 = vmatmul.mubr.f32.gmra.mrb[0].mxu0 %v2214
        %v2504 = vpop.f32.mrb[0].mxu0
        %v2505 = vadd.f32 0.0, %v2504
        %v2506 = vpop.f32.mrb[0].mxu0
        %2507 = vmatprep.mubr.f32.mxu0 %v2250
        %2508 = vmatmul.mubr.f32.gmra.mrb[0].mxu0 %v2249
        %v2509 = vpop.f32.mrb[0].mxu0
        %v2510 = vadd.f32 0.0, %v2509
        %v2511 = vpop.f32.mrb[0].mxu0
        %2512 = vmatprep.mubr.f32.mxu0 %v2268
        %2513 = vmatmul.mubr.f32.gmra.mrb[0].mxu0 %v2260
        %v2514 = vpop.f32.mrb[0].mxu0
        %v2515 = vadd.f32 0.0, %v2514
        %v2516 = vpop.f32.mrb[0].mxu0
        %2517 = vdwg.mxu0
        %2518 = vmatprep.subr.mxu0 0.0
        %2519 = vmatpush1.msra.mxu0 %v1466
        %2520 = vmatprep.subr.mxu0 0.0
        %2521 = vmatpush1.msra.mxu0 %v1467
        %2522 = vmatprep.subr.mxu0 0.0
        %2523 = vmatpush1.msra.mxu0 %v1468
        %2524 = vmatprep.subr.mxu0 0.0
        %2525 = vmatpush1.msra.mxu0 %v1469
        %2526 = vmatprep.subr.mxu0 0.0
        %2527 = vmatpush1.msra.mxu0 %v1470
        %2528 = vmatprep.subr.mxu0 0.0
        %2529 = vmatpush1.msra.mxu0 %v1471
        %2530 = vmatprep.subr.mxu0 0.0
        %2531 = vmatpush1.msra.mxu0 %v1472
        %2532 = vmatprep.subr.mxu0 0.0
        %2533 = vmatpush1.msra.mxu0 %v1473
        %2534 = vmatprep.subr.mxu0 0.0
        %2535 = vmatpush1.msra.mxu0 %v1474
        %2536 = vmatprep.subr.mxu0 0.0
        %2537 = vmatpush1.msra.mxu0 %v1475
        %2538 = vmatprep.subr.mxu0 0.0
        %2539 = vmatpush1.msra.mxu0 %v1476
        %2540 = vmatprep.subr.mxu0 0.0
        %2541 = vmatpush1.msra.mxu0 %v1477
        %2542 = vmatprep.subr.mxu0 0.0
        %2543 = vmatpush1.msra.mxu0 %v1478
        %2544 = vmatprep.subr.mxu0 0.0
        %2545 = vmatpush1.msra.mxu0 %v1479
        %2546 = vmatprep.subr.mxu0 0.0
        %2547 = vmatpush1.msra.mxu0 %v1480
        %2548 = vmatprep.subr.mxu0 0.0
        %2549 = vmatpush1.msra.mxu0 %v1481
        %2550 = vmatprep.subr.mxu0 0.0
        %2551 = vmatpush1.msra.mxu0 0.0
        %2552 = vmatprep.subr.mxu0 0.0
        %2553 = vmatpush1.msra.mxu0 0.0
        %2554 = vmatprep.subr.mxu0 0.0
        %2555 = vmatpush1.msra.mxu0 0.0
        %2556 = vmatprep.subr.mxu0 0.0
        %2557 = vmatpush1.msra.mxu0 0.0
        %2558 = vmatprep.subr.mxu0 0.0
        %2559 = vmatpush1.msra.mxu0 0.0
        %2560 = vmatprep.subr.mxu0 0.0
        %2561 = vmatpush1.msra.mxu0 0.0
        %2562 = vmatprep.subr.mxu0 0.0
        %2563 = vmatpush1.msra.mxu0 0.0
        %2564 = vmatprep.subr.mxu0 0.0
        %2565 = vmatpush1.msra.mxu0 0.0
        %2566 = vmatprep.subr.mxu0 0.0
        %2567 = vmatpush1.msra.mxu0 0.0
        %2568 = vmatprep.subr.mxu0 0.0
        %2569 = vmatpush1.msra.mxu0 0.0
        %2570 = vmatprep.subr.mxu0 0.0
        %2571 = vmatpush1.msra.mxu0 0.0
        %2572 = vmatprep.subr.mxu0 0.0
        %2573 = vmatpush1.msra.mxu0 0.0
        %2574 = vmatprep.subr.mxu0 0.0
        %2575 = vmatpush1.msra.mxu0 0.0
        %2576 = vmatprep.subr.mxu0 0.0
        %2577 = vmatpush1.msra.mxu0 0.0
        %2578 = vmatprep.subr.mxu0 0.0
        %2579 = vmatpush1.msra.mxu0 0.0
        %2580 = vmatprep.subr.mxu0 0.0
        %2581 = vmatpush1.msra.mxu0 0.0
        %2582 = vmatprep.mubr.f32.mxu0 0.0
        %2583 = vmatmul.mubr.f32.gmra.mrb[0].mxu0 %v1516
        %v2584 = vpop.f32.mrb[0].mxu0
        %v2585 = vadd.f32 %v2405, %v2584
        %v2586 = vpop.f32.mrb[0].mxu0
        %2587 = vmatprep.mubr.f32.mxu0 0.0
        %2588 = vmatmul.mubr.f32.gmra.mrb[0].mxu0 %v1551
        %v2589 = vpop.f32.mrb[0].mxu0
        %v2590 = vadd.f32 %v2410, %v2589
        %v2591 = vpop.f32.mrb[0].mxu0
        %2592 = vmatprep.mubr.f32.mxu0 0.0
        %2593 = vmatmul.mubr.f32.gmra.mrb[0].mxu0 %v1586
        %v2594 = vpop.f32.mrb[0].mxu0
        %v2595 = vadd.f32 %v2415, %v2594
        %v2596 = vpop.f32.mrb[0].mxu0
        %2597 = vmatprep.mubr.f32.mxu0 0.0
        %2598 = vmatmul.mubr.f32.gmra.mrb[0].mxu0 %v1621
        %v2599 = vpop.f32.mrb[0].mxu0
        %v2600 = vadd.f32 %v2420, %v2599
        %v2601 = vpop.f32.mrb[0].mxu0
        %2602 = vmatprep.mubr.f32.mxu0 0.0
        %2603 = vmatmul.mubr.f32.gmra.mrb[0].mxu0 %v1656
        %v2604 = vpop.f32.mrb[0].mxu0
        %v2605 = vadd.f32 %v2425, %v2604
        %v2606 = vpop.f32.mrb[0].mxu0
        %2607 = vmatprep.mubr.f32.mxu0 0.0
        %2608 = vmatmul.mubr.f32.gmra.mrb[0].mxu0 %v1691
        %v2609 = vpop.f32.mrb[0].mxu0
        %v2610 = vadd.f32 %v2430, %v2609
        %v2611 = vpop.f32.mrb[0].mxu0
        %2612 = vmatprep.mubr.f32.mxu0 0.0
        %2613 = vmatmul.mubr.f32.gmra.mrb[0].mxu0 %v1726
        %v2614 = vpop.f32.mrb[0].mxu0
        %v2615 = vadd.f32 %v2435, %v2614
        %v2616 = vpop.f32.mrb[0].mxu0
        %2617 = vmatprep.mubr.f32.mxu0 0.0
        %2618 = vmatmul.mubr.f32.gmra.mrb[0].mxu0 %v1761
        %v2619 = vpop.f32.mrb[0].mxu0
        %v2620 = vadd.f32 %v2440, %v2619
        %v2621 = vpop.f32.mrb[0].mxu0
        %2622 = vmatprep.mubr.f32.mxu0 0.0
        %2623 = vmatmul.mubr.f32.gmra.mrb[0].mxu0 %v1796
        %v2624 = vpop.f32.mrb[0].mxu0
        %v2625 = vadd.f32 %v2445, %v2624
        %v2626 = vpop.f32.mrb[0].mxu0
        %2627 = vmatprep.mubr.f32.mxu0 0.0
        %2628 = vmatmul.mubr.f32.gmra.mrb[0].mxu0 %v1831
        %v2629 = vpop.f32.mrb[0].mxu0
        %v2630 = vadd.f32 %v2450, %v2629
        %v2631 = vpop.f32.mrb[0].mxu0
        %2632 = vmatprep.mubr.f32.mxu0 0.0
        %2633 = vmatmul.mubr.f32.gmra.mrb[0].mxu0 %v1866
        %v2634 = vpop.f32.mrb[0].mxu0
        %v2635 = vadd.f32 %v2455, %v2634
        %v2636 = vpop.f32.mrb[0].mxu0
        %2637 = vmatprep.mubr.f32.mxu0 0.0
        %2638 = vmatmul.mubr.f32.gmra.mrb[0].mxu0 %v1901
        %v2639 = vpop.f32.mrb[0].mxu0
        %v2640 = vadd.f32 %v2460, %v2639
        %v2641 = vpop.f32.mrb[0].mxu0
        %2642 = vmatprep.mubr.f32.mxu0 0.0
        %2643 = vmatmul.mubr.f32.gmra.mrb[0].mxu0 %v1936
        %v2644 = vpop.f32.mrb[0].mxu0
        %v2645 = vadd.f32 %v2465, %v2644
        %v2646 = vpop.f32.mrb[0].mxu0
        %2647 = vmatprep.mubr.f32.mxu0 0.0
        %2648 = vmatmul.mubr.f32.gmra.mrb[0].mxu0 %v1971
        %v2649 = vpop.f32.mrb[0].mxu0
        %v2650 = vadd.f32 %v2470, %v2649
        %v2651 = vpop.f32.mrb[0].mxu0
        %2652 = vmatprep.mubr.f32.mxu0 0.0
        %2653 = vmatmul.mubr.f32.gmra.mrb[0].mxu0 %v2006
        %v2654 = vpop.f32.mrb[0].mxu0
        %v2655 = vadd.f32 %v2475, %v2654
        %v2656 = vpop.f32.mrb[0].mxu0
        %2657 = vmatprep.mubr.f32.mxu0 0.0
        %2658 = vmatmul.mubr.f32.gmra.mrb[0].mxu0 %v2041
        %v2659 = vpop.f32.mrb[0].mxu0
        %v2660 = vadd.f32 %v2480, %v2659
        %v2661 = vpop.f32.mrb[0].mxu0
        %2662 = vmatprep.mubr.f32.mxu0 0.0
        %2663 = vmatmul.mubr.f32.gmra.mrb[0].mxu0 %v2076
        %v2664 = vpop.f32.mrb[0].mxu0
        %v2665 = vadd.f32 %v2485, %v2664
        %v2666 = vpop.f32.mrb[0].mxu0
        %2667 = vmatprep.mubr.f32.mxu0 0.0
        %2668 = vmatmul.mubr.f32.gmra.mrb[0].mxu0 %v2111
        %v2669 = vpop.f32.mrb[0].mxu0
        %v2670 = vadd.f32 %v2490, %v2669
        %v2671 = vpop.f32.mrb[0].mxu0
        %2672 = vmatprep.mubr.f32.mxu0 0.0
        %2673 = vmatmul.mubr.f32.gmra.mrb[0].mxu0 %v2146
        %v2674 = vpop.f32.mrb[0].mxu0
        %v2675 = vadd.f32 %v2495, %v2674
        %v2676 = vpop.f32.mrb[0].mxu0
        %2677 = vmatprep.mubr.f32.mxu0 0.0
        %2678 = vmatmul.mubr.f32.gmra.mrb[0].mxu0 %v2181
        %v2679 = vpop.f32.mrb[0].mxu0
        %v2680 = vadd.f32 %v2500, %v2679
        %v2681 = vpop.f32.mrb[0].mxu0
        %2682 = vmatprep.mubr.f32.mxu0 0.0
        %2683 = vmatmul.mubr.f32.gmra.mrb[0].mxu0 %v2216
        %v2684 = vpop.f32.mrb[0].mxu0
        %v2685 = vadd.f32 %v2505, %v2684
        %v2686 = vpop.f32.mrb[0].mxu0
        %2687 = vmatprep.mubr.f32.mxu0 0.0
        %2688 = vmatmul.mubr.f32.gmra.mrb[0].mxu0 %v2251
        %v2689 = vpop.f32.mrb[0].mxu0
        %v2690 = vadd.f32 %v2510, %v2689
        %v2691 = vpop.f32.mrb[0].mxu0
        %2692 = vmatprep.mubr.f32.mxu0 0.0
        %2693 = vmatmul.mubr.f32.gmra.mrb[0].mxu0 %v2267
        %v2694 = vpop.f32.mrb[0].mxu0
        %v2695 = vadd.f32 %v2515, %v2694
        %v2696 = vpop.f32.mrb[0].mxu0
        %2697 = vdwg.mxu0
        %v2698 = vadd.f32 %v551, %v2585
        %v2699 = vadd.f32 %v552, %v2590
        %v2700 = vadd.f32 %v553, %v2595
        %v2701 = vadd.f32 %v554, %v2600
        %v2702 = vadd.f32 %v555, %v2605
        %v2703 = vadd.f32 %v556, %v2610
        %v2704 = vadd.f32 %v557, %v2615
        %v2705 = vadd.f32 %v558, %v2620
        %v2706 = vadd.f32 %v559, %v2625
        %v2707 = vadd.f32 %v560, %v2630
        %v2708 = vadd.f32 %v561, %v2635
        %v2709 = vadd.f32 %v562, %v2640
        %v2710 = vadd.f32 %v563, %v2645
        %v2711 = vadd.f32 %v564, %v2650
        %v2712 = vadd.f32 %v565, %v2655
        %v2713 = vadd.f32 %v566, %v2660
        %v2714 = vadd.f32 %v567, %v2665
        %v2715 = vadd.f32 %v568, %v2670
        %v2716 = vadd.f32 %v569, %v2675
        %v2717 = vadd.f32 %v570, %v2680
        %v2718 = vadd.f32 %v571, %v2685
        %v2719 = vadd.f32 %v572, %v2690
        %v2720 = vadd.f32 %v573, %v2695
        %2721 = vst [vmem:[#allocation4] sm:$0xff] %v2698
        %2722 = vst [vmem:[#allocation4 + $0x8] sm:$0xff] %v2699
        %2723 = vst [vmem:[#allocation4 + $0x10] sm:$0xff] %v2700
        %2724 = vst [vmem:[#allocation4 + $0x18] sm:$0xff] %v2701
        %2725 = vst [vmem:[#allocation4 + $0x20] sm:$0xff] %v2702
        %2726 = vst [vmem:[#allocation4 + $0x28] sm:$0xff] %v2703
        %2727 = vst [vmem:[#allocation4 + $0x30] sm:$0xff] %v2704
        %2728 = vst [vmem:[#allocation4 + $0x38] sm:$0xff] %v2705
        %2729 = vst [vmem:[#allocation4 + $0x40] sm:$0xff] %v2706
        %2730 = vst [vmem:[#allocation4 + $0x48] sm:$0xff] %v2707
        %2731 = vst [vmem:[#allocation4 + $0x50] sm:$0xff] %v2708
        %2732 = vst [vmem:[#allocation4 + $0x58] sm:$0xff] %v2709
        %2733 = vst [vmem:[#allocation4 + $0x60] sm:$0xff] %v2710
        %2734 = vst [vmem:[#allocation4 + $0x68] sm:$0xff] %v2711
        %2735 = vst [vmem:[#allocation4 + $0x70] sm:$0xff] %v2712
        %2736 = vst [vmem:[#allocation4 + $0x78] sm:$0xff] %v2713
        %2737 = vst [vmem:[#allocation4 + $0x80] sm:$0xff] %v2714
        %2738 = vst [vmem:[#allocation4 + $0x88] sm:$0xff] %v2715
        %2739 = vst [vmem:[#allocation4 + $0x90] sm:$0xff] %v2716
        %2740 = vst [vmem:[#allocation4 + $0x98] sm:$0xff] %v2717
        %2741 = vst [vmem:[#allocation4 + $0xa0] sm:$0xff] %v2718
        %2742 = vst [vmem:[#allocation4 + $0xa8] sm:$0xff] %v2719
        %2743 = vst [vmem:[#allocation4 + $0xb0] sm:$0xf] %v2720
        %v2747 = vrot.slane %v390, 1
        %v2748 = vrot.slane %v391, 1
        %v2749 = vsel %vm449, %v2747, %v2748
        %v2750 = vrot.slane %v392, 1
        %v2751 = vsel %vm449, %v2748, %v2750
        %v2752 = vrot.slane %v390, 2
        %v2753 = vrot.slane %v391, 2
        %v2754 = vsel %vm500, %v2752, %v2753
        %v2755 = vrot.slane %v392, 2
        %v2756 = vsel %vm500, %v2753, %v2755
        %v2757 = vld [vmem:[#allocation4] sm:$0xff]
        %v2758 = vld [vmem:[#allocation4 + $0x8] sm:$0xff]
        %v2759 = vld [vmem:[#allocation4 + $0x10] sm:$0xff]
        %v2760 = vld [vmem:[#allocation4 + $0x18] sm:$0xff]
        %v2761 = vld [vmem:[#allocation4 + $0x20] sm:$0xff]
        %v2762 = vld [vmem:[#allocation4 + $0x28] sm:$0xff]
        %v2763 = vld [vmem:[#allocation4 + $0x30] sm:$0xff]
        %v2764 = vld [vmem:[#allocation4 + $0x38] sm:$0xff]
        %v2765 = vld [vmem:[#allocation4 + $0x40] sm:$0xff]
        %v2766 = vld [vmem:[#allocation4 + $0x48] sm:$0xff]
        %v2767 = vld [vmem:[#allocation4 + $0x50] sm:$0xff]
        %v2768 = vld [vmem:[#allocation4 + $0x58] sm:$0xff]
        %v2769 = vld [vmem:[#allocation4 + $0x60] sm:$0xff]
        %v2770 = vld [vmem:[#allocation4 + $0x68] sm:$0xff]
        %v2771 = vld [vmem:[#allocation4 + $0x70] sm:$0xff]
        %v2772 = vld [vmem:[#allocation4 + $0x78] sm:$0xff]
        %v2773 = vld [vmem:[#allocation4 + $0x80] sm:$0xff]
        %v2774 = vld [vmem:[#allocation4 + $0x88] sm:$0xff]
        %v2775 = vld [vmem:[#allocation4 + $0x90] sm:$0xff]
        %v2776 = vld [vmem:[#allocation4 + $0x98] sm:$0xff]
        %v2777 = vld [vmem:[#allocation4 + $0xa0] sm:$0xff]
        %v2778 = vld [vmem:[#allocation4 + $0xa8] sm:$0xff]
        %v2779 = vld [vmem:[#allocation4 + $0xb0] sm:$0xf]
        %v2780 = vcombine.low %v390, %v2749
        %v2781 = vcombine.high %v390, %v2749
        %v2782 = vcombine.high %v2754, %v2754
        %v2784 = vunpack.c.l.s4 1983009808
        %v2785 = vunpack.c.0.s8 %v2784
        %v2786 = vlaneseq
        %v2787 = vshrl.u32 %v2786, 7
        %v2788 = vsub.s32 %v2785, %v2787
        %v2789 = vrot.slane %v2780, %v2788
        %v2791 = vunpack.c.l.s4 1983009808
        %v2792 = vunpack.c.0.s8 %v2791
        %v2793 = vlaneseq
        %v2794 = vshrl.u32 %v2793, 7
        %v2795 = vsub.s32 %v2792, %v2794
        %v2796 = vrot.slane %v2781, %v2795
        %v2798 = vunpack.c.l.s4 1983009808
        %v2799 = vunpack.c.0.s8 %v2798
        %v2800 = vlaneseq
        %v2801 = vshrl.u32 %v2800, 7
        %v2802 = vsub.s32 %v2799, %v2801
        %v2803 = vrot.slane %v2754, %v2802
        %v2805 = vunpack.c.l.s4 1983009808
        %v2806 = vunpack.c.0.s8 %v2805
        %v2807 = vlaneseq
        %v2808 = vshrl.u32 %v2807, 7
        %v2809 = vsub.s32 %v2806, %v2808
        %v2810 = vrot.slane %v2782, %v2809
        %v2811 = vcombine.low %v2789, %v2803
        %v2812 = vcombine.high %v2789, %v2803
        %v2813 = vcombine.low %v2796, %v2810
        %v2814 = vcombine.high %v2796, %v2810
        %v2815 = vcombine.low %v391, %v2751
        %v2816 = vcombine.high %v391, %v2751
        %v2817 = vcombine.high %v2756, %v2756
        %v2819 = vunpack.c.l.s4 1983009808
        %v2820 = vunpack.c.0.s8 %v2819
        %v2821 = vlaneseq
        %v2822 = vshrl.u32 %v2821, 7
        %v2823 = vsub.s32 %v2820, %v2822
        %v2824 = vrot.slane %v2815, %v2823
        %v2826 = vunpack.c.l.s4 1983009808
        %v2827 = vunpack.c.0.s8 %v2826
        %v2828 = vlaneseq
        %v2829 = vshrl.u32 %v2828, 7
        %v2830 = vsub.s32 %v2827, %v2829
        %v2831 = vrot.slane %v2816, %v2830
        %v2833 = vunpack.c.l.s4 1983009808
        %v2834 = vunpack.c.0.s8 %v2833
        %v2835 = vlaneseq
        %v2836 = vshrl.u32 %v2835, 7
        %v2837 = vsub.s32 %v2834, %v2836
        %v2838 = vrot.slane %v2756, %v2837
        %v2840 = vunpack.c.l.s4 1983009808
        %v2841 = vunpack.c.0.s8 %v2840
        %v2842 = vlaneseq
        %v2843 = vshrl.u32 %v2842, 7
        %v2844 = vsub.s32 %v2841, %v2843
        %v2845 = vrot.slane %v2817, %v2844
        %v2846 = vcombine.low %v2824, %v2838
        %v2847 = vcombine.high %v2824, %v2838
        %v2848 = vcombine.low %v2831, %v2845
        %v2849 = vcombine.high %v2831, %v2845
        %v2850 = vcombine.low %v392, %v2750
        %v2852 = vunpack.c.l.s4 1983009808
        %v2853 = vunpack.c.0.s8 %v2852
        %v2854 = vlaneseq
        %v2855 = vshrl.u32 %v2854, 7
        %v2856 = vsub.s32 %v2853, %v2855
        %v2857 = vrot.slane %v2850, %v2856
        %v2859 = vunpack.c.l.s4 1983009808
        %v2860 = vunpack.c.0.s8 %v2859
        %v2861 = vlaneseq
        %v2862 = vshrl.u32 %v2861, 7
        %v2863 = vsub.s32 %v2860, %v2862
        %v2864 = vrot.slane %v2755, %v2863
        %v2865 = vcombine.low %v2857, %v2864
        %s2866 = scalar_lea.vmem %s1, 384
        %v2867 = vld [vmem:[%s2866] sm:$0xff]
        %v2868 = vld [vmem:[%s2866 + $0x8] sm:$0xff]
        %v2869 = vld [vmem:[%s2866 + $0x10] sm:$0xff]
        %v2870 = vld [vmem:[%s2866 + $0x18] sm:$0xff]
        %v2871 = vld [vmem:[%s2866 + $0x20] sm:$0xff]
        %v2872 = vld [vmem:[%s2866 + $0x28] sm:$0xff]
        %v2873 = vld [vmem:[%s2866 + $0x30] sm:$0xff]
        %v2874 = vld [vmem:[%s2866 + $0x38] sm:$0xff]
        %v2875 = vld [vmem:[%s2866 + $0x40] sm:$0xff]
        %v2876 = vld [vmem:[%s2866 + $0x48] sm:$0xff]
        %v2877 = vld [vmem:[%s2866 + $0x50] sm:$0xff]
        %v2878 = vld [vmem:[%s2866 + $0x58] sm:$0xff]
        %v2879 = vld [vmem:[%s2866 + $0x60] sm:$0xff]
        %v2880 = vld [vmem:[%s2866 + $0x68] sm:$0xff]
        %v2881 = vld [vmem:[%s2866 + $0x70] sm:$0xff]
        %v2882 = vld [vmem:[%s2866 + $0x78] sm:$0xff]
        %v2883 = vld [vmem:[%s2866 + $0x80] sm:$0xff]
        %v2884 = vld [vmem:[%s2866 + $0x88] sm:$0xff]
        %v2885 = vld [vmem:[%s2866 + $0x90] sm:$0xff]
        %v2886 = vld [vmem:[%s2866 + $0x98] sm:$0xff]
        %v2887 = vld [vmem:[%s2866 + $0xa0] sm:$0xff]
        %v2888 = vld [vmem:[%s2866 + $0xa8] sm:$0xff]
        %v2889 = vld [vmem:[%s2866 + $0xb0] sm:$0xff]
        %v2890 = vld [vmem:[%s2866 + $0xb8] sm:$0xff]
        %v2891 = vld [vmem:[%s2866 + $0xc0] sm:$0xff]
        %v2892 = vld [vmem:[%s2866 + $0xc8] sm:$0xff]
        %v2893 = vld [vmem:[%s2866 + $0xd0] sm:$0xff]
        %v2894 = vld [vmem:[%s2866 + $0xd8] sm:$0xff]
        %v2895 = vld [vmem:[%s2866 + $0xe0] sm:$0xff]
        %v2896 = vld [vmem:[%s2866 + $0xe8] sm:$0xff]
        %v2897 = vld [vmem:[%s2866 + $0xf0] sm:$0xff]
        %v2898 = vld [vmem:[%s2866 + $0xf8] sm:$0xff]
        %v2899 = vld [vmem:[%s2866 + $0x100] sm:$0xff]
        %v2900 = vld [vmem:[%s2866 + $0x108] sm:$0xff]
        %v2901 = vld [vmem:[%s2866 + $0x110] sm:$0xff]
        %v2902 = vld [vmem:[%s2866 + $0x118] sm:$0xff]
        %v2903 = vld [vmem:[%s2866 + $0x120] sm:$0xff]
        %v2904 = vld [vmem:[%s2866 + $0x128] sm:$0xff]
        %v2905 = vld [vmem:[%s2866 + $0x130] sm:$0xff]
        %v2906 = vld [vmem:[%s2866 + $0x138] sm:$0xff]
        %v2907 = vld [vmem:[%s2866 + $0x140] sm:$0xff]
        %v2908 = vld [vmem:[%s2866 + $0x148] sm:$0xff]
        %v2909 = vld [vmem:[%s2866 + $0x150] sm:$0xff]
        %v2910 = vld [vmem:[%s2866 + $0x158] sm:$0xff]
        %v2911 = vld [vmem:[%s2866 + $0x160] sm:$0xff]
        %v2912 = vld [vmem:[%s2866 + $0x168] sm:$0xff]
        %v2913 = vld [vmem:[%s2866 + $0x170] sm:$0xff]
        %v2914 = vld [vmem:[%s2866 + $0x178] sm:$0xff]
        %v2915 = vcombine.low %v691, %v692
        %v2916 = vcombine.high %v691, %v692
        %v2917 = vcombine.low %v693, %v694
        %v2918 = vcombine.high %v693, %v694
        %v2920 = vunpack.c.l.s4 1983009808
        %v2921 = vunpack.c.0.s8 %v2920
        %v2922 = vlaneseq
        %v2923 = vshrl.u32 %v2922, 7
        %v2924 = vsub.s32 %v2921, %v2923
        %v2925 = vrot.slane %v2915, %v2924
        %v2927 = vunpack.c.l.s4 1983009808
        %v2928 = vunpack.c.0.s8 %v2927
        %v2929 = vlaneseq
        %v2930 = vshrl.u32 %v2929, 7
        %v2931 = vsub.s32 %v2928, %v2930
        %v2932 = vrot.slane %v2916, %v2931
        %v2934 = vunpack.c.l.s4 1983009808
        %v2935 = vunpack.c.0.s8 %v2934
        %v2936 = vlaneseq
        %v2937 = vshrl.u32 %v2936, 7
        %v2938 = vsub.s32 %v2935, %v2937
        %v2939 = vrot.slane %v2917, %v2938
        %v2941 = vunpack.c.l.s4 1983009808
        %v2942 = vunpack.c.0.s8 %v2941
        %v2943 = vlaneseq
        %v2944 = vshrl.u32 %v2943, 7
        %v2945 = vsub.s32 %v2942, %v2944
        %v2946 = vrot.slane %v2918, %v2945
        %v2947 = vcombine.low %v2925, %v2939
        %v2948 = vcombine.high %v2925, %v2939
        %v2949 = vcombine.low %v2932, %v2946
        %v2950 = vcombine.low %v726, %v727
        %v2951 = vcombine.high %v726, %v727
        %v2952 = vcombine.low %v728, %v729
        %v2953 = vcombine.high %v728, %v729
        %v2955 = vunpack.c.l.s4 1983009808
        %v2956 = vunpack.c.0.s8 %v2955
        %v2957 = vlaneseq
        %v2958 = vshrl.u32 %v2957, 7
        %v2959 = vsub.s32 %v2956, %v2958
        %v2960 = vrot.slane %v2950, %v2959
        %v2962 = vunpack.c.l.s4 1983009808
        %v2963 = vunpack.c.0.s8 %v2962
        %v2964 = vlaneseq
        %v2965 = vshrl.u32 %v2964, 7
        %v2966 = vsub.s32 %v2963, %v2965
        %v2967 = vrot.slane %v2951, %v2966
        %v2969 = vunpack.c.l.s4 1983009808
        %v2970 = vunpack.c.0.s8 %v2969
        %v2971 = vlaneseq
        %v2972 = vshrl.u32 %v2971, 7
        %v2973 = vsub.s32 %v2970, %v2972
        %v2974 = vrot.slane %v2952, %v2973
        %v2976 = vunpack.c.l.s4 1983009808
        %v2977 = vunpack.c.0.s8 %v2976
        %v2978 = vlaneseq
        %v2979 = vshrl.u32 %v2978, 7
        %v2980 = vsub.s32 %v2977, %v2979
        %v2981 = vrot.slane %v2953, %v2980
        %v2982 = vcombine.low %v2960, %v2974
        %v2983 = vcombine.high %v2960, %v2974
        %v2984 = vcombine.low %v2967, %v2981
        %v2985 = vcombine.low %v745, %v777
        %v2986 = vcombine.high %v745, %v777
        %v2987 = vcombine.low %v778, %v779
        %v2988 = vcombine.high %v778, %v779
        %v2990 = vunpack.c.l.s4 1983009808
        %v2991 = vunpack.c.0.s8 %v2990
        %v2992 = vlaneseq
        %v2993 = vshrl.u32 %v2992, 7
        %v2994 = vsub.s32 %v2991, %v2993
        %v2995 = vrot.slane %v2985, %v2994
        %v2997 = vunpack.c.l.s4 1983009808
        %v2998 = vunpack.c.0.s8 %v2997
        %v2999 = vlaneseq
        %v3000 = vshrl.u32 %v2999, 7
        %v3001 = vsub.s32 %v2998, %v3000
        %v3002 = vrot.slane %v2986, %v3001
        %v3004 = vunpack.c.l.s4 1983009808
        %v3005 = vunpack.c.0.s8 %v3004
        %v3006 = vlaneseq
        %v3007 = vshrl.u32 %v3006, 7
        %v3008 = vsub.s32 %v3005, %v3007
        %v3009 = vrot.slane %v2987, %v3008
        %v3011 = vunpack.c.l.s4 1983009808
        %v3012 = vunpack.c.0.s8 %v3011
        %v3013 = vlaneseq
        %v3014 = vshrl.u32 %v3013, 7
        %v3015 = vsub.s32 %v3012, %v3014
        %v3016 = vrot.slane %v2988, %v3015
        %v3017 = vcombine.low %v2995, %v3009
        %v3018 = vcombine.high %v2995, %v3009
        %v3019 = vcombine.low %v3002, %v3016
        %v3020 = vcombine.low %v780, %v812
        %v3021 = vcombine.high %v780, %v812
        %v3022 = vcombine.low %v813, %v814
        %v3023 = vcombine.high %v813, %v814
        %v3025 = vunpack.c.l.s4 1983009808
        %v3026 = vunpack.c.0.s8 %v3025
        %v3027 = vlaneseq
        %v3028 = vshrl.u32 %v3027, 7
        %v3029 = vsub.s32 %v3026, %v3028
        %v3030 = vrot.slane %v3020, %v3029
        %v3032 = vunpack.c.l.s4 1983009808
        %v3033 = vunpack.c.0.s8 %v3032
        %v3034 = vlaneseq
        %v3035 = vshrl.u32 %v3034, 7
        %v3036 = vsub.s32 %v3033, %v3035
        %v3037 = vrot.slane %v3021, %v3036
        %v3039 = vunpack.c.l.s4 1983009808
        %v3040 = vunpack.c.0.s8 %v3039
        %v3041 = vlaneseq
        %v3042 = vshrl.u32 %v3041, 7
        %v3043 = vsub.s32 %v3040, %v3042
        %v3044 = vrot.slane %v3022, %v3043
        %v3046 = vunpack.c.l.s4 1983009808
        %v3047 = vunpack.c.0.s8 %v3046
        %v3048 = vlaneseq
        %v3049 = vshrl.u32 %v3048, 7
        %v3050 = vsub.s32 %v3047, %v3049
        %v3051 = vrot.slane %v3023, %v3050
        %v3052 = vcombine.low %v3030, %v3044
        %v3053 = vcombine.high %v3030, %v3044
        %v3054 = vcombine.low %v3037, %v3051
        %v3055 = vcombine.low %v815, %v831
        %v3056 = vcombine.high %v815, %v831
        %v3057 = vcombine.low %v863, %v864
        %v3058 = vcombine.high %v863, %v864
        %v3060 = vunpack.c.l.s4 1983009808
        %v3061 = vunpack.c.0.s8 %v3060
        %v3062 = vlaneseq
        %v3063 = vshrl.u32 %v3062, 7
        %v3064 = vsub.s32 %v3061, %v3063
        %v3065 = vrot.slane %v3055, %v3064
        %v3067 = vunpack.c.l.s4 1983009808
        %v3068 = vunpack.c.0.s8 %v3067
        %v3069 = vlaneseq
        %v3070 = vshrl.u32 %v3069, 7
        %v3071 = vsub.s32 %v3068, %v3070
        %v3072 = vrot.slane %v3056, %v3071
        %v3074 = vunpack.c.l.s4 1983009808
        %v3075 = vunpack.c.0.s8 %v3074
        %v3076 = vlaneseq
        %v3077 = vshrl.u32 %v3076, 7
        %v3078 = vsub.s32 %v3075, %v3077
        %v3079 = vrot.slane %v3057, %v3078
        %v3081 = vunpack.c.l.s4 1983009808
        %v3082 = vunpack.c.0.s8 %v3081
        %v3083 = vlaneseq
        %v3084 = vshrl.u32 %v3083, 7
        %v3085 = vsub.s32 %v3082, %v3084
        %v3086 = vrot.slane %v3058, %v3085
        %v3087 = vcombine.low %v3065, %v3079
        %v3088 = vcombine.high %v3065, %v3079
        %v3089 = vcombine.low %v3072, %v3086
        %v3090 = vcombine.low %v865, %v866
        %v3091 = vcombine.high %v865, %v866
        %v3092 = vcombine.low %v898, %v899
        %v3093 = vcombine.high %v898, %v899
        %v3095 = vunpack.c.l.s4 1983009808
        %v3096 = vunpack.c.0.s8 %v3095
        %v3097 = vlaneseq
        %v3098 = vshrl.u32 %v3097, 7
        %v3099 = vsub.s32 %v3096, %v3098
        %v3100 = vrot.slane %v3090, %v3099
        %v3102 = vunpack.c.l.s4 1983009808
        %v3103 = vunpack.c.0.s8 %v3102
        %v3104 = vlaneseq
        %v3105 = vshrl.u32 %v3104, 7
        %v3106 = vsub.s32 %v3103, %v3105
        %v3107 = vrot.slane %v3091, %v3106
        %v3109 = vunpack.c.l.s4 1983009808
        %v3110 = vunpack.c.0.s8 %v3109
        %v3111 = vlaneseq
        %v3112 = vshrl.u32 %v3111, 7
        %v3113 = vsub.s32 %v3110, %v3112
        %v3114 = vrot.slane %v3092, %v3113
        %v3116 = vunpack.c.l.s4 1983009808
        %v3117 = vunpack.c.0.s8 %v3116
        %v3118 = vlaneseq
        %v3119 = vshrl.u32 %v3118, 7
        %v3120 = vsub.s32 %v3117, %v3119
        %v3121 = vrot.slane %v3093, %v3120
        %v3122 = vcombine.low %v3100, %v3114
        %v3123 = vcombine.high %v3100, %v3114
        %v3124 = vcombine.low %v3107, %v3121
        %v3125 = vcombine.low %v900, %v901
        %v3126 = vcombine.high %v900, %v901
        %v3127 = vcombine.low %v917, %v949
        %v3128 = vcombine.high %v917, %v949
        %v3130 = vunpack.c.l.s4 1983009808
        %v3131 = vunpack.c.0.s8 %v3130
        %v3132 = vlaneseq
        %v3133 = vshrl.u32 %v3132, 7
        %v3134 = vsub.s32 %v3131, %v3133
        %v3135 = vrot.slane %v3125, %v3134
        %v3137 = vunpack.c.l.s4 1983009808
        %v3138 = vunpack.c.0.s8 %v3137
        %v3139 = vlaneseq
        %v3140 = vshrl.u32 %v3139, 7
        %v3141 = vsub.s32 %v3138, %v3140
        %v3142 = vrot.slane %v3126, %v3141
        %v3144 = vunpack.c.l.s4 1983009808
        %v3145 = vunpack.c.0.s8 %v3144
        %v3146 = vlaneseq
        %v3147 = vshrl.u32 %v3146, 7
        %v3148 = vsub.s32 %v3145, %v3147
        %v3149 = vrot.slane %v3127, %v3148
        %v3151 = vunpack.c.l.s4 1983009808
        %v3152 = vunpack.c.0.s8 %v3151
        %v3153 = vlaneseq
        %v3154 = vshrl.u32 %v3153, 7
        %v3155 = vsub.s32 %v3152, %v3154
        %v3156 = vrot.slane %v3128, %v3155
        %v3157 = vcombine.low %v3135, %v3149
        %v3158 = vcombine.high %v3135, %v3149
        %v3159 = vcombine.low %v3142, %v3156
        %v3160 = vcombine.low %v950, %v951
        %v3161 = vcombine.high %v950, %v951
        %v3162 = vcombine.low %v952, %v984
        %v3163 = vcombine.high %v952, %v984
        %v3165 = vunpack.c.l.s4 1983009808
        %v3166 = vunpack.c.0.s8 %v3165
        %v3167 = vlaneseq
        %v3168 = vshrl.u32 %v3167, 7
        %v3169 = vsub.s32 %v3166, %v3168
        %v3170 = vrot.slane %v3160, %v3169
        %v3172 = vunpack.c.l.s4 1983009808
        %v3173 = vunpack.c.0.s8 %v3172
        %v3174 = vlaneseq
        %v3175 = vshrl.u32 %v3174, 7
        %v3176 = vsub.s32 %v3173, %v3175
        %v3177 = vrot.slane %v3161, %v3176
        %v3179 = vunpack.c.l.s4 1983009808
        %v3180 = vunpack.c.0.s8 %v3179
        %v3181 = vlaneseq
        %v3182 = vshrl.u32 %v3181, 7
        %v3183 = vsub.s32 %v3180, %v3182
        %v3184 = vrot.slane %v3162, %v3183
        %v3186 = vunpack.c.l.s4 1983009808
        %v3187 = vunpack.c.0.s8 %v3186
        %v3188 = vlaneseq
        %v3189 = vshrl.u32 %v3188, 7
        %v3190 = vsub.s32 %v3187, %v3189
        %v3191 = vrot.slane %v3163, %v3190
        %v3192 = vcombine.low %v3170, %v3184
        %v3193 = vcombine.high %v3170, %v3184
        %v3194 = vcombine.low %v3177, %v3191
        %v3195 = vcombine.low %v985, %v986
        %v3196 = vcombine.high %v985, %v986
        %v3197 = vcombine.low %v987, %v1003
        %v3198 = vcombine.high %v987, %v1003
        %v3200 = vunpack.c.l.s4 1983009808
        %v3201 = vunpack.c.0.s8 %v3200
        %v3202 = vlaneseq
        %v3203 = vshrl.u32 %v3202, 7
        %v3204 = vsub.s32 %v3201, %v3203
        %v3205 = vrot.slane %v3195, %v3204
        %v3207 = vunpack.c.l.s4 1983009808
        %v3208 = vunpack.c.0.s8 %v3207
        %v3209 = vlaneseq
        %v3210 = vshrl.u32 %v3209, 7
        %v3211 = vsub.s32 %v3208, %v3210
        %v3212 = vrot.slane %v3196, %v3211
        %v3214 = vunpack.c.l.s4 1983009808
        %v3215 = vunpack.c.0.s8 %v3214
        %v3216 = vlaneseq
        %v3217 = vshrl.u32 %v3216, 7
        %v3218 = vsub.s32 %v3215, %v3217
        %v3219 = vrot.slane %v3197, %v3218
        %v3221 = vunpack.c.l.s4 1983009808
        %v3222 = vunpack.c.0.s8 %v3221
        %v3223 = vlaneseq
        %v3224 = vshrl.u32 %v3223, 7
        %v3225 = vsub.s32 %v3222, %v3224
        %v3226 = vrot.slane %v3198, %v3225
        %v3227 = vcombine.low %v3205, %v3219
        %v3228 = vcombine.high %v3205, %v3219
        %v3229 = vcombine.low %v3212, %v3226
        %v3230 = vcombine.low %v1035, %v1036
        %v3231 = vcombine.high %v1035, %v1036
        %v3232 = vcombine.low %v1037, %v1038
        %v3233 = vcombine.high %v1037, %v1038
        %v3235 = vunpack.c.l.s4 1983009808
        %v3236 = vunpack.c.0.s8 %v3235
        %v3237 = vlaneseq
        %v3238 = vshrl.u32 %v3237, 7
        %v3239 = vsub.s32 %v3236, %v3238
        %v3240 = vrot.slane %v3230, %v3239
        %v3242 = vunpack.c.l.s4 1983009808
        %v3243 = vunpack.c.0.s8 %v3242
        %v3244 = vlaneseq
        %v3245 = vshrl.u32 %v3244, 7
        %v3246 = vsub.s32 %v3243, %v3245
        %v3247 = vrot.slane %v3231, %v3246
        %v3249 = vunpack.c.l.s4 1983009808
        %v3250 = vunpack.c.0.s8 %v3249
        %v3251 = vlaneseq
        %v3252 = vshrl.u32 %v3251, 7
        %v3253 = vsub.s32 %v3250, %v3252
        %v3254 = vrot.slane %v3232, %v3253
        %v3256 = vunpack.c.l.s4 1983009808
        %v3257 = vunpack.c.0.s8 %v3256
        %v3258 = vlaneseq
        %v3259 = vshrl.u32 %v3258, 7
        %v3260 = vsub.s32 %v3257, %v3259
        %v3261 = vrot.slane %v3233, %v3260
        %v3262 = vcombine.low %v3240, %v3254
        %v3263 = vcombine.high %v3240, %v3254
        %v3264 = vcombine.low %v3247, %v3261
        %v3265 = vcombine.low %v1070, %v1071
        %v3266 = vcombine.high %v1070, %v1071
        %v3267 = vcombine.low %v1072, %v1073
        %v3268 = vcombine.high %v1072, %v1073
        %v3270 = vunpack.c.l.s4 1983009808
        %v3271 = vunpack.c.0.s8 %v3270
        %v3272 = vlaneseq
        %v3273 = vshrl.u32 %v3272, 7
        %v3274 = vsub.s32 %v3271, %v3273
        %v3275 = vrot.slane %v3265, %v3274
        %v3277 = vunpack.c.l.s4 1983009808
        %v3278 = vunpack.c.0.s8 %v3277
        %v3279 = vlaneseq
        %v3280 = vshrl.u32 %v3279, 7
        %v3281 = vsub.s32 %v3278, %v3280
        %v3282 = vrot.slane %v3266, %v3281
        %v3284 = vunpack.c.l.s4 1983009808
        %v3285 = vunpack.c.0.s8 %v3284
        %v3286 = vlaneseq
        %v3287 = vshrl.u32 %v3286, 7
        %v3288 = vsub.s32 %v3285, %v3287
        %v3289 = vrot.slane %v3267, %v3288
        %v3291 = vunpack.c.l.s4 1983009808
        %v3292 = vunpack.c.0.s8 %v3291
        %v3293 = vlaneseq
        %v3294 = vshrl.u32 %v3293, 7
        %v3295 = vsub.s32 %v3292, %v3294
        %v3296 = vrot.slane %v3268, %v3295
        %v3297 = vcombine.low %v3275, %v3289
        %v3298 = vcombine.high %v3275, %v3289
        %v3299 = vcombine.low %v3282, %v3296
        %v3300 = vcombine.low %v1089, %v1121
        %v3301 = vcombine.high %v1089, %v1121
        %v3302 = vcombine.low %v1122, %v1123
        %v3303 = vcombine.high %v1122, %v1123
        %v3305 = vunpack.c.l.s4 1983009808
        %v3306 = vunpack.c.0.s8 %v3305
        %v3307 = vlaneseq
        %v3308 = vshrl.u32 %v3307, 7
        %v3309 = vsub.s32 %v3306, %v3308
        %v3310 = vrot.slane %v3300, %v3309
        %v3312 = vunpack.c.l.s4 1983009808
        %v3313 = vunpack.c.0.s8 %v3312
        %v3314 = vlaneseq
        %v3315 = vshrl.u32 %v3314, 7
        %v3316 = vsub.s32 %v3313, %v3315
        %v3317 = vrot.slane %v3301, %v3316
        %v3319 = vunpack.c.l.s4 1983009808
        %v3320 = vunpack.c.0.s8 %v3319
        %v3321 = vlaneseq
        %v3322 = vshrl.u32 %v3321, 7
        %v3323 = vsub.s32 %v3320, %v3322
        %v3324 = vrot.slane %v3302, %v3323
        %v3326 = vunpack.c.l.s4 1983009808
        %v3327 = vunpack.c.0.s8 %v3326
        %v3328 = vlaneseq
        %v3329 = vshrl.u32 %v3328, 7
        %v3330 = vsub.s32 %v3327, %v3329
        %v3331 = vrot.slane %v3303, %v3330
        %v3332 = vcombine.low %v3310, %v3324
        %v3333 = vcombine.high %v3310, %v3324
        %v3334 = vcombine.low %v3317, %v3331
        %v3335 = vcombine.low %v1124, %v1156
        %v3336 = vcombine.high %v1124, %v1156
        %v3337 = vcombine.low %v1157, %v1158
        %v3338 = vcombine.high %v1157, %v1158
        %v3340 = vunpack.c.l.s4 1983009808
        %v3341 = vunpack.c.0.s8 %v3340
        %v3342 = vlaneseq
        %v3343 = vshrl.u32 %v3342, 7
        %v3344 = vsub.s32 %v3341, %v3343
        %v3345 = vrot.slane %v3335, %v3344
        %v3347 = vunpack.c.l.s4 1983009808
        %v3348 = vunpack.c.0.s8 %v3347
        %v3349 = vlaneseq
        %v3350 = vshrl.u32 %v3349, 7
        %v3351 = vsub.s32 %v3348, %v3350
        %v3352 = vrot.slane %v3336, %v3351
        %v3354 = vunpack.c.l.s4 1983009808
        %v3355 = vunpack.c.0.s8 %v3354
        %v3356 = vlaneseq
        %v3357 = vshrl.u32 %v3356, 7
        %v3358 = vsub.s32 %v3355, %v3357
        %v3359 = vrot.slane %v3337, %v3358
        %v3361 = vunpack.c.l.s4 1983009808
        %v3362 = vunpack.c.0.s8 %v3361
        %v3363 = vlaneseq
        %v3364 = vshrl.u32 %v3363, 7
        %v3365 = vsub.s32 %v3362, %v3364
        %v3366 = vrot.slane %v3338, %v3365
        %v3367 = vcombine.low %v3345, %v3359
        %v3368 = vcombine.high %v3345, %v3359
        %v3369 = vcombine.low %v3352, %v3366
        %v3370 = vcombine.low %v1159, %v1175
        %v3371 = vcombine.high %v1159, %v1175
        %v3372 = vcombine.low %v1207, %v1208
        %v3373 = vcombine.high %v1207, %v1208
        %v3375 = vunpack.c.l.s4 1983009808
        %v3376 = vunpack.c.0.s8 %v3375
        %v3377 = vlaneseq
        %v3378 = vshrl.u32 %v3377, 7
        %v3379 = vsub.s32 %v3376, %v3378
        %v3380 = vrot.slane %v3370, %v3379
        %v3382 = vunpack.c.l.s4 1983009808
        %v3383 = vunpack.c.0.s8 %v3382
        %v3384 = vlaneseq
        %v3385 = vshrl.u32 %v3384, 7
        %v3386 = vsub.s32 %v3383, %v3385
        %v3387 = vrot.slane %v3371, %v3386
        %v3389 = vunpack.c.l.s4 1983009808
        %v3390 = vunpack.c.0.s8 %v3389
        %v3391 = vlaneseq
        %v3392 = vshrl.u32 %v3391, 7
        %v3393 = vsub.s32 %v3390, %v3392
        %v3394 = vrot.slane %v3372, %v3393
        %v3396 = vunpack.c.l.s4 1983009808
        %v3397 = vunpack.c.0.s8 %v3396
        %v3398 = vlaneseq
        %v3399 = vshrl.u32 %v3398, 7
        %v3400 = vsub.s32 %v3397, %v3399
        %v3401 = vrot.slane %v3373, %v3400
        %v3402 = vcombine.low %v3380, %v3394
        %v3403 = vcombine.high %v3380, %v3394
        %v3404 = vcombine.low %v3387, %v3401
        %v3405 = vcombine.low %v1209, %v1210
        %v3406 = vcombine.high %v1209, %v1210
        %v3407 = vcombine.low %v1242, %v1243
        %v3408 = vcombine.high %v1242, %v1243
        %v3410 = vunpack.c.l.s4 1983009808
        %v3411 = vunpack.c.0.s8 %v3410
        %v3412 = vlaneseq
        %v3413 = vshrl.u32 %v3412, 7
        %v3414 = vsub.s32 %v3411, %v3413
        %v3415 = vrot.slane %v3405, %v3414
        %v3417 = vunpack.c.l.s4 1983009808
        %v3418 = vunpack.c.0.s8 %v3417
        %v3419 = vlaneseq
        %v3420 = vshrl.u32 %v3419, 7
        %v3421 = vsub.s32 %v3418, %v3420
        %v3422 = vrot.slane %v3406, %v3421
        %v3424 = vunpack.c.l.s4 1983009808
        %v3425 = vunpack.c.0.s8 %v3424
        %v3426 = vlaneseq
        %v3427 = vshrl.u32 %v3426, 7
        %v3428 = vsub.s32 %v3425, %v3427
        %v3429 = vrot.slane %v3407, %v3428
        %v3431 = vunpack.c.l.s4 1983009808
        %v3432 = vunpack.c.0.s8 %v3431
        %v3433 = vlaneseq
        %v3434 = vshrl.u32 %v3433, 7
        %v3435 = vsub.s32 %v3432, %v3434
        %v3436 = vrot.slane %v3408, %v3435
        %v3437 = vcombine.low %v3415, %v3429
        %v3438 = vcombine.high %v3415, %v3429
        %v3439 = vcombine.low %v3422, %v3436
        %v3440 = vcombine.low %v1244, %v1245
        %v3441 = vcombine.high %v1244, %v1245
        %v3442 = vcombine.low %v1261, %v1293
        %v3443 = vcombine.high %v1261, %v1293
        %v3445 = vunpack.c.l.s4 1983009808
        %v3446 = vunpack.c.0.s8 %v3445
        %v3447 = vlaneseq
        %v3448 = vshrl.u32 %v3447, 7
        %v3449 = vsub.s32 %v3446, %v3448
        %v3450 = vrot.slane %v3440, %v3449
        %v3452 = vunpack.c.l.s4 1983009808
        %v3453 = vunpack.c.0.s8 %v3452
        %v3454 = vlaneseq
        %v3455 = vshrl.u32 %v3454, 7
        %v3456 = vsub.s32 %v3453, %v3455
        %v3457 = vrot.slane %v3441, %v3456
        %v3459 = vunpack.c.l.s4 1983009808
        %v3460 = vunpack.c.0.s8 %v3459
        %v3461 = vlaneseq
        %v3462 = vshrl.u32 %v3461, 7
        %v3463 = vsub.s32 %v3460, %v3462
        %v3464 = vrot.slane %v3442, %v3463
        %v3466 = vunpack.c.l.s4 1983009808
        %v3467 = vunpack.c.0.s8 %v3466
        %v3468 = vlaneseq
        %v3469 = vshrl.u32 %v3468, 7
        %v3470 = vsub.s32 %v3467, %v3469
        %v3471 = vrot.slane %v3443, %v3470
        %v3472 = vcombine.low %v3450, %v3464
        %v3473 = vcombine.high %v3450, %v3464
        %v3474 = vcombine.low %v3457, %v3471
        %v3475 = vcombine.low %v1294, %v1295
        %v3476 = vcombine.high %v1294, %v1295
        %v3477 = vcombine.low %v1296, %v1328
        %v3478 = vcombine.high %v1296, %v1328
        %v3480 = vunpack.c.l.s4 1983009808
        %v3481 = vunpack.c.0.s8 %v3480
        %v3482 = vlaneseq
        %v3483 = vshrl.u32 %v3482, 7
        %v3484 = vsub.s32 %v3481, %v3483
        %v3485 = vrot.slane %v3475, %v3484
        %v3487 = vunpack.c.l.s4 1983009808
        %v3488 = vunpack.c.0.s8 %v3487
        %v3489 = vlaneseq
        %v3490 = vshrl.u32 %v3489, 7
        %v3491 = vsub.s32 %v3488, %v3490
        %v3492 = vrot.slane %v3476, %v3491
        %v3494 = vunpack.c.l.s4 1983009808
        %v3495 = vunpack.c.0.s8 %v3494
        %v3496 = vlaneseq
        %v3497 = vshrl.u32 %v3496, 7
        %v3498 = vsub.s32 %v3495, %v3497
        %v3499 = vrot.slane %v3477, %v3498
        %v3501 = vunpack.c.l.s4 1983009808
        %v3502 = vunpack.c.0.s8 %v3501
        %v3503 = vlaneseq
        %v3504 = vshrl.u32 %v3503, 7
        %v3505 = vsub.s32 %v3502, %v3504
        %v3506 = vrot.slane %v3478, %v3505
        %v3507 = vcombine.low %v3485, %v3499
        %v3508 = vcombine.high %v3485, %v3499
        %v3509 = vcombine.low %v3492, %v3506
        %v3510 = vcombine.low %v1329, %v1330
        %v3511 = vcombine.high %v1329, %v1330
        %v3512 = vcombine.low %v1331, %v1347
        %v3513 = vcombine.high %v1331, %v1347
        %v3515 = vunpack.c.l.s4 1983009808
        %v3516 = vunpack.c.0.s8 %v3515
        %v3517 = vlaneseq
        %v3518 = vshrl.u32 %v3517, 7
        %v3519 = vsub.s32 %v3516, %v3518
        %v3520 = vrot.slane %v3510, %v3519
        %v3522 = vunpack.c.l.s4 1983009808
        %v3523 = vunpack.c.0.s8 %v3522
        %v3524 = vlaneseq
        %v3525 = vshrl.u32 %v3524, 7
        %v3526 = vsub.s32 %v3523, %v3525
        %v3527 = vrot.slane %v3511, %v3526
        %v3529 = vunpack.c.l.s4 1983009808
        %v3530 = vunpack.c.0.s8 %v3529
        %v3531 = vlaneseq
        %v3532 = vshrl.u32 %v3531, 7
        %v3533 = vsub.s32 %v3530, %v3532
        %v3534 = vrot.slane %v3512, %v3533
        %v3536 = vunpack.c.l.s4 1983009808
        %v3537 = vunpack.c.0.s8 %v3536
        %v3538 = vlaneseq
        %v3539 = vshrl.u32 %v3538, 7
        %v3540 = vsub.s32 %v3537, %v3539
        %v3541 = vrot.slane %v3513, %v3540
        %v3542 = vcombine.low %v3520, %v3534
        %v3543 = vcombine.high %v3520, %v3534
        %v3544 = vcombine.low %v3527, %v3541
        %v3545 = vcombine.low %v1379, %v1380
        %v3546 = vcombine.high %v1379, %v1380
        %v3547 = vcombine.low %v1381, %v1382
        %v3548 = vcombine.high %v1381, %v1382
        %v3550 = vunpack.c.l.s4 1983009808
        %v3551 = vunpack.c.0.s8 %v3550
        %v3552 = vlaneseq
        %v3553 = vshrl.u32 %v3552, 7
        %v3554 = vsub.s32 %v3551, %v3553
        %v3555 = vrot.slane %v3545, %v3554
        %v3557 = vunpack.c.l.s4 1983009808
        %v3558 = vunpack.c.0.s8 %v3557
        %v3559 = vlaneseq
        %v3560 = vshrl.u32 %v3559, 7
        %v3561 = vsub.s32 %v3558, %v3560
        %v3562 = vrot.slane %v3546, %v3561
        %v3564 = vunpack.c.l.s4 1983009808
        %v3565 = vunpack.c.0.s8 %v3564
        %v3566 = vlaneseq
        %v3567 = vshrl.u32 %v3566, 7
        %v3568 = vsub.s32 %v3565, %v3567
        %v3569 = vrot.slane %v3547, %v3568
        %v3571 = vunpack.c.l.s4 1983009808
        %v3572 = vunpack.c.0.s8 %v3571
        %v3573 = vlaneseq
        %v3574 = vshrl.u32 %v3573, 7
        %v3575 = vsub.s32 %v3572, %v3574
        %v3576 = vrot.slane %v3548, %v3575
        %v3577 = vcombine.low %v3555, %v3569
        %v3578 = vcombine.high %v3555, %v3569
        %v3579 = vcombine.low %v3562, %v3576
        %v3580 = vcombine.low %v1414, %v1415
        %v3581 = vcombine.high %v1414, %v1415
        %v3582 = vcombine.low %v1416, %v1417
        %v3583 = vcombine.high %v1416, %v1417
        %v3585 = vunpack.c.l.s4 1983009808
        %v3586 = vunpack.c.0.s8 %v3585
        %v3587 = vlaneseq
        %v3588 = vshrl.u32 %v3587, 7
        %v3589 = vsub.s32 %v3586, %v3588
        %v3590 = vrot.slane %v3580, %v3589
        %v3592 = vunpack.c.l.s4 1983009808
        %v3593 = vunpack.c.0.s8 %v3592
        %v3594 = vlaneseq
        %v3595 = vshrl.u32 %v3594, 7
        %v3596 = vsub.s32 %v3593, %v3595
        %v3597 = vrot.slane %v3581, %v3596
        %v3599 = vunpack.c.l.s4 1983009808
        %v3600 = vunpack.c.0.s8 %v3599
        %v3601 = vlaneseq
        %v3602 = vshrl.u32 %v3601, 7
        %v3603 = vsub.s32 %v3600, %v3602
        %v3604 = vrot.slane %v3582, %v3603
        %v3606 = vunpack.c.l.s4 1983009808
        %v3607 = vunpack.c.0.s8 %v3606
        %v3608 = vlaneseq
        %v3609 = vshrl.u32 %v3608, 7
        %v3610 = vsub.s32 %v3607, %v3609
        %v3611 = vrot.slane %v3583, %v3610
        %v3612 = vcombine.low %v3590, %v3604
        %v3613 = vcombine.high %v3590, %v3604
        %v3614 = vcombine.low %v3597, %v3611
        %v3615 = vcombine.low %v1433, %v2811
        %v3616 = vcombine.high %v1433, %v2811
        %v3617 = vcombine.low %v2812, %v2813
        %v3618 = vcombine.high %v2812, %v2813
        %v3620 = vunpack.c.l.s4 1983009808
        %v3621 = vunpack.c.0.s8 %v3620
        %v3622 = vlaneseq
        %v3623 = vshrl.u32 %v3622, 7
        %v3624 = vsub.s32 %v3621, %v3623
        %v3625 = vrot.slane %v3615, %v3624
        %v3627 = vunpack.c.l.s4 1983009808
        %v3628 = vunpack.c.0.s8 %v3627
        %v3629 = vlaneseq
        %v3630 = vshrl.u32 %v3629, 7
        %v3631 = vsub.s32 %v3628, %v3630
        %v3632 = vrot.slane %v3616, %v3631
        %v3634 = vunpack.c.l.s4 1983009808
        %v3635 = vunpack.c.0.s8 %v3634
        %v3636 = vlaneseq
        %v3637 = vshrl.u32 %v3636, 7
        %v3638 = vsub.s32 %v3635, %v3637
        %v3639 = vrot.slane %v3617, %v3638
        %v3641 = vunpack.c.l.s4 1983009808
        %v3642 = vunpack.c.0.s8 %v3641
        %v3643 = vlaneseq
        %v3644 = vshrl.u32 %v3643, 7
        %v3645 = vsub.s32 %v3642, %v3644
        %v3646 = vrot.slane %v3618, %v3645
        %v3647 = vcombine.low %v3625, %v3639
        %v3648 = vcombine.high %v3625, %v3639
        %v3649 = vcombine.low %v3632, %v3646
        %v3650 = vcombine.low %v2814, %v2846
        %v3651 = vcombine.high %v2814, %v2846
        %v3652 = vcombine.low %v2847, %v2848
        %v3653 = vcombine.high %v2847, %v2848
        %v3655 = vunpack.c.l.s4 1983009808
        %v3656 = vunpack.c.0.s8 %v3655
        %v3657 = vlaneseq
        %v3658 = vshrl.u32 %v3657, 7
        %v3659 = vsub.s32 %v3656, %v3658
        %v3660 = vrot.slane %v3650, %v3659
        %v3662 = vunpack.c.l.s4 1983009808
        %v3663 = vunpack.c.0.s8 %v3662
        %v3664 = vlaneseq
        %v3665 = vshrl.u32 %v3664, 7
        %v3666 = vsub.s32 %v3663, %v3665
        %v3667 = vrot.slane %v3651, %v3666
        %v3669 = vunpack.c.l.s4 1983009808
        %v3670 = vunpack.c.0.s8 %v3669
        %v3671 = vlaneseq
        %v3672 = vshrl.u32 %v3671, 7
        %v3673 = vsub.s32 %v3670, %v3672
        %v3674 = vrot.slane %v3652, %v3673
        %v3676 = vunpack.c.l.s4 1983009808
        %v3677 = vunpack.c.0.s8 %v3676
        %v3678 = vlaneseq
        %v3679 = vshrl.u32 %v3678, 7
        %v3680 = vsub.s32 %v3677, %v3679
        %v3681 = vrot.slane %v3653, %v3680
        %v3682 = vcombine.low %v3660, %v3674
        %v3683 = vcombine.high %v3660, %v3674
        %v3684 = vcombine.low %v3667, %v3681
        %v3685 = vcombine.low %v2849, %v2865
        %v3686 = vcombine.high %v2849, %v2865
        %v3688 = vunpack.c.l.s4 1983009808
        %v3689 = vunpack.c.0.s8 %v3688
        %v3690 = vlaneseq
        %v3691 = vshrl.u32 %v3690, 7
        %v3692 = vsub.s32 %v3689, %v3691
        %v3693 = vrot.slane %v3685, %v3692
        %v3695 = vunpack.c.l.s4 1983009808
        %v3696 = vunpack.c.0.s8 %v3695
        %v3697 = vlaneseq
        %v3698 = vshrl.u32 %v3697, 7
        %v3699 = vsub.s32 %v3696, %v3698
        %v3700 = vrot.slane %v3686, %v3699
        %v3701 = vcombine.high %v3693, %v3693
        %3771 = vmatprep.subr.mxu0 0.0
        %3772 = vmatpush1.msra.mxu0 %v2867
        %3773 = vmatprep.subr.mxu0 0.0
        %3774 = vmatpush1.msra.mxu0 %v2868
        %3775 = vmatprep.subr.mxu0 0.0
        %3776 = vmatpush1.msra.mxu0 %v2869
        %3777 = vmatprep.subr.mxu0 0.0
        %3778 = vmatpush1.msra.mxu0 %v2870
        %3779 = vmatprep.subr.mxu0 0.0
        %3780 = vmatpush1.msra.mxu0 %v2871
        %3781 = vmatprep.subr.mxu0 0.0
        %3782 = vmatpush1.msra.mxu0 %v2872
        %3783 = vmatprep.subr.mxu0 0.0
        %3784 = vmatpush1.msra.mxu0 %v2873
        %3785 = vmatprep.subr.mxu0 0.0
        %3786 = vmatpush1.msra.mxu0 %v2874
        %3787 = vmatprep.subr.mxu0 0.0
        %3788 = vmatpush1.msra.mxu0 %v2875
        %3789 = vmatprep.subr.mxu0 0.0
        %3790 = vmatpush1.msra.mxu0 %v2876
        %3791 = vmatprep.subr.mxu0 0.0
        %3792 = vmatpush1.msra.mxu0 %v2877
        %3793 = vmatprep.subr.mxu0 0.0
        %3794 = vmatpush1.msra.mxu0 %v2878
        %3795 = vmatprep.subr.mxu0 0.0
        %3796 = vmatpush1.msra.mxu0 %v2879
        %3797 = vmatprep.subr.mxu0 0.0
        %3798 = vmatpush1.msra.mxu0 %v2880
        %3799 = vmatprep.subr.mxu0 0.0
        %3800 = vmatpush1.msra.mxu0 %v2881
        %3801 = vmatprep.subr.mxu0 0.0
        %3802 = vmatpush1.msra.mxu0 %v2882
        %3803 = vmatprep.subr.mxu0 0.0
        %3804 = vmatpush1.msra.mxu0 %v2883
        %3805 = vmatprep.subr.mxu0 0.0
        %3806 = vmatpush1.msra.mxu0 %v2884
        %3807 = vmatprep.subr.mxu0 0.0
        %3808 = vmatpush1.msra.mxu0 %v2885
        %3809 = vmatprep.subr.mxu0 0.0
        %3810 = vmatpush1.msra.mxu0 %v2886
        %3811 = vmatprep.subr.mxu0 0.0
        %3812 = vmatpush1.msra.mxu0 %v2887
        %3813 = vmatprep.subr.mxu0 0.0
        %3814 = vmatpush1.msra.mxu0 %v2888
        %3815 = vmatprep.subr.mxu0 0.0
        %3816 = vmatpush1.msra.mxu0 %v2889
        %3817 = vmatprep.subr.mxu0 0.0
        %3818 = vmatpush1.msra.mxu0 %v2890
        %3819 = vmatprep.subr.mxu0 0.0
        %3820 = vmatpush1.msra.mxu0 %v2891
        %3821 = vmatprep.subr.mxu0 0.0
        %3822 = vmatpush1.msra.mxu0 %v2892
        %3823 = vmatprep.subr.mxu0 0.0
        %3824 = vmatpush1.msra.mxu0 %v2893
        %3825 = vmatprep.subr.mxu0 0.0
        %3826 = vmatpush1.msra.mxu0 %v2894
        %3827 = vmatprep.subr.mxu0 0.0
        %3828 = vmatpush1.msra.mxu0 %v2895
        %3829 = vmatprep.subr.mxu0 0.0
        %3830 = vmatpush1.msra.mxu0 %v2896
        %3831 = vmatprep.subr.mxu0 0.0
        %3832 = vmatpush1.msra.mxu0 %v2897
        %3833 = vmatprep.subr.mxu0 0.0
        %3834 = vmatpush1.msra.mxu0 %v2898
        %3835 = vmatprep.mubr.f32.mxu0 %v2948
        %3836 = vmatmul.mubr.f32.gmra.mrb[0].mxu0 %v2947
        %v3837 = vpop.f32.mrb[0].mxu0
        %v3838 = vadd.f32 0.0, %v3837
        %v3839 = vpop.f32.mrb[0].mxu0
        %3840 = vmatprep.mubr.f32.mxu0 %v2983
        %3841 = vmatmul.mubr.f32.gmra.mrb[0].mxu0 %v2982
        %v3842 = vpop.f32.mrb[0].mxu0
        %v3843 = vadd.f32 0.0, %v3842
        %v3844 = vpop.f32.mrb[0].mxu0
        %3845 = vmatprep.mubr.f32.mxu0 %v3018
        %3846 = vmatmul.mubr.f32.gmra.mrb[0].mxu0 %v3017
        %v3847 = vpop.f32.mrb[0].mxu0
        %v3848 = vadd.f32 0.0, %v3847
        %v3849 = vpop.f32.mrb[0].mxu0
        %3850 = vmatprep.mubr.f32.mxu0 %v3053
        %3851 = vmatmul.mubr.f32.gmra.mrb[0].mxu0 %v3052
        %v3852 = vpop.f32.mrb[0].mxu0
        %v3853 = vadd.f32 0.0, %v3852
        %v3854 = vpop.f32.mrb[0].mxu0
        %3855 = vmatprep.mubr.f32.mxu0 %v3088
        %3856 = vmatmul.mubr.f32.gmra.mrb[0].mxu0 %v3087
        %v3857 = vpop.f32.mrb[0].mxu0
        %v3858 = vadd.f32 0.0, %v3857
        %v3859 = vpop.f32.mrb[0].mxu0
        %3860 = vmatprep.mubr.f32.mxu0 %v3123
        %3861 = vmatmul.mubr.f32.gmra.mrb[0].mxu0 %v3122
        %v3862 = vpop.f32.mrb[0].mxu0
        %v3863 = vadd.f32 0.0, %v3862
        %v3864 = vpop.f32.mrb[0].mxu0
        %3865 = vmatprep.mubr.f32.mxu0 %v3158
        %3866 = vmatmul.mubr.f32.gmra.mrb[0].mxu0 %v3157
        %v3867 = vpop.f32.mrb[0].mxu0
        %v3868 = vadd.f32 0.0, %v3867
        %v3869 = vpop.f32.mrb[0].mxu0
        %3870 = vmatprep.mubr.f32.mxu0 %v3193
        %3871 = vmatmul.mubr.f32.gmra.mrb[0].mxu0 %v3192
        %v3872 = vpop.f32.mrb[0].mxu0
        %v3873 = vadd.f32 0.0, %v3872
        %v3874 = vpop.f32.mrb[0].mxu0
        %3875 = vmatprep.mubr.f32.mxu0 %v3228
        %3876 = vmatmul.mubr.f32.gmra.mrb[0].mxu0 %v3227
        %v3877 = vpop.f32.mrb[0].mxu0
        %v3878 = vadd.f32 0.0, %v3877
        %v3879 = vpop.f32.mrb[0].mxu0
        %3880 = vmatprep.mubr.f32.mxu0 %v3263
        %3881 = vmatmul.mubr.f32.gmra.mrb[0].mxu0 %v3262
        %v3882 = vpop.f32.mrb[0].mxu0
        %v3883 = vadd.f32 0.0, %v3882
        %v3884 = vpop.f32.mrb[0].mxu0
        %3885 = vmatprep.mubr.f32.mxu0 %v3298
        %3886 = vmatmul.mubr.f32.gmra.mrb[0].mxu0 %v3297
        %v3887 = vpop.f32.mrb[0].mxu0
        %v3888 = vadd.f32 0.0, %v3887
        %v3889 = vpop.f32.mrb[0].mxu0
        %3890 = vmatprep.mubr.f32.mxu0 %v3333
        %3891 = vmatmul.mubr.f32.gmra.mrb[0].mxu0 %v3332
        %v3892 = vpop.f32.mrb[0].mxu0
        %v3893 = vadd.f32 0.0, %v3892
        %v3894 = vpop.f32.mrb[0].mxu0
        %3895 = vmatprep.mubr.f32.mxu0 %v3368
        %3896 = vmatmul.mubr.f32.gmra.mrb[0].mxu0 %v3367
        %v3897 = vpop.f32.mrb[0].mxu0
        %v3898 = vadd.f32 0.0, %v3897
        %v3899 = vpop.f32.mrb[0].mxu0
        %3900 = vmatprep.mubr.f32.mxu0 %v3403
        %3901 = vmatmul.mubr.f32.gmra.mrb[0].mxu0 %v3402
        %v3902 = vpop.f32.mrb[0].mxu0
        %v3903 = vadd.f32 0.0, %v3902
        %v3904 = vpop.f32.mrb[0].mxu0
        %3905 = vmatprep.mubr.f32.mxu0 %v3438
        %3906 = vmatmul.mubr.f32.gmra.mrb[0].mxu0 %v3437
        %v3907 = vpop.f32.mrb[0].mxu0
        %v3908 = vadd.f32 0.0, %v3907
        %v3909 = vpop.f32.mrb[0].mxu0
        %3910 = vmatprep.mubr.f32.mxu0 %v3473
        %3911 = vmatmul.mubr.f32.gmra.mrb[0].mxu0 %v3472
        %v3912 = vpop.f32.mrb[0].mxu0
        %v3913 = vadd.f32 0.0, %v3912
        %v3914 = vpop.f32.mrb[0].mxu0
        %3915 = vmatprep.mubr.f32.mxu0 %v3508
        %3916 = vmatmul.mubr.f32.gmra.mrb[0].mxu0 %v3507
        %v3917 = vpop.f32.mrb[0].mxu0
        %v3918 = vadd.f32 0.0, %v3917
        %v3919 = vpop.f32.mrb[0].mxu0
        %3920 = vmatprep.mubr.f32.mxu0 %v3543
        %3921 = vmatmul.mubr.f32.gmra.mrb[0].mxu0 %v3542
        %v3922 = vpop.f32.mrb[0].mxu0
        %v3923 = vadd.f32 0.0, %v3922
        %v3924 = vpop.f32.mrb[0].mxu0
        %3925 = vmatprep.mubr.f32.mxu0 %v3578
        %3926 = vmatmul.mubr.f32.gmra.mrb[0].mxu0 %v3577
        %v3927 = vpop.f32.mrb[0].mxu0
        %v3928 = vadd.f32 0.0, %v3927
        %v3929 = vpop.f32.mrb[0].mxu0
        %3930 = vmatprep.mubr.f32.mxu0 %v3613
        %3931 = vmatmul.mubr.f32.gmra.mrb[0].mxu0 %v3612
        %v3932 = vpop.f32.mrb[0].mxu0
        %v3933 = vadd.f32 0.0, %v3932
        %v3934 = vpop.f32.mrb[0].mxu0
        %3935 = vmatprep.mubr.f32.mxu0 %v3648
        %3936 = vmatmul.mubr.f32.gmra.mrb[0].mxu0 %v3647
        %v3937 = vpop.f32.mrb[0].mxu0
        %v3938 = vadd.f32 0.0, %v3937
        %v3939 = vpop.f32.mrb[0].mxu0
        %3940 = vmatprep.mubr.f32.mxu0 %v3683
        %3941 = vmatmul.mubr.f32.gmra.mrb[0].mxu0 %v3682
        %v3942 = vpop.f32.mrb[0].mxu0
        %v3943 = vadd.f32 0.0, %v3942
        %v3944 = vpop.f32.mrb[0].mxu0
        %3945 = vmatprep.mubr.f32.mxu0 %v3701
        %3946 = vmatmul.mubr.f32.gmra.mrb[0].mxu0 %v3693
        %v3947 = vpop.f32.mrb[0].mxu0
        %v3948 = vadd.f32 0.0, %v3947
        %v3949 = vpop.f32.mrb[0].mxu0
        %3950 = vdwg.mxu0
        %3951 = vmatprep.subr.mxu0 0.0
        %3952 = vmatpush1.msra.mxu0 %v2899
        %3953 = vmatprep.subr.mxu0 0.0
        %3954 = vmatpush1.msra.mxu0 %v2900
        %3955 = vmatprep.subr.mxu0 0.0
        %3956 = vmatpush1.msra.mxu0 %v2901
        %3957 = vmatprep.subr.mxu0 0.0
        %3958 = vmatpush1.msra.mxu0 %v2902
        %3959 = vmatprep.subr.mxu0 0.0
        %3960 = vmatpush1.msra.mxu0 %v2903
        %3961 = vmatprep.subr.mxu0 0.0
        %3962 = vmatpush1.msra.mxu0 %v2904
        %3963 = vmatprep.subr.mxu0 0.0
        %3964 = vmatpush1.msra.mxu0 %v2905
        %3965 = vmatprep.subr.mxu0 0.0
        %3966 = vmatpush1.msra.mxu0 %v2906
        %3967 = vmatprep.subr.mxu0 0.0
        %3968 = vmatpush1.msra.mxu0 %v2907
        %3969 = vmatprep.subr.mxu0 0.0
        %3970 = vmatpush1.msra.mxu0 %v2908
        %3971 = vmatprep.subr.mxu0 0.0
        %3972 = vmatpush1.msra.mxu0 %v2909
        %3973 = vmatprep.subr.mxu0 0.0
        %3974 = vmatpush1.msra.mxu0 %v2910
        %3975 = vmatprep.subr.mxu0 0.0
        %3976 = vmatpush1.msra.mxu0 %v2911
        %3977 = vmatprep.subr.mxu0 0.0
        %3978 = vmatpush1.msra.mxu0 %v2912
        %3979 = vmatprep.subr.mxu0 0.0
        %3980 = vmatpush1.msra.mxu0 %v2913
        %3981 = vmatprep.subr.mxu0 0.0
        %3982 = vmatpush1.msra.mxu0 %v2914
        %3983 = vmatprep.subr.mxu0 0.0
        %3984 = vmatpush1.msra.mxu0 0.0
        %3985 = vmatprep.subr.mxu0 0.0
        %3986 = vmatpush1.msra.mxu0 0.0
        %3987 = vmatprep.subr.mxu0 0.0
        %3988 = vmatpush1.msra.mxu0 0.0
        %3989 = vmatprep.subr.mxu0 0.0
        %3990 = vmatpush1.msra.mxu0 0.0
        %3991 = vmatprep.subr.mxu0 0.0
        %3992 = vmatpush1.msra.mxu0 0.0
        %3993 = vmatprep.subr.mxu0 0.0
        %3994 = vmatpush1.msra.mxu0 0.0
        %3995 = vmatprep.subr.mxu0 0.0
        %3996 = vmatpush1.msra.mxu0 0.0
        %3997 = vmatprep.subr.mxu0 0.0
        %3998 = vmatpush1.msra.mxu0 0.0
        %3999 = vmatprep.subr.mxu0 0.0
        %4000 = vmatpush1.msra.mxu0 0.0
        %4001 = vmatprep.subr.mxu0 0.0
        %4002 = vmatpush1.msra.mxu0 0.0
        %4003 = vmatprep.subr.mxu0 0.0
        %4004 = vmatpush1.msra.mxu0 0.0
        %4005 = vmatprep.subr.mxu0 0.0
        %4006 = vmatpush1.msra.mxu0 0.0
        %4007 = vmatprep.subr.mxu0 0.0
        %4008 = vmatpush1.msra.mxu0 0.0
        %4009 = vmatprep.subr.mxu0 0.0
        %4010 = vmatpush1.msra.mxu0 0.0
        %4011 = vmatprep.subr.mxu0 0.0
        %4012 = vmatpush1.msra.mxu0 0.0
        %4013 = vmatprep.subr.mxu0 0.0
        %4014 = vmatpush1.msra.mxu0 0.0
        %4015 = vmatprep.mubr.f32.mxu0 0.0
        %4016 = vmatmul.mubr.f32.gmra.mrb[0].mxu0 %v2949
        %v4017 = vpop.f32.mrb[0].mxu0
        %v4018 = vadd.f32 %v3838, %v4017
        %v4019 = vpop.f32.mrb[0].mxu0
        %4020 = vmatprep.mubr.f32.mxu0 0.0
        %4021 = vmatmul.mubr.f32.gmra.mrb[0].mxu0 %v2984
        %v4022 = vpop.f32.mrb[0].mxu0
        %v4023 = vadd.f32 %v3843, %v4022
        %v4024 = vpop.f32.mrb[0].mxu0
        %4025 = vmatprep.mubr.f32.mxu0 0.0
        %4026 = vmatmul.mubr.f32.gmra.mrb[0].mxu0 %v3019
        %v4027 = vpop.f32.mrb[0].mxu0
        %v4028 = vadd.f32 %v3848, %v4027
        %v4029 = vpop.f32.mrb[0].mxu0
        %4030 = vmatprep.mubr.f32.mxu0 0.0
        %4031 = vmatmul.mubr.f32.gmra.mrb[0].mxu0 %v3054
        %v4032 = vpop.f32.mrb[0].mxu0
        %v4033 = vadd.f32 %v3853, %v4032
        %v4034 = vpop.f32.mrb[0].mxu0
        %4035 = vmatprep.mubr.f32.mxu0 0.0
        %4036 = vmatmul.mubr.f32.gmra.mrb[0].mxu0 %v3089
        %v4037 = vpop.f32.mrb[0].mxu0
        %v4038 = vadd.f32 %v3858, %v4037
        %v4039 = vpop.f32.mrb[0].mxu0
        %4040 = vmatprep.mubr.f32.mxu0 0.0
        %4041 = vmatmul.mubr.f32.gmra.mrb[0].mxu0 %v3124
        %v4042 = vpop.f32.mrb[0].mxu0
        %v4043 = vadd.f32 %v3863, %v4042
        %v4044 = vpop.f32.mrb[0].mxu0
        %4045 = vmatprep.mubr.f32.mxu0 0.0
        %4046 = vmatmul.mubr.f32.gmra.mrb[0].mxu0 %v3159
        %v4047 = vpop.f32.mrb[0].mxu0
        %v4048 = vadd.f32 %v3868, %v4047
        %v4049 = vpop.f32.mrb[0].mxu0
        %4050 = vmatprep.mubr.f32.mxu0 0.0
        %4051 = vmatmul.mubr.f32.gmra.mrb[0].mxu0 %v3194
        %v4052 = vpop.f32.mrb[0].mxu0
        %v4053 = vadd.f32 %v3873, %v4052
        %v4054 = vpop.f32.mrb[0].mxu0
        %4055 = vmatprep.mubr.f32.mxu0 0.0
        %4056 = vmatmul.mubr.f32.gmra.mrb[0].mxu0 %v3229
        %v4057 = vpop.f32.mrb[0].mxu0
        %v4058 = vadd.f32 %v3878, %v4057
        %v4059 = vpop.f32.mrb[0].mxu0
        %4060 = vmatprep.mubr.f32.mxu0 0.0
        %4061 = vmatmul.mubr.f32.gmra.mrb[0].mxu0 %v3264
        %v4062 = vpop.f32.mrb[0].mxu0
        %v4063 = vadd.f32 %v3883, %v4062
        %v4064 = vpop.f32.mrb[0].mxu0
        %4065 = vmatprep.mubr.f32.mxu0 0.0
        %4066 = vmatmul.mubr.f32.gmra.mrb[0].mxu0 %v3299
        %v4067 = vpop.f32.mrb[0].mxu0
        %v4068 = vadd.f32 %v3888, %v4067
        %v4069 = vpop.f32.mrb[0].mxu0
        %4070 = vmatprep.mubr.f32.mxu0 0.0
        %4071 = vmatmul.mubr.f32.gmra.mrb[0].mxu0 %v3334
        %v4072 = vpop.f32.mrb[0].mxu0
        %v4073 = vadd.f32 %v3893, %v4072
        %v4074 = vpop.f32.mrb[0].mxu0
        %4075 = vmatprep.mubr.f32.mxu0 0.0
        %4076 = vmatmul.mubr.f32.gmra.mrb[0].mxu0 %v3369
        %v4077 = vpop.f32.mrb[0].mxu0
        %v4078 = vadd.f32 %v3898, %v4077
        %v4079 = vpop.f32.mrb[0].mxu0
        %4080 = vmatprep.mubr.f32.mxu0 0.0
        %4081 = vmatmul.mubr.f32.gmra.mrb[0].mxu0 %v3404
        %v4082 = vpop.f32.mrb[0].mxu0
        %v4083 = vadd.f32 %v3903, %v4082
        %v4084 = vpop.f32.mrb[0].mxu0
        %4085 = vmatprep.mubr.f32.mxu0 0.0
        %4086 = vmatmul.mubr.f32.gmra.mrb[0].mxu0 %v3439
        %v4087 = vpop.f32.mrb[0].mxu0
        %v4088 = vadd.f32 %v3908, %v4087
        %v4089 = vpop.f32.mrb[0].mxu0
        %4090 = vmatprep.mubr.f32.mxu0 0.0
        %4091 = vmatmul.mubr.f32.gmra.mrb[0].mxu0 %v3474
        %v4092 = vpop.f32.mrb[0].mxu0
        %v4093 = vadd.f32 %v3913, %v4092
        %v4094 = vpop.f32.mrb[0].mxu0
        %4095 = vmatprep.mubr.f32.mxu0 0.0
        %4096 = vmatmul.mubr.f32.gmra.mrb[0].mxu0 %v3509
        %v4097 = vpop.f32.mrb[0].mxu0
        %v4098 = vadd.f32 %v3918, %v4097
        %v4099 = vpop.f32.mrb[0].mxu0
        %4100 = vmatprep.mubr.f32.mxu0 0.0
        %4101 = vmatmul.mubr.f32.gmra.mrb[0].mxu0 %v3544
        %v4102 = vpop.f32.mrb[0].mxu0
        %v4103 = vadd.f32 %v3923, %v4102
        %v4104 = vpop.f32.mrb[0].mxu0
        %4105 = vmatprep.mubr.f32.mxu0 0.0
        %4106 = vmatmul.mubr.f32.gmra.mrb[0].mxu0 %v3579
        %v4107 = vpop.f32.mrb[0].mxu0
        %v4108 = vadd.f32 %v3928, %v4107
        %v4109 = vpop.f32.mrb[0].mxu0
        %4110 = vmatprep.mubr.f32.mxu0 0.0
        %4111 = vmatmul.mubr.f32.gmra.mrb[0].mxu0 %v3614
        %v4112 = vpop.f32.mrb[0].mxu0
        %v4113 = vadd.f32 %v3933, %v4112
        %v4114 = vpop.f32.mrb[0].mxu0
        %4115 = vmatprep.mubr.f32.mxu0 0.0
        %4116 = vmatmul.mubr.f32.gmra.mrb[0].mxu0 %v3649
        %v4117 = vpop.f32.mrb[0].mxu0
        %v4118 = vadd.f32 %v3938, %v4117
        %v4119 = vpop.f32.mrb[0].mxu0
        %4120 = vmatprep.mubr.f32.mxu0 0.0
        %4121 = vmatmul.mubr.f32.gmra.mrb[0].mxu0 %v3684
        %v4122 = vpop.f32.mrb[0].mxu0
        %v4123 = vadd.f32 %v3943, %v4122
        %v4124 = vpop.f32.mrb[0].mxu0
        %4125 = vmatprep.mubr.f32.mxu0 0.0
        %4126 = vmatmul.mubr.f32.gmra.mrb[0].mxu0 %v3700
        %v4127 = vpop.f32.mrb[0].mxu0
        %v4128 = vadd.f32 %v3948, %v4127
        %v4129 = vpop.f32.mrb[0].mxu0
        %4130 = vdwg.mxu0
        %v4131 = vadd.f32 %v2757, %v4018
        %v4132 = vadd.f32 %v2758, %v4023
        %v4133 = vadd.f32 %v2759, %v4028
        %v4134 = vadd.f32 %v2760, %v4033
        %v4135 = vadd.f32 %v2761, %v4038
        %v4136 = vadd.f32 %v2762, %v4043
        %v4137 = vadd.f32 %v2763, %v4048
        %v4138 = vadd.f32 %v2764, %v4053
        %v4139 = vadd.f32 %v2765, %v4058
        %v4140 = vadd.f32 %v2766, %v4063
        %v4141 = vadd.f32 %v2767, %v4068
        %v4142 = vadd.f32 %v2768, %v4073
        %v4143 = vadd.f32 %v2769, %v4078
        %v4144 = vadd.f32 %v2770, %v4083
        %v4145 = vadd.f32 %v2771, %v4088
        %v4146 = vadd.f32 %v2772, %v4093
        %v4147 = vadd.f32 %v2773, %v4098
        %v4148 = vadd.f32 %v2774, %v4103
        %v4149 = vadd.f32 %v2775, %v4108
        %v4150 = vadd.f32 %v2776, %v4113
        %v4151 = vadd.f32 %v2777, %v4118
        %v4152 = vadd.f32 %v2778, %v4123
        %v4153 = vadd.f32 %v2779, %v4128
        %4154 = vst [vmem:[#allocation4] sm:$0xff] %v4131
        %4155 = vst [vmem:[#allocation4 + $0x8] sm:$0xff] %v4132
        %4156 = vst [vmem:[#allocation4 + $0x10] sm:$0xff] %v4133
        %4157 = vst [vmem:[#allocation4 + $0x18] sm:$0xff] %v4134
        %4158 = vst [vmem:[#allocation4 + $0x20] sm:$0xff] %v4135
        %4159 = vst [vmem:[#allocation4 + $0x28] sm:$0xff] %v4136
        %4160 = vst [vmem:[#allocation4 + $0x30] sm:$0xff] %v4137
        %4161 = vst [vmem:[#allocation4 + $0x38] sm:$0xff] %v4138
        %4162 = vst [vmem:[#allocation4 + $0x40] sm:$0xff] %v4139
        %4163 = vst [vmem:[#allocation4 + $0x48] sm:$0xff] %v4140
        %4164 = vst [vmem:[#allocation4 + $0x50] sm:$0xff] %v4141
        %4165 = vst [vmem:[#allocation4 + $0x58] sm:$0xff] %v4142
        %4166 = vst [vmem:[#allocation4 + $0x60] sm:$0xff] %v4143
        %4167 = vst [vmem:[#allocation4 + $0x68] sm:$0xff] %v4144
        %4168 = vst [vmem:[#allocation4 + $0x70] sm:$0xff] %v4145
        %4169 = vst [vmem:[#allocation4 + $0x78] sm:$0xff] %v4146
        %4170 = vst [vmem:[#allocation4 + $0x80] sm:$0xff] %v4147
        %4171 = vst [vmem:[#allocation4 + $0x88] sm:$0xff] %v4148
        %4172 = vst [vmem:[#allocation4 + $0x90] sm:$0xff] %v4149
        %4173 = vst [vmem:[#allocation4 + $0x98] sm:$0xff] %v4150
        %4174 = vst [vmem:[#allocation4 + $0xa0] sm:$0xff] %v4151
        %4175 = vst [vmem:[#allocation4 + $0xa8] sm:$0xff] %v4152
        %4176 = vst [vmem:[#allocation4 + $0xb0] sm:$0xf] %v4153
        %v4180 = vrot.slane %v393, 1
        %v4181 = vrot.slane %v394, 1
        %v4182 = vsel %vm449, %v4180, %v4181
        %v4183 = vrot.slane %v395, 1
        %v4184 = vsel %vm449, %v4181, %v4183
        %v4185 = vrot.slane %v393, 2
        %v4186 = vrot.slane %v394, 2
        %v4187 = vsel %vm500, %v4185, %v4186
        %v4188 = vrot.slane %v395, 2
        %v4189 = vsel %vm500, %v4186, %v4188
        %v4190 = vld [vmem:[#allocation4] sm:$0xff]
        %v4191 = vld [vmem:[#allocation4 + $0x8] sm:$0xff]
        %v4192 = vld [vmem:[#allocation4 + $0x10] sm:$0xff]
        %v4193 = vld [vmem:[#allocation4 + $0x18] sm:$0xff]
        %v4194 = vld [vmem:[#allocation4 + $0x20] sm:$0xff]
        %v4195 = vld [vmem:[#allocation4 + $0x28] sm:$0xff]
        %v4196 = vld [vmem:[#allocation4 + $0x30] sm:$0xff]
        %v4197 = vld [vmem:[#allocation4 + $0x38] sm:$0xff]
        %v4198 = vld [vmem:[#allocation4 + $0x40] sm:$0xff]
        %v4199 = vld [vmem:[#allocation4 + $0x48] sm:$0xff]
        %v4200 = vld [vmem:[#allocation4 + $0x50] sm:$0xff]
        %v4201 = vld [vmem:[#allocation4 + $0x58] sm:$0xff]
        %v4202 = vld [vmem:[#allocation4 + $0x60] sm:$0xff]
        %v4203 = vld [vmem:[#allocation4 + $0x68] sm:$0xff]
        %v4204 = vld [vmem:[#allocation4 + $0x70] sm:$0xff]
        %v4205 = vld [vmem:[#allocation4 + $0x78] sm:$0xff]
        %v4206 = vld [vmem:[#allocation4 + $0x80] sm:$0xff]
        %v4207 = vld [vmem:[#allocation4 + $0x88] sm:$0xff]
        %v4208 = vld [vmem:[#allocation4 + $0x90] sm:$0xff]
        %v4209 = vld [vmem:[#allocation4 + $0x98] sm:$0xff]
        %v4210 = vld [vmem:[#allocation4 + $0xa0] sm:$0xff]
        %v4211 = vld [vmem:[#allocation4 + $0xa8] sm:$0xff]
        %v4212 = vld [vmem:[#allocation4 + $0xb0] sm:$0xf]
        %v4213 = vcombine.low %v393, %v4182
        %v4214 = vcombine.high %v393, %v4182
        %v4215 = vcombine.high %v4187, %v4187
        %v4217 = vunpack.c.l.s4 1983009808
        %v4218 = vunpack.c.0.s8 %v4217
        %v4219 = vlaneseq
        %v4220 = vshrl.u32 %v4219, 7
        %v4221 = vsub.s32 %v4218, %v4220
        %v4222 = vrot.slane %v4213, %v4221
        %v4224 = vunpack.c.l.s4 1983009808
        %v4225 = vunpack.c.0.s8 %v4224
        %v4226 = vlaneseq
        %v4227 = vshrl.u32 %v4226, 7
        %v4228 = vsub.s32 %v4225, %v4227
        %v4229 = vrot.slane %v4214, %v4228
        %v4231 = vunpack.c.l.s4 1983009808
        %v4232 = vunpack.c.0.s8 %v4231
        %v4233 = vlaneseq
        %v4234 = vshrl.u32 %v4233, 7
        %v4235 = vsub.s32 %v4232, %v4234
        %v4236 = vrot.slane %v4187, %v4235
        %v4238 = vunpack.c.l.s4 1983009808
        %v4239 = vunpack.c.0.s8 %v4238
        %v4240 = vlaneseq
        %v4241 = vshrl.u32 %v4240, 7
        %v4242 = vsub.s32 %v4239, %v4241
        %v4243 = vrot.slane %v4215, %v4242
        %v4244 = vcombine.low %v4222, %v4236
        %v4245 = vcombine.high %v4222, %v4236
        %v4246 = vcombine.low %v4229, %v4243
        %v4247 = vcombine.high %v4229, %v4243
        %v4248 = vcombine.low %v394, %v4184
        %v4249 = vcombine.high %v394, %v4184
        %v4250 = vcombine.high %v4189, %v4189
        %v4252 = vunpack.c.l.s4 1983009808
        %v4253 = vunpack.c.0.s8 %v4252
        %v4254 = vlaneseq
        %v4255 = vshrl.u32 %v4254, 7
        %v4256 = vsub.s32 %v4253, %v4255
        %v4257 = vrot.slane %v4248, %v4256
        %v4259 = vunpack.c.l.s4 1983009808
        %v4260 = vunpack.c.0.s8 %v4259
        %v4261 = vlaneseq
        %v4262 = vshrl.u32 %v4261, 7
        %v4263 = vsub.s32 %v4260, %v4262
        %v4264 = vrot.slane %v4249, %v4263
        %v4266 = vunpack.c.l.s4 1983009808
        %v4267 = vunpack.c.0.s8 %v4266
        %v4268 = vlaneseq
        %v4269 = vshrl.u32 %v4268, 7
        %v4270 = vsub.s32 %v4267, %v4269
        %v4271 = vrot.slane %v4189, %v4270
        %v4273 = vunpack.c.l.s4 1983009808
        %v4274 = vunpack.c.0.s8 %v4273
        %v4275 = vlaneseq
        %v4276 = vshrl.u32 %v4275, 7
        %v4277 = vsub.s32 %v4274, %v4276
        %v4278 = vrot.slane %v4250, %v4277
        %v4279 = vcombine.low %v4257, %v4271
        %v4280 = vcombine.high %v4257, %v4271
        %v4281 = vcombine.low %v4264, %v4278
        %v4282 = vcombine.high %v4264, %v4278
        %v4283 = vcombine.low %v395, %v4183
        %v4285 = vunpack.c.l.s4 1983009808
        %v4286 = vunpack.c.0.s8 %v4285
        %v4287 = vlaneseq
        %v4288 = vshrl.u32 %v4287, 7
        %v4289 = vsub.s32 %v4286, %v4288
        %v4290 = vrot.slane %v4283, %v4289
        %v4292 = vunpack.c.l.s4 1983009808
        %v4293 = vunpack.c.0.s8 %v4292
        %v4294 = vlaneseq
        %v4295 = vshrl.u32 %v4294, 7
        %v4296 = vsub.s32 %v4293, %v4295
        %v4297 = vrot.slane %v4188, %v4296
        %v4298 = vcombine.low %v4290, %v4297
        %s4299 = scalar_lea.vmem %s1, 768
        %v4300 = vld [vmem:[%s4299] sm:$0xff]
        %v4301 = vld [vmem:[%s4299 + $0x8] sm:$0xff]
        %v4302 = vld [vmem:[%s4299 + $0x10] sm:$0xff]
        %v4303 = vld [vmem:[%s4299 + $0x18] sm:$0xff]
        %v4304 = vld [vmem:[%s4299 + $0x20] sm:$0xff]
        %v4305 = vld [vmem:[%s4299 + $0x28] sm:$0xff]
        %v4306 = vld [vmem:[%s4299 + $0x30] sm:$0xff]
        %v4307 = vld [vmem:[%s4299 + $0x38] sm:$0xff]
        %v4308 = vld [vmem:[%s4299 + $0x40] sm:$0xff]
        %v4309 = vld [vmem:[%s4299 + $0x48] sm:$0xff]
        %v4310 = vld [vmem:[%s4299 + $0x50] sm:$0xff]
        %v4311 = vld [vmem:[%s4299 + $0x58] sm:$0xff]
        %v4312 = vld [vmem:[%s4299 + $0x60] sm:$0xff]
        %v4313 = vld [vmem:[%s4299 + $0x68] sm:$0xff]
        %v4314 = vld [vmem:[%s4299 + $0x70] sm:$0xff]
        %v4315 = vld [vmem:[%s4299 + $0x78] sm:$0xff]
        %v4316 = vld [vmem:[%s4299 + $0x80] sm:$0xff]
        %v4317 = vld [vmem:[%s4299 + $0x88] sm:$0xff]
        %v4318 = vld [vmem:[%s4299 + $0x90] sm:$0xff]
        %v4319 = vld [vmem:[%s4299 + $0x98] sm:$0xff]
        %v4320 = vld [vmem:[%s4299 + $0xa0] sm:$0xff]
        %v4321 = vld [vmem:[%s4299 + $0xa8] sm:$0xff]
        %v4322 = vld [vmem:[%s4299 + $0xb0] sm:$0xff]
        %v4323 = vld [vmem:[%s4299 + $0xb8] sm:$0xff]
        %v4324 = vld [vmem:[%s4299 + $0xc0] sm:$0xff]
        %v4325 = vld [vmem:[%s4299 + $0xc8] sm:$0xff]
        %v4326 = vld [vmem:[%s4299 + $0xd0] sm:$0xff]
        %v4327 = vld [vmem:[%s4299 + $0xd8] sm:$0xff]
        %v4328 = vld [vmem:[%s4299 + $0xe0] sm:$0xff]
        %v4329 = vld [vmem:[%s4299 + $0xe8] sm:$0xff]
        %v4330 = vld [vmem:[%s4299 + $0xf0] sm:$0xff]
        %v4331 = vld [vmem:[%s4299 + $0xf8] sm:$0xff]
        %v4332 = vld [vmem:[%s4299 + $0x100] sm:$0xff]
        %v4333 = vld [vmem:[%s4299 + $0x108] sm:$0xff]
        %v4334 = vld [vmem:[%s4299 + $0x110] sm:$0xff]
        %v4335 = vld [vmem:[%s4299 + $0x118] sm:$0xff]
        %v4336 = vld [vmem:[%s4299 + $0x120] sm:$0xff]
        %v4337 = vld [vmem:[%s4299 + $0x128] sm:$0xff]
        %v4338 = vld [vmem:[%s4299 + $0x130] sm:$0xff]
        %v4339 = vld [vmem:[%s4299 + $0x138] sm:$0xff]
        %v4340 = vld [vmem:[%s4299 + $0x140] sm:$0xff]
        %v4341 = vld [vmem:[%s4299 + $0x148] sm:$0xff]
        %v4342 = vld [vmem:[%s4299 + $0x150] sm:$0xff]
        %v4343 = vld [vmem:[%s4299 + $0x158] sm:$0xff]
        %v4344 = vld [vmem:[%s4299 + $0x160] sm:$0xff]
        %v4345 = vld [vmem:[%s4299 + $0x168] sm:$0xff]
        %v4346 = vld [vmem:[%s4299 + $0x170] sm:$0xff]
        %v4347 = vld [vmem:[%s4299 + $0x178] sm:$0xff]
        %v4348 = vcombine.low %v1646, %v1667
        %v4349 = vcombine.high %v1646, %v1667
        %v4350 = vcombine.low %v1653, %v1674
        %v4351 = vcombine.low %v1681, %v1702
        %v4352 = vcombine.high %v1681, %v1702
        %v4353 = vcombine.low %v1688, %v1709
        %v4354 = vcombine.low %v1716, %v1737
        %v4355 = vcombine.high %v1716, %v1737
        %v4356 = vcombine.low %v1723, %v1744
        %v4357 = vcombine.low %v1751, %v1772
        %v4358 = vcombine.high %v1751, %v1772
        %v4359 = vcombine.low %v1758, %v1779
        %v4360 = vcombine.low %v1786, %v1807
        %v4361 = vcombine.high %v1786, %v1807
        %v4362 = vcombine.low %v1793, %v1814
        %v4363 = vcombine.low %v1821, %v1842
        %v4364 = vcombine.high %v1821, %v1842
        %v4365 = vcombine.low %v1828, %v1849
        %v4366 = vcombine.low %v1856, %v1877
        %v4367 = vcombine.high %v1856, %v1877
        %v4368 = vcombine.low %v1863, %v1884
        %v4369 = vcombine.low %v1891, %v1912
        %v4370 = vcombine.high %v1891, %v1912
        %v4371 = vcombine.low %v1898, %v1919
        %v4372 = vcombine.low %v1926, %v1947
        %v4373 = vcombine.high %v1926, %v1947
        %v4374 = vcombine.low %v1933, %v1954
        %v4375 = vcombine.low %v1961, %v1982
        %v4376 = vcombine.high %v1961, %v1982
        %v4377 = vcombine.low %v1968, %v1989
        %v4378 = vcombine.low %v1996, %v2017
        %v4379 = vcombine.high %v1996, %v2017
        %v4380 = vcombine.low %v2003, %v2024
        %v4381 = vcombine.low %v2031, %v2052
        %v4382 = vcombine.high %v2031, %v2052
        %v4383 = vcombine.low %v2038, %v2059
        %v4384 = vcombine.low %v2066, %v2087
        %v4385 = vcombine.high %v2066, %v2087
        %v4386 = vcombine.low %v2073, %v2094
        %v4387 = vcombine.low %v2101, %v2122
        %v4388 = vcombine.high %v2101, %v2122
        %v4389 = vcombine.low %v2108, %v2129
        %v4390 = vcombine.low %v2136, %v2157
        %v4391 = vcombine.high %v2136, %v2157
        %v4392 = vcombine.low %v2143, %v2164
        %v4393 = vcombine.low %v2171, %v2192
        %v4394 = vcombine.high %v2171, %v2192
        %v4395 = vcombine.low %v2178, %v2199
        %v4396 = vcombine.low %v2206, %v2227
        %v4397 = vcombine.high %v2206, %v2227
        %v4398 = vcombine.low %v2213, %v2234
        %v4399 = vcombine.low %v2241, %v2260
        %v4400 = vcombine.high %v2241, %v2260
        %v4401 = vcombine.low %v2248, %v2267
        %v4402 = vcombine.low %v2811, %v2812
        %v4403 = vcombine.high %v2811, %v2812
        %v4404 = vcombine.low %v2813, %v2814
        %v4405 = vcombine.high %v2813, %v2814
        %v4407 = vunpack.c.l.s4 1983009808
        %v4408 = vunpack.c.0.s8 %v4407
        %v4409 = vlaneseq
        %v4410 = vshrl.u32 %v4409, 7
        %v4411 = vsub.s32 %v4408, %v4410
        %v4412 = vrot.slane %v4402, %v4411
        %v4414 = vunpack.c.l.s4 1983009808
        %v4415 = vunpack.c.0.s8 %v4414
        %v4416 = vlaneseq
        %v4417 = vshrl.u32 %v4416, 7
        %v4418 = vsub.s32 %v4415, %v4417
        %v4419 = vrot.slane %v4403, %v4418
        %v4421 = vunpack.c.l.s4 1983009808
        %v4422 = vunpack.c.0.s8 %v4421
        %v4423 = vlaneseq
        %v4424 = vshrl.u32 %v4423, 7
        %v4425 = vsub.s32 %v4422, %v4424
        %v4426 = vrot.slane %v4404, %v4425
        %v4428 = vunpack.c.l.s4 1983009808
        %v4429 = vunpack.c.0.s8 %v4428
        %v4430 = vlaneseq
        %v4431 = vshrl.u32 %v4430, 7
        %v4432 = vsub.s32 %v4429, %v4431
        %v4433 = vrot.slane %v4405, %v4432
        %v4434 = vcombine.low %v4412, %v4426
        %v4435 = vcombine.high %v4412, %v4426
        %v4436 = vcombine.low %v4419, %v4433
        %v4437 = vcombine.low %v2846, %v2847
        %v4438 = vcombine.high %v2846, %v2847
        %v4439 = vcombine.low %v2848, %v2849
        %v4440 = vcombine.high %v2848, %v2849
        %v4442 = vunpack.c.l.s4 1983009808
        %v4443 = vunpack.c.0.s8 %v4442
        %v4444 = vlaneseq
        %v4445 = vshrl.u32 %v4444, 7
        %v4446 = vsub.s32 %v4443, %v4445
        %v4447 = vrot.slane %v4437, %v4446
        %v4449 = vunpack.c.l.s4 1983009808
        %v4450 = vunpack.c.0.s8 %v4449
        %v4451 = vlaneseq
        %v4452 = vshrl.u32 %v4451, 7
        %v4453 = vsub.s32 %v4450, %v4452
        %v4454 = vrot.slane %v4438, %v4453
        %v4456 = vunpack.c.l.s4 1983009808
        %v4457 = vunpack.c.0.s8 %v4456
        %v4458 = vlaneseq
        %v4459 = vshrl.u32 %v4458, 7
        %v4460 = vsub.s32 %v4457, %v4459
        %v4461 = vrot.slane %v4439, %v4460
        %v4463 = vunpack.c.l.s4 1983009808
        %v4464 = vunpack.c.0.s8 %v4463
        %v4465 = vlaneseq
        %v4466 = vshrl.u32 %v4465, 7
        %v4467 = vsub.s32 %v4464, %v4466
        %v4468 = vrot.slane %v4440, %v4467
        %v4469 = vcombine.low %v4447, %v4461
        %v4470 = vcombine.high %v4447, %v4461
        %v4471 = vcombine.low %v4454, %v4468
        %v4472 = vcombine.low %v2865, %v4244
        %v4473 = vcombine.high %v2865, %v4244
        %v4474 = vcombine.low %v4245, %v4246
        %v4475 = vcombine.high %v4245, %v4246
        %v4477 = vunpack.c.l.s4 1983009808
        %v4478 = vunpack.c.0.s8 %v4477
        %v4479 = vlaneseq
        %v4480 = vshrl.u32 %v4479, 7
        %v4481 = vsub.s32 %v4478, %v4480
        %v4482 = vrot.slane %v4472, %v4481
        %v4484 = vunpack.c.l.s4 1983009808
        %v4485 = vunpack.c.0.s8 %v4484
        %v4486 = vlaneseq
        %v4487 = vshrl.u32 %v4486, 7
        %v4488 = vsub.s32 %v4485, %v4487
        %v4489 = vrot.slane %v4473, %v4488
        %v4491 = vunpack.c.l.s4 1983009808
        %v4492 = vunpack.c.0.s8 %v4491
        %v4493 = vlaneseq
        %v4494 = vshrl.u32 %v4493, 7
        %v4495 = vsub.s32 %v4492, %v4494
        %v4496 = vrot.slane %v4474, %v4495
        %v4498 = vunpack.c.l.s4 1983009808
        %v4499 = vunpack.c.0.s8 %v4498
        %v4500 = vlaneseq
        %v4501 = vshrl.u32 %v4500, 7
        %v4502 = vsub.s32 %v4499, %v4501
        %v4503 = vrot.slane %v4475, %v4502
        %v4504 = vcombine.low %v4482, %v4496
        %v4505 = vcombine.high %v4482, %v4496
        %v4506 = vcombine.low %v4489, %v4503
        %v4507 = vcombine.low %v4247, %v4279
        %v4508 = vcombine.high %v4247, %v4279
        %v4509 = vcombine.low %v4280, %v4281
        %v4510 = vcombine.high %v4280, %v4281
        %v4512 = vunpack.c.l.s4 1983009808
        %v4513 = vunpack.c.0.s8 %v4512
        %v4514 = vlaneseq
        %v4515 = vshrl.u32 %v4514, 7
        %v4516 = vsub.s32 %v4513, %v4515
        %v4517 = vrot.slane %v4507, %v4516
        %v4519 = vunpack.c.l.s4 1983009808
        %v4520 = vunpack.c.0.s8 %v4519
        %v4521 = vlaneseq
        %v4522 = vshrl.u32 %v4521, 7
        %v4523 = vsub.s32 %v4520, %v4522
        %v4524 = vrot.slane %v4508, %v4523
        %v4526 = vunpack.c.l.s4 1983009808
        %v4527 = vunpack.c.0.s8 %v4526
        %v4528 = vlaneseq
        %v4529 = vshrl.u32 %v4528, 7
        %v4530 = vsub.s32 %v4527, %v4529
        %v4531 = vrot.slane %v4509, %v4530
        %v4533 = vunpack.c.l.s4 1983009808
        %v4534 = vunpack.c.0.s8 %v4533
        %v4535 = vlaneseq
        %v4536 = vshrl.u32 %v4535, 7
        %v4537 = vsub.s32 %v4534, %v4536
        %v4538 = vrot.slane %v4510, %v4537
        %v4539 = vcombine.low %v4517, %v4531
        %v4540 = vcombine.high %v4517, %v4531
        %v4541 = vcombine.low %v4524, %v4538
        %v4542 = vcombine.low %v4282, %v4298
        %v4543 = vcombine.high %v4282, %v4298
        %v4545 = vunpack.c.l.s4 1983009808
        %v4546 = vunpack.c.0.s8 %v4545
        %v4547 = vlaneseq
        %v4548 = vshrl.u32 %v4547, 7
        %v4549 = vsub.s32 %v4546, %v4548
        %v4550 = vrot.slane %v4542, %v4549
        %v4552 = vunpack.c.l.s4 1983009808
        %v4553 = vunpack.c.0.s8 %v4552
        %v4554 = vlaneseq
        %v4555 = vshrl.u32 %v4554, 7
        %v4556 = vsub.s32 %v4553, %v4555
        %v4557 = vrot.slane %v4543, %v4556
        %v4558 = vcombine.high %v4550, %v4550
        %4628 = vmatprep.subr.mxu0 0.0
        %4629 = vmatpush1.msra.mxu0 %v4300
        %4630 = vmatprep.subr.mxu0 0.0
        %4631 = vmatpush1.msra.mxu0 %v4301
        %4632 = vmatprep.subr.mxu0 0.0
        %4633 = vmatpush1.msra.mxu0 %v4302
        %4634 = vmatprep.subr.mxu0 0.0
        %4635 = vmatpush1.msra.mxu0 %v4303
        %4636 = vmatprep.subr.mxu0 0.0
        %4637 = vmatpush1.msra.mxu0 %v4304
        %4638 = vmatprep.subr.mxu0 0.0
        %4639 = vmatpush1.msra.mxu0 %v4305
        %4640 = vmatprep.subr.mxu0 0.0
        %4641 = vmatpush1.msra.mxu0 %v4306
        %4642 = vmatprep.subr.mxu0 0.0
        %4643 = vmatpush1.msra.mxu0 %v4307
        %4644 = vmatprep.subr.mxu0 0.0
        %4645 = vmatpush1.msra.mxu0 %v4308
        %4646 = vmatprep.subr.mxu0 0.0
        %4647 = vmatpush1.msra.mxu0 %v4309
        %4648 = vmatprep.subr.mxu0 0.0
        %4649 = vmatpush1.msra.mxu0 %v4310
        %4650 = vmatprep.subr.mxu0 0.0
        %4651 = vmatpush1.msra.mxu0 %v4311
        %4652 = vmatprep.subr.mxu0 0.0
        %4653 = vmatpush1.msra.mxu0 %v4312
        %4654 = vmatprep.subr.mxu0 0.0
        %4655 = vmatpush1.msra.mxu0 %v4313
        %4656 = vmatprep.subr.mxu0 0.0
        %4657 = vmatpush1.msra.mxu0 %v4314
        %4658 = vmatprep.subr.mxu0 0.0
        %4659 = vmatpush1.msra.mxu0 %v4315
        %4660 = vmatprep.subr.mxu0 0.0
        %4661 = vmatpush1.msra.mxu0 %v4316
        %4662 = vmatprep.subr.mxu0 0.0
        %4663 = vmatpush1.msra.mxu0 %v4317
        %4664 = vmatprep.subr.mxu0 0.0
        %4665 = vmatpush1.msra.mxu0 %v4318
        %4666 = vmatprep.subr.mxu0 0.0
        %4667 = vmatpush1.msra.mxu0 %v4319
        %4668 = vmatprep.subr.mxu0 0.0
        %4669 = vmatpush1.msra.mxu0 %v4320
        %4670 = vmatprep.subr.mxu0 0.0
        %4671 = vmatpush1.msra.mxu0 %v4321
        %4672 = vmatprep.subr.mxu0 0.0
        %4673 = vmatpush1.msra.mxu0 %v4322
        %4674 = vmatprep.subr.mxu0 0.0
        %4675 = vmatpush1.msra.mxu0 %v4323
        %4676 = vmatprep.subr.mxu0 0.0
        %4677 = vmatpush1.msra.mxu0 %v4324
        %4678 = vmatprep.subr.mxu0 0.0
        %4679 = vmatpush1.msra.mxu0 %v4325
        %4680 = vmatprep.subr.mxu0 0.0
        %4681 = vmatpush1.msra.mxu0 %v4326
        %4682 = vmatprep.subr.mxu0 0.0
        %4683 = vmatpush1.msra.mxu0 %v4327
        %4684 = vmatprep.subr.mxu0 0.0
        %4685 = vmatpush1.msra.mxu0 %v4328
        %4686 = vmatprep.subr.mxu0 0.0
        %4687 = vmatpush1.msra.mxu0 %v4329
        %4688 = vmatprep.subr.mxu0 0.0
        %4689 = vmatpush1.msra.mxu0 %v4330
        %4690 = vmatprep.subr.mxu0 0.0
        %4691 = vmatpush1.msra.mxu0 %v4331
        %4692 = vmatprep.mubr.f32.mxu0 %v4349
        %4693 = vmatmul.mubr.f32.gmra.mrb[0].mxu0 %v4348
        %v4694 = vpop.f32.mrb[0].mxu0
        %v4695 = vadd.f32 0.0, %v4694
        %v4696 = vpop.f32.mrb[0].mxu0
        %4697 = vmatprep.mubr.f32.mxu0 %v4352
        %4698 = vmatmul.mubr.f32.gmra.mrb[0].mxu0 %v4351
        %v4699 = vpop.f32.mrb[0].mxu0
        %v4700 = vadd.f32 0.0, %v4699
        %v4701 = vpop.f32.mrb[0].mxu0
        %4702 = vmatprep.mubr.f32.mxu0 %v4355
        %4703 = vmatmul.mubr.f32.gmra.mrb[0].mxu0 %v4354
        %v4704 = vpop.f32.mrb[0].mxu0
        %v4705 = vadd.f32 0.0, %v4704
        %v4706 = vpop.f32.mrb[0].mxu0
        %4707 = vmatprep.mubr.f32.mxu0 %v4358
        %4708 = vmatmul.mubr.f32.gmra.mrb[0].mxu0 %v4357
        %v4709 = vpop.f32.mrb[0].mxu0
        %v4710 = vadd.f32 0.0, %v4709
        %v4711 = vpop.f32.mrb[0].mxu0
        %4712 = vmatprep.mubr.f32.mxu0 %v4361
        %4713 = vmatmul.mubr.f32.gmra.mrb[0].mxu0 %v4360
        %v4714 = vpop.f32.mrb[0].mxu0
        %v4715 = vadd.f32 0.0, %v4714
        %v4716 = vpop.f32.mrb[0].mxu0
        %4717 = vmatprep.mubr.f32.mxu0 %v4364
        %4718 = vmatmul.mubr.f32.gmra.mrb[0].mxu0 %v4363
        %v4719 = vpop.f32.mrb[0].mxu0
        %v4720 = vadd.f32 0.0, %v4719
        %v4721 = vpop.f32.mrb[0].mxu0
        %4722 = vmatprep.mubr.f32.mxu0 %v4367
        %4723 = vmatmul.mubr.f32.gmra.mrb[0].mxu0 %v4366
        %v4724 = vpop.f32.mrb[0].mxu0
        %v4725 = vadd.f32 0.0, %v4724
        %v4726 = vpop.f32.mrb[0].mxu0
        %4727 = vmatprep.mubr.f32.mxu0 %v4370
        %4728 = vmatmul.mubr.f32.gmra.mrb[0].mxu0 %v4369
        %v4729 = vpop.f32.mrb[0].mxu0
        %v4730 = vadd.f32 0.0, %v4729
        %v4731 = vpop.f32.mrb[0].mxu0
        %4732 = vmatprep.mubr.f32.mxu0 %v4373
        %4733 = vmatmul.mubr.f32.gmra.mrb[0].mxu0 %v4372
        %v4734 = vpop.f32.mrb[0].mxu0
        %v4735 = vadd.f32 0.0, %v4734
        %v4736 = vpop.f32.mrb[0].mxu0
        %4737 = vmatprep.mubr.f32.mxu0 %v4376
        %4738 = vmatmul.mubr.f32.gmra.mrb[0].mxu0 %v4375
        %v4739 = vpop.f32.mrb[0].mxu0
        %v4740 = vadd.f32 0.0, %v4739
        %v4741 = vpop.f32.mrb[0].mxu0
        %4742 = vmatprep.mubr.f32.mxu0 %v4379
        %4743 = vmatmul.mubr.f32.gmra.mrb[0].mxu0 %v4378
        %v4744 = vpop.f32.mrb[0].mxu0
        %v4745 = vadd.f32 0.0, %v4744
        %v4746 = vpop.f32.mrb[0].mxu0
        %4747 = vmatprep.mubr.f32.mxu0 %v4382
        %4748 = vmatmul.mubr.f32.gmra.mrb[0].mxu0 %v4381
        %v4749 = vpop.f32.mrb[0].mxu0
        %v4750 = vadd.f32 0.0, %v4749
        %v4751 = vpop.f32.mrb[0].mxu0
        %4752 = vmatprep.mubr.f32.mxu0 %v4385
        %4753 = vmatmul.mubr.f32.gmra.mrb[0].mxu0 %v4384
        %v4754 = vpop.f32.mrb[0].mxu0
        %v4755 = vadd.f32 0.0, %v4754
        %v4756 = vpop.f32.mrb[0].mxu0
        %4757 = vmatprep.mubr.f32.mxu0 %v4388
        %4758 = vmatmul.mubr.f32.gmra.mrb[0].mxu0 %v4387
        %v4759 = vpop.f32.mrb[0].mxu0
        %v4760 = vadd.f32 0.0, %v4759
        %v4761 = vpop.f32.mrb[0].mxu0
        %4762 = vmatprep.mubr.f32.mxu0 %v4391
        %4763 = vmatmul.mubr.f32.gmra.mrb[0].mxu0 %v4390
        %v4764 = vpop.f32.mrb[0].mxu0
        %v4765 = vadd.f32 0.0, %v4764
        %v4766 = vpop.f32.mrb[0].mxu0
        %4767 = vmatprep.mubr.f32.mxu0 %v4394
        %4768 = vmatmul.mubr.f32.gmra.mrb[0].mxu0 %v4393
        %v4769 = vpop.f32.mrb[0].mxu0
        %v4770 = vadd.f32 0.0, %v4769
        %v4771 = vpop.f32.mrb[0].mxu0
        %4772 = vmatprep.mubr.f32.mxu0 %v4397
        %4773 = vmatmul.mubr.f32.gmra.mrb[0].mxu0 %v4396
        %v4774 = vpop.f32.mrb[0].mxu0
        %v4775 = vadd.f32 0.0, %v4774
        %v4776 = vpop.f32.mrb[0].mxu0
        %4777 = vmatprep.mubr.f32.mxu0 %v4400
        %4778 = vmatmul.mubr.f32.gmra.mrb[0].mxu0 %v4399
        %v4779 = vpop.f32.mrb[0].mxu0
        %v4780 = vadd.f32 0.0, %v4779
        %v4781 = vpop.f32.mrb[0].mxu0
        %4782 = vmatprep.mubr.f32.mxu0 %v4435
        %4783 = vmatmul.mubr.f32.gmra.mrb[0].mxu0 %v4434
        %v4784 = vpop.f32.mrb[0].mxu0
        %v4785 = vadd.f32 0.0, %v4784
        %v4786 = vpop.f32.mrb[0].mxu0
        %4787 = vmatprep.mubr.f32.mxu0 %v4470
        %4788 = vmatmul.mubr.f32.gmra.mrb[0].mxu0 %v4469
        %v4789 = vpop.f32.mrb[0].mxu0
        %v4790 = vadd.f32 0.0, %v4789
        %v4791 = vpop.f32.mrb[0].mxu0
        %4792 = vmatprep.mubr.f32.mxu0 %v4505
        %4793 = vmatmul.mubr.f32.gmra.mrb[0].mxu0 %v4504
        %v4794 = vpop.f32.mrb[0].mxu0
        %v4795 = vadd.f32 0.0, %v4794
        %v4796 = vpop.f32.mrb[0].mxu0
        %4797 = vmatprep.mubr.f32.mxu0 %v4540
        %4798 = vmatmul.mubr.f32.gmra.mrb[0].mxu0 %v4539
        %v4799 = vpop.f32.mrb[0].mxu0
        %v4800 = vadd.f32 0.0, %v4799
        %v4801 = vpop.f32.mrb[0].mxu0
        %4802 = vmatprep.mubr.f32.mxu0 %v4558
        %4803 = vmatmul.mubr.f32.gmra.mrb[0].mxu0 %v4550
        %v4804 = vpop.f32.mrb[0].mxu0
        %v4805 = vadd.f32 0.0, %v4804
        %v4806 = vpop.f32.mrb[0].mxu0
        %4807 = vdwg.mxu0
        %4808 = vmatprep.subr.mxu0 0.0
        %4809 = vmatpush1.msra.mxu0 %v4332
        %4810 = vmatprep.subr.mxu0 0.0
        %4811 = vmatpush1.msra.mxu0 %v4333
        %4812 = vmatprep.subr.mxu0 0.0
        %4813 = vmatpush1.msra.mxu0 %v4334
        %4814 = vmatprep.subr.mxu0 0.0
        %4815 = vmatpush1.msra.mxu0 %v4335
        %4816 = vmatprep.subr.mxu0 0.0
        %4817 = vmatpush1.msra.mxu0 %v4336
        %4818 = vmatprep.subr.mxu0 0.0
        %4819 = vmatpush1.msra.mxu0 %v4337
        %4820 = vmatprep.subr.mxu0 0.0
        %4821 = vmatpush1.msra.mxu0 %v4338
        %4822 = vmatprep.subr.mxu0 0.0
        %4823 = vmatpush1.msra.mxu0 %v4339
        %4824 = vmatprep.subr.mxu0 0.0
        %4825 = vmatpush1.msra.mxu0 %v4340
        %4826 = vmatprep.subr.mxu0 0.0
        %4827 = vmatpush1.msra.mxu0 %v4341
        %4828 = vmatprep.subr.mxu0 0.0
        %4829 = vmatpush1.msra.mxu0 %v4342
        %4830 = vmatprep.subr.mxu0 0.0
        %4831 = vmatpush1.msra.mxu0 %v4343
        %4832 = vmatprep.subr.mxu0 0.0
        %4833 = vmatpush1.msra.mxu0 %v4344
        %4834 = vmatprep.subr.mxu0 0.0
        %4835 = vmatpush1.msra.mxu0 %v4345
        %4836 = vmatprep.subr.mxu0 0.0
        %4837 = vmatpush1.msra.mxu0 %v4346
        %4838 = vmatprep.subr.mxu0 0.0
        %4839 = vmatpush1.msra.mxu0 %v4347
        %4840 = vmatprep.subr.mxu0 0.0
        %4841 = vmatpush1.msra.mxu0 0.0
        %4842 = vmatprep.subr.mxu0 0.0
        %4843 = vmatpush1.msra.mxu0 0.0
        %4844 = vmatprep.subr.mxu0 0.0
        %4845 = vmatpush1.msra.mxu0 0.0
        %4846 = vmatprep.subr.mxu0 0.0
        %4847 = vmatpush1.msra.mxu0 0.0
        %4848 = vmatprep.subr.mxu0 0.0
        %4849 = vmatpush1.msra.mxu0 0.0
        %4850 = vmatprep.subr.mxu0 0.0
        %4851 = vmatpush1.msra.mxu0 0.0
        %4852 = vmatprep.subr.mxu0 0.0
        %4853 = vmatpush1.msra.mxu0 0.0
        %4854 = vmatprep.subr.mxu0 0.0
        %4855 = vmatpush1.msra.mxu0 0.0
        %4856 = vmatprep.subr.mxu0 0.0
        %4857 = vmatpush1.msra.mxu0 0.0
        %4858 = vmatprep.subr.mxu0 0.0
        %4859 = vmatpush1.msra.mxu0 0.0
        %4860 = vmatprep.subr.mxu0 0.0
        %4861 = vmatpush1.msra.mxu0 0.0
        %4862 = vmatprep.subr.mxu0 0.0
        %4863 = vmatpush1.msra.mxu0 0.0
        %4864 = vmatprep.subr.mxu0 0.0
        %4865 = vmatpush1.msra.mxu0 0.0
        %4866 = vmatprep.subr.mxu0 0.0
        %4867 = vmatpush1.msra.mxu0 0.0
        %4868 = vmatprep.subr.mxu0 0.0
        %4869 = vmatpush1.msra.mxu0 0.0
        %4870 = vmatprep.subr.mxu0 0.0
        %4871 = vmatpush1.msra.mxu0 0.0
        %4872 = vmatprep.mubr.f32.mxu0 0.0
        %4873 = vmatmul.mubr.f32.gmra.mrb[0].mxu0 %v4350
        %v4874 = vpop.f32.mrb[0].mxu0
        %v4875 = vadd.f32 %v4695, %v4874
        %v4876 = vpop.f32.mrb[0].mxu0
        %4877 = vmatprep.mubr.f32.mxu0 0.0
        %4878 = vmatmul.mubr.f32.gmra.mrb[0].mxu0 %v4353
        %v4879 = vpop.f32.mrb[0].mxu0
        %v4880 = vadd.f32 %v4700, %v4879
        %v4881 = vpop.f32.mrb[0].mxu0
        %4882 = vmatprep.mubr.f32.mxu0 0.0
        %4883 = vmatmul.mubr.f32.gmra.mrb[0].mxu0 %v4356
        %v4884 = vpop.f32.mrb[0].mxu0
        %v4885 = vadd.f32 %v4705, %v4884
        %v4886 = vpop.f32.mrb[0].mxu0
        %4887 = vmatprep.mubr.f32.mxu0 0.0
        %4888 = vmatmul.mubr.f32.gmra.mrb[0].mxu0 %v4359
        %v4889 = vpop.f32.mrb[0].mxu0
        %v4890 = vadd.f32 %v4710, %v4889
        %v4891 = vpop.f32.mrb[0].mxu0
        %4892 = vmatprep.mubr.f32.mxu0 0.0
        %4893 = vmatmul.mubr.f32.gmra.mrb[0].mxu0 %v4362
        %v4894 = vpop.f32.mrb[0].mxu0
        %v4895 = vadd.f32 %v4715, %v4894
        %v4896 = vpop.f32.mrb[0].mxu0
        %4897 = vmatprep.mubr.f32.mxu0 0.0
        %4898 = vmatmul.mubr.f32.gmra.mrb[0].mxu0 %v4365
        %v4899 = vpop.f32.mrb[0].mxu0
        %v4900 = vadd.f32 %v4720, %v4899
        %v4901 = vpop.f32.mrb[0].mxu0
        %4902 = vmatprep.mubr.f32.mxu0 0.0
        %4903 = vmatmul.mubr.f32.gmra.mrb[0].mxu0 %v4368
        %v4904 = vpop.f32.mrb[0].mxu0
        %v4905 = vadd.f32 %v4725, %v4904
        %v4906 = vpop.f32.mrb[0].mxu0
        %4907 = vmatprep.mubr.f32.mxu0 0.0
        %4908 = vmatmul.mubr.f32.gmra.mrb[0].mxu0 %v4371
        %v4909 = vpop.f32.mrb[0].mxu0
        %v4910 = vadd.f32 %v4730, %v4909
        %v4911 = vpop.f32.mrb[0].mxu0
        %4912 = vmatprep.mubr.f32.mxu0 0.0
        %4913 = vmatmul.mubr.f32.gmra.mrb[0].mxu0 %v4374
        %v4914 = vpop.f32.mrb[0].mxu0
        %v4915 = vadd.f32 %v4735, %v4914
        %v4916 = vpop.f32.mrb[0].mxu0
        %4917 = vmatprep.mubr.f32.mxu0 0.0
        %4918 = vmatmul.mubr.f32.gmra.mrb[0].mxu0 %v4377
        %v4919 = vpop.f32.mrb[0].mxu0
        %v4920 = vadd.f32 %v4740, %v4919
        %v4921 = vpop.f32.mrb[0].mxu0
        %4922 = vmatprep.mubr.f32.mxu0 0.0
        %4923 = vmatmul.mubr.f32.gmra.mrb[0].mxu0 %v4380
        %v4924 = vpop.f32.mrb[0].mxu0
        %v4925 = vadd.f32 %v4745, %v4924
        %v4926 = vpop.f32.mrb[0].mxu0
        %4927 = vmatprep.mubr.f32.mxu0 0.0
        %4928 = vmatmul.mubr.f32.gmra.mrb[0].mxu0 %v4383
        %v4929 = vpop.f32.mrb[0].mxu0
        %v4930 = vadd.f32 %v4750, %v4929
        %v4931 = vpop.f32.mrb[0].mxu0
        %4932 = vmatprep.mubr.f32.mxu0 0.0
        %4933 = vmatmul.mubr.f32.gmra.mrb[0].mxu0 %v4386
        %v4934 = vpop.f32.mrb[0].mxu0
        %v4935 = vadd.f32 %v4755, %v4934
        %v4936 = vpop.f32.mrb[0].mxu0
        %4937 = vmatprep.mubr.f32.mxu0 0.0
        %4938 = vmatmul.mubr.f32.gmra.mrb[0].mxu0 %v4389
        %v4939 = vpop.f32.mrb[0].mxu0
        %v4940 = vadd.f32 %v4760, %v4939
        %v4941 = vpop.f32.mrb[0].mxu0
        %4942 = vmatprep.mubr.f32.mxu0 0.0
        %4943 = vmatmul.mubr.f32.gmra.mrb[0].mxu0 %v4392
        %v4944 = vpop.f32.mrb[0].mxu0
        %v4945 = vadd.f32 %v4765, %v4944
        %v4946 = vpop.f32.mrb[0].mxu0
        %4947 = vmatprep.mubr.f32.mxu0 0.0
        %4948 = vmatmul.mubr.f32.gmra.mrb[0].mxu0 %v4395
        %v4949 = vpop.f32.mrb[0].mxu0
        %v4950 = vadd.f32 %v4770, %v4949
        %v4951 = vpop.f32.mrb[0].mxu0
        %4952 = vmatprep.mubr.f32.mxu0 0.0
        %4953 = vmatmul.mubr.f32.gmra.mrb[0].mxu0 %v4398
        %v4954 = vpop.f32.mrb[0].mxu0
        %v4955 = vadd.f32 %v4775, %v4954
        %v4956 = vpop.f32.mrb[0].mxu0
        %4957 = vmatprep.mubr.f32.mxu0 0.0
        %4958 = vmatmul.mubr.f32.gmra.mrb[0].mxu0 %v4401
        %v4959 = vpop.f32.mrb[0].mxu0
        %v4960 = vadd.f32 %v4780, %v4959
        %v4961 = vpop.f32.mrb[0].mxu0
        %4962 = vmatprep.mubr.f32.mxu0 0.0
        %4963 = vmatmul.mubr.f32.gmra.mrb[0].mxu0 %v4436
        %v4964 = vpop.f32.mrb[0].mxu0
        %v4965 = vadd.f32 %v4785, %v4964
        %v4966 = vpop.f32.mrb[0].mxu0
        %4967 = vmatprep.mubr.f32.mxu0 0.0
        %4968 = vmatmul.mubr.f32.gmra.mrb[0].mxu0 %v4471
        %v4969 = vpop.f32.mrb[0].mxu0
        %v4970 = vadd.f32 %v4790, %v4969
        %v4971 = vpop.f32.mrb[0].mxu0
        %4972 = vmatprep.mubr.f32.mxu0 0.0
        %4973 = vmatmul.mubr.f32.gmra.mrb[0].mxu0 %v4506
        %v4974 = vpop.f32.mrb[0].mxu0
        %v4975 = vadd.f32 %v4795, %v4974
        %v4976 = vpop.f32.mrb[0].mxu0
        %4977 = vmatprep.mubr.f32.mxu0 0.0
        %4978 = vmatmul.mubr.f32.gmra.mrb[0].mxu0 %v4541
        %v4979 = vpop.f32.mrb[0].mxu0
        %v4980 = vadd.f32 %v4800, %v4979
        %v4981 = vpop.f32.mrb[0].mxu0
        %4982 = vmatprep.mubr.f32.mxu0 0.0
        %4983 = vmatmul.mubr.f32.gmra.mrb[0].mxu0 %v4557
        %v4984 = vpop.f32.mrb[0].mxu0
        %v4985 = vadd.f32 %v4805, %v4984
        %v4986 = vpop.f32.mrb[0].mxu0
        %4987 = vdwg.mxu0
        %v4988 = vadd.f32 %v4190, %v4875
        %v4989 = vadd.f32 %v4191, %v4880
        %v4990 = vadd.f32 %v4192, %v4885
        %v4991 = vadd.f32 %v4193, %v4890
        %v4992 = vadd.f32 %v4194, %v4895
        %v4993 = vadd.f32 %v4195, %v4900
        %v4994 = vadd.f32 %v4196, %v4905
        %v4995 = vadd.f32 %v4197, %v4910
        %v4996 = vadd.f32 %v4198, %v4915
        %v4997 = vadd.f32 %v4199, %v4920
        %v4998 = vadd.f32 %v4200, %v4925
        %v4999 = vadd.f32 %v4201, %v4930
        %v5000 = vadd.f32 %v4202, %v4935
        %v5001 = vadd.f32 %v4203, %v4940
        %v5002 = vadd.f32 %v4204, %v4945
        %v5003 = vadd.f32 %v4205, %v4950
        %v5004 = vadd.f32 %v4206, %v4955
        %v5005 = vadd.f32 %v4207, %v4960
        %v5006 = vadd.f32 %v4208, %v4965
        %v5007 = vadd.f32 %v4209, %v4970
        %v5008 = vadd.f32 %v4210, %v4975
        %v5009 = vadd.f32 %v4211, %v4980
        %v5010 = vadd.f32 %v4212, %v4985
        %5011 = vst [vmem:[#allocation4] sm:$0xff] %v4988
        %5012 = vst [vmem:[#allocation4 + $0x8] sm:$0xff] %v4989
        %5013 = vst [vmem:[#allocation4 + $0x10] sm:$0xff] %v4990
        %5014 = vst [vmem:[#allocation4 + $0x18] sm:$0xff] %v4991
        %5015 = vst [vmem:[#allocation4 + $0x20] sm:$0xff] %v4992
        %5016 = vst [vmem:[#allocation4 + $0x28] sm:$0xff] %v4993
        %5017 = vst [vmem:[#allocation4 + $0x30] sm:$0xff] %v4994
        %5018 = vst [vmem:[#allocation4 + $0x38] sm:$0xff] %v4995
        %5019 = vst [vmem:[#allocation4 + $0x40] sm:$0xff] %v4996
        %5020 = vst [vmem:[#allocation4 + $0x48] sm:$0xff] %v4997
        %5021 = vst [vmem:[#allocation4 + $0x50] sm:$0xff] %v4998
        %5022 = vst [vmem:[#allocation4 + $0x58] sm:$0xff] %v4999
        %5023 = vst [vmem:[#allocation4 + $0x60] sm:$0xff] %v5000
        %5024 = vst [vmem:[#allocation4 + $0x68] sm:$0xff] %v5001
        %5025 = vst [vmem:[#allocation4 + $0x70] sm:$0xff] %v5002
        %5026 = vst [vmem:[#allocation4 + $0x78] sm:$0xff] %v5003
        %5027 = vst [vmem:[#allocation4 + $0x80] sm:$0xff] %v5004
        %5028 = vst [vmem:[#allocation4 + $0x88] sm:$0xff] %v5005
        %5029 = vst [vmem:[#allocation4 + $0x90] sm:$0xff] %v5006
        %5030 = vst [vmem:[#allocation4 + $0x98] sm:$0xff] %v5007
        %5031 = vst [vmem:[#allocation4 + $0xa0] sm:$0xff] %v5008
        %5032 = vst [vmem:[#allocation4 + $0xa8] sm:$0xff] %v5009
        %5033 = vst [vmem:[#allocation4 + $0xb0] sm:$0xf] %v5010
        %v5034 = vld [vmem:[#allocation4] sm:$0xff]
        %v5035 = vld [vmem:[#allocation4 + $0x8] sm:$0xff]
        %v5036 = vld [vmem:[#allocation4 + $0x10] sm:$0xff]
        %v5037 = vld [vmem:[#allocation4 + $0x18] sm:$0xff]
        %v5038 = vld [vmem:[#allocation4 + $0x20] sm:$0xff]
        %v5039 = vld [vmem:[#allocation4 + $0x28] sm:$0xff]
        %v5040 = vld [vmem:[#allocation4 + $0x30] sm:$0xff]
        %v5041 = vld [vmem:[#allocation4 + $0x38] sm:$0xff]
        %v5042 = vld [vmem:[#allocation4 + $0x40] sm:$0xff]
        %v5043 = vld [vmem:[#allocation4 + $0x48] sm:$0xff]
        %v5044 = vld [vmem:[#allocation4 + $0x50] sm:$0xff]
        %v5045 = vld [vmem:[#allocation4 + $0x58] sm:$0xff]
        %v5046 = vld [vmem:[#allocation4 + $0x60] sm:$0xff]
        %v5047 = vld [vmem:[#allocation4 + $0x68] sm:$0xff]
        %v5048 = vld [vmem:[#allocation4 + $0x70] sm:$0xff]
        %v5049 = vld [vmem:[#allocation4 + $0x78] sm:$0xff]
        %v5050 = vld [vmem:[#allocation4 + $0x80] sm:$0xff]
        %v5051 = vld [vmem:[#allocation4 + $0x88] sm:$0xff]
        %v5052 = vld [vmem:[#allocation4 + $0x90] sm:$0xff]
        %v5053 = vld [vmem:[#allocation4 + $0x98] sm:$0xff]
        %v5054 = vld [vmem:[#allocation4 + $0xa0] sm:$0xff]
        %v5055 = vld [vmem:[#allocation4 + $0xa8] sm:$0xff]
        %v5056 = vld [vmem:[#allocation4 + $0xb0] sm:$0xf]
        %v5057 = vld [vmem:[%s2] sm:$0x1]
        %v5059 = vlaneseq
        %v5060 = vshrl.u32 %v5059, 7
        %v5061 = vsub.s32 0, %v5060
        %v5062 = vrot.slane %v5057, %v5061
        %v5064 = vadd.f32 %v5034, %v5062
        %v5065 = vadd.f32 %v5035, %v5062
        %v5066 = vadd.f32 %v5036, %v5062
        %v5067 = vadd.f32 %v5037, %v5062
        %v5068 = vadd.f32 %v5038, %v5062
        %v5069 = vadd.f32 %v5039, %v5062
        %v5070 = vadd.f32 %v5040, %v5062
        %v5071 = vadd.f32 %v5041, %v5062
        %v5072 = vadd.f32 %v5042, %v5062
        %v5073 = vadd.f32 %v5043, %v5062
        %v5074 = vadd.f32 %v5044, %v5062
        %v5075 = vadd.f32 %v5045, %v5062
        %v5076 = vadd.f32 %v5046, %v5062
        %v5077 = vadd.f32 %v5047, %v5062
        %v5078 = vadd.f32 %v5048, %v5062
        %v5079 = vadd.f32 %v5049, %v5062
        %v5080 = vadd.f32 %v5050, %v5062
        %v5081 = vadd.f32 %v5051, %v5062
        %v5082 = vadd.f32 %v5052, %v5062
        %v5083 = vadd.f32 %v5053, %v5062
        %v5084 = vadd.f32 %v5054, %v5062
        %v5085 = vadd.f32 %v5055, %v5062
        %v5086 = vadd.f32 %v5056, %v5062
        %v5087 = vmax.f32 %v5064, 0.0
        %v5088 = vmax.f32 %v5065, 0.0
        %v5089 = vmax.f32 %v5066, 0.0
        %v5090 = vmax.f32 %v5067, 0.0
        %v5091 = vmax.f32 %v5068, 0.0
        %v5092 = vmax.f32 %v5069, 0.0
        %v5093 = vmax.f32 %v5070, 0.0
        %v5094 = vmax.f32 %v5071, 0.0
        %v5095 = vmax.f32 %v5072, 0.0
        %v5096 = vmax.f32 %v5073, 0.0
        %v5097 = vmax.f32 %v5074, 0.0
        %v5098 = vmax.f32 %v5075, 0.0
        %v5099 = vmax.f32 %v5076, 0.0
        %v5100 = vmax.f32 %v5077, 0.0
        %v5101 = vmax.f32 %v5078, 0.0
        %v5102 = vmax.f32 %v5079, 0.0
        %v5103 = vmax.f32 %v5080, 0.0
        %v5104 = vmax.f32 %v5081, 0.0
        %v5105 = vmax.f32 %v5082, 0.0
        %v5106 = vmax.f32 %v5083, 0.0
        %v5107 = vmax.f32 %v5084, 0.0
        %v5108 = vmax.f32 %v5085, 0.0
        %v5109 = vmax.f32 %v5086, 0.0
        %v5133 = vcombine.high %v5087, %v5087
        %v5135 = vunpack.c.l.s4 1983009808
        %v5136 = vunpack.c.0.s8 %v5135
        %v5137 = vlaneseq
        %v5138 = vshrl.u32 %v5137, 7
        %v5139 = vsub.s32 %v5136, %v5138
        %v5140 = vrot.slane %v5087, %v5139
        %v5142 = vunpack.c.l.s4 1983009808
        %v5143 = vunpack.c.0.s8 %v5142
        %v5144 = vlaneseq
        %v5145 = vshrl.u32 %v5144, 7
        %v5146 = vsub.s32 %v5143, %v5145
        %v5147 = vrot.slane %v5133, %v5146
        %v5148 = vcombine.high %v5140, %v5140
        %v5149 = vcombine.high %v5147, %v5147
        %v5150 = vcombine.high %v5088, %v5088
        %v5152 = vunpack.c.l.s4 1983009808
        %v5153 = vunpack.c.0.s8 %v5152
        %v5154 = vlaneseq
        %v5155 = vshrl.u32 %v5154, 7
        %v5156 = vsub.s32 %v5153, %v5155
        %v5157 = vrot.slane %v5088, %v5156
        %v5159 = vunpack.c.l.s4 1983009808
        %v5160 = vunpack.c.0.s8 %v5159
        %v5161 = vlaneseq
        %v5162 = vshrl.u32 %v5161, 7
        %v5163 = vsub.s32 %v5160, %v5162
        %v5164 = vrot.slane %v5150, %v5163
        %v5165 = vcombine.high %v5157, %v5157
        %v5166 = vcombine.high %v5164, %v5164
        %v5167 = vcombine.high %v5089, %v5089
        %v5169 = vunpack.c.l.s4 1983009808
        %v5170 = vunpack.c.0.s8 %v5169
        %v5171 = vlaneseq
        %v5172 = vshrl.u32 %v5171, 7
        %v5173 = vsub.s32 %v5170, %v5172
        %v5174 = vrot.slane %v5089, %v5173
        %v5176 = vunpack.c.l.s4 1983009808
        %v5177 = vunpack.c.0.s8 %v5176
        %v5178 = vlaneseq
        %v5179 = vshrl.u32 %v5178, 7
        %v5180 = vsub.s32 %v5177, %v5179
        %v5181 = vrot.slane %v5167, %v5180
        %v5182 = vcombine.high %v5174, %v5174
        %v5183 = vcombine.high %v5181, %v5181
        %v5184 = vcombine.high %v5090, %v5090
        %v5186 = vunpack.c.l.s4 1983009808
        %v5187 = vunpack.c.0.s8 %v5186
        %v5188 = vlaneseq
        %v5189 = vshrl.u32 %v5188, 7
        %v5190 = vsub.s32 %v5187, %v5189
        %v5191 = vrot.slane %v5090, %v5190
        %v5193 = vunpack.c.l.s4 1983009808
        %v5194 = vunpack.c.0.s8 %v5193
        %v5195 = vlaneseq
        %v5196 = vshrl.u32 %v5195, 7
        %v5197 = vsub.s32 %v5194, %v5196
        %v5198 = vrot.slane %v5184, %v5197
        %v5199 = vcombine.high %v5191, %v5191
        %v5200 = vcombine.high %v5198, %v5198
        %v5201 = vcombine.high %v5091, %v5091
        %v5203 = vunpack.c.l.s4 1983009808
        %v5204 = vunpack.c.0.s8 %v5203
        %v5205 = vlaneseq
        %v5206 = vshrl.u32 %v5205, 7
        %v5207 = vsub.s32 %v5204, %v5206
        %v5208 = vrot.slane %v5091, %v5207
        %v5210 = vunpack.c.l.s4 1983009808
        %v5211 = vunpack.c.0.s8 %v5210
        %v5212 = vlaneseq
        %v5213 = vshrl.u32 %v5212, 7
        %v5214 = vsub.s32 %v5211, %v5213
        %v5215 = vrot.slane %v5201, %v5214
        %v5216 = vcombine.high %v5208, %v5208
        %v5217 = vcombine.high %v5215, %v5215
        %v5218 = vcombine.high %v5092, %v5092
        %v5220 = vunpack.c.l.s4 1983009808
        %v5221 = vunpack.c.0.s8 %v5220
        %v5222 = vlaneseq
        %v5223 = vshrl.u32 %v5222, 7
        %v5224 = vsub.s32 %v5221, %v5223
        %v5225 = vrot.slane %v5092, %v5224
        %v5227 = vunpack.c.l.s4 1983009808
        %v5228 = vunpack.c.0.s8 %v5227
        %v5229 = vlaneseq
        %v5230 = vshrl.u32 %v5229, 7
        %v5231 = vsub.s32 %v5228, %v5230
        %v5232 = vrot.slane %v5218, %v5231
        %v5233 = vcombine.high %v5225, %v5225
        %v5234 = vcombine.high %v5232, %v5232
        %v5235 = vcombine.high %v5093, %v5093
        %v5237 = vunpack.c.l.s4 1983009808
        %v5238 = vunpack.c.0.s8 %v5237
        %v5239 = vlaneseq
        %v5240 = vshrl.u32 %v5239, 7
        %v5241 = vsub.s32 %v5238, %v5240
        %v5242 = vrot.slane %v5093, %v5241
        %v5244 = vunpack.c.l.s4 1983009808
        %v5245 = vunpack.c.0.s8 %v5244
        %v5246 = vlaneseq
        %v5247 = vshrl.u32 %v5246, 7
        %v5248 = vsub.s32 %v5245, %v5247
        %v5249 = vrot.slane %v5235, %v5248
        %v5250 = vcombine.high %v5242, %v5242
        %v5251 = vcombine.high %v5249, %v5249
        %v5252 = vcombine.high %v5094, %v5094
        %v5254 = vunpack.c.l.s4 1983009808
        %v5255 = vunpack.c.0.s8 %v5254
        %v5256 = vlaneseq
        %v5257 = vshrl.u32 %v5256, 7
        %v5258 = vsub.s32 %v5255, %v5257
        %v5259 = vrot.slane %v5094, %v5258
        %v5261 = vunpack.c.l.s4 1983009808
        %v5262 = vunpack.c.0.s8 %v5261
        %v5263 = vlaneseq
        %v5264 = vshrl.u32 %v5263, 7
        %v5265 = vsub.s32 %v5262, %v5264
        %v5266 = vrot.slane %v5252, %v5265
        %v5267 = vcombine.high %v5259, %v5259
        %v5268 = vcombine.high %v5266, %v5266
        %v5269 = vcombine.high %v5095, %v5095
        %v5271 = vunpack.c.l.s4 1983009808
        %v5272 = vunpack.c.0.s8 %v5271
        %v5273 = vlaneseq
        %v5274 = vshrl.u32 %v5273, 7
        %v5275 = vsub.s32 %v5272, %v5274
        %v5276 = vrot.slane %v5095, %v5275
        %v5278 = vunpack.c.l.s4 1983009808
        %v5279 = vunpack.c.0.s8 %v5278
        %v5280 = vlaneseq
        %v5281 = vshrl.u32 %v5280, 7
        %v5282 = vsub.s32 %v5279, %v5281
        %v5283 = vrot.slane %v5269, %v5282
        %v5284 = vcombine.high %v5276, %v5276
        %v5285 = vcombine.high %v5283, %v5283
        %v5286 = vcombine.high %v5096, %v5096
        %v5288 = vunpack.c.l.s4 1983009808
        %v5289 = vunpack.c.0.s8 %v5288
        %v5290 = vlaneseq
        %v5291 = vshrl.u32 %v5290, 7
        %v5292 = vsub.s32 %v5289, %v5291
        %v5293 = vrot.slane %v5096, %v5292
        %v5295 = vunpack.c.l.s4 1983009808
        %v5296 = vunpack.c.0.s8 %v5295
        %v5297 = vlaneseq
        %v5298 = vshrl.u32 %v5297, 7
        %v5299 = vsub.s32 %v5296, %v5298
        %v5300 = vrot.slane %v5286, %v5299
        %v5301 = vcombine.high %v5293, %v5293
        %v5302 = vcombine.high %v5300, %v5300
        %v5303 = vcombine.high %v5097, %v5097
        %v5305 = vunpack.c.l.s4 1983009808
        %v5306 = vunpack.c.0.s8 %v5305
        %v5307 = vlaneseq
        %v5308 = vshrl.u32 %v5307, 7
        %v5309 = vsub.s32 %v5306, %v5308
        %v5310 = vrot.slane %v5097, %v5309
        %v5312 = vunpack.c.l.s4 1983009808
        %v5313 = vunpack.c.0.s8 %v5312
        %v5314 = vlaneseq
        %v5315 = vshrl.u32 %v5314, 7
        %v5316 = vsub.s32 %v5313, %v5315
        %v5317 = vrot.slane %v5303, %v5316
        %v5318 = vcombine.high %v5310, %v5310
        %v5319 = vcombine.high %v5317, %v5317
        %v5320 = vcombine.high %v5098, %v5098
        %v5322 = vunpack.c.l.s4 1983009808
        %v5323 = vunpack.c.0.s8 %v5322
        %v5324 = vlaneseq
        %v5325 = vshrl.u32 %v5324, 7
        %v5326 = vsub.s32 %v5323, %v5325
        %v5327 = vrot.slane %v5098, %v5326
        %v5329 = vunpack.c.l.s4 1983009808
        %v5330 = vunpack.c.0.s8 %v5329
        %v5331 = vlaneseq
        %v5332 = vshrl.u32 %v5331, 7
        %v5333 = vsub.s32 %v5330, %v5332
        %v5334 = vrot.slane %v5320, %v5333
        %v5335 = vcombine.high %v5327, %v5327
        %v5336 = vcombine.high %v5334, %v5334
        %v5337 = vcombine.high %v5099, %v5099
        %v5339 = vunpack.c.l.s4 1983009808
        %v5340 = vunpack.c.0.s8 %v5339
        %v5341 = vlaneseq
        %v5342 = vshrl.u32 %v5341, 7
        %v5343 = vsub.s32 %v5340, %v5342
        %v5344 = vrot.slane %v5099, %v5343
        %v5346 = vunpack.c.l.s4 1983009808
        %v5347 = vunpack.c.0.s8 %v5346
        %v5348 = vlaneseq
        %v5349 = vshrl.u32 %v5348, 7
        %v5350 = vsub.s32 %v5347, %v5349
        %v5351 = vrot.slane %v5337, %v5350
        %v5352 = vcombine.high %v5344, %v5344
        %v5353 = vcombine.high %v5351, %v5351
        %v5354 = vcombine.high %v5100, %v5100
        %v5356 = vunpack.c.l.s4 1983009808
        %v5357 = vunpack.c.0.s8 %v5356
        %v5358 = vlaneseq
        %v5359 = vshrl.u32 %v5358, 7
        %v5360 = vsub.s32 %v5357, %v5359
        %v5361 = vrot.slane %v5100, %v5360
        %v5363 = vunpack.c.l.s4 1983009808
        %v5364 = vunpack.c.0.s8 %v5363
        %v5365 = vlaneseq
        %v5366 = vshrl.u32 %v5365, 7
        %v5367 = vsub.s32 %v5364, %v5366
        %v5368 = vrot.slane %v5354, %v5367
        %v5369 = vcombine.high %v5361, %v5361
        %v5370 = vcombine.high %v5368, %v5368
        %v5371 = vcombine.high %v5101, %v5101
        %v5373 = vunpack.c.l.s4 1983009808
        %v5374 = vunpack.c.0.s8 %v5373
        %v5375 = vlaneseq
        %v5376 = vshrl.u32 %v5375, 7
        %v5377 = vsub.s32 %v5374, %v5376
        %v5378 = vrot.slane %v5101, %v5377
        %v5380 = vunpack.c.l.s4 1983009808
        %v5381 = vunpack.c.0.s8 %v5380
        %v5382 = vlaneseq
        %v5383 = vshrl.u32 %v5382, 7
        %v5384 = vsub.s32 %v5381, %v5383
        %v5385 = vrot.slane %v5371, %v5384
        %v5386 = vcombine.high %v5378, %v5378
        %v5387 = vcombine.high %v5385, %v5385
        %v5388 = vcombine.high %v5102, %v5102
        %v5390 = vunpack.c.l.s4 1983009808
        %v5391 = vunpack.c.0.s8 %v5390
        %v5392 = vlaneseq
        %v5393 = vshrl.u32 %v5392, 7
        %v5394 = vsub.s32 %v5391, %v5393
        %v5395 = vrot.slane %v5102, %v5394
        %v5397 = vunpack.c.l.s4 1983009808
        %v5398 = vunpack.c.0.s8 %v5397
        %v5399 = vlaneseq
        %v5400 = vshrl.u32 %v5399, 7
        %v5401 = vsub.s32 %v5398, %v5400
        %v5402 = vrot.slane %v5388, %v5401
        %v5403 = vcombine.high %v5395, %v5395
        %v5404 = vcombine.high %v5402, %v5402
        %v5405 = vcombine.high %v5103, %v5103
        %v5407 = vunpack.c.l.s4 1983009808
        %v5408 = vunpack.c.0.s8 %v5407
        %v5409 = vlaneseq
        %v5410 = vshrl.u32 %v5409, 7
        %v5411 = vsub.s32 %v5408, %v5410
        %v5412 = vrot.slane %v5103, %v5411
        %v5414 = vunpack.c.l.s4 1983009808
        %v5415 = vunpack.c.0.s8 %v5414
        %v5416 = vlaneseq
        %v5417 = vshrl.u32 %v5416, 7
        %v5418 = vsub.s32 %v5415, %v5417
        %v5419 = vrot.slane %v5405, %v5418
        %v5420 = vcombine.high %v5412, %v5412
        %v5421 = vcombine.high %v5419, %v5419
        %v5422 = vcombine.high %v5104, %v5104
        %v5424 = vunpack.c.l.s4 1983009808
        %v5425 = vunpack.c.0.s8 %v5424
        %v5426 = vlaneseq
        %v5427 = vshrl.u32 %v5426, 7
        %v5428 = vsub.s32 %v5425, %v5427
        %v5429 = vrot.slane %v5104, %v5428
        %v5431 = vunpack.c.l.s4 1983009808
        %v5432 = vunpack.c.0.s8 %v5431
        %v5433 = vlaneseq
        %v5434 = vshrl.u32 %v5433, 7
        %v5435 = vsub.s32 %v5432, %v5434
        %v5436 = vrot.slane %v5422, %v5435
        %v5437 = vcombine.high %v5429, %v5429
        %v5438 = vcombine.high %v5436, %v5436
        %v5439 = vcombine.high %v5105, %v5105
        %v5441 = vunpack.c.l.s4 1983009808
        %v5442 = vunpack.c.0.s8 %v5441
        %v5443 = vlaneseq
        %v5444 = vshrl.u32 %v5443, 7
        %v5445 = vsub.s32 %v5442, %v5444
        %v5446 = vrot.slane %v5105, %v5445
        %v5448 = vunpack.c.l.s4 1983009808
        %v5449 = vunpack.c.0.s8 %v5448
        %v5450 = vlaneseq
        %v5451 = vshrl.u32 %v5450, 7
        %v5452 = vsub.s32 %v5449, %v5451
        %v5453 = vrot.slane %v5439, %v5452
        %v5454 = vcombine.high %v5446, %v5446
        %v5455 = vcombine.high %v5453, %v5453
        %v5456 = vcombine.high %v5106, %v5106
        %v5458 = vunpack.c.l.s4 1983009808
        %v5459 = vunpack.c.0.s8 %v5458
        %v5460 = vlaneseq
        %v5461 = vshrl.u32 %v5460, 7
        %v5462 = vsub.s32 %v5459, %v5461
        %v5463 = vrot.slane %v5106, %v5462
        %v5465 = vunpack.c.l.s4 1983009808
        %v5466 = vunpack.c.0.s8 %v5465
        %v5467 = vlaneseq
        %v5468 = vshrl.u32 %v5467, 7
        %v5469 = vsub.s32 %v5466, %v5468
        %v5470 = vrot.slane %v5456, %v5469
        %v5471 = vcombine.high %v5463, %v5463
        %v5472 = vcombine.high %v5470, %v5470
        %v5473 = vcombine.high %v5107, %v5107
        %v5475 = vunpack.c.l.s4 1983009808
        %v5476 = vunpack.c.0.s8 %v5475
        %v5477 = vlaneseq
        %v5478 = vshrl.u32 %v5477, 7
        %v5479 = vsub.s32 %v5476, %v5478
        %v5480 = vrot.slane %v5107, %v5479
        %v5482 = vunpack.c.l.s4 1983009808
        %v5483 = vunpack.c.0.s8 %v5482
        %v5484 = vlaneseq
        %v5485 = vshrl.u32 %v5484, 7
        %v5486 = vsub.s32 %v5483, %v5485
        %v5487 = vrot.slane %v5473, %v5486
        %v5488 = vcombine.high %v5480, %v5480
        %v5489 = vcombine.high %v5487, %v5487
        %v5490 = vcombine.high %v5108, %v5108
        %v5492 = vunpack.c.l.s4 1983009808
        %v5493 = vunpack.c.0.s8 %v5492
        %v5494 = vlaneseq
        %v5495 = vshrl.u32 %v5494, 7
        %v5496 = vsub.s32 %v5493, %v5495
        %v5497 = vrot.slane %v5108, %v5496
        %v5499 = vunpack.c.l.s4 1983009808
        %v5500 = vunpack.c.0.s8 %v5499
        %v5501 = vlaneseq
        %v5502 = vshrl.u32 %v5501, 7
        %v5503 = vsub.s32 %v5500, %v5502
        %v5504 = vrot.slane %v5490, %v5503
        %v5505 = vcombine.high %v5497, %v5497
        %v5506 = vcombine.high %v5504, %v5504
        %v5508 = vunpack.c.l.s4 1983009808
        %v5509 = vunpack.c.0.s8 %v5508
        %v5510 = vlaneseq
        %v5511 = vshrl.u32 %v5510, 7
        %v5512 = vsub.s32 %v5509, %v5511
        %v5513 = vrot.slane %v5109, %v5512
        %v5514 = vcombine.high %v5513, %v5513
        %v5515 = vlaneseq
        %v5516 = vshrl.u32 %v5515, 7
        %v5517 = vadd.s32 %v5516, 8
        %v5518 = vadd.s32 %v5516, 16
        %s5519 = ssub.s32 1, %s207
        %v5520 = vstv %s5519
        %vm5521 = vcmp.le.s32.totalorder %v5520, 0
        %vm5522 = vcmp.le.s32.totalorder %v5520, 1
        %vm5523 = vcmp.le.s32.totalorder %v5520, 2
        %vm5524 = vcmp.le.s32.totalorder %v5520, 3
        %vm5525 = vcmp.le.s32.totalorder %v5520, 4
        %vm5526 = vcmp.le.s32.totalorder %v5520, 5
        %vm5527 = vcmp.le.s32.totalorder %v5520, 6
        %vm5528 = vcmp.le.s32.totalorder %v5520, 7
        %vm5529 = vcmp.le.s32.totalorder %v5520, 8
        %vm5530 = vcmp.le.s32.totalorder %v5520, 9
        %s5531 = ssub.s32 17, %s207
        %v5532 = vstv %s5531
        %vm5533 = vcmp.gt.s32.totalorder %v5532, 0
        %vm5534 = vcmp.gt.s32.totalorder %v5532, 1
        %vm5535 = vcmp.gt.s32.totalorder %v5532, 2
        %vm5536 = vcmp.gt.s32.totalorder %v5532, 3
        %vm5537 = vcmp.gt.s32.totalorder %v5532, 4
        %vm5538 = vcmp.gt.s32.totalorder %v5532, 5
        %vm5539 = vcmp.gt.s32.totalorder %v5532, 6
        %vm5540 = vcmp.gt.s32.totalorder %v5532, 7
        %vm5541 = vcmp.gt.s32.totalorder %v5532, 8
        %vm5542 = vcmp.gt.s32.totalorder %v5532, 9
        %vm5543 = vmand %vm5521, %vm5533
        %vm5544 = vmand %vm5522, %vm5534
        %vm5545 = vmand %vm5523, %vm5535
        %vm5546 = vmand %vm5524, %vm5536
        %vm5547 = vmand %vm5525, %vm5537
        %vm5548 = vmand %vm5526, %vm5538
        %vm5549 = vmand %vm5527, %vm5539
        %vm5550 = vmand %vm5528, %vm5540
        %vm5551 = vmand %vm5529, %vm5541
        %vm5552 = vmand %vm5530, %vm5542
        %vm5553 = vcmp.ge.s32.totalorder %v5516, 1
        %vm5554 = vcmp.ge.s32.totalorder %v5517, 1
        %vm5555 = vcmp.ge.s32.totalorder %v5518, 1
        %vm5556 = vmand %vm5543, %vm5553
        %vm5557 = vmand %vm5543, %vm5554
        %vm5558 = vmand %vm5543, %vm5555
        %vm5559 = vmand %vm5544, %vm5553
        %vm5560 = vmand %vm5544, %vm5554
        %vm5561 = vmand %vm5544, %vm5555
        %vm5562 = vmand %vm5545, %vm5553
        %vm5563 = vmand %vm5545, %vm5554
        %vm5564 = vmand %vm5545, %vm5555
        %vm5565 = vmand %vm5546, %vm5553
        %vm5566 = vmand %vm5546, %vm5554
        %vm5567 = vmand %vm5546, %vm5555
        %vm5568 = vmand %vm5547, %vm5553
        %vm5569 = vmand %vm5547, %vm5554
        %vm5570 = vmand %vm5547, %vm5555
        %vm5571 = vmand %vm5548, %vm5553
        %vm5572 = vmand %vm5548, %vm5554
        %vm5573 = vmand %vm5548, %vm5555
        %vm5574 = vmand %vm5549, %vm5553
        %vm5575 = vmand %vm5549, %vm5554
        %vm5576 = vmand %vm5549, %vm5555
        %vm5577 = vmand %vm5550, %vm5553
        %vm5578 = vmand %vm5550, %vm5554
        %vm5579 = vmand %vm5550, %vm5555
        %vm5580 = vmand %vm5551, %vm5553
        %vm5581 = vmand %vm5551, %vm5554
        %vm5582 = vmand %vm5551, %vm5555
        %vm5583 = vmand %vm5552, %vm5553
        %vm5584 = vmand %vm5552, %vm5554
        %vm5585 = vmand %vm5552, %vm5555
        %vm5586 = vcmp.le.s32.totalorder %v5516, 16
        %vm5587 = vcmp.le.s32.totalorder %v5517, 16
        %vm5588 = vcmp.le.s32.totalorder %v5518, 16
        %vm5589 = vmand %vm5556, %vm5586
        %vm5590 = vmand %vm5557, %vm5587
        %vm5591 = vmand %vm5558, %vm5588
        %vm5592 = vmand %vm5559, %vm5586
        %vm5593 = vmand %vm5560, %vm5587
        %vm5594 = vmand %vm5561, %vm5588
        %vm5595 = vmand %vm5562, %vm5586
        %vm5596 = vmand %vm5563, %vm5587
        %vm5597 = vmand %vm5564, %vm5588
        %vm5598 = vmand %vm5565, %vm5586
        %vm5599 = vmand %vm5566, %vm5587
        %vm5600 = vmand %vm5567, %vm5588
        %vm5601 = vmand %vm5568, %vm5586
        %vm5602 = vmand %vm5569, %vm5587
        %vm5603 = vmand %vm5570, %vm5588
        %vm5604 = vmand %vm5571, %vm5586
        %vm5605 = vmand %vm5572, %vm5587
        %vm5606 = vmand %vm5573, %vm5588
        %vm5607 = vmand %vm5574, %vm5586
        %vm5608 = vmand %vm5575, %vm5587
        %vm5609 = vmand %vm5576, %vm5588
        %vm5610 = vmand %vm5577, %vm5586
        %vm5611 = vmand %vm5578, %vm5587
        %vm5612 = vmand %vm5579, %vm5588
        %vm5613 = vmand %vm5580, %vm5586
        %vm5614 = vmand %vm5581, %vm5587
        %vm5615 = vmand %vm5582, %vm5588
        %vm5616 = vmand %vm5583, %vm5586
        %vm5617 = vmand %vm5584, %vm5587
        %vm5618 = vmand %vm5585, %vm5588
        %v5619 = vcombine.low %v5140, %v5148
        %v5620 = vcombine.low %v5147, %v5149
        %v5622 = vunpack.c.l.s4 1983009808
        %v5623 = vunpack.c.0.s8 %v5622
        %v5624 = vlaneseq
        %v5625 = vshrl.u32 %v5624, 7
        %v5626 = vsub.s32 %v5623, %v5625
        %v5627 = vrot.slane %v5619, %v5626
        %v5629 = vunpack.c.l.s4 1983009808
        %v5630 = vunpack.c.0.s8 %v5629
        %v5631 = vlaneseq
        %v5632 = vshrl.u32 %v5631, 7
        %v5633 = vsub.s32 %v5630, %v5632
        %v5634 = vrot.slane %v5620, %v5633
        %v5635 = vcombine.low %v5627, %v5634
        %v5636 = vcombine.low %v5157, %v5165
        %v5637 = vcombine.low %v5164, %v5166
        %v5639 = vunpack.c.l.s4 1983009808
        %v5640 = vunpack.c.0.s8 %v5639
        %v5641 = vlaneseq
        %v5642 = vshrl.u32 %v5641, 7
        %v5643 = vsub.s32 %v5640, %v5642
        %v5644 = vrot.slane %v5636, %v5643
        %v5646 = vunpack.c.l.s4 1983009808
        %v5647 = vunpack.c.0.s8 %v5646
        %v5648 = vlaneseq
        %v5649 = vshrl.u32 %v5648, 7
        %v5650 = vsub.s32 %v5647, %v5649
        %v5651 = vrot.slane %v5637, %v5650
        %v5652 = vcombine.low %v5644, %v5651
        %v5654 = vunpack.c.l.s4 1983009808
        %v5655 = vunpack.c.0.s8 %v5654
        %v5656 = vlaneseq
        %v5657 = vshrl.u32 %v5656, 7
        %v5658 = vsub.s32 %v5655, %v5657
        %v5659 = vrot.slane %v5174, %v5658
        %v5660 = vcombine.low %v5182, %v5181
        %v5661 = vcombine.low %v5183, %v5191
        %v5663 = vunpack.c.l.s4 1983009808
        %v5664 = vunpack.c.0.s8 %v5663
        %v5665 = vlaneseq
        %v5666 = vshrl.u32 %v5665, 7
        %v5667 = vsub.s32 %v5664, %v5666
        %v5668 = vrot.slane %v5660, %v5667
        %v5670 = vunpack.c.l.s4 1983009808
        %v5671 = vunpack.c.0.s8 %v5670
        %v5672 = vlaneseq
        %v5673 = vshrl.u32 %v5672, 7
        %v5674 = vsub.s32 %v5671, %v5673
        %v5675 = vrot.slane %v5661, %v5674
        %v5676 = vcombine.low %v5668, %v5675
        %v5677 = vcombine.low %v5199, %v5198
        %v5678 = vcombine.low %v5200, %v5208
        %v5680 = vunpack.c.l.s4 1983009808
        %v5681 = vunpack.c.0.s8 %v5680
        %v5682 = vlaneseq
        %v5683 = vshrl.u32 %v5682, 7
        %v5684 = vsub.s32 %v5681, %v5683
        %v5685 = vrot.slane %v5677, %v5684
        %v5687 = vunpack.c.l.s4 1983009808
        %v5688 = vunpack.c.0.s8 %v5687
        %v5689 = vlaneseq
        %v5690 = vshrl.u32 %v5689, 7
        %v5691 = vsub.s32 %v5688, %v5690
        %v5692 = vrot.slane %v5678, %v5691
        %v5693 = vcombine.low %v5685, %v5692
        %v5695 = vunpack.c.l.s4 1983009808
        %v5696 = vunpack.c.0.s8 %v5695
        %v5697 = vlaneseq
        %v5698 = vshrl.u32 %v5697, 7
        %v5699 = vsub.s32 %v5696, %v5698
        %v5700 = vrot.slane %v5216, %v5699
        %v5701 = vcombine.low %v5215, %v5217
        %v5702 = vcombine.low %v5225, %v5233
        %v5704 = vunpack.c.l.s4 1983009808
        %v5705 = vunpack.c.0.s8 %v5704
        %v5706 = vlaneseq
        %v5707 = vshrl.u32 %v5706, 7
        %v5708 = vsub.s32 %v5705, %v5707
        %v5709 = vrot.slane %v5701, %v5708
        %v5711 = vunpack.c.l.s4 1983009808
        %v5712 = vunpack.c.0.s8 %v5711
        %v5713 = vlaneseq
        %v5714 = vshrl.u32 %v5713, 7
        %v5715 = vsub.s32 %v5712, %v5714
        %v5716 = vrot.slane %v5702, %v5715
        %v5717 = vcombine.low %v5709, %v5716
        %v5718 = vcombine.low %v5232, %v5234
        %v5719 = vcombine.low %v5242, %v5250
        %v5721 = vunpack.c.l.s4 1983009808
        %v5722 = vunpack.c.0.s8 %v5721
        %v5723 = vlaneseq
        %v5724 = vshrl.u32 %v5723, 7
        %v5725 = vsub.s32 %v5722, %v5724
        %v5726 = vrot.slane %v5718, %v5725
        %v5728 = vunpack.c.l.s4 1983009808
        %v5729 = vunpack.c.0.s8 %v5728
        %v5730 = vlaneseq
        %v5731 = vshrl.u32 %v5730, 7
        %v5732 = vsub.s32 %v5729, %v5731
        %v5733 = vrot.slane %v5719, %v5732
        %v5734 = vcombine.low %v5726, %v5733
        %v5736 = vunpack.c.l.s4 1983009808
        %v5737 = vunpack.c.0.s8 %v5736
        %v5738 = vlaneseq
        %v5739 = vshrl.u32 %v5738, 7
        %v5740 = vsub.s32 %v5737, %v5739
        %v5741 = vrot.slane %v5249, %v5740
        %v5742 = vcombine.low %v5251, %v5259
        %v5743 = vcombine.low %v5267, %v5266
        %v5745 = vunpack.c.l.s4 1983009808
        %v5746 = vunpack.c.0.s8 %v5745
        %v5747 = vlaneseq
        %v5748 = vshrl.u32 %v5747, 7
        %v5749 = vsub.s32 %v5746, %v5748
        %v5750 = vrot.slane %v5742, %v5749
        %v5752 = vunpack.c.l.s4 1983009808
        %v5753 = vunpack.c.0.s8 %v5752
        %v5754 = vlaneseq
        %v5755 = vshrl.u32 %v5754, 7
        %v5756 = vsub.s32 %v5753, %v5755
        %v5757 = vrot.slane %v5743, %v5756
        %v5758 = vcombine.low %v5750, %v5757
        %v5759 = vcombine.low %v5268, %v5276
        %v5760 = vcombine.low %v5284, %v5283
        %v5762 = vunpack.c.l.s4 1983009808
        %v5763 = vunpack.c.0.s8 %v5762
        %v5764 = vlaneseq
        %v5765 = vshrl.u32 %v5764, 7
        %v5766 = vsub.s32 %v5763, %v5765
        %v5767 = vrot.slane %v5759, %v5766
        %v5769 = vunpack.c.l.s4 1983009808
        %v5770 = vunpack.c.0.s8 %v5769
        %v5771 = vlaneseq
        %v5772 = vshrl.u32 %v5771, 7
        %v5773 = vsub.s32 %v5770, %v5772
        %v5774 = vrot.slane %v5760, %v5773
        %v5775 = vcombine.low %v5767, %v5774
        %v5777 = vunpack.c.l.s4 1983009808
        %v5778 = vunpack.c.0.s8 %v5777
        %v5779 = vlaneseq
        %v5780 = vshrl.u32 %v5779, 7
        %v5781 = vsub.s32 %v5778, %v5780
        %v5782 = vrot.slane %v5285, %v5781
        %v5783 = vcombine.low %v5293, %v5301
        %v5784 = vcombine.low %v5300, %v5302
        %v5786 = vunpack.c.l.s4 1983009808
        %v5787 = vunpack.c.0.s8 %v5786
        %v5788 = vlaneseq
        %v5789 = vshrl.u32 %v5788, 7
        %v5790 = vsub.s32 %v5787, %v5789
        %v5791 = vrot.slane %v5783, %v5790
        %v5793 = vunpack.c.l.s4 1983009808
        %v5794 = vunpack.c.0.s8 %v5793
        %v5795 = vlaneseq
        %v5796 = vshrl.u32 %v5795, 7
        %v5797 = vsub.s32 %v5794, %v5796
        %v5798 = vrot.slane %v5784, %v5797
        %v5799 = vcombine.low %v5791, %v5798
        %v5800 = vcombine.low %v5310, %v5318
        %v5801 = vcombine.low %v5317, %v5319
        %v5803 = vunpack.c.l.s4 1983009808
        %v5804 = vunpack.c.0.s8 %v5803
        %v5805 = vlaneseq
        %v5806 = vshrl.u32 %v5805, 7
        %v5807 = vsub.s32 %v5804, %v5806
        %v5808 = vrot.slane %v5800, %v5807
        %v5810 = vunpack.c.l.s4 1983009808
        %v5811 = vunpack.c.0.s8 %v5810
        %v5812 = vlaneseq
        %v5813 = vshrl.u32 %v5812, 7
        %v5814 = vsub.s32 %v5811, %v5813
        %v5815 = vrot.slane %v5801, %v5814
        %v5816 = vcombine.low %v5808, %v5815
        %v5818 = vunpack.c.l.s4 1983009808
        %v5819 = vunpack.c.0.s8 %v5818
        %v5820 = vlaneseq
        %v5821 = vshrl.u32 %v5820, 7
        %v5822 = vsub.s32 %v5819, %v5821
        %v5823 = vrot.slane %v5327, %v5822
        %v5824 = vcombine.low %v5335, %v5334
        %v5825 = vcombine.low %v5336, %v5344
        %v5827 = vunpack.c.l.s4 1983009808
        %v5828 = vunpack.c.0.s8 %v5827
        %v5829 = vlaneseq
        %v5830 = vshrl.u32 %v5829, 7
        %v5831 = vsub.s32 %v5828, %v5830
        %v5832 = vrot.slane %v5824, %v5831
        %v5834 = vunpack.c.l.s4 1983009808
        %v5835 = vunpack.c.0.s8 %v5834
        %v5836 = vlaneseq
        %v5837 = vshrl.u32 %v5836, 7
        %v5838 = vsub.s32 %v5835, %v5837
        %v5839 = vrot.slane %v5825, %v5838
        %v5840 = vcombine.low %v5832, %v5839
        %v5841 = vcombine.low %v5352, %v5351
        %v5842 = vcombine.low %v5353, %v5361
        %v5844 = vunpack.c.l.s4 1983009808
        %v5845 = vunpack.c.0.s8 %v5844
        %v5846 = vlaneseq
        %v5847 = vshrl.u32 %v5846, 7
        %v5848 = vsub.s32 %v5845, %v5847
        %v5849 = vrot.slane %v5841, %v5848
        %v5851 = vunpack.c.l.s4 1983009808
        %v5852 = vunpack.c.0.s8 %v5851
        %v5853 = vlaneseq
        %v5854 = vshrl.u32 %v5853, 7
        %v5855 = vsub.s32 %v5852, %v5854
        %v5856 = vrot.slane %v5842, %v5855
        %v5857 = vcombine.low %v5849, %v5856
        %v5859 = vunpack.c.l.s4 1983009808
        %v5860 = vunpack.c.0.s8 %v5859
        %v5861 = vlaneseq
        %v5862 = vshrl.u32 %v5861, 7
        %v5863 = vsub.s32 %v5860, %v5862
        %v5864 = vrot.slane %v5369, %v5863
        %v5865 = vcombine.low %v5368, %v5370
        %v5866 = vcombine.low %v5378, %v5386
        %v5868 = vunpack.c.l.s4 1983009808
        %v5869 = vunpack.c.0.s8 %v5868
        %v5870 = vlaneseq
        %v5871 = vshrl.u32 %v5870, 7
        %v5872 = vsub.s32 %v5869, %v5871
        %v5873 = vrot.slane %v5865, %v5872
        %v5875 = vunpack.c.l.s4 1983009808
        %v5876 = vunpack.c.0.s8 %v5875
        %v5877 = vlaneseq
        %v5878 = vshrl.u32 %v5877, 7
        %v5879 = vsub.s32 %v5876, %v5878
        %v5880 = vrot.slane %v5866, %v5879
        %v5881 = vcombine.low %v5873, %v5880
        %v5882 = vcombine.low %v5385, %v5387
        %v5883 = vcombine.low %v5395, %v5403
        %v5885 = vunpack.c.l.s4 1983009808
        %v5886 = vunpack.c.0.s8 %v5885
        %v5887 = vlaneseq
        %v5888 = vshrl.u32 %v5887, 7
        %v5889 = vsub.s32 %v5886, %v5888
        %v5890 = vrot.slane %v5882, %v5889
        %v5892 = vunpack.c.l.s4 1983009808
        %v5893 = vunpack.c.0.s8 %v5892
        %v5894 = vlaneseq
        %v5895 = vshrl.u32 %v5894, 7
        %v5896 = vsub.s32 %v5893, %v5895
        %v5897 = vrot.slane %v5883, %v5896
        %v5898 = vcombine.low %v5890, %v5897
        %v5900 = vunpack.c.l.s4 1983009808
        %v5901 = vunpack.c.0.s8 %v5900
        %v5902 = vlaneseq
        %v5903 = vshrl.u32 %v5902, 7
        %v5904 = vsub.s32 %v5901, %v5903
        %v5905 = vrot.slane %v5402, %v5904
        %v5906 = vcombine.low %v5404, %v5412
        %v5907 = vcombine.low %v5420, %v5419
        %v5909 = vunpack.c.l.s4 1983009808
        %v5910 = vunpack.c.0.s8 %v5909
        %v5911 = vlaneseq
        %v5912 = vshrl.u32 %v5911, 7
        %v5913 = vsub.s32 %v5910, %v5912
        %v5914 = vrot.slane %v5906, %v5913
        %v5916 = vunpack.c.l.s4 1983009808
        %v5917 = vunpack.c.0.s8 %v5916
        %v5918 = vlaneseq
        %v5919 = vshrl.u32 %v5918, 7
        %v5920 = vsub.s32 %v5917, %v5919
        %v5921 = vrot.slane %v5907, %v5920
        %v5922 = vcombine.low %v5914, %v5921
        %v5923 = vcombine.low %v5421, %v5429
        %v5924 = vcombine.low %v5437, %v5436
        %v5926 = vunpack.c.l.s4 1983009808
        %v5927 = vunpack.c.0.s8 %v5926
        %v5928 = vlaneseq
        %v5929 = vshrl.u32 %v5928, 7
        %v5930 = vsub.s32 %v5927, %v5929
        %v5931 = vrot.slane %v5923, %v5930
        %v5933 = vunpack.c.l.s4 1983009808
        %v5934 = vunpack.c.0.s8 %v5933
        %v5935 = vlaneseq
        %v5936 = vshrl.u32 %v5935, 7
        %v5937 = vsub.s32 %v5934, %v5936
        %v5938 = vrot.slane %v5924, %v5937
        %v5939 = vcombine.low %v5931, %v5938
        %v5941 = vunpack.c.l.s4 1983009808
        %v5942 = vunpack.c.0.s8 %v5941
        %v5943 = vlaneseq
        %v5944 = vshrl.u32 %v5943, 7
        %v5945 = vsub.s32 %v5942, %v5944
        %v5946 = vrot.slane %v5438, %v5945
        %v5947 = vcombine.low %v5446, %v5454
        %v5948 = vcombine.low %v5453, %v5455
        %v5950 = vunpack.c.l.s4 1983009808
        %v5951 = vunpack.c.0.s8 %v5950
        %v5952 = vlaneseq
        %v5953 = vshrl.u32 %v5952, 7
        %v5954 = vsub.s32 %v5951, %v5953
        %v5955 = vrot.slane %v5947, %v5954
        %v5957 = vunpack.c.l.s4 1983009808
        %v5958 = vunpack.c.0.s8 %v5957
        %v5959 = vlaneseq
        %v5960 = vshrl.u32 %v5959, 7
        %v5961 = vsub.s32 %v5958, %v5960
        %v5962 = vrot.slane %v5948, %v5961
        %v5963 = vcombine.low %v5955, %v5962
        %v5964 = vcombine.low %v5463, %v5471
        %v5965 = vcombine.low %v5470, %v5472
        %v5967 = vunpack.c.l.s4 1983009808
        %v5968 = vunpack.c.0.s8 %v5967
        %v5969 = vlaneseq
        %v5970 = vshrl.u32 %v5969, 7
        %v5971 = vsub.s32 %v5968, %v5970
        %v5972 = vrot.slane %v5964, %v5971
        %v5974 = vunpack.c.l.s4 1983009808
        %v5975 = vunpack.c.0.s8 %v5974
        %v5976 = vlaneseq
        %v5977 = vshrl.u32 %v5976, 7
        %v5978 = vsub.s32 %v5975, %v5977
        %v5979 = vrot.slane %v5965, %v5978
        %v5980 = vcombine.low %v5972, %v5979
        %v5982 = vunpack.c.l.s4 1983009808
        %v5983 = vunpack.c.0.s8 %v5982
        %v5984 = vlaneseq
        %v5985 = vshrl.u32 %v5984, 7
        %v5986 = vsub.s32 %v5983, %v5985
        %v5987 = vrot.slane %v5480, %v5986
        %v5988 = vcombine.low %v5488, %v5487
        %v5989 = vcombine.low %v5489, %v5497
        %v5991 = vunpack.c.l.s4 1983009808
        %v5992 = vunpack.c.0.s8 %v5991
        %v5993 = vlaneseq
        %v5994 = vshrl.u32 %v5993, 7
        %v5995 = vsub.s32 %v5992, %v5994
        %v5996 = vrot.slane %v5988, %v5995
        %v5998 = vunpack.c.l.s4 1983009808
        %v5999 = vunpack.c.0.s8 %v5998
        %v6000 = vlaneseq
        %v6001 = vshrl.u32 %v6000, 7
        %v6002 = vsub.s32 %v5999, %v6001
        %v6003 = vrot.slane %v5989, %v6002
        %v6004 = vcombine.low %v5996, %v6003
        %v6005 = vcombine.low %v5505, %v5504
        %v6006 = vcombine.low %v5506, %v5513
        %v6008 = vunpack.c.l.s4 1983009808
        %v6009 = vunpack.c.0.s8 %v6008
        %v6010 = vlaneseq
        %v6011 = vshrl.u32 %v6010, 7
        %v6012 = vsub.s32 %v6009, %v6011
        %v6013 = vrot.slane %v6005, %v6012
        %v6015 = vunpack.c.l.s4 1983009808
        %v6016 = vunpack.c.0.s8 %v6015
        %v6017 = vlaneseq
        %v6018 = vshrl.u32 %v6017, 7
        %v6019 = vsub.s32 %v6016, %v6018
        %v6020 = vrot.slane %v6006, %v6019
        %v6021 = vcombine.low %v6013, %v6020
        %v6023 = vunpack.c.l.s4 1983009808
        %v6024 = vunpack.c.0.s8 %v6023
        %v6025 = vlaneseq
        %v6026 = vshrl.u32 %v6025, 7
        %v6027 = vsub.s32 %v6024, %v6026
        %v6028 = vrot.slane %v5514, %v6027
        %v6059 = vsel %vm5589, %v5635, 0.0
        %v6060 = vsel %vm5590, %v5652, 0.0
        %v6061 = vsel %vm5591, %v5659, 0.0
        %v6062 = vsel %vm5592, %v5676, 0.0
        %v6063 = vsel %vm5593, %v5693, 0.0
        %v6064 = vsel %vm5594, %v5700, 0.0
        %v6065 = vsel %vm5595, %v5717, 0.0
        %v6066 = vsel %vm5596, %v5734, 0.0
        %v6067 = vsel %vm5597, %v5741, 0.0
        %v6068 = vsel %vm5598, %v5758, 0.0
        %v6069 = vsel %vm5599, %v5775, 0.0
        %v6070 = vsel %vm5600, %v5782, 0.0
        %v6071 = vsel %vm5601, %v5799, 0.0
        %v6072 = vsel %vm5602, %v5816, 0.0
        %v6073 = vsel %vm5603, %v5823, 0.0
        %v6074 = vsel %vm5604, %v5840, 0.0
        %v6075 = vsel %vm5605, %v5857, 0.0
        %v6076 = vsel %vm5606, %v5864, 0.0
        %v6077 = vsel %vm5607, %v5881, 0.0
        %v6078 = vsel %vm5608, %v5898, 0.0
        %v6079 = vsel %vm5609, %v5905, 0.0
        %v6080 = vsel %vm5610, %v5922, 0.0
        %v6081 = vsel %vm5611, %v5939, 0.0
        %v6082 = vsel %vm5612, %v5946, 0.0
        %v6083 = vsel %vm5613, %v5963, 0.0
        %v6084 = vsel %vm5614, %v5980, 0.0
        %v6085 = vsel %vm5615, %v5987, 0.0
        %v6086 = vsel %vm5616, %v6004, 0.0
        %v6087 = vsel %vm5617, %v6021, 0.0
        %v6088 = vsel %vm5618, %v6028, 0.0
        %6089 = vst [vmem:[#allocation3] sm:$0xff] %v6059
        %6090 = vst [vmem:[#allocation3 + $0x8] sm:$0xff] %v6060
        %6091 = vst [vmem:[#allocation3 + $0x10] sm:$0x3] %v6061
        %6092 = vst [vmem:[#allocation3 + $0x18] sm:$0xff] %v6062
        %6093 = vst [vmem:[#allocation3 + $0x20] sm:$0xff] %v6063
        %6094 = vst [vmem:[#allocation3 + $0x28] sm:$0x3] %v6064
        %6095 = vst [vmem:[#allocation3 + $0x30] sm:$0xff] %v6065
        %6096 = vst [vmem:[#allocation3 + $0x38] sm:$0xff] %v6066
        %6097 = vst [vmem:[#allocation3 + $0x40] sm:$0x3] %v6067
        %6098 = vst [vmem:[#allocation3 + $0x48] sm:$0xff] %v6068
        %6099 = vst [vmem:[#allocation3 + $0x50] sm:$0xff] %v6069
        %6100 = vst [vmem:[#allocation3 + $0x58] sm:$0x3] %v6070
        %6101 = vst [vmem:[#allocation3 + $0x60] sm:$0xff] %v6071
        %6102 = vst [vmem:[#allocation3 + $0x68] sm:$0xff] %v6072
        %6103 = vst [vmem:[#allocation3 + $0x70] sm:$0x3] %v6073
        %6104 = vst [vmem:[#allocation3 + $0x78] sm:$0xff] %v6074
        %6105 = vst [vmem:[#allocation3 + $0x80] sm:$0xff] %v6075
        %6106 = vst [vmem:[#allocation3 + $0x88] sm:$0x3] %v6076
        %6107 = vst [vmem:[#allocation3 + $0x90] sm:$0xff] %v6077
        %6108 = vst [vmem:[#allocation3 + $0x98] sm:$0xff] %v6078
        %6109 = vst [vmem:[#allocation3 + $0xa0] sm:$0x3] %v6079
        %6110 = vst [vmem:[#allocation3 + $0xa8] sm:$0xff] %v6080
        %6111 = vst [vmem:[#allocation3 + $0xb0] sm:$0xff] %v6081
        %6112 = vst [vmem:[#allocation3 + $0xb8] sm:$0x3] %v6082
        %6113 = vst [vmem:[#allocation3 + $0xc0] sm:$0xff] %v6083
        %6114 = vst [vmem:[#allocation3 + $0xc8] sm:$0xff] %v6084
        %6115 = vst [vmem:[#allocation3 + $0xd0] sm:$0x3] %v6085
        %6116 = vst [vmem:[#allocation3 + $0xd8] sm:$0xff] %v6086
        %6117 = vst [vmem:[#allocation3 + $0xe0] sm:$0xff] %v6087
        %6118 = vst [vmem:[#allocation3 + $0xe8] sm:$0x3] %v6088
        %v6119 = vld [vmem:[#allocation3] sm:$0xff]
        %v6120 = vld [vmem:[#allocation3 + $0x8] sm:$0xff]
        %v6121 = vld [vmem:[#allocation3 + $0x10] sm:$0x3]
        %v6122 = vld [vmem:[#allocation3 + $0x18] sm:$0xff]
        %v6123 = vld [vmem:[#allocation3 + $0x20] sm:$0xff]
        %v6124 = vld [vmem:[#allocation3 + $0x28] sm:$0x3]
        %v6125 = vld [vmem:[#allocation3 + $0x30] sm:$0xff]
        %v6126 = vld [vmem:[#allocation3 + $0x38] sm:$0xff]
        %v6127 = vld [vmem:[#allocation3 + $0x40] sm:$0x3]
        %v6128 = vld [vmem:[#allocation3 + $0x48] sm:$0xff]
        %v6129 = vld [vmem:[#allocation3 + $0x50] sm:$0xff]
        %v6130 = vld [vmem:[#allocation3 + $0x58] sm:$0x3]
        %v6131 = vld [vmem:[#allocation3 + $0x60] sm:$0xff]
        %v6132 = vld [vmem:[#allocation3 + $0x68] sm:$0xff]
        %v6133 = vld [vmem:[#allocation3 + $0x70] sm:$0x3]
        %v6134 = vld [vmem:[#allocation3 + $0x78] sm:$0xff]
        %v6135 = vld [vmem:[#allocation3 + $0x80] sm:$0xff]
        %v6136 = vld [vmem:[#allocation3 + $0x88] sm:$0x3]
        %v6137 = vld [vmem:[#allocation3 + $0x90] sm:$0xff]
        %v6138 = vld [vmem:[#allocation3 + $0x98] sm:$0xff]
        %v6139 = vld [vmem:[#allocation3 + $0xa0] sm:$0x3]
        %v6140 = vld [vmem:[#allocation3 + $0xa8] sm:$0xff]
        %v6141 = vld [vmem:[#allocation3 + $0xb0] sm:$0xff]
        %v6142 = vld [vmem:[#allocation3 + $0xb8] sm:$0x3]
        %v6143 = vld [vmem:[#allocation3 + $0xc0] sm:$0xff]
        %v6144 = vld [vmem:[#allocation3 + $0xc8] sm:$0xff]
        %v6145 = vld [vmem:[#allocation3 + $0xd0] sm:$0x3]
        %v6146 = vld [vmem:[#allocation3 + $0xd8] sm:$0xff]
        %v6147 = vld [vmem:[#allocation3 + $0xe0] sm:$0xff]
        %v6148 = vld [vmem:[#allocation3 + $0xe8] sm:$0x3]
        %6149 = vst [vmem:[#allocation5] sm:$0xff] 0.0
        %6150 = vst [vmem:[#allocation5 + $0x8] sm:$0xff] 0.0
        %6151 = vst [vmem:[#allocation5 + $0x10] sm:$0xff] 0.0
        %6152 = vst [vmem:[#allocation5 + $0x18] sm:$0xff] 0.0
        %6153 = vst [vmem:[#allocation5 + $0x20] sm:$0xff] 0.0
        %6154 = vst [vmem:[#allocation5 + $0x28] sm:$0xff] 0.0
        %6155 = vst [vmem:[#allocation5 + $0x30] sm:$0xff] 0.0
        %6156 = vst [vmem:[#allocation5 + $0x38] sm:$0xff] 0.0
        %6157 = vst [vmem:[#allocation5 + $0x40] sm:$0xff] 0.0
        %6158 = vst [vmem:[#allocation5 + $0x48] sm:$0xff] 0.0
        %6159 = vst [vmem:[#allocation5 + $0x50] sm:$0xff] 0.0
        %6160 = vst [vmem:[#allocation5 + $0x58] sm:$0xff] 0.0
        %6161 = vst [vmem:[#allocation5 + $0x60] sm:$0xff] 0.0
        %6162 = vst [vmem:[#allocation5 + $0x68] sm:$0xff] 0.0
        %6163 = vst [vmem:[#allocation5 + $0x70] sm:$0xff] 0.0
        %6164 = vst [vmem:[#allocation5 + $0x78] sm:$0xff] 0.0
        %v6189 = vrot.slane %v6119, 1
        %v6190 = vrot.slane %v6120, 1
        %v6191 = vsel %vm449, %v6189, %v6190
        %v6192 = vrot.slane %v6121, 1
        %v6193 = vsel %vm449, %v6190, %v6192
        %v6194 = vrot.slane %v6122, 1
        %v6195 = vrot.slane %v6123, 1
        %v6196 = vsel %vm449, %v6194, %v6195
        %v6197 = vrot.slane %v6124, 1
        %v6198 = vsel %vm449, %v6195, %v6197
        %v6199 = vrot.slane %v6125, 1
        %v6200 = vrot.slane %v6126, 1
        %v6201 = vsel %vm449, %v6199, %v6200
        %v6202 = vrot.slane %v6127, 1
        %v6203 = vsel %vm449, %v6200, %v6202
        %v6204 = vrot.slane %v6128, 1
        %v6205 = vrot.slane %v6129, 1
        %v6206 = vsel %vm449, %v6204, %v6205
        %v6207 = vrot.slane %v6130, 1
        %v6208 = vsel %vm449, %v6205, %v6207
        %v6209 = vrot.slane %v6131, 1
        %v6210 = vrot.slane %v6132, 1
        %v6211 = vsel %vm449, %v6209, %v6210
        %v6212 = vrot.slane %v6133, 1
        %v6213 = vsel %vm449, %v6210, %v6212
        %v6214 = vrot.slane %v6134, 1
        %v6215 = vrot.slane %v6135, 1
        %v6216 = vsel %vm449, %v6214, %v6215
        %v6217 = vrot.slane %v6136, 1
        %v6218 = vsel %vm449, %v6215, %v6217
        %v6219 = vrot.slane %v6137, 1
        %v6220 = vrot.slane %v6138, 1
        %v6221 = vsel %vm449, %v6219, %v6220
        %v6222 = vrot.slane %v6139, 1
        %v6223 = vsel %vm449, %v6220, %v6222
        %v6224 = vrot.slane %v6140, 1
        %v6225 = vrot.slane %v6141, 1
        %v6226 = vsel %vm449, %v6224, %v6225
        %v6227 = vrot.slane %v6142, 1
        %v6228 = vsel %vm449, %v6225, %v6227
        %v6245 = vrot.slane %v6119, 2
        %v6246 = vrot.slane %v6120, 2
        %v6247 = vsel %vm500, %v6245, %v6246
        %v6248 = vrot.slane %v6121, 2
        %v6249 = vsel %vm500, %v6246, %v6248
        %v6250 = vrot.slane %v6122, 2
        %v6251 = vrot.slane %v6123, 2
        %v6252 = vsel %vm500, %v6250, %v6251
        %v6253 = vrot.slane %v6124, 2
        %v6254 = vsel %vm500, %v6251, %v6253
        %v6255 = vrot.slane %v6125, 2
        %v6256 = vrot.slane %v6126, 2
        %v6257 = vsel %vm500, %v6255, %v6256
        %v6258 = vrot.slane %v6127, 2
        %v6259 = vsel %vm500, %v6256, %v6258
        %v6260 = vrot.slane %v6128, 2
        %v6261 = vrot.slane %v6129, 2
        %v6262 = vsel %vm500, %v6260, %v6261
        %v6263 = vrot.slane %v6130, 2
        %v6264 = vsel %vm500, %v6261, %v6263
        %v6265 = vrot.slane %v6131, 2
        %v6266 = vrot.slane %v6132, 2
        %v6267 = vsel %vm500, %v6265, %v6266
        %v6268 = vrot.slane %v6133, 2
        %v6269 = vsel %vm500, %v6266, %v6268
        %v6270 = vrot.slane %v6134, 2
        %v6271 = vrot.slane %v6135, 2
        %v6272 = vsel %vm500, %v6270, %v6271
        %v6273 = vrot.slane %v6136, 2
        %v6274 = vsel %vm500, %v6271, %v6273
        %v6275 = vrot.slane %v6137, 2
        %v6276 = vrot.slane %v6138, 2
        %v6277 = vsel %vm500, %v6275, %v6276
        %v6278 = vrot.slane %v6139, 2
        %v6279 = vsel %vm500, %v6276, %v6278
        %v6280 = vrot.slane %v6140, 2
        %v6281 = vrot.slane %v6141, 2
        %v6282 = vsel %vm500, %v6280, %v6281
        %v6283 = vrot.slane %v6142, 2
        %v6284 = vsel %vm500, %v6281, %v6283
        %v6301 = vld [vmem:[#allocation5] sm:$0xff]
        %v6302 = vld [vmem:[#allocation5 + $0x8] sm:$0xff]
        %v6303 = vld [vmem:[#allocation5 + $0x10] sm:$0xff]
        %v6304 = vld [vmem:[#allocation5 + $0x18] sm:$0xff]
        %v6305 = vld [vmem:[#allocation5 + $0x20] sm:$0xff]
        %v6306 = vld [vmem:[#allocation5 + $0x28] sm:$0xff]
        %v6307 = vld [vmem:[#allocation5 + $0x30] sm:$0xff]
        %v6308 = vld [vmem:[#allocation5 + $0x38] sm:$0xff]
        %v6309 = vld [vmem:[#allocation5 + $0x40] sm:$0xff]
        %v6310 = vld [vmem:[#allocation5 + $0x48] sm:$0xff]
        %v6311 = vld [vmem:[#allocation5 + $0x50] sm:$0xff]
        %v6312 = vld [vmem:[#allocation5 + $0x58] sm:$0xff]
        %v6313 = vld [vmem:[#allocation5 + $0x60] sm:$0xff]
        %v6314 = vld [vmem:[#allocation5 + $0x68] sm:$0xff]
        %v6315 = vld [vmem:[#allocation5 + $0x70] sm:$0xff]
        %v6316 = vld [vmem:[#allocation5 + $0x78] sm:$0xff]
        %v6317 = vld [vmem:[#allocation7] sm:$0xff]
        %v6318 = vld [vmem:[#allocation7 + $0x8] sm:$0xff]
        %v6319 = vld [vmem:[#allocation7 + $0x10] sm:$0xff]
        %v6320 = vld [vmem:[#allocation7 + $0x18] sm:$0xff]
        %v6321 = vld [vmem:[#allocation7 + $0x20] sm:$0xff]
        %v6322 = vld [vmem:[#allocation7 + $0x28] sm:$0xff]
        %v6323 = vld [vmem:[#allocation7 + $0x30] sm:$0xff]
        %v6324 = vld [vmem:[#allocation7 + $0x38] sm:$0xff]
        %v6325 = vld [vmem:[#allocation7 + $0x40] sm:$0xff]
        %v6326 = vld [vmem:[#allocation7 + $0x48] sm:$0xff]
        %v6327 = vld [vmem:[#allocation7 + $0x50] sm:$0xff]
        %v6328 = vld [vmem:[#allocation7 + $0x58] sm:$0xff]
        %v6329 = vld [vmem:[#allocation7 + $0x60] sm:$0xff]
        %v6330 = vld [vmem:[#allocation7 + $0x68] sm:$0xff]
        %v6331 = vld [vmem:[#allocation7 + $0x70] sm:$0xff]
        %v6332 = vld [vmem:[#allocation7 + $0x78] sm:$0xff]
        %v6333 = vld [vmem:[#allocation7 + $0x80] sm:$0xff]
        %v6334 = vld [vmem:[#allocation7 + $0x88] sm:$0xff]
        %v6335 = vld [vmem:[#allocation7 + $0x90] sm:$0xff]
        %v6336 = vld [vmem:[#allocation7 + $0x98] sm:$0xff]
        %v6337 = vld [vmem:[#allocation7 + $0xa0] sm:$0xff]
        %v6338 = vld [vmem:[#allocation7 + $0xa8] sm:$0xff]
        %v6339 = vld [vmem:[#allocation7 + $0xb0] sm:$0xff]
        %v6340 = vld [vmem:[#allocation7 + $0xb8] sm:$0xff]
        %v6341 = vld [vmem:[#allocation7 + $0xc0] sm:$0xff]
        %v6342 = vld [vmem:[#allocation7 + $0xc8] sm:$0xff]
        %v6343 = vld [vmem:[#allocation7 + $0xd0] sm:$0xff]
        %v6344 = vld [vmem:[#allocation7 + $0xd8] sm:$0xff]
        %v6345 = vld [vmem:[#allocation7 + $0xe0] sm:$0xff]
        %v6346 = vld [vmem:[#allocation7 + $0xe8] sm:$0xff]
        %v6347 = vld [vmem:[#allocation7 + $0xf0] sm:$0xff]
        %v6348 = vld [vmem:[#allocation7 + $0xf8] sm:$0xff]
        %v6349 = vld [vmem:[#allocation7 + $0x100] sm:$0xff]
        %v6350 = vld [vmem:[#allocation7 + $0x108] sm:$0xff]
        %v6351 = vld [vmem:[#allocation7 + $0x110] sm:$0xff]
        %v6352 = vld [vmem:[#allocation7 + $0x118] sm:$0xff]
        %v6353 = vld [vmem:[#allocation7 + $0x120] sm:$0xff]
        %v6354 = vld [vmem:[#allocation7 + $0x128] sm:$0xff]
        %v6355 = vld [vmem:[#allocation7 + $0x130] sm:$0xff]
        %v6356 = vld [vmem:[#allocation7 + $0x138] sm:$0xff]
        %v6357 = vld [vmem:[#allocation7 + $0x140] sm:$0xff]
        %v6358 = vld [vmem:[#allocation7 + $0x148] sm:$0xff]
        %v6359 = vld [vmem:[#allocation7 + $0x150] sm:$0xff]
        %v6360 = vld [vmem:[#allocation7 + $0x158] sm:$0xff]
        %v6361 = vld [vmem:[#allocation7 + $0x160] sm:$0xff]
        %v6362 = vld [vmem:[#allocation7 + $0x168] sm:$0xff]
        %v6363 = vld [vmem:[#allocation7 + $0x170] sm:$0xff]
        %v6364 = vld [vmem:[#allocation7 + $0x178] sm:$0xff]
        %6365 = vmatprep.subr.mxu0 0.0
        %6366 = vmatpush1.msra.mxu0 %v6317
        %6367 = vmatprep.subr.mxu0 0.0
        %6368 = vmatpush1.msra.mxu0 %v6318
        %6369 = vmatprep.subr.mxu0 0.0
        %6370 = vmatpush1.msra.mxu0 %v6319
        %6371 = vmatprep.subr.mxu0 0.0
        %6372 = vmatpush1.msra.mxu0 %v6320
        %6373 = vmatprep.subr.mxu0 0.0
        %6374 = vmatpush1.msra.mxu0 %v6321
        %6375 = vmatprep.subr.mxu0 0.0
        %6376 = vmatpush1.msra.mxu0 %v6322
        %6377 = vmatprep.subr.mxu0 0.0
        %6378 = vmatpush1.msra.mxu0 %v6323
        %6379 = vmatprep.subr.mxu0 0.0
        %6380 = vmatpush1.msra.mxu0 %v6324
        %6381 = vmatprep.subr.mxu0 0.0
        %6382 = vmatpush1.msra.mxu0 %v6325
        %6383 = vmatprep.subr.mxu0 0.0
        %6384 = vmatpush1.msra.mxu0 %v6326
        %6385 = vmatprep.subr.mxu0 0.0
        %6386 = vmatpush1.msra.mxu0 %v6327
        %6387 = vmatprep.subr.mxu0 0.0
        %6388 = vmatpush1.msra.mxu0 %v6328
        %6389 = vmatprep.subr.mxu0 0.0
        %6390 = vmatpush1.msra.mxu0 %v6329
        %6391 = vmatprep.subr.mxu0 0.0
        %6392 = vmatpush1.msra.mxu0 %v6330
        %6393 = vmatprep.subr.mxu0 0.0
        %6394 = vmatpush1.msra.mxu0 %v6331
        %6395 = vmatprep.subr.mxu0 0.0
        %6396 = vmatpush1.msra.mxu0 %v6332
        %6397 = vmatprep.subr.mxu0 0.0
        %6398 = vmatpush1.msra.mxu0 %v6333
        %6399 = vmatprep.subr.mxu0 0.0
        %6400 = vmatpush1.msra.mxu0 %v6334
        %6401 = vmatprep.subr.mxu0 0.0
        %6402 = vmatpush1.msra.mxu0 %v6335
        %6403 = vmatprep.subr.mxu0 0.0
        %6404 = vmatpush1.msra.mxu0 %v6336
        %6405 = vmatprep.subr.mxu0 0.0
        %6406 = vmatpush1.msra.mxu0 %v6337
        %6407 = vmatprep.subr.mxu0 0.0
        %6408 = vmatpush1.msra.mxu0 %v6338
        %6409 = vmatprep.subr.mxu0 0.0
        %6410 = vmatpush1.msra.mxu0 %v6339
        %6411 = vmatprep.subr.mxu0 0.0
        %6412 = vmatpush1.msra.mxu0 %v6340
        %6413 = vmatprep.subr.mxu0 0.0
        %6414 = vmatpush1.msra.mxu0 %v6341
        %6415 = vmatprep.subr.mxu0 0.0
        %6416 = vmatpush1.msra.mxu0 %v6342
        %6417 = vmatprep.subr.mxu0 0.0
        %6418 = vmatpush1.msra.mxu0 %v6343
        %6419 = vmatprep.subr.mxu0 0.0
        %6420 = vmatpush1.msra.mxu0 %v6344
        %6421 = vmatprep.subr.mxu0 0.0
        %6422 = vmatpush1.msra.mxu0 %v6345
        %6423 = vmatprep.subr.mxu0 0.0
        %6424 = vmatpush1.msra.mxu0 %v6346
        %6425 = vmatprep.subr.mxu0 0.0
        %6426 = vmatpush1.msra.mxu0 %v6347
        %6427 = vmatprep.subr.mxu0 0.0
        %6428 = vmatpush1.msra.mxu0 %v6348
        %6429 = vmatprep.mubr.f32.mxu0 %v6191
        %6430 = vmatmul.mubr.f32.gmra.mrb[0].mxu0 %v6119
        %v6431 = vpop.f32.mrb[0].mxu0
        %v6432 = vadd.f32 0.0, %v6431
        %v6433 = vpop.f32.mrb[0].mxu0
        %6434 = vmatprep.mubr.f32.mxu0 %v6193
        %6435 = vmatmul.mubr.f32.gmra.mrb[0].mxu0 %v6120
        %v6436 = vpop.f32.mrb[0].mxu0
        %v6437 = vadd.f32 0.0, %v6436
        %v6438 = vpop.f32.mrb[0].mxu0
        %6439 = vmatprep.mubr.f32.mxu0 %v6196
        %6440 = vmatmul.mubr.f32.gmra.mrb[0].mxu0 %v6122
        %v6441 = vpop.f32.mrb[0].mxu0
        %v6442 = vadd.f32 0.0, %v6441
        %v6443 = vpop.f32.mrb[0].mxu0
        %6444 = vmatprep.mubr.f32.mxu0 %v6198
        %6445 = vmatmul.mubr.f32.gmra.mrb[0].mxu0 %v6123
        %v6446 = vpop.f32.mrb[0].mxu0
        %v6447 = vadd.f32 0.0, %v6446
        %v6448 = vpop.f32.mrb[0].mxu0
        %6449 = vmatprep.mubr.f32.mxu0 %v6201
        %6450 = vmatmul.mubr.f32.gmra.mrb[0].mxu0 %v6125
        %v6451 = vpop.f32.mrb[0].mxu0
        %v6452 = vadd.f32 0.0, %v6451
        %v6453 = vpop.f32.mrb[0].mxu0
        %6454 = vmatprep.mubr.f32.mxu0 %v6203
        %6455 = vmatmul.mubr.f32.gmra.mrb[0].mxu0 %v6126
        %v6456 = vpop.f32.mrb[0].mxu0
        %v6457 = vadd.f32 0.0, %v6456
        %v6458 = vpop.f32.mrb[0].mxu0
        %6459 = vmatprep.mubr.f32.mxu0 %v6206
        %6460 = vmatmul.mubr.f32.gmra.mrb[0].mxu0 %v6128
        %v6461 = vpop.f32.mrb[0].mxu0
        %v6462 = vadd.f32 0.0, %v6461
        %v6463 = vpop.f32.mrb[0].mxu0
        %6464 = vmatprep.mubr.f32.mxu0 %v6208
        %6465 = vmatmul.mubr.f32.gmra.mrb[0].mxu0 %v6129
        %v6466 = vpop.f32.mrb[0].mxu0
        %v6467 = vadd.f32 0.0, %v6466
        %v6468 = vpop.f32.mrb[0].mxu0
        %6469 = vmatprep.mubr.f32.mxu0 %v6211
        %6470 = vmatmul.mubr.f32.gmra.mrb[0].mxu0 %v6131
        %v6471 = vpop.f32.mrb[0].mxu0
        %v6472 = vadd.f32 0.0, %v6471
        %v6473 = vpop.f32.mrb[0].mxu0
        %6474 = vmatprep.mubr.f32.mxu0 %v6213
        %6475 = vmatmul.mubr.f32.gmra.mrb[0].mxu0 %v6132
        %v6476 = vpop.f32.mrb[0].mxu0
        %v6477 = vadd.f32 0.0, %v6476
        %v6478 = vpop.f32.mrb[0].mxu0
        %6479 = vmatprep.mubr.f32.mxu0 %v6216
        %6480 = vmatmul.mubr.f32.gmra.mrb[0].mxu0 %v6134
        %v6481 = vpop.f32.mrb[0].mxu0
        %v6482 = vadd.f32 0.0, %v6481
        %v6483 = vpop.f32.mrb[0].mxu0
        %6484 = vmatprep.mubr.f32.mxu0 %v6218
        %6485 = vmatmul.mubr.f32.gmra.mrb[0].mxu0 %v6135
        %v6486 = vpop.f32.mrb[0].mxu0
        %v6487 = vadd.f32 0.0, %v6486
        %v6488 = vpop.f32.mrb[0].mxu0
        %6489 = vmatprep.mubr.f32.mxu0 %v6221
        %6490 = vmatmul.mubr.f32.gmra.mrb[0].mxu0 %v6137
        %v6491 = vpop.f32.mrb[0].mxu0
        %v6492 = vadd.f32 0.0, %v6491
        %v6493 = vpop.f32.mrb[0].mxu0
        %6494 = vmatprep.mubr.f32.mxu0 %v6223
        %6495 = vmatmul.mubr.f32.gmra.mrb[0].mxu0 %v6138
        %v6496 = vpop.f32.mrb[0].mxu0
        %v6497 = vadd.f32 0.0, %v6496
        %v6498 = vpop.f32.mrb[0].mxu0
        %6499 = vmatprep.mubr.f32.mxu0 %v6226
        %6500 = vmatmul.mubr.f32.gmra.mrb[0].mxu0 %v6140
        %v6501 = vpop.f32.mrb[0].mxu0
        %v6502 = vadd.f32 0.0, %v6501
        %v6503 = vpop.f32.mrb[0].mxu0
        %6504 = vmatprep.mubr.f32.mxu0 %v6228
        %6505 = vmatmul.mubr.f32.gmra.mrb[0].mxu0 %v6141
        %v6506 = vpop.f32.mrb[0].mxu0
        %v6507 = vadd.f32 0.0, %v6506
        %v6508 = vpop.f32.mrb[0].mxu0
        %6509 = vdwg.mxu0
        %6510 = vmatprep.subr.mxu0 0.0
        %6511 = vmatpush1.msra.mxu0 %v6349
        %6512 = vmatprep.subr.mxu0 0.0
        %6513 = vmatpush1.msra.mxu0 %v6350
        %6514 = vmatprep.subr.mxu0 0.0
        %6515 = vmatpush1.msra.mxu0 %v6351
        %6516 = vmatprep.subr.mxu0 0.0
        %6517 = vmatpush1.msra.mxu0 %v6352
        %6518 = vmatprep.subr.mxu0 0.0
        %6519 = vmatpush1.msra.mxu0 %v6353
        %6520 = vmatprep.subr.mxu0 0.0
        %6521 = vmatpush1.msra.mxu0 %v6354
        %6522 = vmatprep.subr.mxu0 0.0
        %6523 = vmatpush1.msra.mxu0 %v6355
        %6524 = vmatprep.subr.mxu0 0.0
        %6525 = vmatpush1.msra.mxu0 %v6356
        %6526 = vmatprep.subr.mxu0 0.0
        %6527 = vmatpush1.msra.mxu0 %v6357
        %6528 = vmatprep.subr.mxu0 0.0
        %6529 = vmatpush1.msra.mxu0 %v6358
        %6530 = vmatprep.subr.mxu0 0.0
        %6531 = vmatpush1.msra.mxu0 %v6359
        %6532 = vmatprep.subr.mxu0 0.0
        %6533 = vmatpush1.msra.mxu0 %v6360
        %6534 = vmatprep.subr.mxu0 0.0
        %6535 = vmatpush1.msra.mxu0 %v6361
        %6536 = vmatprep.subr.mxu0 0.0
        %6537 = vmatpush1.msra.mxu0 %v6362
        %6538 = vmatprep.subr.mxu0 0.0
        %6539 = vmatpush1.msra.mxu0 %v6363
        %6540 = vmatprep.subr.mxu0 0.0
        %6541 = vmatpush1.msra.mxu0 %v6364
        %6542 = vmatprep.subr.mxu0 0.0
        %6543 = vmatpush1.msra.mxu0 0.0
        %6544 = vmatprep.subr.mxu0 0.0
        %6545 = vmatpush1.msra.mxu0 0.0
        %6546 = vmatprep.subr.mxu0 0.0
        %6547 = vmatpush1.msra.mxu0 0.0
        %6548 = vmatprep.subr.mxu0 0.0
        %6549 = vmatpush1.msra.mxu0 0.0
        %6550 = vmatprep.subr.mxu0 0.0
        %6551 = vmatpush1.msra.mxu0 0.0
        %6552 = vmatprep.subr.mxu0 0.0
        %6553 = vmatpush1.msra.mxu0 0.0
        %6554 = vmatprep.subr.mxu0 0.0
        %6555 = vmatpush1.msra.mxu0 0.0
        %6556 = vmatprep.subr.mxu0 0.0
        %6557 = vmatpush1.msra.mxu0 0.0
        %6558 = vmatprep.subr.mxu0 0.0
        %6559 = vmatpush1.msra.mxu0 0.0
        %6560 = vmatprep.subr.mxu0 0.0
        %6561 = vmatpush1.msra.mxu0 0.0
        %6562 = vmatprep.subr.mxu0 0.0
        %6563 = vmatpush1.msra.mxu0 0.0
        %6564 = vmatprep.subr.mxu0 0.0
        %6565 = vmatpush1.msra.mxu0 0.0
        %6566 = vmatprep.subr.mxu0 0.0
        %6567 = vmatpush1.msra.mxu0 0.0
        %6568 = vmatprep.subr.mxu0 0.0
        %6569 = vmatpush1.msra.mxu0 0.0
        %6570 = vmatprep.subr.mxu0 0.0
        %6571 = vmatpush1.msra.mxu0 0.0
        %6572 = vmatprep.subr.mxu0 0.0
        %6573 = vmatpush1.msra.mxu0 0.0
        %6574 = vmatprep.mubr.f32.mxu0 0.0
        %6575 = vmatmul.mubr.f32.gmra.mrb[0].mxu0 %v6247
        %v6576 = vpop.f32.mrb[0].mxu0
        %v6577 = vadd.f32 %v6432, %v6576
        %v6578 = vpop.f32.mrb[0].mxu0
        %6579 = vmatprep.mubr.f32.mxu0 0.0
        %6580 = vmatmul.mubr.f32.gmra.mrb[0].mxu0 %v6249
        %v6581 = vpop.f32.mrb[0].mxu0
        %v6582 = vadd.f32 %v6437, %v6581
        %v6583 = vpop.f32.mrb[0].mxu0
        %6584 = vmatprep.mubr.f32.mxu0 0.0
        %6585 = vmatmul.mubr.f32.gmra.mrb[0].mxu0 %v6252
        %v6586 = vpop.f32.mrb[0].mxu0
        %v6587 = vadd.f32 %v6442, %v6586
        %v6588 = vpop.f32.mrb[0].mxu0
        %6589 = vmatprep.mubr.f32.mxu0 0.0
        %6590 = vmatmul.mubr.f32.gmra.mrb[0].mxu0 %v6254
        %v6591 = vpop.f32.mrb[0].mxu0
        %v6592 = vadd.f32 %v6447, %v6591
        %v6593 = vpop.f32.mrb[0].mxu0
        %6594 = vmatprep.mubr.f32.mxu0 0.0
        %6595 = vmatmul.mubr.f32.gmra.mrb[0].mxu0 %v6257
        %v6596 = vpop.f32.mrb[0].mxu0
        %v6597 = vadd.f32 %v6452, %v6596
        %v6598 = vpop.f32.mrb[0].mxu0
        %6599 = vmatprep.mubr.f32.mxu0 0.0
        %6600 = vmatmul.mubr.f32.gmra.mrb[0].mxu0 %v6259
        %v6601 = vpop.f32.mrb[0].mxu0
        %v6602 = vadd.f32 %v6457, %v6601
        %v6603 = vpop.f32.mrb[0].mxu0
        %6604 = vmatprep.mubr.f32.mxu0 0.0
        %6605 = vmatmul.mubr.f32.gmra.mrb[0].mxu0 %v6262
        %v6606 = vpop.f32.mrb[0].mxu0
        %v6607 = vadd.f32 %v6462, %v6606
        %v6608 = vpop.f32.mrb[0].mxu0
        %6609 = vmatprep.mubr.f32.mxu0 0.0
        %6610 = vmatmul.mubr.f32.gmra.mrb[0].mxu0 %v6264
        %v6611 = vpop.f32.mrb[0].mxu0
        %v6612 = vadd.f32 %v6467, %v6611
        %v6613 = vpop.f32.mrb[0].mxu0
        %6614 = vmatprep.mubr.f32.mxu0 0.0
        %6615 = vmatmul.mubr.f32.gmra.mrb[0].mxu0 %v6267
        %v6616 = vpop.f32.mrb[0].mxu0
        %v6617 = vadd.f32 %v6472, %v6616
        %v6618 = vpop.f32.mrb[0].mxu0
        %6619 = vmatprep.mubr.f32.mxu0 0.0
        %6620 = vmatmul.mubr.f32.gmra.mrb[0].mxu0 %v6269
        %v6621 = vpop.f32.mrb[0].mxu0
        %v6622 = vadd.f32 %v6477, %v6621
        %v6623 = vpop.f32.mrb[0].mxu0
        %6624 = vmatprep.mubr.f32.mxu0 0.0
        %6625 = vmatmul.mubr.f32.gmra.mrb[0].mxu0 %v6272
        %v6626 = vpop.f32.mrb[0].mxu0
        %v6627 = vadd.f32 %v6482, %v6626
        %v6628 = vpop.f32.mrb[0].mxu0
        %6629 = vmatprep.mubr.f32.mxu0 0.0
        %6630 = vmatmul.mubr.f32.gmra.mrb[0].mxu0 %v6274
        %v6631 = vpop.f32.mrb[0].mxu0
        %v6632 = vadd.f32 %v6487, %v6631
        %v6633 = vpop.f32.mrb[0].mxu0
        %6634 = vmatprep.mubr.f32.mxu0 0.0
        %6635 = vmatmul.mubr.f32.gmra.mrb[0].mxu0 %v6277
        %v6636 = vpop.f32.mrb[0].mxu0
        %v6637 = vadd.f32 %v6492, %v6636
        %v6638 = vpop.f32.mrb[0].mxu0
        %6639 = vmatprep.mubr.f32.mxu0 0.0
        %6640 = vmatmul.mubr.f32.gmra.mrb[0].mxu0 %v6279
        %v6641 = vpop.f32.mrb[0].mxu0
        %v6642 = vadd.f32 %v6497, %v6641
        %v6643 = vpop.f32.mrb[0].mxu0
        %6644 = vmatprep.mubr.f32.mxu0 0.0
        %6645 = vmatmul.mubr.f32.gmra.mrb[0].mxu0 %v6282
        %v6646 = vpop.f32.mrb[0].mxu0
        %v6647 = vadd.f32 %v6502, %v6646
        %v6648 = vpop.f32.mrb[0].mxu0
        %6649 = vmatprep.mubr.f32.mxu0 0.0
        %6650 = vmatmul.mubr.f32.gmra.mrb[0].mxu0 %v6284
        %v6651 = vpop.f32.mrb[0].mxu0
        %v6652 = vadd.f32 %v6507, %v6651
        %v6653 = vpop.f32.mrb[0].mxu0
        %6654 = vdwg.mxu0
        %v6655 = vadd.f32 %v6301, %v6577
        %v6656 = vadd.f32 %v6302, %v6582
        %v6657 = vadd.f32 %v6303, %v6587
        %v6658 = vadd.f32 %v6304, %v6592
        %v6659 = vadd.f32 %v6305, %v6597
        %v6660 = vadd.f32 %v6306, %v6602
        %v6661 = vadd.f32 %v6307, %v6607
        %v6662 = vadd.f32 %v6308, %v6612
        %v6663 = vadd.f32 %v6309, %v6617
        %v6664 = vadd.f32 %v6310, %v6622
        %v6665 = vadd.f32 %v6311, %v6627
        %v6666 = vadd.f32 %v6312, %v6632
        %v6667 = vadd.f32 %v6313, %v6637
        %v6668 = vadd.f32 %v6314, %v6642
        %v6669 = vadd.f32 %v6315, %v6647
        %v6670 = vadd.f32 %v6316, %v6652
        %6671 = vst [vmem:[#allocation5] sm:$0xff] %v6655
        %6672 = vst [vmem:[#allocation5 + $0x8] sm:$0xff] %v6656
        %6673 = vst [vmem:[#allocation5 + $0x10] sm:$0xff] %v6657
        %6674 = vst [vmem:[#allocation5 + $0x18] sm:$0xff] %v6658
        %6675 = vst [vmem:[#allocation5 + $0x20] sm:$0xff] %v6659
        %6676 = vst [vmem:[#allocation5 + $0x28] sm:$0xff] %v6660
        %6677 = vst [vmem:[#allocation5 + $0x30] sm:$0xff] %v6661
        %6678 = vst [vmem:[#allocation5 + $0x38] sm:$0xff] %v6662
        %6679 = vst [vmem:[#allocation5 + $0x40] sm:$0xff] %v6663
        %6680 = vst [vmem:[#allocation5 + $0x48] sm:$0xff] %v6664
        %6681 = vst [vmem:[#allocation5 + $0x50] sm:$0xff] %v6665
        %6682 = vst [vmem:[#allocation5 + $0x58] sm:$0xff] %v6666
        %6683 = vst [vmem:[#allocation5 + $0x60] sm:$0xff] %v6667
        %6684 = vst [vmem:[#allocation5 + $0x68] sm:$0xff] %v6668
        %6685 = vst [vmem:[#allocation5 + $0x70] sm:$0xff] %v6669
        %6686 = vst [vmem:[#allocation5 + $0x78] sm:$0xff] %v6670
        %v6690 = vrot.slane %v6143, 1
        %v6691 = vrot.slane %v6144, 1
        %v6692 = vsel %vm449, %v6690, %v6691
        %v6693 = vrot.slane %v6145, 1
        %v6694 = vsel %vm449, %v6691, %v6693
        %v6697 = vrot.slane %v6143, 2
        %v6698 = vrot.slane %v6144, 2
        %v6699 = vsel %vm500, %v6697, %v6698
        %v6700 = vrot.slane %v6145, 2
        %v6701 = vsel %vm500, %v6698, %v6700
        %v6704 = vld [vmem:[#allocation5] sm:$0xff]
        %v6705 = vld [vmem:[#allocation5 + $0x8] sm:$0xff]
        %v6706 = vld [vmem:[#allocation5 + $0x10] sm:$0xff]
        %v6707 = vld [vmem:[#allocation5 + $0x18] sm:$0xff]
        %v6708 = vld [vmem:[#allocation5 + $0x20] sm:$0xff]
        %v6709 = vld [vmem:[#allocation5 + $0x28] sm:$0xff]
        %v6710 = vld [vmem:[#allocation5 + $0x30] sm:$0xff]
        %v6711 = vld [vmem:[#allocation5 + $0x38] sm:$0xff]
        %v6712 = vld [vmem:[#allocation5 + $0x40] sm:$0xff]
        %v6713 = vld [vmem:[#allocation5 + $0x48] sm:$0xff]
        %v6714 = vld [vmem:[#allocation5 + $0x50] sm:$0xff]
        %v6715 = vld [vmem:[#allocation5 + $0x58] sm:$0xff]
        %v6716 = vld [vmem:[#allocation5 + $0x60] sm:$0xff]
        %v6717 = vld [vmem:[#allocation5 + $0x68] sm:$0xff]
        %v6718 = vld [vmem:[#allocation5 + $0x70] sm:$0xff]
        %v6719 = vld [vmem:[#allocation5 + $0x78] sm:$0xff]
        %s6720 = scalar_lea.vmem [#allocation7], 384
        %v6721 = vld [vmem:[%s6720] sm:$0xff]
        %v6722 = vld [vmem:[%s6720 + $0x8] sm:$0xff]
        %v6723 = vld [vmem:[%s6720 + $0x10] sm:$0xff]
        %v6724 = vld [vmem:[%s6720 + $0x18] sm:$0xff]
        %v6725 = vld [vmem:[%s6720 + $0x20] sm:$0xff]
        %v6726 = vld [vmem:[%s6720 + $0x28] sm:$0xff]
        %v6727 = vld [vmem:[%s6720 + $0x30] sm:$0xff]
        %v6728 = vld [vmem:[%s6720 + $0x38] sm:$0xff]
        %v6729 = vld [vmem:[%s6720 + $0x40] sm:$0xff]
        %v6730 = vld [vmem:[%s6720 + $0x48] sm:$0xff]
        %v6731 = vld [vmem:[%s6720 + $0x50] sm:$0xff]
        %v6732 = vld [vmem:[%s6720 + $0x58] sm:$0xff]
        %v6733 = vld [vmem:[%s6720 + $0x60] sm:$0xff]
        %v6734 = vld [vmem:[%s6720 + $0x68] sm:$0xff]
        %v6735 = vld [vmem:[%s6720 + $0x70] sm:$0xff]
        %v6736 = vld [vmem:[%s6720 + $0x78] sm:$0xff]
        %v6737 = vld [vmem:[%s6720 + $0x80] sm:$0xff]
        %v6738 = vld [vmem:[%s6720 + $0x88] sm:$0xff]
        %v6739 = vld [vmem:[%s6720 + $0x90] sm:$0xff]
        %v6740 = vld [vmem:[%s6720 + $0x98] sm:$0xff]
        %v6741 = vld [vmem:[%s6720 + $0xa0] sm:$0xff]
        %v6742 = vld [vmem:[%s6720 + $0xa8] sm:$0xff]
        %v6743 = vld [vmem:[%s6720 + $0xb0] sm:$0xff]
        %v6744 = vld [vmem:[%s6720 + $0xb8] sm:$0xff]
        %v6745 = vld [vmem:[%s6720 + $0xc0] sm:$0xff]
        %v6746 = vld [vmem:[%s6720 + $0xc8] sm:$0xff]
        %v6747 = vld [vmem:[%s6720 + $0xd0] sm:$0xff]
        %v6748 = vld [vmem:[%s6720 + $0xd8] sm:$0xff]
        %v6749 = vld [vmem:[%s6720 + $0xe0] sm:$0xff]
        %v6750 = vld [vmem:[%s6720 + $0xe8] sm:$0xff]
        %v6751 = vld [vmem:[%s6720 + $0xf0] sm:$0xff]
        %v6752 = vld [vmem:[%s6720 + $0xf8] sm:$0xff]
        %v6753 = vld [vmem:[%s6720 + $0x100] sm:$0xff]
        %v6754 = vld [vmem:[%s6720 + $0x108] sm:$0xff]
        %v6755 = vld [vmem:[%s6720 + $0x110] sm:$0xff]
        %v6756 = vld [vmem:[%s6720 + $0x118] sm:$0xff]
        %v6757 = vld [vmem:[%s6720 + $0x120] sm:$0xff]
        %v6758 = vld [vmem:[%s6720 + $0x128] sm:$0xff]
        %v6759 = vld [vmem:[%s6720 + $0x130] sm:$0xff]
        %v6760 = vld [vmem:[%s6720 + $0x138] sm:$0xff]
        %v6761 = vld [vmem:[%s6720 + $0x140] sm:$0xff]
        %v6762 = vld [vmem:[%s6720 + $0x148] sm:$0xff]
        %v6763 = vld [vmem:[%s6720 + $0x150] sm:$0xff]
        %v6764 = vld [vmem:[%s6720 + $0x158] sm:$0xff]
        %v6765 = vld [vmem:[%s6720 + $0x160] sm:$0xff]
        %v6766 = vld [vmem:[%s6720 + $0x168] sm:$0xff]
        %v6767 = vld [vmem:[%s6720 + $0x170] sm:$0xff]
        %v6768 = vld [vmem:[%s6720 + $0x178] sm:$0xff]
        %6769 = vmatprep.subr.mxu0 0.0
        %6770 = vmatpush1.msra.mxu0 %v6721
        %6771 = vmatprep.subr.mxu0 0.0
        %6772 = vmatpush1.msra.mxu0 %v6722
        %6773 = vmatprep.subr.mxu0 0.0
        %6774 = vmatpush1.msra.mxu0 %v6723
        %6775 = vmatprep.subr.mxu0 0.0
        %6776 = vmatpush1.msra.mxu0 %v6724
        %6777 = vmatprep.subr.mxu0 0.0
        %6778 = vmatpush1.msra.mxu0 %v6725
        %6779 = vmatprep.subr.mxu0 0.0
        %6780 = vmatpush1.msra.mxu0 %v6726
        %6781 = vmatprep.subr.mxu0 0.0
        %6782 = vmatpush1.msra.mxu0 %v6727
        %6783 = vmatprep.subr.mxu0 0.0
        %6784 = vmatpush1.msra.mxu0 %v6728
        %6785 = vmatprep.subr.mxu0 0.0
        %6786 = vmatpush1.msra.mxu0 %v6729
        %6787 = vmatprep.subr.mxu0 0.0
        %6788 = vmatpush1.msra.mxu0 %v6730
        %6789 = vmatprep.subr.mxu0 0.0
        %6790 = vmatpush1.msra.mxu0 %v6731
        %6791 = vmatprep.subr.mxu0 0.0
        %6792 = vmatpush1.msra.mxu0 %v6732
        %6793 = vmatprep.subr.mxu0 0.0
        %6794 = vmatpush1.msra.mxu0 %v6733
        %6795 = vmatprep.subr.mxu0 0.0
        %6796 = vmatpush1.msra.mxu0 %v6734
        %6797 = vmatprep.subr.mxu0 0.0
        %6798 = vmatpush1.msra.mxu0 %v6735
        %6799 = vmatprep.subr.mxu0 0.0
        %6800 = vmatpush1.msra.mxu0 %v6736
        %6801 = vmatprep.subr.mxu0 0.0
        %6802 = vmatpush1.msra.mxu0 %v6737
        %6803 = vmatprep.subr.mxu0 0.0
        %6804 = vmatpush1.msra.mxu0 %v6738
        %6805 = vmatprep.subr.mxu0 0.0
        %6806 = vmatpush1.msra.mxu0 %v6739
        %6807 = vmatprep.subr.mxu0 0.0
        %6808 = vmatpush1.msra.mxu0 %v6740
        %6809 = vmatprep.subr.mxu0 0.0
        %6810 = vmatpush1.msra.mxu0 %v6741
        %6811 = vmatprep.subr.mxu0 0.0
        %6812 = vmatpush1.msra.mxu0 %v6742
        %6813 = vmatprep.subr.mxu0 0.0
        %6814 = vmatpush1.msra.mxu0 %v6743
        %6815 = vmatprep.subr.mxu0 0.0
        %6816 = vmatpush1.msra.mxu0 %v6744
        %6817 = vmatprep.subr.mxu0 0.0
        %6818 = vmatpush1.msra.mxu0 %v6745
        %6819 = vmatprep.subr.mxu0 0.0
        %6820 = vmatpush1.msra.mxu0 %v6746
        %6821 = vmatprep.subr.mxu0 0.0
        %6822 = vmatpush1.msra.mxu0 %v6747
        %6823 = vmatprep.subr.mxu0 0.0
        %6824 = vmatpush1.msra.mxu0 %v6748
        %6825 = vmatprep.subr.mxu0 0.0
        %6826 = vmatpush1.msra.mxu0 %v6749
        %6827 = vmatprep.subr.mxu0 0.0
        %6828 = vmatpush1.msra.mxu0 %v6750
        %6829 = vmatprep.subr.mxu0 0.0
        %6830 = vmatpush1.msra.mxu0 %v6751
        %6831 = vmatprep.subr.mxu0 0.0
        %6832 = vmatpush1.msra.mxu0 %v6752
        %6833 = vmatprep.mubr.f32.mxu0 %v6196
        %6834 = vmatmul.mubr.f32.gmra.mrb[0].mxu0 %v6122
        %v6835 = vpop.f32.mrb[0].mxu0
        %v6836 = vadd.f32 0.0, %v6835
        %v6837 = vpop.f32.mrb[0].mxu0
        %6838 = vmatprep.mubr.f32.mxu0 %v6198
        %6839 = vmatmul.mubr.f32.gmra.mrb[0].mxu0 %v6123
        %v6840 = vpop.f32.mrb[0].mxu0
        %v6841 = vadd.f32 0.0, %v6840
        %v6842 = vpop.f32.mrb[0].mxu0
        %6843 = vmatprep.mubr.f32.mxu0 %v6201
        %6844 = vmatmul.mubr.f32.gmra.mrb[0].mxu0 %v6125
        %v6845 = vpop.f32.mrb[0].mxu0
        %v6846 = vadd.f32 0.0, %v6845
        %v6847 = vpop.f32.mrb[0].mxu0
        %6848 = vmatprep.mubr.f32.mxu0 %v6203
        %6849 = vmatmul.mubr.f32.gmra.mrb[0].mxu0 %v6126
        %v6850 = vpop.f32.mrb[0].mxu0
        %v6851 = vadd.f32 0.0, %v6850
        %v6852 = vpop.f32.mrb[0].mxu0
        %6853 = vmatprep.mubr.f32.mxu0 %v6206
        %6854 = vmatmul.mubr.f32.gmra.mrb[0].mxu0 %v6128
        %v6855 = vpop.f32.mrb[0].mxu0
        %v6856 = vadd.f32 0.0, %v6855
        %v6857 = vpop.f32.mrb[0].mxu0
        %6858 = vmatprep.mubr.f32.mxu0 %v6208
        %6859 = vmatmul.mubr.f32.gmra.mrb[0].mxu0 %v6129
        %v6860 = vpop.f32.mrb[0].mxu0
        %v6861 = vadd.f32 0.0, %v6860
        %v6862 = vpop.f32.mrb[0].mxu0
        %6863 = vmatprep.mubr.f32.mxu0 %v6211
        %6864 = vmatmul.mubr.f32.gmra.mrb[0].mxu0 %v6131
        %v6865 = vpop.f32.mrb[0].mxu0
        %v6866 = vadd.f32 0.0, %v6865
        %v6867 = vpop.f32.mrb[0].mxu0
        %6868 = vmatprep.mubr.f32.mxu0 %v6213
        %6869 = vmatmul.mubr.f32.gmra.mrb[0].mxu0 %v6132
        %v6870 = vpop.f32.mrb[0].mxu0
        %v6871 = vadd.f32 0.0, %v6870
        %v6872 = vpop.f32.mrb[0].mxu0
        %6873 = vmatprep.mubr.f32.mxu0 %v6216
        %6874 = vmatmul.mubr.f32.gmra.mrb[0].mxu0 %v6134
        %v6875 = vpop.f32.mrb[0].mxu0
        %v6876 = vadd.f32 0.0, %v6875
        %v6877 = vpop.f32.mrb[0].mxu0
        %6878 = vmatprep.mubr.f32.mxu0 %v6218
        %6879 = vmatmul.mubr.f32.gmra.mrb[0].mxu0 %v6135
        %v6880 = vpop.f32.mrb[0].mxu0
        %v6881 = vadd.f32 0.0, %v6880
        %v6882 = vpop.f32.mrb[0].mxu0
        %6883 = vmatprep.mubr.f32.mxu0 %v6221
        %6884 = vmatmul.mubr.f32.gmra.mrb[0].mxu0 %v6137
        %v6885 = vpop.f32.mrb[0].mxu0
        %v6886 = vadd.f32 0.0, %v6885
        %v6887 = vpop.f32.mrb[0].mxu0
        %6888 = vmatprep.mubr.f32.mxu0 %v6223
        %6889 = vmatmul.mubr.f32.gmra.mrb[0].mxu0 %v6138
        %v6890 = vpop.f32.mrb[0].mxu0
        %v6891 = vadd.f32 0.0, %v6890
        %v6892 = vpop.f32.mrb[0].mxu0
        %6893 = vmatprep.mubr.f32.mxu0 %v6226
        %6894 = vmatmul.mubr.f32.gmra.mrb[0].mxu0 %v6140
        %v6895 = vpop.f32.mrb[0].mxu0
        %v6896 = vadd.f32 0.0, %v6895
        %v6897 = vpop.f32.mrb[0].mxu0
        %6898 = vmatprep.mubr.f32.mxu0 %v6228
        %6899 = vmatmul.mubr.f32.gmra.mrb[0].mxu0 %v6141
        %v6900 = vpop.f32.mrb[0].mxu0
        %v6901 = vadd.f32 0.0, %v6900
        %v6902 = vpop.f32.mrb[0].mxu0
        %6903 = vmatprep.mubr.f32.mxu0 %v6692
        %6904 = vmatmul.mubr.f32.gmra.mrb[0].mxu0 %v6143
        %v6905 = vpop.f32.mrb[0].mxu0
        %v6906 = vadd.f32 0.0, %v6905
        %v6907 = vpop.f32.mrb[0].mxu0
        %6908 = vmatprep.mubr.f32.mxu0 %v6694
        %6909 = vmatmul.mubr.f32.gmra.mrb[0].mxu0 %v6144
        %v6910 = vpop.f32.mrb[0].mxu0
        %v6911 = vadd.f32 0.0, %v6910
        %v6912 = vpop.f32.mrb[0].mxu0
        %6913 = vdwg.mxu0
        %6914 = vmatprep.subr.mxu0 0.0
        %6915 = vmatpush1.msra.mxu0 %v6753
        %6916 = vmatprep.subr.mxu0 0.0
        %6917 = vmatpush1.msra.mxu0 %v6754
        %6918 = vmatprep.subr.mxu0 0.0
        %6919 = vmatpush1.msra.mxu0 %v6755
        %6920 = vmatprep.subr.mxu0 0.0
        %6921 = vmatpush1.msra.mxu0 %v6756
        %6922 = vmatprep.subr.mxu0 0.0
        %6923 = vmatpush1.msra.mxu0 %v6757
        %6924 = vmatprep.subr.mxu0 0.0
        %6925 = vmatpush1.msra.mxu0 %v6758
        %6926 = vmatprep.subr.mxu0 0.0
        %6927 = vmatpush1.msra.mxu0 %v6759
        %6928 = vmatprep.subr.mxu0 0.0
        %6929 = vmatpush1.msra.mxu0 %v6760
        %6930 = vmatprep.subr.mxu0 0.0
        %6931 = vmatpush1.msra.mxu0 %v6761
        %6932 = vmatprep.subr.mxu0 0.0
        %6933 = vmatpush1.msra.mxu0 %v6762
        %6934 = vmatprep.subr.mxu0 0.0
        %6935 = vmatpush1.msra.mxu0 %v6763
        %6936 = vmatprep.subr.mxu0 0.0
        %6937 = vmatpush1.msra.mxu0 %v6764
        %6938 = vmatprep.subr.mxu0 0.0
        %6939 = vmatpush1.msra.mxu0 %v6765
        %6940 = vmatprep.subr.mxu0 0.0
        %6941 = vmatpush1.msra.mxu0 %v6766
        %6942 = vmatprep.subr.mxu0 0.0
        %6943 = vmatpush1.msra.mxu0 %v6767
        %6944 = vmatprep.subr.mxu0 0.0
        %6945 = vmatpush1.msra.mxu0 %v6768
        %6946 = vmatprep.subr.mxu0 0.0
        %6947 = vmatpush1.msra.mxu0 0.0
        %6948 = vmatprep.subr.mxu0 0.0
        %6949 = vmatpush1.msra.mxu0 0.0
        %6950 = vmatprep.subr.mxu0 0.0
        %6951 = vmatpush1.msra.mxu0 0.0
        %6952 = vmatprep.subr.mxu0 0.0
        %6953 = vmatpush1.msra.mxu0 0.0
        %6954 = vmatprep.subr.mxu0 0.0
        %6955 = vmatpush1.msra.mxu0 0.0
        %6956 = vmatprep.subr.mxu0 0.0
        %6957 = vmatpush1.msra.mxu0 0.0
        %6958 = vmatprep.subr.mxu0 0.0
        %6959 = vmatpush1.msra.mxu0 0.0
        %6960 = vmatprep.subr.mxu0 0.0
        %6961 = vmatpush1.msra.mxu0 0.0
        %6962 = vmatprep.subr.mxu0 0.0
        %6963 = vmatpush1.msra.mxu0 0.0
        %6964 = vmatprep.subr.mxu0 0.0
        %6965 = vmatpush1.msra.mxu0 0.0
        %6966 = vmatprep.subr.mxu0 0.0
        %6967 = vmatpush1.msra.mxu0 0.0
        %6968 = vmatprep.subr.mxu0 0.0
        %6969 = vmatpush1.msra.mxu0 0.0
        %6970 = vmatprep.subr.mxu0 0.0
        %6971 = vmatpush1.msra.mxu0 0.0
        %6972 = vmatprep.subr.mxu0 0.0
        %6973 = vmatpush1.msra.mxu0 0.0
        %6974 = vmatprep.subr.mxu0 0.0
        %6975 = vmatpush1.msra.mxu0 0.0
        %6976 = vmatprep.subr.mxu0 0.0
        %6977 = vmatpush1.msra.mxu0 0.0
        %6978 = vmatprep.mubr.f32.mxu0 0.0
        %6979 = vmatmul.mubr.f32.gmra.mrb[0].mxu0 %v6252
        %v6980 = vpop.f32.mrb[0].mxu0
        %v6981 = vadd.f32 %v6836, %v6980
        %v6982 = vpop.f32.mrb[0].mxu0
        %6983 = vmatprep.mubr.f32.mxu0 0.0
        %6984 = vmatmul.mubr.f32.gmra.mrb[0].mxu0 %v6254
        %v6985 = vpop.f32.mrb[0].mxu0
        %v6986 = vadd.f32 %v6841, %v6985
        %v6987 = vpop.f32.mrb[0].mxu0
        %6988 = vmatprep.mubr.f32.mxu0 0.0
        %6989 = vmatmul.mubr.f32.gmra.mrb[0].mxu0 %v6257
        %v6990 = vpop.f32.mrb[0].mxu0
        %v6991 = vadd.f32 %v6846, %v6990
        %v6992 = vpop.f32.mrb[0].mxu0
        %6993 = vmatprep.mubr.f32.mxu0 0.0
        %6994 = vmatmul.mubr.f32.gmra.mrb[0].mxu0 %v6259
        %v6995 = vpop.f32.mrb[0].mxu0
        %v6996 = vadd.f32 %v6851, %v6995
        %v6997 = vpop.f32.mrb[0].mxu0
        %6998 = vmatprep.mubr.f32.mxu0 0.0
        %6999 = vmatmul.mubr.f32.gmra.mrb[0].mxu0 %v6262
        %v7000 = vpop.f32.mrb[0].mxu0
        %v7001 = vadd.f32 %v6856, %v7000
        %v7002 = vpop.f32.mrb[0].mxu0
        %7003 = vmatprep.mubr.f32.mxu0 0.0
        %7004 = vmatmul.mubr.f32.gmra.mrb[0].mxu0 %v6264
        %v7005 = vpop.f32.mrb[0].mxu0
        %v7006 = vadd.f32 %v6861, %v7005
        %v7007 = vpop.f32.mrb[0].mxu0
        %7008 = vmatprep.mubr.f32.mxu0 0.0
        %7009 = vmatmul.mubr.f32.gmra.mrb[0].mxu0 %v6267
        %v7010 = vpop.f32.mrb[0].mxu0
        %v7011 = vadd.f32 %v6866, %v7010
        %v7012 = vpop.f32.mrb[0].mxu0
        %7013 = vmatprep.mubr.f32.mxu0 0.0
        %7014 = vmatmul.mubr.f32.gmra.mrb[0].mxu0 %v6269
        %v7015 = vpop.f32.mrb[0].mxu0
        %v7016 = vadd.f32 %v6871, %v7015
        %v7017 = vpop.f32.mrb[0].mxu0
        %7018 = vmatprep.mubr.f32.mxu0 0.0
        %7019 = vmatmul.mubr.f32.gmra.mrb[0].mxu0 %v6272
        %v7020 = vpop.f32.mrb[0].mxu0
        %v7021 = vadd.f32 %v6876, %v7020
        %v7022 = vpop.f32.mrb[0].mxu0
        %7023 = vmatprep.mubr.f32.mxu0 0.0
        %7024 = vmatmul.mubr.f32.gmra.mrb[0].mxu0 %v6274
        %v7025 = vpop.f32.mrb[0].mxu0
        %v7026 = vadd.f32 %v6881, %v7025
        %v7027 = vpop.f32.mrb[0].mxu0
        %7028 = vmatprep.mubr.f32.mxu0 0.0
        %7029 = vmatmul.mubr.f32.gmra.mrb[0].mxu0 %v6277
        %v7030 = vpop.f32.mrb[0].mxu0
        %v7031 = vadd.f32 %v6886, %v7030
        %v7032 = vpop.f32.mrb[0].mxu0
        %7033 = vmatprep.mubr.f32.mxu0 0.0
        %7034 = vmatmul.mubr.f32.gmra.mrb[0].mxu0 %v6279
        %v7035 = vpop.f32.mrb[0].mxu0
        %v7036 = vadd.f32 %v6891, %v7035
        %v7037 = vpop.f32.mrb[0].mxu0
        %7038 = vmatprep.mubr.f32.mxu0 0.0
        %7039 = vmatmul.mubr.f32.gmra.mrb[0].mxu0 %v6282
        %v7040 = vpop.f32.mrb[0].mxu0
        %v7041 = vadd.f32 %v6896, %v7040
        %v7042 = vpop.f32.mrb[0].mxu0
        %7043 = vmatprep.mubr.f32.mxu0 0.0
        %7044 = vmatmul.mubr.f32.gmra.mrb[0].mxu0 %v6284
        %v7045 = vpop.f32.mrb[0].mxu0
        %v7046 = vadd.f32 %v6901, %v7045
        %v7047 = vpop.f32.mrb[0].mxu0
        %7048 = vmatprep.mubr.f32.mxu0 0.0
        %7049 = vmatmul.mubr.f32.gmra.mrb[0].mxu0 %v6699
        %v7050 = vpop.f32.mrb[0].mxu0
        %v7051 = vadd.f32 %v6906, %v7050
        %v7052 = vpop.f32.mrb[0].mxu0
        %7053 = vmatprep.mubr.f32.mxu0 0.0
        %7054 = vmatmul.mubr.f32.gmra.mrb[0].mxu0 %v6701
        %v7055 = vpop.f32.mrb[0].mxu0
        %v7056 = vadd.f32 %v6911, %v7055
        %v7057 = vpop.f32.mrb[0].mxu0
        %7058 = vdwg.mxu0
        %v7059 = vadd.f32 %v6704, %v6981
        %v7060 = vadd.f32 %v6705, %v6986
        %v7061 = vadd.f32 %v6706, %v6991
        %v7062 = vadd.f32 %v6707, %v6996
        %v7063 = vadd.f32 %v6708, %v7001
        %v7064 = vadd.f32 %v6709, %v7006
        %v7065 = vadd.f32 %v6710, %v7011
        %v7066 = vadd.f32 %v6711, %v7016
        %v7067 = vadd.f32 %v6712, %v7021
        %v7068 = vadd.f32 %v6713, %v7026
        %v7069 = vadd.f32 %v6714, %v7031
        %v7070 = vadd.f32 %v6715, %v7036
        %v7071 = vadd.f32 %v6716, %v7041
        %v7072 = vadd.f32 %v6717, %v7046
        %v7073 = vadd.f32 %v6718, %v7051
        %v7074 = vadd.f32 %v6719, %v7056
        %7075 = vst [vmem:[#allocation5] sm:$0xff] %v7059
        %7076 = vst [vmem:[#allocation5 + $0x8] sm:$0xff] %v7060
        %7077 = vst [vmem:[#allocation5 + $0x10] sm:$0xff] %v7061
        %7078 = vst [vmem:[#allocation5 + $0x18] sm:$0xff] %v7062
        %7079 = vst [vmem:[#allocation5 + $0x20] sm:$0xff] %v7063
        %7080 = vst [vmem:[#allocation5 + $0x28] sm:$0xff] %v7064
        %7081 = vst [vmem:[#allocation5 + $0x30] sm:$0xff] %v7065
        %7082 = vst [vmem:[#allocation5 + $0x38] sm:$0xff] %v7066
        %7083 = vst [vmem:[#allocation5 + $0x40] sm:$0xff] %v7067
        %7084 = vst [vmem:[#allocation5 + $0x48] sm:$0xff] %v7068
        %7085 = vst [vmem:[#allocation5 + $0x50] sm:$0xff] %v7069
        %7086 = vst [vmem:[#allocation5 + $0x58] sm:$0xff] %v7070
        %7087 = vst [vmem:[#allocation5 + $0x60] sm:$0xff] %v7071
        %7088 = vst [vmem:[#allocation5 + $0x68] sm:$0xff] %v7072
        %7089 = vst [vmem:[#allocation5 + $0x70] sm:$0xff] %v7073
        %7090 = vst [vmem:[#allocation5 + $0x78] sm:$0xff] %v7074
        %v7094 = vrot.slane %v6146, 1
        %v7095 = vrot.slane %v6147, 1
        %v7096 = vsel %vm449, %v7094, %v7095
        %v7097 = vrot.slane %v6148, 1
        %v7098 = vsel %vm449, %v7095, %v7097
        %v7101 = vrot.slane %v6146, 2
        %v7102 = vrot.slane %v6147, 2
        %v7103 = vsel %vm500, %v7101, %v7102
        %v7104 = vrot.slane %v6148, 2
        %v7105 = vsel %vm500, %v7102, %v7104
        %v7108 = vld [vmem:[#allocation5] sm:$0xff]
        %v7109 = vld [vmem:[#allocation5 + $0x8] sm:$0xff]
        %v7110 = vld [vmem:[#allocation5 + $0x10] sm:$0xff]
        %v7111 = vld [vmem:[#allocation5 + $0x18] sm:$0xff]
        %v7112 = vld [vmem:[#allocation5 + $0x20] sm:$0xff]
        %v7113 = vld [vmem:[#allocation5 + $0x28] sm:$0xff]
        %v7114 = vld [vmem:[#allocation5 + $0x30] sm:$0xff]
        %v7115 = vld [vmem:[#allocation5 + $0x38] sm:$0xff]
        %v7116 = vld [vmem:[#allocation5 + $0x40] sm:$0xff]
        %v7117 = vld [vmem:[#allocation5 + $0x48] sm:$0xff]
        %v7118 = vld [vmem:[#allocation5 + $0x50] sm:$0xff]
        %v7119 = vld [vmem:[#allocation5 + $0x58] sm:$0xff]
        %v7120 = vld [vmem:[#allocation5 + $0x60] sm:$0xff]
        %v7121 = vld [vmem:[#allocation5 + $0x68] sm:$0xff]
        %v7122 = vld [vmem:[#allocation5 + $0x70] sm:$0xff]
        %v7123 = vld [vmem:[#allocation5 + $0x78] sm:$0xff]
        %s7124 = scalar_lea.vmem [#allocation7], 768
        %v7125 = vld [vmem:[%s7124] sm:$0xff]
        %v7126 = vld [vmem:[%s7124 + $0x8] sm:$0xff]
        %v7127 = vld [vmem:[%s7124 + $0x10] sm:$0xff]
        %v7128 = vld [vmem:[%s7124 + $0x18] sm:$0xff]
        %v7129 = vld [vmem:[%s7124 + $0x20] sm:$0xff]
        %v7130 = vld [vmem:[%s7124 + $0x28] sm:$0xff]
        %v7131 = vld [vmem:[%s7124 + $0x30] sm:$0xff]
        %v7132 = vld [vmem:[%s7124 + $0x38] sm:$0xff]
        %v7133 = vld [vmem:[%s7124 + $0x40] sm:$0xff]
        %v7134 = vld [vmem:[%s7124 + $0x48] sm:$0xff]
        %v7135 = vld [vmem:[%s7124 + $0x50] sm:$0xff]
        %v7136 = vld [vmem:[%s7124 + $0x58] sm:$0xff]
        %v7137 = vld [vmem:[%s7124 + $0x60] sm:$0xff]
        %v7138 = vld [vmem:[%s7124 + $0x68] sm:$0xff]
        %v7139 = vld [vmem:[%s7124 + $0x70] sm:$0xff]
        %v7140 = vld [vmem:[%s7124 + $0x78] sm:$0xff]
        %v7141 = vld [vmem:[%s7124 + $0x80] sm:$0xff]
        %v7142 = vld [vmem:[%s7124 + $0x88] sm:$0xff]
        %v7143 = vld [vmem:[%s7124 + $0x90] sm:$0xff]
        %v7144 = vld [vmem:[%s7124 + $0x98] sm:$0xff]
        %v7145 = vld [vmem:[%s7124 + $0xa0] sm:$0xff]
        %v7146 = vld [vmem:[%s7124 + $0xa8] sm:$0xff]
        %v7147 = vld [vmem:[%s7124 + $0xb0] sm:$0xff]
        %v7148 = vld [vmem:[%s7124 + $0xb8] sm:$0xff]
        %v7149 = vld [vmem:[%s7124 + $0xc0] sm:$0xff]
        %v7150 = vld [vmem:[%s7124 + $0xc8] sm:$0xff]
        %v7151 = vld [vmem:[%s7124 + $0xd0] sm:$0xff]
        %v7152 = vld [vmem:[%s7124 + $0xd8] sm:$0xff]
        %v7153 = vld [vmem:[%s7124 + $0xe0] sm:$0xff]
        %v7154 = vld [vmem:[%s7124 + $0xe8] sm:$0xff]
        %v7155 = vld [vmem:[%s7124 + $0xf0] sm:$0xff]
        %v7156 = vld [vmem:[%s7124 + $0xf8] sm:$0xff]
        %v7157 = vld [vmem:[%s7124 + $0x100] sm:$0xff]
        %v7158 = vld [vmem:[%s7124 + $0x108] sm:$0xff]
        %v7159 = vld [vmem:[%s7124 + $0x110] sm:$0xff]
        %v7160 = vld [vmem:[%s7124 + $0x118] sm:$0xff]
        %v7161 = vld [vmem:[%s7124 + $0x120] sm:$0xff]
        %v7162 = vld [vmem:[%s7124 + $0x128] sm:$0xff]
        %v7163 = vld [vmem:[%s7124 + $0x130] sm:$0xff]
        %v7164 = vld [vmem:[%s7124 + $0x138] sm:$0xff]
        %v7165 = vld [vmem:[%s7124 + $0x140] sm:$0xff]
        %v7166 = vld [vmem:[%s7124 + $0x148] sm:$0xff]
        %v7167 = vld [vmem:[%s7124 + $0x150] sm:$0xff]
        %v7168 = vld [vmem:[%s7124 + $0x158] sm:$0xff]
        %v7169 = vld [vmem:[%s7124 + $0x160] sm:$0xff]
        %v7170 = vld [vmem:[%s7124 + $0x168] sm:$0xff]
        %v7171 = vld [vmem:[%s7124 + $0x170] sm:$0xff]
        %v7172 = vld [vmem:[%s7124 + $0x178] sm:$0xff]
        %7173 = vmatprep.subr.mxu0 0.0
        %7174 = vmatpush1.msra.mxu0 %v7125
        %7175 = vmatprep.subr.mxu0 0.0
        %7176 = vmatpush1.msra.mxu0 %v7126
        %7177 = vmatprep.subr.mxu0 0.0
        %7178 = vmatpush1.msra.mxu0 %v7127
        %7179 = vmatprep.subr.mxu0 0.0
        %7180 = vmatpush1.msra.mxu0 %v7128
        %7181 = vmatprep.subr.mxu0 0.0
        %7182 = vmatpush1.msra.mxu0 %v7129
        %7183 = vmatprep.subr.mxu0 0.0
        %7184 = vmatpush1.msra.mxu0 %v7130
        %7185 = vmatprep.subr.mxu0 0.0
        %7186 = vmatpush1.msra.mxu0 %v7131
        %7187 = vmatprep.subr.mxu0 0.0
        %7188 = vmatpush1.msra.mxu0 %v7132
        %7189 = vmatprep.subr.mxu0 0.0
        %7190 = vmatpush1.msra.mxu0 %v7133
        %7191 = vmatprep.subr.mxu0 0.0
        %7192 = vmatpush1.msra.mxu0 %v7134
        %7193 = vmatprep.subr.mxu0 0.0
        %7194 = vmatpush1.msra.mxu0 %v7135
        %7195 = vmatprep.subr.mxu0 0.0
        %7196 = vmatpush1.msra.mxu0 %v7136
        %7197 = vmatprep.subr.mxu0 0.0
        %7198 = vmatpush1.msra.mxu0 %v7137
        %7199 = vmatprep.subr.mxu0 0.0
        %7200 = vmatpush1.msra.mxu0 %v7138
        %7201 = vmatprep.subr.mxu0 0.0
        %7202 = vmatpush1.msra.mxu0 %v7139
        %7203 = vmatprep.subr.mxu0 0.0
        %7204 = vmatpush1.msra.mxu0 %v7140
        %7205 = vmatprep.subr.mxu0 0.0
        %7206 = vmatpush1.msra.mxu0 %v7141
        %7207 = vmatprep.subr.mxu0 0.0
        %7208 = vmatpush1.msra.mxu0 %v7142
        %7209 = vmatprep.subr.mxu0 0.0
        %7210 = vmatpush1.msra.mxu0 %v7143
        %7211 = vmatprep.subr.mxu0 0.0
        %7212 = vmatpush1.msra.mxu0 %v7144
        %7213 = vmatprep.subr.mxu0 0.0
        %7214 = vmatpush1.msra.mxu0 %v7145
        %7215 = vmatprep.subr.mxu0 0.0
        %7216 = vmatpush1.msra.mxu0 %v7146
        %7217 = vmatprep.subr.mxu0 0.0
        %7218 = vmatpush1.msra.mxu0 %v7147
        %7219 = vmatprep.subr.mxu0 0.0
        %7220 = vmatpush1.msra.mxu0 %v7148
        %7221 = vmatprep.subr.mxu0 0.0
        %7222 = vmatpush1.msra.mxu0 %v7149
        %7223 = vmatprep.subr.mxu0 0.0
        %7224 = vmatpush1.msra.mxu0 %v7150
        %7225 = vmatprep.subr.mxu0 0.0
        %7226 = vmatpush1.msra.mxu0 %v7151
        %7227 = vmatprep.subr.mxu0 0.0
        %7228 = vmatpush1.msra.mxu0 %v7152
        %7229 = vmatprep.subr.mxu0 0.0
        %7230 = vmatpush1.msra.mxu0 %v7153
        %7231 = vmatprep.subr.mxu0 0.0
        %7232 = vmatpush1.msra.mxu0 %v7154
        %7233 = vmatprep.subr.mxu0 0.0
        %7234 = vmatpush1.msra.mxu0 %v7155
        %7235 = vmatprep.subr.mxu0 0.0
        %7236 = vmatpush1.msra.mxu0 %v7156
        %7237 = vmatprep.mubr.f32.mxu0 %v6201
        %7238 = vmatmul.mubr.f32.gmra.mrb[0].mxu0 %v6125
        %v7239 = vpop.f32.mrb[0].mxu0
        %v7240 = vadd.f32 0.0, %v7239
        %v7241 = vpop.f32.mrb[0].mxu0
        %7242 = vmatprep.mubr.f32.mxu0 %v6203
        %7243 = vmatmul.mubr.f32.gmra.mrb[0].mxu0 %v6126
        %v7244 = vpop.f32.mrb[0].mxu0
        %v7245 = vadd.f32 0.0, %v7244
        %v7246 = vpop.f32.mrb[0].mxu0
        %7247 = vmatprep.mubr.f32.mxu0 %v6206
        %7248 = vmatmul.mubr.f32.gmra.mrb[0].mxu0 %v6128
        %v7249 = vpop.f32.mrb[0].mxu0
        %v7250 = vadd.f32 0.0, %v7249
        %v7251 = vpop.f32.mrb[0].mxu0
        %7252 = vmatprep.mubr.f32.mxu0 %v6208
        %7253 = vmatmul.mubr.f32.gmra.mrb[0].mxu0 %v6129
        %v7254 = vpop.f32.mrb[0].mxu0
        %v7255 = vadd.f32 0.0, %v7254
        %v7256 = vpop.f32.mrb[0].mxu0
        %7257 = vmatprep.mubr.f32.mxu0 %v6211
        %7258 = vmatmul.mubr.f32.gmra.mrb[0].mxu0 %v6131
        %v7259 = vpop.f32.mrb[0].mxu0
        %v7260 = vadd.f32 0.0, %v7259
        %v7261 = vpop.f32.mrb[0].mxu0
        %7262 = vmatprep.mubr.f32.mxu0 %v6213
        %7263 = vmatmul.mubr.f32.gmra.mrb[0].mxu0 %v6132
        %v7264 = vpop.f32.mrb[0].mxu0
        %v7265 = vadd.f32 0.0, %v7264
        %v7266 = vpop.f32.mrb[0].mxu0
        %7267 = vmatprep.mubr.f32.mxu0 %v6216
        %7268 = vmatmul.mubr.f32.gmra.mrb[0].mxu0 %v6134
        %v7269 = vpop.f32.mrb[0].mxu0
        %v7270 = vadd.f32 0.0, %v7269
        %v7271 = vpop.f32.mrb[0].mxu0
        %7272 = vmatprep.mubr.f32.mxu0 %v6218
        %7273 = vmatmul.mubr.f32.gmra.mrb[0].mxu0 %v6135
        %v7274 = vpop.f32.mrb[0].mxu0
        %v7275 = vadd.f32 0.0, %v7274
        %v7276 = vpop.f32.mrb[0].mxu0
        %7277 = vmatprep.mubr.f32.mxu0 %v6221
        %7278 = vmatmul.mubr.f32.gmra.mrb[0].mxu0 %v6137
        %v7279 = vpop.f32.mrb[0].mxu0
        %v7280 = vadd.f32 0.0, %v7279
        %v7281 = vpop.f32.mrb[0].mxu0
        %7282 = vmatprep.mubr.f32.mxu0 %v6223
        %7283 = vmatmul.mubr.f32.gmra.mrb[0].mxu0 %v6138
        %v7284 = vpop.f32.mrb[0].mxu0
        %v7285 = vadd.f32 0.0, %v7284
        %v7286 = vpop.f32.mrb[0].mxu0
        %7287 = vmatprep.mubr.f32.mxu0 %v6226
        %7288 = vmatmul.mubr.f32.gmra.mrb[0].mxu0 %v6140
        %v7289 = vpop.f32.mrb[0].mxu0
        %v7290 = vadd.f32 0.0, %v7289
        %v7291 = vpop.f32.mrb[0].mxu0
        %7292 = vmatprep.mubr.f32.mxu0 %v6228
        %7293 = vmatmul.mubr.f32.gmra.mrb[0].mxu0 %v6141
        %v7294 = vpop.f32.mrb[0].mxu0
        %v7295 = vadd.f32 0.0, %v7294
        %v7296 = vpop.f32.mrb[0].mxu0
        %7297 = vmatprep.mubr.f32.mxu0 %v6692
        %7298 = vmatmul.mubr.f32.gmra.mrb[0].mxu0 %v6143
        %v7299 = vpop.f32.mrb[0].mxu0
        %v7300 = vadd.f32 0.0, %v7299
        %v7301 = vpop.f32.mrb[0].mxu0
        %7302 = vmatprep.mubr.f32.mxu0 %v6694
        %7303 = vmatmul.mubr.f32.gmra.mrb[0].mxu0 %v6144
        %v7304 = vpop.f32.mrb[0].mxu0
        %v7305 = vadd.f32 0.0, %v7304
        %v7306 = vpop.f32.mrb[0].mxu0
        %7307 = vmatprep.mubr.f32.mxu0 %v7096
        %7308 = vmatmul.mubr.f32.gmra.mrb[0].mxu0 %v6146
        %v7309 = vpop.f32.mrb[0].mxu0
        %v7310 = vadd.f32 0.0, %v7309
        %v7311 = vpop.f32.mrb[0].mxu0
        %7312 = vmatprep.mubr.f32.mxu0 %v7098
        %7313 = vmatmul.mubr.f32.gmra.mrb[0].mxu0 %v6147
        %v7314 = vpop.f32.mrb[0].mxu0
        %v7315 = vadd.f32 0.0, %v7314
        %v7316 = vpop.f32.mrb[0].mxu0
        %7317 = vdwg.mxu0
        %7318 = vmatprep.subr.mxu0 0.0
        %7319 = vmatpush1.msra.mxu0 %v7157
        %7320 = vmatprep.subr.mxu0 0.0
        %7321 = vmatpush1.msra.mxu0 %v7158
        %7322 = vmatprep.subr.mxu0 0.0
        %7323 = vmatpush1.msra.mxu0 %v7159
        %7324 = vmatprep.subr.mxu0 0.0
        %7325 = vmatpush1.msra.mxu0 %v7160
        %7326 = vmatprep.subr.mxu0 0.0
        %7327 = vmatpush1.msra.mxu0 %v7161
        %7328 = vmatprep.subr.mxu0 0.0
        %7329 = vmatpush1.msra.mxu0 %v7162
        %7330 = vmatprep.subr.mxu0 0.0
        %7331 = vmatpush1.msra.mxu0 %v7163
        %7332 = vmatprep.subr.mxu0 0.0
        %7333 = vmatpush1.msra.mxu0 %v7164
        %7334 = vmatprep.subr.mxu0 0.0
        %7335 = vmatpush1.msra.mxu0 %v7165
        %7336 = vmatprep.subr.mxu0 0.0
        %7337 = vmatpush1.msra.mxu0 %v7166
        %7338 = vmatprep.subr.mxu0 0.0
        %7339 = vmatpush1.msra.mxu0 %v7167
        %7340 = vmatprep.subr.mxu0 0.0
        %7341 = vmatpush1.msra.mxu0 %v7168
        %7342 = vmatprep.subr.mxu0 0.0
        %7343 = vmatpush1.msra.mxu0 %v7169
        %7344 = vmatprep.subr.mxu0 0.0
        %7345 = vmatpush1.msra.mxu0 %v7170
        %7346 = vmatprep.subr.mxu0 0.0
        %7347 = vmatpush1.msra.mxu0 %v7171
        %7348 = vmatprep.subr.mxu0 0.0
        %7349 = vmatpush1.msra.mxu0 %v7172
        %7350 = vmatprep.subr.mxu0 0.0
        %7351 = vmatpush1.msra.mxu0 0.0
        %7352 = vmatprep.subr.mxu0 0.0
        %7353 = vmatpush1.msra.mxu0 0.0
        %7354 = vmatprep.subr.mxu0 0.0
        %7355 = vmatpush1.msra.mxu0 0.0
        %7356 = vmatprep.subr.mxu0 0.0
        %7357 = vmatpush1.msra.mxu0 0.0
        %7358 = vmatprep.subr.mxu0 0.0
        %7359 = vmatpush1.msra.mxu0 0.0
        %7360 = vmatprep.subr.mxu0 0.0
        %7361 = vmatpush1.msra.mxu0 0.0
        %7362 = vmatprep.subr.mxu0 0.0
        %7363 = vmatpush1.msra.mxu0 0.0
        %7364 = vmatprep.subr.mxu0 0.0
        %7365 = vmatpush1.msra.mxu0 0.0
        %7366 = vmatprep.subr.mxu0 0.0
        %7367 = vmatpush1.msra.mxu0 0.0
        %7368 = vmatprep.subr.mxu0 0.0
        %7369 = vmatpush1.msra.mxu0 0.0
        %7370 = vmatprep.subr.mxu0 0.0
        %7371 = vmatpush1.msra.mxu0 0.0
        %7372 = vmatprep.subr.mxu0 0.0
        %7373 = vmatpush1.msra.mxu0 0.0
        %7374 = vmatprep.subr.mxu0 0.0
        %7375 = vmatpush1.msra.mxu0 0.0
        %7376 = vmatprep.subr.mxu0 0.0
        %7377 = vmatpush1.msra.mxu0 0.0
        %7378 = vmatprep.subr.mxu0 0.0
        %7379 = vmatpush1.msra.mxu0 0.0
        %7380 = vmatprep.subr.mxu0 0.0
        %7381 = vmatpush1.msra.mxu0 0.0
        %7382 = vmatprep.mubr.f32.mxu0 0.0
        %7383 = vmatmul.mubr.f32.gmra.mrb[0].mxu0 %v6257
        %v7384 = vpop.f32.mrb[0].mxu0
        %v7385 = vadd.f32 %v7240, %v7384
        %v7386 = vpop.f32.mrb[0].mxu0
        %7387 = vmatprep.mubr.f32.mxu0 0.0
        %7388 = vmatmul.mubr.f32.gmra.mrb[0].mxu0 %v6259
        %v7389 = vpop.f32.mrb[0].mxu0
        %v7390 = vadd.f32 %v7245, %v7389
        %v7391 = vpop.f32.mrb[0].mxu0
        %7392 = vmatprep.mubr.f32.mxu0 0.0
        %7393 = vmatmul.mubr.f32.gmra.mrb[0].mxu0 %v6262
        %v7394 = vpop.f32.mrb[0].mxu0
        %v7395 = vadd.f32 %v7250, %v7394
        %v7396 = vpop.f32.mrb[0].mxu0
        %7397 = vmatprep.mubr.f32.mxu0 0.0
        %7398 = vmatmul.mubr.f32.gmra.mrb[0].mxu0 %v6264
        %v7399 = vpop.f32.mrb[0].mxu0
        %v7400 = vadd.f32 %v7255, %v7399
        %v7401 = vpop.f32.mrb[0].mxu0
        %7402 = vmatprep.mubr.f32.mxu0 0.0
        %7403 = vmatmul.mubr.f32.gmra.mrb[0].mxu0 %v6267
        %v7404 = vpop.f32.mrb[0].mxu0
        %v7405 = vadd.f32 %v7260, %v7404
        %v7406 = vpop.f32.mrb[0].mxu0
        %7407 = vmatprep.mubr.f32.mxu0 0.0
        %7408 = vmatmul.mubr.f32.gmra.mrb[0].mxu0 %v6269
        %v7409 = vpop.f32.mrb[0].mxu0
        %v7410 = vadd.f32 %v7265, %v7409
        %v7411 = vpop.f32.mrb[0].mxu0
        %7412 = vmatprep.mubr.f32.mxu0 0.0
        %7413 = vmatmul.mubr.f32.gmra.mrb[0].mxu0 %v6272
        %v7414 = vpop.f32.mrb[0].mxu0
        %v7415 = vadd.f32 %v7270, %v7414
        %v7416 = vpop.f32.mrb[0].mxu0
        %7417 = vmatprep.mubr.f32.mxu0 0.0
        %7418 = vmatmul.mubr.f32.gmra.mrb[0].mxu0 %v6274
        %v7419 = vpop.f32.mrb[0].mxu0
        %v7420 = vadd.f32 %v7275, %v7419
        %v7421 = vpop.f32.mrb[0].mxu0
        %7422 = vmatprep.mubr.f32.mxu0 0.0
        %7423 = vmatmul.mubr.f32.gmra.mrb[0].mxu0 %v6277
        %v7424 = vpop.f32.mrb[0].mxu0
        %v7425 = vadd.f32 %v7280, %v7424
        %v7426 = vpop.f32.mrb[0].mxu0
        %7427 = vmatprep.mubr.f32.mxu0 0.0
        %7428 = vmatmul.mubr.f32.gmra.mrb[0].mxu0 %v6279
        %v7429 = vpop.f32.mrb[0].mxu0
        %v7430 = vadd.f32 %v7285, %v7429
        %v7431 = vpop.f32.mrb[0].mxu0
        %7432 = vmatprep.mubr.f32.mxu0 0.0
        %7433 = vmatmul.mubr.f32.gmra.mrb[0].mxu0 %v6282
        %v7434 = vpop.f32.mrb[0].mxu0
        %v7435 = vadd.f32 %v7290, %v7434
        %v7436 = vpop.f32.mrb[0].mxu0
        %7437 = vmatprep.mubr.f32.mxu0 0.0
        %7438 = vmatmul.mubr.f32.gmra.mrb[0].mxu0 %v6284
        %v7439 = vpop.f32.mrb[0].mxu0
        %v7440 = vadd.f32 %v7295, %v7439
        %v7441 = vpop.f32.mrb[0].mxu0
        %7442 = vmatprep.mubr.f32.mxu0 0.0
        %7443 = vmatmul.mubr.f32.gmra.mrb[0].mxu0 %v6699
        %v7444 = vpop.f32.mrb[0].mxu0
        %v7445 = vadd.f32 %v7300, %v7444
        %v7446 = vpop.f32.mrb[0].mxu0
        %7447 = vmatprep.mubr.f32.mxu0 0.0
        %7448 = vmatmul.mubr.f32.gmra.mrb[0].mxu0 %v6701
        %v7449 = vpop.f32.mrb[0].mxu0
        %v7450 = vadd.f32 %v7305, %v7449
        %v7451 = vpop.f32.mrb[0].mxu0
        %7452 = vmatprep.mubr.f32.mxu0 0.0
        %7453 = vmatmul.mubr.f32.gmra.mrb[0].mxu0 %v7103
        %v7454 = vpop.f32.mrb[0].mxu0
        %v7455 = vadd.f32 %v7310, %v7454
        %v7456 = vpop.f32.mrb[0].mxu0
        %7457 = vmatprep.mubr.f32.mxu0 0.0
        %7458 = vmatmul.mubr.f32.gmra.mrb[0].mxu0 %v7105
        %v7459 = vpop.f32.mrb[0].mxu0
        %v7460 = vadd.f32 %v7315, %v7459
        %v7461 = vpop.f32.mrb[0].mxu0
        %7462 = vdwg.mxu0
        %v7463 = vadd.f32 %v7108, %v7385
        %v7464 = vadd.f32 %v7109, %v7390
        %v7465 = vadd.f32 %v7110, %v7395
        %v7466 = vadd.f32 %v7111, %v7400
        %v7467 = vadd.f32 %v7112, %v7405
        %v7468 = vadd.f32 %v7113, %v7410
        %v7469 = vadd.f32 %v7114, %v7415
        %v7470 = vadd.f32 %v7115, %v7420
        %v7471 = vadd.f32 %v7116, %v7425
        %v7472 = vadd.f32 %v7117, %v7430
        %v7473 = vadd.f32 %v7118, %v7435
        %v7474 = vadd.f32 %v7119, %v7440
        %v7475 = vadd.f32 %v7120, %v7445
        %v7476 = vadd.f32 %v7121, %v7450
        %v7477 = vadd.f32 %v7122, %v7455
        %v7478 = vadd.f32 %v7123, %v7460
        %7479 = vst [vmem:[#allocation5] sm:$0xff] %v7463
        %7480 = vst [vmem:[#allocation5 + $0x8] sm:$0xff] %v7464
        %7481 = vst [vmem:[#allocation5 + $0x10] sm:$0xff] %v7465
        %7482 = vst [vmem:[#allocation5 + $0x18] sm:$0xff] %v7466
        %7483 = vst [vmem:[#allocation5 + $0x20] sm:$0xff] %v7467
        %7484 = vst [vmem:[#allocation5 + $0x28] sm:$0xff] %v7468
        %7485 = vst [vmem:[#allocation5 + $0x30] sm:$0xff] %v7469
        %7486 = vst [vmem:[#allocation5 + $0x38] sm:$0xff] %v7470
        %7487 = vst [vmem:[#allocation5 + $0x40] sm:$0xff] %v7471
        %7488 = vst [vmem:[#allocation5 + $0x48] sm:$0xff] %v7472
        %7489 = vst [vmem:[#allocation5 + $0x50] sm:$0xff] %v7473
        %7490 = vst [vmem:[#allocation5 + $0x58] sm:$0xff] %v7474
        %7491 = vst [vmem:[#allocation5 + $0x60] sm:$0xff] %v7475
        %7492 = vst [vmem:[#allocation5 + $0x68] sm:$0xff] %v7476
        %7493 = vst [vmem:[#allocation5 + $0x70] sm:$0xff] %v7477
        %7494 = vst [vmem:[#allocation5 + $0x78] sm:$0xff] %v7478
        %v7495 = vld [vmem:[#allocation5] sm:$0xff]
        %v7496 = vld [vmem:[#allocation5 + $0x8] sm:$0xff]
        %v7497 = vld [vmem:[#allocation5 + $0x10] sm:$0xff]
        %v7498 = vld [vmem:[#allocation5 + $0x18] sm:$0xff]
        %v7499 = vld [vmem:[#allocation5 + $0x20] sm:$0xff]
        %v7500 = vld [vmem:[#allocation5 + $0x28] sm:$0xff]
        %v7501 = vld [vmem:[#allocation5 + $0x30] sm:$0xff]
        %v7502 = vld [vmem:[#allocation5 + $0x38] sm:$0xff]
        %v7503 = vld [vmem:[#allocation5 + $0x40] sm:$0xff]
        %v7504 = vld [vmem:[#allocation5 + $0x48] sm:$0xff]
        %v7505 = vld [vmem:[#allocation5 + $0x50] sm:$0xff]
        %v7506 = vld [vmem:[#allocation5 + $0x58] sm:$0xff]
        %v7507 = vld [vmem:[#allocation5 + $0x60] sm:$0xff]
        %v7508 = vld [vmem:[#allocation5 + $0x68] sm:$0xff]
        %v7509 = vld [vmem:[#allocation5 + $0x70] sm:$0xff]
        %v7510 = vld [vmem:[#allocation5 + $0x78] sm:$0xff]
        %v7511 = vld [vmem:[%s4] sm:$0x1]
        %v7513 = vlaneseq
        %v7514 = vshrl.u32 %v7513, 7
        %v7515 = vsub.s32 0, %v7514
        %v7516 = vrot.slane %v7511, %v7515
        %v7518 = vadd.f32 %v7495, %v7516
        %v7519 = vadd.f32 %v7496, %v7516
        %v7520 = vadd.f32 %v7497, %v7516
        %v7521 = vadd.f32 %v7498, %v7516
        %v7522 = vadd.f32 %v7499, %v7516
        %v7523 = vadd.f32 %v7500, %v7516
        %v7524 = vadd.f32 %v7501, %v7516
        %v7525 = vadd.f32 %v7502, %v7516
        %v7526 = vadd.f32 %v7503, %v7516
        %v7527 = vadd.f32 %v7504, %v7516
        %v7528 = vadd.f32 %v7505, %v7516
        %v7529 = vadd.f32 %v7506, %v7516
        %v7530 = vadd.f32 %v7507, %v7516
        %v7531 = vadd.f32 %v7508, %v7516
        %v7532 = vadd.f32 %v7509, %v7516
        %v7533 = vadd.f32 %v7510, %v7516
        %v7534 = vmax.f32 %v7518, 0.0
        %v7535 = vmax.f32 %v7519, 0.0
        %v7536 = vmax.f32 %v7520, 0.0
        %v7537 = vmax.f32 %v7521, 0.0
        %v7538 = vmax.f32 %v7522, 0.0
        %v7539 = vmax.f32 %v7523, 0.0
        %v7540 = vmax.f32 %v7524, 0.0
        %v7541 = vmax.f32 %v7525, 0.0
        %v7542 = vmax.f32 %v7526, 0.0
        %v7543 = vmax.f32 %v7527, 0.0
        %v7544 = vmax.f32 %v7528, 0.0
        %v7545 = vmax.f32 %v7529, 0.0
        %v7546 = vmax.f32 %v7530, 0.0
        %v7547 = vmax.f32 %v7531, 0.0
        %v7548 = vmax.f32 %v7532, 0.0
        %v7549 = vmax.f32 %v7533, 0.0
        %7550 = vst [vmem:[%s205] sm:$0xff] %v7534
        %7551 = vst [vmem:[%s205 + $0x8] sm:$0xff] %v7535
        %7552 = vst [vmem:[%s205 + $0x10] sm:$0xff] %v7536
        %7553 = vst [vmem:[%s205 + $0x18] sm:$0xff] %v7537
        %7554 = vst [vmem:[%s205 + $0x20] sm:$0xff] %v7538
        %7555 = vst [vmem:[%s205 + $0x28] sm:$0xff] %v7539
        %7556 = vst [vmem:[%s205 + $0x30] sm:$0xff] %v7540
        %7557 = vst [vmem:[%s205 + $0x38] sm:$0xff] %v7541
        %7558 = vst [vmem:[%s205 + $0x40] sm:$0xff] %v7542
        %7559 = vst [vmem:[%s205 + $0x48] sm:$0xff] %v7543
        %7560 = vst [vmem:[%s205 + $0x50] sm:$0xff] %v7544
        %7561 = vst [vmem:[%s205 + $0x58] sm:$0xff] %v7545
        %7562 = vst [vmem:[%s205 + $0x60] sm:$0xff] %v7546
        %7563 = vst [vmem:[%s205 + $0x68] sm:$0xff] %v7547
        %7564 = vst [vmem:[%s205 + $0x70] sm:$0xff] %v7548
        %7565 = vst [vmem:[%s205 + $0x78] sm:$0xff] %v7549
        %s7566 = sand.u32 %s126, 1
        %s7567 = scalar_lea.sflag [#allocation9], %s7566
        %s7568 = sand.u32 %s126, 1
        %s7569 = smul.addr %s7568, 128
        %s7570 = scalar_lea.vmem [#allocation10], %s7569
        // Predicated region
        $region78: #{tpu_custom_call.1} parent=35 // pred_check
          %p7571 = pneg %p136
        $region79: #{tpu_custom_call.1} parent=35 // pred_check_branch
          %7573 = sbr.rel (%p7571) target = $region81
        $region80: #{tpu_custom_call.1} parent=35 // pred_region
          %s7574 = smul.u32 8, %s25
          %s7576 = ssub.s32 2048, 2048
          %7577 = vsyncadd %s7567, %s7576
          %s7578 = smul.addr %s7574, 2
          %s7579 = smul.addr %s24, 32
          %s7580 = sadd.s32 %s7578, %s7579
          %s7581 = smul.addr %s7580, 128
          %s7582 = scalar_lea.hbm %s5, %s7581
          %s7583 = sshll.u32 %s7570, 4
          %s7584 = int_to_ptr.vmem [resolvable:$true] %s7583
          %7589 = dma.vmem_to_hbm [thread:$0]  %s7584, 2048, %s7582, %s7567, 128, 128, 8
        $region81: #{tpu_custom_call.1} parent=35 // pred_fallthru
          _
      $region36: #{tpu_custom_call.1} parent=5 // pred_fallthru
        _
      %p7590 = scmp.le.s32.totalorder 2, %s15
      // Predicated region
      $region82: #{tpu_custom_call.1} parent=5 // pred_check
        %p7591 = pneg %p7590
      $region83: #{tpu_custom_call.1} parent=5 // pred_check_branch
        %7593 = sbr.rel (%p7591) target = $region85
      $region84: #{tpu_custom_call.1} parent=5 // pred_region
        %s7594 = ssub.s32 %s15, 2
        // Predicated region
        $region86: #{tpu_custom_call.1} parent=84 // pred_check
          %p7595 = pneg %p142
        $region87: #{tpu_custom_call.1} parent=84 // pred_check_branch
          %7597 = sbr.rel (%p7595) target = $region89
        $region88: #{tpu_custom_call.1} parent=84 // pred_region
          %s7598 = sand.u32 %s127, 1
          %s7599 = scalar_lea.sflag [#allocation9], %s7598
          %s7600 = sand.u32 %s127, 1
          %s7601 = smul.addr %s7600, 128
          %s7602 = scalar_lea.vmem [#allocation10], %s7601
          %7603 = dma.done %s7599, 2048
        $region89: #{tpu_custom_call.1} parent=84 // pred_fallthru
          _
      $region85: #{tpu_custom_call.1} parent=5 // pred_fallthru
        _
    $region6: #{tpu_custom_call.1} parent=1 // loop_footer
      %s19 = sadd.s32 1, %s15
    $region7: #{tpu_custom_call.1} parent=1 // loop_footer_branch
      %14 = sbr.rel target = $region3
    $region8: #{tpu_custom_call.1} parent=1 // loop_exit
      _
    %7604 = vsyncpa [#allocation8], 1
    %s7605 = scalar_lea.sflag [#allocation8], 1
    %7606 = vsyncpa %s7605, 1
    %7607 = vsyncpa [#allocation9], 1
    %s7608 = scalar_lea.sflag [#allocation9], 1
    %7609 = vsyncpa %s7608, 1
  %7610 = vsyncmov [#allocation6]
  %s7611 = vpop.sfrf %7610
  %p7612 = scmp.eq.s32.totalorder %s7611, 0
  %p7613 = pneg %p7612
  %7615 = shalt.err (%p7613)

</llo_original>
